<compile_context>
chip_gen: v7x
topology: tpu7x:2x2x1
jax: 0.10.0
libtpu: 0.0.40
codegen_flags: <defaults>
</compile_context>

<pallas_src>
import functools

import jax
import jax.numpy as jnp
from jax.experimental import pallas as pl
from jax.experimental.pallas import tpu as pltpu

EPS = 1e-5                       # nn.BatchNorm2d default eps
_ROW_BLOCK = 1024                # row tile for the lane-dense elementwise kernels
_VMEM_LIMIT = 48 * 1024 * 1024   # conservative vs v7x's 64 MiB physical VMEM


def _round_up(x, m):
    return ((x + m - 1) // m) * m


# ---------------------------------------------------------------------------
# Fused "rowpad" conv kernel: K shifted MXU matmuls from a haloed activation
# tile resident in VMEM, with BN pass-1 statistics in the epilogue.
# ---------------------------------------------------------------------------
def _conv_rowpad_kernel(x_ref, w_ref, m_ref, o_ref, sum_ref, sq_ref, *,
                        offsets, rows_out):
    # x_ref: (1, rows_in, Cin) bf16  -- whole padded image, rows flattened
    # w_ref: (K, Cin, Cout) bf16     -- resident taps
    # m_ref: (1, rows_out, 1) f32    -- 1.0 on valid columns, 0.0 on junk
    # o_ref: (1, rows_out, Cout) f32 ; sum_ref / sq_ref: (1, 1, Cout) f32
    # Full-tile aligned load; the (possibly unaligned) row-shifted slices are
    # taken on the 32-bit value and cast back to bf16 right before the MXU.
    xv = x_ref[0].astype(jnp.float32)

    def tap(t):
        off = offsets[t]
        xs = xv[off:off + rows_out, :].astype(jnp.bfloat16)
        return jnp.dot(xs, w_ref[t], preferred_element_type=jnp.float32)

    acc = tap(0)
    for t in range(1, len(offsets)):
        acc = acc + tap(t)
    o_ref[0] = acc

    masked = acc * m_ref[0]                 # zero the junk (w >= W) columns
    sum_ref[0] = jnp.sum(masked, axis=0, keepdims=True)
    sq_ref[0] = jnp.sum(masked * acc, axis=0, keepdims=True)


def pallas_conv_rowpad(xflat, w_taps, offsets, rows_out, row_mask):
    """xflat (N, rows_in, Cin) bf16, w_taps (K, Cin, Cout) bf16.

    Returns (out (N, rows_out, Cout) f32, ch_sum (Cout,), ch_sumsq (Cout,)),
    statistics taken over valid (non-junk) positions only.
    """
    N, rows_in, cin = xflat.shape
    K, _, cout = w_taps.shape
    kernel = functools.partial(_conv_rowpad_kernel,
                               offsets=tuple(int(o) for o in offsets),
                               rows_out=rows_out)
    out, s, q = pl.pallas_call(
        kernel,
        out_shape=(jax.ShapeDtypeStruct((N, rows_out, cout), jnp.float32),
                   jax.ShapeDtypeStruct((N, 1, cout), jnp.float32),
                   jax.ShapeDtypeStruct((N, 1, cout), jnp.float32)),
        grid=(N,),
        in_specs=[pl.BlockSpec((1, rows_in, cin), lambda n: (n, 0, 0)),
                  pl.BlockSpec((K, cin, cout), lambda n: (0, 0, 0)),
                  pl.BlockSpec((1, rows_out, 1), lambda n: (0, 0, 0))],
        out_specs=(pl.BlockSpec((1, rows_out, cout), lambda n: (n, 0, 0)),
                   pl.BlockSpec((1, 1, cout), lambda n: (n, 0, 0)),
                   pl.BlockSpec((1, 1, cout), lambda n: (n, 0, 0))),
        compiler_params=pltpu.CompilerParams(
            dimension_semantics=("parallel",),
            vmem_limit_bytes=_VMEM_LIMIT),
    )(xflat, w_taps, row_mask)
    return out, jnp.sum(s, axis=(0, 1)), jnp.sum(q, axis=(0, 1))


# ---------------------------------------------------------------------------
# Lane-dense elementwise BN-apply kernels
# ---------------------------------------------------------------------------
def _dense_view(M, C):
    """View (M, C) as (Md, Cd) with Cd lane-dense when C divides 128."""
    if C % 128 == 0:
        return 1, M, C
    if 128 % C == 0 and (M * C) % 128 == 0:
        return 128 // C, (M * C) // 128, 128
    return 1, M, C            # lane-masked fallback (odd channel counts)


def _lane_vec(v, r):
    return jnp.tile(v.astype(jnp.float32), r).reshape(1, -1)


def _row_tile(Md):
    if Md <= 8:
        return Md
    # >= 2 grid programs when possible so v7x's second TensorCore has work.
    return min(_ROW_BLOCK, max(8, _round_up(Md // 2, 8)))


def _bn_relu_kernel(y_ref, sc_ref, sh_ref, bn_ref, relu_ref):
    z = y_ref[...] * sc_ref[...] + sh_ref[...]
    bn_ref[...] = z
    relu_ref[...] = jnp.maximum(z, 0.0).astype(relu_ref.dtype)


def _bn_add_relu_kernel(y_ref, sc_ref, sh_ref, r_ref, rsc_ref, rsh_ref,
                        bn_ref, sum_ref, out_ref):
    # NOTE(v5e): 3 f32 stores per tile; if this ever becomes store-slot bound
    # the `sum` capture (= bn + shortcut) could be recomputed by the consumer.
    z = y_ref[...] * sc_ref[...] + sh_ref[...]
    res = r_ref[...] * rsc_ref[...] + rsh_ref[...]
    s = z + res
    bn_ref[...] = z
    sum_ref[...] = s
    out_ref[...] = jnp.maximum(s, 0.0)


def pallas_bn_relu(y2d, scale, shift):
    """(M, C) f32 -> (bn (M, C) f32, relu (M, C) bf16)."""
    M, C = y2d.shape
    r, Md, Cd = _dense_view(M, C)
    yd = y2d.reshape(Md, Cd)
    tr = _row_tile(Md)
    row = pl.BlockSpec((tr, Cd), lambda i: (i, 0))
    vec = pl.BlockSpec((1, Cd), lambda i: (0, 0))
    bn, relu = pl.pallas_call(
        _bn_relu_kernel,
        out_shape=(jax.ShapeDtypeStruct((Md, Cd), jnp.float32),
                   jax.ShapeDtypeStruct((Md, Cd), jnp.bfloat16)),
        grid=(pl.cdiv(Md, tr),),
        in_specs=[row, vec, vec],
        out_specs=(row, row),
        compiler_params=pltpu.CompilerParams(
            dimension_semantics=("parallel",)),
    )(yd, _lane_vec(scale, r), _lane_vec(shift, r))
    return bn.reshape(M, C), relu.reshape(M, C)


def pallas_bn_add_relu(y2d, scale, shift, r2d, r_scale, r_shift):
    """Fused bn2(y), bn2(y)+shortcut, relu(sum).  Each output (M, C) f32."""
    M, C = y2d.shape
    r, Md, Cd = _dense_view(M, C)
    yd = y2d.reshape(Md, Cd)
    rd = r2d.astype(jnp.float32).reshape(Md, Cd)
    tr = _row_tile(Md)
    row = pl.BlockSpec((tr, Cd), lambda i: (i, 0))
    vec = pl.BlockSpec((1, Cd), lambda i: (0, 0))
    bn, summed, out = pl.pallas_call(
        _bn_add_relu_kernel,
        out_shape=(jax.ShapeDtypeStruct((Md, Cd), jnp.float32),) * 3,
        grid=(pl.cdiv(Md, tr),),
        in_specs=[row, vec, vec, row, vec, vec],
        out_specs=(row,) * 3,
        compiler_params=pltpu.CompilerParams(
            dimension_semantics=("parallel",)),
    )(yd, _lane_vec(scale, r), _lane_vec(shift, r),
      rd, _lane_vec(r_scale, r), _lane_vec(r_shift, r))
    return bn.reshape(M, C), summed.reshape(M, C), out.reshape(M, C)


def _bn_scale_shift(ch_sum, ch_sq, count, gamma, beta):
    mean = ch_sum / count
    var = jnp.maximum(ch_sq / count - mean * mean, 0.0)   # biased batch var
    scale = gamma * jax.lax.rsqrt(var + EPS)
    shift = beta - mean * scale
    return scale, shift


# ---------------------------------------------------------------------------
# Fallback (stride != 1 only): bf16 im2col + tiled Pallas MXU matmul
# ---------------------------------------------------------------------------
def _matmul_kernel(a_ref, b_ref, o_ref):
    @pl.when(pl.program_id(2) == 0)
    def _():
        o_ref[...] = jnp.zeros_like(o_ref)
    o_ref[...] += jnp.dot(a_ref[...], b_ref[...],
                          preferred_element_type=jnp.float32)


def pallas_matmul(a, b):
    """bf16 (M, K) @ (K, N) -> f32 (M, N)."""
    a = a.astype(jnp.bfloat16)
    b = b.astype(jnp.bfloat16)
    M, K = a.shape
    _, N = b.shape
    Kp = _round_up(K, 128)
    Np = _round_up(N, 128)
    tk = Kp if Kp <= 512 else next(t for t in (512, 384, 256, 128) if Kp % t == 0)
    tn = Np if Np <= 512 else next(t for t in (512, 384, 256, 128) if Np % t == 0)
    tm = min(512, _round_up(M, 8))
    Mp = _round_up(M, tm)
    a = jnp.pad(a, ((0, Mp - M), (0, Kp - K)))
    b = jnp.pad(b, ((0, Kp - K), (0, Np - N)))
    out = pl.pallas_call(
        _matmul_kernel,
        out_shape=jax.ShapeDtypeStruct((Mp, Np), jnp.float32),
        grid=(Mp // tm, Np // tn, Kp // tk),
        in_specs=[pl.BlockSpec((tm, tk), lambda i, j, k: (i, k)),
                  pl.BlockSpec((tk, tn), lambda i, j, k: (k, j))],
        out_specs=pl.BlockSpec((tm, tn), lambda i, j, k: (i, j)),
        compiler_params=pltpu.CompilerParams(
            dimension_semantics=("parallel", "parallel", "arbitrary"),
            vmem_limit_bytes=_VMEM_LIMIT),
    )(a, b)
    return out[:M, :N]


def conv_im2col_fallback(x_nhwc, w, stride):
    """Strided 3x3 conv, padding=1, via bf16 im2col + Pallas matmul."""
    # TODO(synk): fuse the strided conv into the rowpad kernel instead.
    N, H, W, C = x_nhwc.shape
    xb = jnp.pad(x_nhwc.astype(jnp.bfloat16), ((0, 0), (1, 1), (1, 1), (0, 0)))
    Ho = (H - 1) // stride + 1
    Wo = (W - 1) // stride + 1
    cols = [xb[:, kh:kh + (Ho - 1) * stride + 1:stride,
               kw:kw + (Wo - 1) * stride + 1:stride, :]
            for kh in range(3) for kw in range(3)]
    patches = jnp.concatenate(cols, axis=-1).reshape(N * Ho * Wo, 9 * C)
    wm = jnp.transpose(w, (2, 3, 1, 0)).reshape(9 * C, -1)
    return pallas_matmul(patches, wm).reshape(N, Ho, Wo, -1)


# ---------------------------------------------------------------------------
# Layout helpers / parameter init
# ---------------------------------------------------------------------------
def conv3x3_taps(w):
    # torch (Cout, Cin, 3, 3) -> (9, Cin, Cout) bf16, tap index = kh*3 + kw
    cout, cin = w.shape[0], w.shape[1]
    return jnp.transpose(w, (2, 3, 1, 0)).reshape(9, cin, cout).astype(jnp.bfloat16)


def compact_to_rowpad(a_nhwc):
    n, h, w, c = a_nhwc.shape
    return jnp.pad(a_nhwc, ((0, 0), (0, 0), (0, 2), (0, 0))).reshape(
        n, h * (w + 2), c)


def rowpad_to_nchw(a_rowpad, n, h, w):
    c = a_rowpad.shape[-1]
    wp = a_rowpad.shape[1] // h
    a = a_rowpad.reshape(n, h, wp, c)[:, :, :w, :]
    return jnp.transpose(a, (0, 3, 1, 2)).astype(jnp.float32)


def init_params(key, in_planes, planes, stride):
    k1, k2, k3 = jax.random.split(key, 3)
    params = {
        "conv1_w": 0.1 * jax.random.normal(k1, (planes, in_planes, 3, 3),
                                           jnp.float32),
        "bn1_gamma": jnp.ones((planes,), jnp.float32),
        "bn1_beta": jnp.zeros((planes,), jnp.float32),
        "conv2_w": 0.1 * jax.random.normal(k2, (planes, planes, 3, 3),
                                           jnp.float32),
        "bn2_gamma": jnp.ones((planes,), jnp.float32),
        "bn2_beta": jnp.zeros((planes,), jnp.float32),
    }
    if stride != 1 or in_planes != planes:
        params["sc_conv_w"] = 0.1 * jax.random.normal(
            k3, (planes, in_planes, 1, 1), jnp.float32)
        params["sc_bn_gamma"] = jnp.ones((planes,), jnp.float32)
        params["sc_bn_beta"] = jnp.zeros((planes,), jnp.float32)
    return params


# ---------------------------------------------------------------------------
# BasicBlockSplit.forward
# ---------------------------------------------------------------------------
def basic_block_split_forward(x_nchw, params, stride=1):
    """Mirrors BasicBlockSplit.forward(x, input_list, output_list).

    Returns (out_nchw, input_list, output_list); the Variable(out.data)
    autograd-graph splits are value no-ops, so list entries are the NCHW
    tensors PyTorch would have appended.
    """
    input_list, output_list = [], []
    N, Cin, H, W = x_nchw.shape
    planes = params["conv1_w"].shape[0]
    x = jnp.transpose(x_nchw, (0, 2, 3, 1))            # NHWC f32

    Ho = (H - 1) // stride + 1
    Wo = (W - 1) // stride + 1
    Wop = Wo + 2                     # padded width of the output grid
    rows_out = Ho * Wop
    rows_in = (Ho + 3) * Wop
    count = N * Ho * Wo              # valid positions per channel (BN count)
    offs9 = tuple(kh * Wop + kw for kh in range(3) for kw in range(3))
    valid = (jnp.arange(rows_out) % Wop) < Wo
    mask3 = valid.astype(jnp.float32).reshape(1, rows_out, 1)

    # ---- conv1 (3x3, stride, pad=1, no bias) + fused BN1 statistics --------
    if stride == 1:
        xflat1 = jnp.pad(x.astype(jnp.bfloat16),
                         ((0, 0), (1, 2), (1, 1), (0, 0))
                         ).reshape(N, rows_in, Cin)
        o1p, s1, q1 = pallas_conv_rowpad(
            xflat1, conv3x3_taps(params["conv1_w"]), offs9, rows_out, mask3)
    else:
        xflat1 = None
        o1c = conv_im2col_fallback(x, params["conv1_w"], stride)
        s1 = jnp.sum(o1c, axis=(0, 1, 2))
        q1 = jnp.sum(o1c * o1c, axis=(0, 1, 2))
        o1p = compact_to_rowpad(o1c)

    cap = rowpad_to_nchw(o1p, N, Ho, Wo)
    output_list.append(cap)
    input_list.append(cap)

    # ---- bn1 + relu (fused dual output; relu kept bf16 for conv2) ----------
    scale1, shift1 = _bn_scale_shift(s1, q1, count,
                                     params["bn1_gamma"], params["bn1_beta"])
    bn1f, relu1f = pallas_bn_relu(o1p.reshape(-1, planes), scale1, shift1)
    bn1p = bn1f.reshape(N, rows_out, planes)
    relu1p = relu1f.reshape(N, rows_out, planes)
    cap = rowpad_to_nchw(bn1p, N, Ho, Wo)
    output_list.append(cap)
    input_list.append(cap)
    cap = rowpad_to_nchw(relu1p, N, Ho, Wo)
    output_list.append(cap)
    input_list.append(cap)

    # ---- conv2 (3x3, stride=1, pad=1) + fused BN2 statistics ----------------
    # Re-pad relu1 into the haloed rowpad layout (junk columns zeroed so the
    # shifted embedding reproduces exact zero padding); one bf16 XLA pass.
    relu1_z = jnp.where(valid[None, :, None], relu1p, 0)
    xflat2 = jnp.pad(relu1_z, ((0, 0), (Wop + 1, 2 * Wop - 1), (0, 0)))
    o2p, s2, q2 = pallas_conv_rowpad(
        xflat2, conv3x3_taps(params["conv2_w"]), offs9, rows_out, mask3)
    cap = rowpad_to_nchw(o2p, N, Ho, Wo)
    output_list.append(cap)
    input_list.append(cap)

    # ---- shortcut(x) ---------------------------------------------------------
    if "sc_conv_w" in params:
        wsc = jnp.transpose(params["sc_conv_w"].reshape(planes, Cin),
                            (1, 0)).astype(jnp.bfloat16)        # (Cin, planes)
        if stride == 1:
            scp, ss, sq = pallas_conv_rowpad(
                xflat1, wsc.reshape(1, Cin, planes), (Wop + 1,), rows_out, mask3)
        else:
            x_s = x[:, ::stride, ::stride, :].astype(jnp.bfloat16)
            scc = pallas_matmul(x_s.reshape(N * Ho * Wo, Cin),
                                wsc).reshape(N, Ho, Wo, planes)
            ss = jnp.sum(scc, axis=(0, 1, 2))
            sq = jnp.sum(scc * scc, axis=(0, 1, 2))
            scp = compact_to_rowpad(scc)
        sc_scale, sc_shift = _bn_scale_shift(
            ss, sq, count, params["sc_bn_gamma"], params["sc_bn_beta"])
    else:
        # identity shortcut (stride == 1 and Cin == planes)
        scp = jnp.pad(x, ((0, 0), (0, 0), (0, 2), (0, 0))).reshape(
            N, rows_out, planes)
        sc_scale = jnp.ones((planes,), jnp.float32)
        sc_shift = jnp.zeros((planes,), jnp.float32)

    # ---- bn2 + shortcut-normalize + residual add + relu (fused, 3 outputs) --
    scale2, shift2 = _bn_scale_shift(s2, q2, count,
                                     params["bn2_gamma"], params["bn2_beta"])
    bn2f, sumf, outf = pallas_bn_add_relu(
        o2p.reshape(-1, planes), scale2, shift2,
        scp.reshape(-1, planes), sc_scale, sc_shift)
    output_list.append(rowpad_to_nchw(bn2f.reshape(N, rows_out, planes),
                                      N, Ho, Wo))
    input_list.append(rowpad_to_nchw(sumf.reshape(N, rows_out, planes),
                                     N, Ho, Wo))
    out_nchw = rowpad_to_nchw(outf.reshape(N, rows_out, planes), N, Ho, Wo)
    output_list.append(out_nchw)

    return out_nchw, input_list, output_list


# ---------------------------------------------------------------------------
# Pure-JAX reference (numerical sanity check only)
# ---------------------------------------------------------------------------
def _conv_ref(x_nchw, w, stride, padding):
    return jax.lax.conv_general_dilated(
        x_nchw, w, window_strides=(stride, stride), padding=padding,
        dimension_numbers=("NCHW", "OIHW", "NCHW"))


def _bn_ref(y, gamma, beta):
    mean = y.mean(axis=(0, 2, 3), keepdims=True)
    var = ((y - mean) ** 2).mean(axis=(0, 2, 3), keepdims=True)
    g = gamma.reshape(1, -1, 1, 1)
    b = beta.reshape(1, -1, 1, 1)
    return (y - mean) * jax.lax.rsqrt(var + EPS) * g + b


def reference_forward(x, params, stride):
    out = _conv_ref(x, params["conv1_w"], stride, ((1, 1), (1, 1)))
    out = jax.nn.relu(_bn_ref(out, params["bn1_gamma"], params["bn1_beta"]))
    out = _conv_ref(out, params["conv2_w"], 1, ((1, 1), (1, 1)))
    out = _bn_ref(out, params["bn2_gamma"], params["bn2_beta"])
    if "sc_conv_w" in params:
        sc = _conv_ref(x, params["sc_conv_w"], stride, ((0, 0), (0, 0)))
        sc = _bn_ref(sc, params["sc_bn_gamma"], params["sc_bn_beta"])
    else:
        sc = x
    return jax.nn.relu(out + sc)


# ---------------------------------------------------------------------------
if __name__ == "__main__":
    in_planes, planes, stride = 4, 8, 1      # channel change -> conv shortcut
    key = jax.random.PRNGKey(0)
    kp, kx = jax.random.split(key)
    params = init_params(kp, in_planes, planes, stride)
    x = jax.random.normal(kx, (2, in_planes, 16, 16), jnp.float32)

    fwd = jax.jit(functools.partial(basic_block_split_forward, stride=stride))
    out, input_list, output_list = fwd(x, params)
    jax.block_until_ready(out)
    for t in input_list + output_list:
        jax.block_until_ready(t)

    assert out.shape == (2, planes, 16, 16)
    assert len(output_list) == 6 and len(input_list) == 5

    # Loose check vs a plain-JAX fp32 reference (kernel path uses bf16 MXU
    # inputs with fp32 accumulation, so tolerances are generous).
    ref = reference_forward(x, params, stride)
    max_err = float(jnp.max(jnp.abs(out - ref)))
    assert max_err < 2e-1, f"max abs error {max_err}"

    print("KERNEL_OK")
</pallas_src>

<mosaic_0001>
module attributes {stable_mosaic.version = 11 : i64} {
  func.func @_conv_rowpad_kernel(%arg0: i32, %arg1: memref<1x342x4xbf16, #tpu.memory_space<vmem>>, %arg2: memref<9x4x8xbf16, #tpu.memory_space<vmem>>, %arg3: memref<1x288x1xf32, #tpu.memory_space<vmem>>, %arg4: memref<1x288x8xf32, #tpu.memory_space<vmem>>, %arg5: memref<1x1x8xf32, #tpu.memory_space<vmem>>, %arg6: memref<1x1x8xf32, #tpu.memory_space<vmem>>) attributes {dimension_semantics = [#tpu.dimension_semantics<parallel>], iteration_bounds = array<i64: 2>, scalar_prefetch = 0 : i64, scratch_operands = 0 : i64, tpu.core_type = #tpu.core_type<tc>, window_params = [{transform_indices = @transform_0, window_bounds = array<i64: 1, 342, 4>}, {pipeline_mode = #tpu.pipeline_mode<synchronous>, transform_indices = @transform_1, window_bounds = array<i64: 9, 4, 8>}, {pipeline_mode = #tpu.pipeline_mode<synchronous>, transform_indices = @transform_2, window_bounds = array<i64: 1, 288, 1>}, {transform_indices = @transform_3, window_bounds = array<i64: 1, 288, 8>}, {transform_indices = @transform_4, window_bounds = array<i64: 1, 1, 8>}, {transform_indices = @transform_5, window_bounds = array<i64: 1, 1, 8>}]} {
    %c0 = arith.constant 0 : index
    %c0_0 = arith.constant 0 : index
    %c0_1 = arith.constant 0 : index
    %0 = vector.load %arg1[%c0, %c0_0, %c0_1] : memref<1x342x4xbf16, #tpu.memory_space<vmem>>, vector<1x342x4xbf16>
    %1 = vector.shape_cast %0 : vector<1x342x4xbf16> to vector<342x4xbf16>
    %2 = arith.extf %1 : vector<342x4xbf16> to vector<342x4xf32>
    %3 = vector.extract_strided_slice %2 {offsets = [0, 0], sizes = [288, 4], strides = [1, 1]} : vector<342x4xf32> to vector<288x4xf32>
    %4 = arith.truncf %3 : vector<288x4xf32> to vector<288x4xbf16>
    %c0_2 = arith.constant 0 : index
    %c0_3 = arith.constant 0 : index
    %c0_4 = arith.constant 0 : index
    %5 = vector.load %arg2[%c0_2, %c0_3, %c0_4] : memref<9x4x8xbf16, #tpu.memory_space<vmem>>, vector<1x4x8xbf16>
    %6 = vector.shape_cast %5 : vector<1x4x8xbf16> to vector<4x8xbf16>
    %cst = arith.constant dense<0.000000e+00> : vector<288x8xf32>
    %7 = tpu.matmul %4, %6, %cst {dimension_numbers = #tpu.dot_dimension_numbers<[1], [0], [0], [1], [0, 0, 1, 1], [], []>} : vector<288x4xbf16>, vector<4x8xbf16>, vector<288x8xf32> -> vector<288x8xf32>
    %8 = vector.extract_strided_slice %2 {offsets = [1, 0], sizes = [288, 4], strides = [1, 1]} : vector<342x4xf32> to vector<288x4xf32>
    %9 = arith.truncf %8 : vector<288x4xf32> to vector<288x4xbf16>
    %c1 = arith.constant 1 : index
    %c0_5 = arith.constant 0 : index
    %c0_6 = arith.constant 0 : index
    %10 = vector.load %arg2[%c1, %c0_5, %c0_6] : memref<9x4x8xbf16, #tpu.memory_space<vmem>>, vector<1x4x8xbf16>
    %11 = vector.shape_cast %10 : vector<1x4x8xbf16> to vector<4x8xbf16>
    %cst_7 = arith.constant dense<0.000000e+00> : vector<288x8xf32>
    %12 = tpu.matmul %9, %11, %cst_7 {dimension_numbers = #tpu.dot_dimension_numbers<[1], [0], [0], [1], [0, 0, 1, 1], [], []>} : vector<288x4xbf16>, vector<4x8xbf16>, vector<288x8xf32> -> vector<288x8xf32>
    %13 = arith.addf %7, %12 : vector<288x8xf32>
    %14 = vector.extract_strided_slice %2 {offsets = [2, 0], sizes = [288, 4], strides = [1, 1]} : vector<342x4xf32> to vector<288x4xf32>
    %15 = arith.truncf %14 : vector<288x4xf32> to vector<288x4xbf16>
    %c2 = arith.constant 2 : index
    %c0_8 = arith.constant 0 : index
    %c0_9 = arith.constant 0 : index
    %16 = vector.load %arg2[%c2, %c0_8, %c0_9] : memref<9x4x8xbf16, #tpu.memory_space<vmem>>, vector<1x4x8xbf16>
    %17 = vector.shape_cast %16 : vector<1x4x8xbf16> to vector<4x8xbf16>
    %cst_10 = arith.constant dense<0.000000e+00> : vector<288x8xf32>
    %18 = tpu.matmul %15, %17, %cst_10 {dimension_numbers = #tpu.dot_dimension_numbers<[1], [0], [0], [1], [0, 0, 1, 1], [], []>} : vector<288x4xbf16>, vector<4x8xbf16>, vector<288x8xf32> -> vector<288x8xf32>
    %19 = arith.addf %13, %18 : vector<288x8xf32>
    %20 = vector.extract_strided_slice %2 {offsets = [18, 0], sizes = [288, 4], strides = [1, 1]} : vector<342x4xf32> to vector<288x4xf32>
    %21 = arith.truncf %20 : vector<288x4xf32> to vector<288x4xbf16>
    %c3 = arith.constant 3 : index
    %c0_11 = arith.constant 0 : index
    %c0_12 = arith.constant 0 : index
    %22 = vector.load %arg2[%c3, %c0_11, %c0_12] : memref<9x4x8xbf16, #tpu.memory_space<vmem>>, vector<1x4x8xbf16>
    %23 = vector.shape_cast %22 : vector<1x4x8xbf16> to vector<4x8xbf16>
    %cst_13 = arith.constant dense<0.000000e+00> : vector<288x8xf32>
    %24 = tpu.matmul %21, %23, %cst_13 {dimension_numbers = #tpu.dot_dimension_numbers<[1], [0], [0], [1], [0, 0, 1, 1], [], []>} : vector<288x4xbf16>, vector<4x8xbf16>, vector<288x8xf32> -> vector<288x8xf32>
    %25 = arith.addf %19, %24 : vector<288x8xf32>
    %26 = vector.extract_strided_slice %2 {offsets = [19, 0], sizes = [288, 4], strides = [1, 1]} : vector<342x4xf32> to vector<288x4xf32>
    %27 = arith.truncf %26 : vector<288x4xf32> to vector<288x4xbf16>
    %c4 = arith.constant 4 : index
    %c0_14 = arith.constant 0 : index
    %c0_15 = arith.constant 0 : index
    %28 = vector.load %arg2[%c4, %c0_14, %c0_15] : memref<9x4x8xbf16, #tpu.memory_space<vmem>>, vector<1x4x8xbf16>
    %29 = vector.shape_cast %28 : vector<1x4x8xbf16> to vector<4x8xbf16>
    %cst_16 = arith.constant dense<0.000000e+00> : vector<288x8xf32>
    %30 = tpu.matmul %27, %29, %cst_16 {dimension_numbers = #tpu.dot_dimension_numbers<[1], [0], [0], [1], [0, 0, 1, 1], [], []>} : vector<288x4xbf16>, vector<4x8xbf16>, vector<288x8xf32> -> vector<288x8xf32>
    %31 = arith.addf %25, %30 : vector<288x8xf32>
    %32 = vector.extract_strided_slice %2 {offsets = [20, 0], sizes = [288, 4], strides = [1, 1]} : vector<342x4xf32> to vector<288x4xf32>
    %33 = arith.truncf %32 : vector<288x4xf32> to vector<288x4xbf16>
    %c5 = arith.constant 5 : index
    %c0_17 = arith.constant 0 : index
    %c0_18 = arith.constant 0 : index
    %34 = vector.load %arg2[%c5, %c0_17, %c0_18] : memref<9x4x8xbf16, #tpu.memory_space<vmem>>, vector<1x4x8xbf16>
    %35 = vector.shape_cast %34 : vector<1x4x8xbf16> to vector<4x8xbf16>
    %cst_19 = arith.constant dense<0.000000e+00> : vector<288x8xf32>
    %36 = tpu.matmul %33, %35, %cst_19 {dimension_numbers = #tpu.dot_dimension_numbers<[1], [0], [0], [1], [0, 0, 1, 1], [], []>} : vector<288x4xbf16>, vector<4x8xbf16>, vector<288x8xf32> -> vector<288x8xf32>
    %37 = arith.addf %31, %36 : vector<288x8xf32>
    %38 = vector.extract_strided_slice %2 {offsets = [36, 0], sizes = [288, 4], strides = [1, 1]} : vector<342x4xf32> to vector<288x4xf32>
    %39 = arith.truncf %38 : vector<288x4xf32> to vector<288x4xbf16>
    %c6 = arith.constant 6 : index
    %c0_20 = arith.constant 0 : index
    %c0_21 = arith.constant 0 : index
    %40 = vector.load %arg2[%c6, %c0_20, %c0_21] : memref<9x4x8xbf16, #tpu.memory_space<vmem>>, vector<1x4x8xbf16>
    %41 = vector.shape_cast %40 : vector<1x4x8xbf16> to vector<4x8xbf16>
    %cst_22 = arith.constant dense<0.000000e+00> : vector<288x8xf32>
    %42 = tpu.matmul %39, %41, %cst_22 {dimension_numbers = #tpu.dot_dimension_numbers<[1], [0], [0], [1], [0, 0, 1, 1], [], []>} : vector<288x4xbf16>, vector<4x8xbf16>, vector<288x8xf32> -> vector<288x8xf32>
    %43 = arith.addf %37, %42 : vector<288x8xf32>
    %44 = vector.extract_strided_slice %2 {offsets = [37, 0], sizes = [288, 4], strides = [1, 1]} : vector<342x4xf32> to vector<288x4xf32>
    %45 = arith.truncf %44 : vector<288x4xf32> to vector<288x4xbf16>
    %c7 = arith.constant 7 : index
    %c0_23 = arith.constant 0 : index
    %c0_24 = arith.constant 0 : index
    %46 = vector.load %arg2[%c7, %c0_23, %c0_24] : memref<9x4x8xbf16, #tpu.memory_space<vmem>>, vector<1x4x8xbf16>
    %47 = vector.shape_cast %46 : vector<1x4x8xbf16> to vector<4x8xbf16>
    %cst_25 = arith.constant dense<0.000000e+00> : vector<288x8xf32>
    %48 = tpu.matmul %45, %47, %cst_25 {dimension_numbers = #tpu.dot_dimension_numbers<[1], [0], [0], [1], [0, 0, 1, 1], [], []>} : vector<288x4xbf16>, vector<4x8xbf16>, vector<288x8xf32> -> vector<288x8xf32>
    %49 = arith.addf %43, %48 : vector<288x8xf32>
    %50 = vector.extract_strided_slice %2 {offsets = [38, 0], sizes = [288, 4], strides = [1, 1]} : vector<342x4xf32> to vector<288x4xf32>
    %51 = arith.truncf %50 : vector<288x4xf32> to vector<288x4xbf16>
    %c8 = arith.constant 8 : index
    %c0_26 = arith.constant 0 : index
    %c0_27 = arith.constant 0 : index
    %52 = vector.load %arg2[%c8, %c0_26, %c0_27] : memref<9x4x8xbf16, #tpu.memory_space<vmem>>, vector<1x4x8xbf16>
    %53 = vector.shape_cast %52 : vector<1x4x8xbf16> to vector<4x8xbf16>
    %cst_28 = arith.constant dense<0.000000e+00> : vector<288x8xf32>
    %54 = tpu.matmul %51, %53, %cst_28 {dimension_numbers = #tpu.dot_dimension_numbers<[1], [0], [0], [1], [0, 0, 1, 1], [], []>} : vector<288x4xbf16>, vector<4x8xbf16>, vector<288x8xf32> -> vector<288x8xf32>
    %55 = arith.addf %49, %54 : vector<288x8xf32>
    %c0_29 = arith.constant 0 : index
    %c0_30 = arith.constant 0 : index
    %c0_31 = arith.constant 0 : index
    %56 = vector.load %arg4[%c0_29, %c0_30, %c0_31] : memref<1x288x8xf32, #tpu.memory_space<vmem>>, vector<1x288x8xf32>
    %57 = vector.shape_cast %56 : vector<1x288x8xf32> to vector<288x8xf32>
    %58 = vector.shape_cast %55 : vector<288x8xf32> to vector<1x288x8xf32>
    tpu.vector_store %arg4[%c0_29, %c0_30, %c0_31], %58 {strides = array<i32>} : memref<1x288x8xf32, #tpu.memory_space<vmem>>, vector<1x288x8xf32>,
    %c0_32 = arith.constant 0 : index
    %c0_33 = arith.constant 0 : index
    %c0_34 = arith.constant 0 : index
    %59 = vector.load %arg3[%c0_32, %c0_33, %c0_34] : memref<1x288x1xf32, #tpu.memory_space<vmem>>, vector<1x288x1xf32>
    %60 = vector.shape_cast %59 : vector<1x288x1xf32> to vector<288x1xf32>
    %61 = vector.broadcast %60 : vector<288x1xf32> to vector<288x8xf32>
    %62 = arith.mulf %55, %61 : vector<288x8xf32>
    %cst_35 = arith.constant dense<0.000000e+00> : vector<8xf32>
    %63 = vector.multi_reduction <add>, %62, %cst_35 [0] : vector<288x8xf32> to vector<8xf32>
    %64 = vector.shape_cast %63 : vector<8xf32> to vector<1x8xf32>
    %c0_36 = arith.constant 0 : index
    %c0_37 = arith.constant 0 : index
    %c0_38 = arith.constant 0 : index
    %65 = vector.load %arg5[%c0_36, %c0_37, %c0_38] : memref<1x1x8xf32, #tpu.memory_space<vmem>>, vector<1x1x8xf32>
    %66 = vector.shape_cast %65 : vector<1x1x8xf32> to vector<1x8xf32>
    %67 = vector.shape_cast %64 : vector<1x8xf32> to vector<1x1x8xf32>
    tpu.vector_store %arg5[%c0_36, %c0_37, %c0_38], %67 {strides = array<i32>} : memref<1x1x8xf32, #tpu.memory_space<vmem>>, vector<1x1x8xf32>,
    %68 = arith.mulf %62, %55 : vector<288x8xf32>
    %cst_39 = arith.constant dense<0.000000e+00> : vector<8xf32>
    %69 = vector.multi_reduction <add>, %68, %cst_39 [0] : vector<288x8xf32> to vector<8xf32>
    %70 = vector.shape_cast %69 : vector<8xf32> to vector<1x8xf32>
    %c0_40 = arith.constant 0 : index
    %c0_41 = arith.constant 0 : index
    %c0_42 = arith.constant 0 : index
    %71 = vector.load %arg6[%c0_40, %c0_41, %c0_42] : memref<1x1x8xf32, #tpu.memory_space<vmem>>, vector<1x1x8xf32>
    %72 = vector.shape_cast %71 : vector<1x1x8xf32> to vector<1x8xf32>
    %73 = vector.shape_cast %70 : vector<1x8xf32> to vector<1x1x8xf32>
    tpu.vector_store %arg6[%c0_40, %c0_41, %c0_42], %73 {strides = array<i32>} : memref<1x1x8xf32, #tpu.memory_space<vmem>>, vector<1x1x8xf32>,
    return
  }
  func.func @transform_0(%arg0: i32) -> (i32, i32, i32) {
    %c0_i32 = arith.constant 0 : i32
    %c0_i32_0 = arith.constant 0 : i32
    %c0_i32_1 = arith.constant 0 : i32
    return %arg0, %c0_i32, %c0_i32_0 : i32, i32, i32
  }
  func.func @transform_1(%arg0: i32) -> (i32, i32, i32) {
    %c0_i32 = arith.constant 0 : i32
    %c0_i32_0 = arith.constant 0 : i32
    %c0_i32_1 = arith.constant 0 : i32
    %c0_i32_2 = arith.constant 0 : i32
    return %c0_i32, %c0_i32_0, %c0_i32_1 : i32, i32, i32
  }
  func.func @transform_2(%arg0: i32) -> (i32, i32, i32) {
    %c0_i32 = arith.constant 0 : i32
    %c0_i32_0 = arith.constant 0 : i32
    %c0_i32_1 = arith.constant 0 : i32
    %c0_i32_2 = arith.constant 0 : i32
    return %c0_i32, %c0_i32_0, %c0_i32_1 : i32, i32, i32
  }
  func.func @transform_3(%arg0: i32) -> (i32, i32, i32) {
    %c0_i32 = arith.constant 0 : i32
    %c0_i32_0 = arith.constant 0 : i32
    %c0_i32_1 = arith.constant 0 : i32
    return %arg0, %c0_i32, %c0_i32_0 : i32, i32, i32
  }
  func.func @transform_4(%arg0: i32) -> (i32, i32, i32) {
    %c0_i32 = arith.constant 0 : i32
    %c0_i32_0 = arith.constant 0 : i32
    %c0_i32_1 = arith.constant 0 : i32
    return %arg0, %c0_i32, %c0_i32_0 : i32, i32, i32
  }
  func.func @transform_5(%arg0: i32) -> (i32, i32, i32) {
    %c0_i32 = arith.constant 0 : i32
    %c0_i32_0 = arith.constant 0 : i32
    %c0_i32_1 = arith.constant 0 : i32
    return %arg0, %c0_i32, %c0_i32_0 : i32, i32, i32
  }
}

module attributes {stable_mosaic.version = 11 : i64} {
  func.func @_bn_relu_kernel(%arg0: i32, %arg1: memref<24x128xf32, #tpu.memory_space<vmem>>, %arg2: memref<1x128xf32, #tpu.memory_space<vmem>>, %arg3: memref<1x128xf32, #tpu.memory_space<vmem>>, %arg4: memref<24x128xf32, #tpu.memory_space<vmem>>, %arg5: memref<24x128xbf16, #tpu.memory_space<vmem>>) attributes {dimension_semantics = [#tpu.dimension_semantics<parallel>], iteration_bounds = array<i64: 2>, scalar_prefetch = 0 : i64, scratch_operands = 0 : i64, tpu.core_type = #tpu.core_type<tc>, window_params = [{transform_indices = @transform_0, window_bounds = array<i64: 24, 128>}, {pipeline_mode = #tpu.pipeline_mode<synchronous>, transform_indices = @transform_1, window_bounds = array<i64: 1, 128>}, {pipeline_mode = #tpu.pipeline_mode<synchronous>, transform_indices = @transform_2, window_bounds = array<i64: 1, 128>}, {transform_indices = @transform_3, window_bounds = array<i64: 24, 128>}, {transform_indices = @transform_4, window_bounds = array<i64: 24, 128>}]} {
    %c0 = arith.constant 0 : index
    %c0_0 = arith.constant 0 : index
    %0 = vector.load %arg1[%c0, %c0_0] : memref<24x128xf32, #tpu.memory_space<vmem>>, vector<24x128xf32>
    %c0_1 = arith.constant 0 : index
    %c0_2 = arith.constant 0 : index
    %1 = vector.load %arg2[%c0_1, %c0_2] : memref<1x128xf32, #tpu.memory_space<vmem>>, vector<1x128xf32>
    %2 = vector.broadcast %1 : vector<1x128xf32> to vector<24x128xf32>
    %3 = arith.mulf %0, %2 : vector<24x128xf32>
    %c0_3 = arith.constant 0 : index
    %c0_4 = arith.constant 0 : index
    %4 = vector.load %arg3[%c0_3, %c0_4] : memref<1x128xf32, #tpu.memory_space<vmem>>, vector<1x128xf32>
    %5 = vector.broadcast %4 : vector<1x128xf32> to vector<24x128xf32>
    %6 = arith.addf %3, %5 : vector<24x128xf32>
    %c0_5 = arith.constant 0 : index
    %c0_6 = arith.constant 0 : index
    %7 = vector.load %arg4[%c0_5, %c0_6] : memref<24x128xf32, #tpu.memory_space<vmem>>, vector<24x128xf32>
    tpu.vector_store %arg4[%c0_5, %c0_6], %6 {strides = array<i32>} : memref<24x128xf32, #tpu.memory_space<vmem>>, vector<24x128xf32>,
    %cst = arith.constant 0.000000e+00 : f32
    %8 = vector.broadcast %cst : f32 to vector<24x128xf32>
    %9 = arith.maximumf %6, %8 : vector<24x128xf32>
    %10 = arith.truncf %9 : vector<24x128xf32> to vector<24x128xbf16>
    %c0_7 = arith.constant 0 : index
    %c0_8 = arith.constant 0 : index
    %11 = vector.load %arg5[%c0_7, %c0_8] : memref<24x128xbf16, #tpu.memory_space<vmem>>, vector<24x128xbf16>
    tpu.vector_store %arg5[%c0_7, %c0_8], %10 {strides = array<i32>} : memref<24x128xbf16, #tpu.memory_space<vmem>>, vector<24x128xbf16>,
    return
  }
  func.func @transform_0(%arg0: i32) -> (i32, i32) {
    %c0_i32 = arith.constant 0 : i32
    %c0_i32_0 = arith.constant 0 : i32
    return %arg0, %c0_i32 : i32, i32
  }
  func.func @transform_1(%arg0: i32) -> (i32, i32) {
    %c0_i32 = arith.constant 0 : i32
    %c0_i32_0 = arith.constant 0 : i32
    %c0_i32_1 = arith.constant 0 : i32
    return %c0_i32, %c0_i32_0 : i32, i32
  }
  func.func @transform_2(%arg0: i32) -> (i32, i32) {
    %c0_i32 = arith.constant 0 : i32
    %c0_i32_0 = arith.constant 0 : i32
    %c0_i32_1 = arith.constant 0 : i32
    return %c0_i32, %c0_i32_0 : i32, i32
  }
  func.func @transform_3(%arg0: i32) -> (i32, i32) {
    %c0_i32 = arith.constant 0 : i32
    %c0_i32_0 = arith.constant 0 : i32
    return %arg0, %c0_i32 : i32, i32
  }
  func.func @transform_4(%arg0: i32) -> (i32, i32) {
    %c0_i32 = arith.constant 0 : i32
    %c0_i32_0 = arith.constant 0 : i32
    return %arg0, %c0_i32 : i32, i32
  }
}

module attributes {stable_mosaic.version = 11 : i64} {
  func.func @_conv_rowpad_kernel(%arg0: i32, %arg1: memref<1x342x8xbf16, #tpu.memory_space<vmem>>, %arg2: memref<9x8x8xbf16, #tpu.memory_space<vmem>>, %arg3: memref<1x288x1xf32, #tpu.memory_space<vmem>>, %arg4: memref<1x288x8xf32, #tpu.memory_space<vmem>>, %arg5: memref<1x1x8xf32, #tpu.memory_space<vmem>>, %arg6: memref<1x1x8xf32, #tpu.memory_space<vmem>>) attributes {dimension_semantics = [#tpu.dimension_semantics<parallel>], iteration_bounds = array<i64: 2>, scalar_prefetch = 0 : i64, scratch_operands = 0 : i64, tpu.core_type = #tpu.core_type<tc>, window_params = [{transform_indices = @transform_0, window_bounds = array<i64: 1, 342, 8>}, {pipeline_mode = #tpu.pipeline_mode<synchronous>, transform_indices = @transform_1, window_bounds = array<i64: 9, 8, 8>}, {pipeline_mode = #tpu.pipeline_mode<synchronous>, transform_indices = @transform_2, window_bounds = array<i64: 1, 288, 1>}, {transform_indices = @transform_3, window_bounds = array<i64: 1, 288, 8>}, {transform_indices = @transform_4, window_bounds = array<i64: 1, 1, 8>}, {transform_indices = @transform_5, window_bounds = array<i64: 1, 1, 8>}]} {
    %c0 = arith.constant 0 : index
    %c0_0 = arith.constant 0 : index
    %c0_1 = arith.constant 0 : index
    %0 = vector.load %arg1[%c0, %c0_0, %c0_1] : memref<1x342x8xbf16, #tpu.memory_space<vmem>>, vector<1x342x8xbf16>
    %1 = vector.shape_cast %0 : vector<1x342x8xbf16> to vector<342x8xbf16>
    %2 = arith.extf %1 : vector<342x8xbf16> to vector<342x8xf32>
    %3 = vector.extract_strided_slice %2 {offsets = [0, 0], sizes = [288, 8], strides = [1, 1]} : vector<342x8xf32> to vector<288x8xf32>
    %4 = arith.truncf %3 : vector<288x8xf32> to vector<288x8xbf16>
    %c0_2 = arith.constant 0 : index
    %c0_3 = arith.constant 0 : index
    %c0_4 = arith.constant 0 : index
    %5 = vector.load %arg2[%c0_2, %c0_3, %c0_4] : memref<9x8x8xbf16, #tpu.memory_space<vmem>>, vector<1x8x8xbf16>
    %6 = vector.shape_cast %5 : vector<1x8x8xbf16> to vector<8x8xbf16>
    %cst = arith.constant dense<0.000000e+00> : vector<288x8xf32>
    %7 = tpu.matmul %4, %6, %cst {dimension_numbers = #tpu.dot_dimension_numbers<[1], [0], [0], [1], [0, 0, 1, 1], [], []>} : vector<288x8xbf16>, vector<8x8xbf16>, vector<288x8xf32> -> vector<288x8xf32>
    %8 = vector.extract_strided_slice %2 {offsets = [1, 0], sizes = [288, 8], strides = [1, 1]} : vector<342x8xf32> to vector<288x8xf32>
    %9 = arith.truncf %8 : vector<288x8xf32> to vector<288x8xbf16>
    %c1 = arith.constant 1 : index
    %c0_5 = arith.constant 0 : index
    %c0_6 = arith.constant 0 : index
    %10 = vector.load %arg2[%c1, %c0_5, %c0_6] : memref<9x8x8xbf16, #tpu.memory_space<vmem>>, vector<1x8x8xbf16>
    %11 = vector.shape_cast %10 : vector<1x8x8xbf16> to vector<8x8xbf16>
    %cst_7 = arith.constant dense<0.000000e+00> : vector<288x8xf32>
    %12 = tpu.matmul %9, %11, %cst_7 {dimension_numbers = #tpu.dot_dimension_numbers<[1], [0], [0], [1], [0, 0, 1, 1], [], []>} : vector<288x8xbf16>, vector<8x8xbf16>, vector<288x8xf32> -> vector<288x8xf32>
    %13 = arith.addf %7, %12 : vector<288x8xf32>
    %14 = vector.extract_strided_slice %2 {offsets = [2, 0], sizes = [288, 8], strides = [1, 1]} : vector<342x8xf32> to vector<288x8xf32>
    %15 = arith.truncf %14 : vector<288x8xf32> to vector<288x8xbf16>
    %c2 = arith.constant 2 : index
    %c0_8 = arith.constant 0 : index
    %c0_9 = arith.constant 0 : index
    %16 = vector.load %arg2[%c2, %c0_8, %c0_9] : memref<9x8x8xbf16, #tpu.memory_space<vmem>>, vector<1x8x8xbf16>
    %17 = vector.shape_cast %16 : vector<1x8x8xbf16> to vector<8x8xbf16>
    %cst_10 = arith.constant dense<0.000000e+00> : vector<288x8xf32>
    %18 = tpu.matmul %15, %17, %cst_10 {dimension_numbers = #tpu.dot_dimension_numbers<[1], [0], [0], [1], [0, 0, 1, 1], [], []>} : vector<288x8xbf16>, vector<8x8xbf16>, vector<288x8xf32> -> vector<288x8xf32>
    %19 = arith.addf %13, %18 : vector<288x8xf32>
    %20 = vector.extract_strided_slice %2 {offsets = [18, 0], sizes = [288, 8], strides = [1, 1]} : vector<342x8xf32> to vector<288x8xf32>
    %21 = arith.truncf %20 : vector<288x8xf32> to vector<288x8xbf16>
    %c3 = arith.constant 3 : index
    %c0_11 = arith.constant 0 : index
    %c0_12 = arith.constant 0 : index
    %22 = vector.load %arg2[%c3, %c0_11, %c0_12] : memref<9x8x8xbf16, #tpu.memory_space<vmem>>, vector<1x8x8xbf16>
    %23 = vector.shape_cast %22 : vector<1x8x8xbf16> to vector<8x8xbf16>
    %cst_13 = arith.constant dense<0.000000e+00> : vector<288x8xf32>
    %24 = tpu.matmul %21, %23, %cst_13 {dimension_numbers = #tpu.dot_dimension_numbers<[1], [0], [0], [1], [0, 0, 1, 1], [], []>} : vector<288x8xbf16>, vector<8x8xbf16>, vector<288x8xf32> -> vector<288x8xf32>
    %25 = arith.addf %19, %24 : vector<288x8xf32>
    %26 = vector.extract_strided_slice %2 {offsets = [19, 0], sizes = [288, 8], strides = [1, 1]} : vector<342x8xf32> to vector<288x8xf32>
    %27 = arith.truncf %26 : vector<288x8xf32> to vector<288x8xbf16>
    %c4 = arith.constant 4 : index
    %c0_14 = arith.constant 0 : index
    %c0_15 = arith.constant 0 : index
    %28 = vector.load %arg2[%c4, %c0_14, %c0_15] : memref<9x8x8xbf16, #tpu.memory_space<vmem>>, vector<1x8x8xbf16>
    %29 = vector.shape_cast %28 : vector<1x8x8xbf16> to vector<8x8xbf16>
    %cst_16 = arith.constant dense<0.000000e+00> : vector<288x8xf32>
    %30 = tpu.matmul %27, %29, %cst_16 {dimension_numbers = #tpu.dot_dimension_numbers<[1], [0], [0], [1], [0, 0, 1, 1], [], []>} : vector<288x8xbf16>, vector<8x8xbf16>, vector<288x8xf32> -> vector<288x8xf32>
    %31 = arith.addf %25, %30 : vector<288x8xf32>
    %32 = vector.extract_strided_slice %2 {offsets = [20, 0], sizes = [288, 8], strides = [1, 1]} : vector<342x8xf32> to vector<288x8xf32>
    %33 = arith.truncf %32 : vector<288x8xf32> to vector<288x8xbf16>
    %c5 = arith.constant 5 : index
    %c0_17 = arith.constant 0 : index
    %c0_18 = arith.constant 0 : index
    %34 = vector.load %arg2[%c5, %c0_17, %c0_18] : memref<9x8x8xbf16, #tpu.memory_space<vmem>>, vector<1x8x8xbf16>
    %35 = vector.shape_cast %34 : vector<1x8x8xbf16> to vector<8x8xbf16>
    %cst_19 = arith.constant dense<0.000000e+00> : vector<288x8xf32>
    %36 = tpu.matmul %33, %35, %cst_19 {dimension_numbers = #tpu.dot_dimension_numbers<[1], [0], [0], [1], [0, 0, 1, 1], [], []>} : vector<288x8xbf16>, vector<8x8xbf16>, vector<288x8xf32> -> vector<288x8xf32>
    %37 = arith.addf %31, %36 : vector<288x8xf32>
    %38 = vector.extract_strided_slice %2 {offsets = [36, 0], sizes = [288, 8], strides = [1, 1]} : vector<342x8xf32> to vector<288x8xf32>
    %39 = arith.truncf %38 : vector<288x8xf32> to vector<288x8xbf16>
    %c6 = arith.constant 6 : index
    %c0_20 = arith.constant 0 : index
    %c0_21 = arith.constant 0 : index
    %40 = vector.load %arg2[%c6, %c0_20, %c0_21] : memref<9x8x8xbf16, #tpu.memory_space<vmem>>, vector<1x8x8xbf16>
    %41 = vector.shape_cast %40 : vector<1x8x8xbf16> to vector<8x8xbf16>
    %cst_22 = arith.constant dense<0.000000e+00> : vector<288x8xf32>
    %42 = tpu.matmul %39, %41, %cst_22 {dimension_numbers = #tpu.dot_dimension_numbers<[1], [0], [0], [1], [0, 0, 1, 1], [], []>} : vector<288x8xbf16>, vector<8x8xbf16>, vector<288x8xf32> -> vector<288x8xf32>
    %43 = arith.addf %37, %42 : vector<288x8xf32>
    %44 = vector.extract_strided_slice %2 {offsets = [37, 0], sizes = [288, 8], strides = [1, 1]} : vector<342x8xf32> to vector<288x8xf32>
    %45 = arith.truncf %44 : vector<288x8xf32> to vector<288x8xbf16>
    %c7 = arith.constant 7 : index
    %c0_23 = arith.constant 0 : index
    %c0_24 = arith.constant 0 : index
    %46 = vector.load %arg2[%c7, %c0_23, %c0_24] : memref<9x8x8xbf16, #tpu.memory_space<vmem>>, vector<1x8x8xbf16>
    %47 = vector.shape_cast %46 : vector<1x8x8xbf16> to vector<8x8xbf16>
    %cst_25 = arith.constant dense<0.000000e+00> : vector<288x8xf32>
    %48 = tpu.matmul %45, %47, %cst_25 {dimension_numbers = #tpu.dot_dimension_numbers<[1], [0], [0], [1], [0, 0, 1, 1], [], []>} : vector<288x8xbf16>, vector<8x8xbf16>, vector<288x8xf32> -> vector<288x8xf32>
    %49 = arith.addf %43, %48 : vector<288x8xf32>
    %50 = vector.extract_strided_slice %2 {offsets = [38, 0], sizes = [288, 8], strides = [1, 1]} : vector<342x8xf32> to vector<288x8xf32>
    %51 = arith.truncf %50 : vector<288x8xf32> to vector<288x8xbf16>
    %c8 = arith.constant 8 : index
    %c0_26 = arith.constant 0 : index
    %c0_27 = arith.constant 0 : index
    %52 = vector.load %arg2[%c8, %c0_26, %c0_27] : memref<9x8x8xbf16, #tpu.memory_space<vmem>>, vector<1x8x8xbf16>
    %53 = vector.shape_cast %52 : vector<1x8x8xbf16> to vector<8x8xbf16>
    %cst_28 = arith.constant dense<0.000000e+00> : vector<288x8xf32>
    %54 = tpu.matmul %51, %53, %cst_28 {dimension_numbers = #tpu.dot_dimension_numbers<[1], [0], [0], [1], [0, 0, 1, 1], [], []>} : vector<288x8xbf16>, vector<8x8xbf16>, vector<288x8xf32> -> vector<288x8xf32>
    %55 = arith.addf %49, %54 : vector<288x8xf32>
    %c0_29 = arith.constant 0 : index
    %c0_30 = arith.constant 0 : index
    %c0_31 = arith.constant 0 : index
    %56 = vector.load %arg4[%c0_29, %c0_30, %c0_31] : memref<1x288x8xf32, #tpu.memory_space<vmem>>, vector<1x288x8xf32>
    %57 = vector.shape_cast %56 : vector<1x288x8xf32> to vector<288x8xf32>
    %58 = vector.shape_cast %55 : vector<288x8xf32> to vector<1x288x8xf32>
    tpu.vector_store %arg4[%c0_29, %c0_30, %c0_31], %58 {strides = array<i32>} : memref<1x288x8xf32, #tpu.memory_space<vmem>>, vector<1x288x8xf32>,
    %c0_32 = arith.constant 0 : index
    %c0_33 = arith.constant 0 : index
    %c0_34 = arith.constant 0 : index
    %59 = vector.load %arg3[%c0_32, %c0_33, %c0_34] : memref<1x288x1xf32, #tpu.memory_space<vmem>>, vector<1x288x1xf32>
    %60 = vector.shape_cast %59 : vector<1x288x1xf32> to vector<288x1xf32>
    %61 = vector.broadcast %60 : vector<288x1xf32> to vector<288x8xf32>
    %62 = arith.mulf %55, %61 : vector<288x8xf32>
    %cst_35 = arith.constant dense<0.000000e+00> : vector<8xf32>
    %63 = vector.multi_reduction <add>, %62, %cst_35 [0] : vector<288x8xf32> to vector<8xf32>
    %64 = vector.shape_cast %63 : vector<8xf32> to vector<1x8xf32>
    %c0_36 = arith.constant 0 : index
    %c0_37 = arith.constant 0 : index
    %c0_38 = arith.constant 0 : index
    %65 = vector.load %arg5[%c0_36, %c0_37, %c0_38] : memref<1x1x8xf32, #tpu.memory_space<vmem>>, vector<1x1x8xf32>
    %66 = vector.shape_cast %65 : vector<1x1x8xf32> to vector<1x8xf32>
    %67 = vector.shape_cast %64 : vector<1x8xf32> to vector<1x1x8xf32>
    tpu.vector_store %arg5[%c0_36, %c0_37, %c0_38], %67 {strides = array<i32>} : memref<1x1x8xf32, #tpu.memory_space<vmem>>, vector<1x1x8xf32>,
    %68 = arith.mulf %62, %55 : vector<288x8xf32>
    %cst_39 = arith.constant dense<0.000000e+00> : vector<8xf32>
    %69 = vector.multi_reduction <add>, %68, %cst_39 [0] : vector<288x8xf32> to vector<8xf32>
    %70 = vector.shape_cast %69 : vector<8xf32> to vector<1x8xf32>
    %c0_40 = arith.constant 0 : index
    %c0_41 = arith.constant 0 : index
    %c0_42 = arith.constant 0 : index
    %71 = vector.load %arg6[%c0_40, %c0_41, %c0_42] : memref<1x1x8xf32, #tpu.memory_space<vmem>>, vector<1x1x8xf32>
    %72 = vector.shape_cast %71 : vector<1x1x8xf32> to vector<1x8xf32>
    %73 = vector.shape_cast %70 : vector<1x8xf32> to vector<1x1x8xf32>
    tpu.vector_store %arg6[%c0_40, %c0_41, %c0_42], %73 {strides = array<i32>} : memref<1x1x8xf32, #tpu.memory_space<vmem>>, vector<1x1x8xf32>,
    return
  }
  func.func @transform_0(%arg0: i32) -> (i32, i32, i32) {
    %c0_i32 = arith.constant 0 : i32
    %c0_i32_0 = arith.constant 0 : i32
    %c0_i32_1 = arith.constant 0 : i32
    return %arg0, %c0_i32, %c0_i32_0 : i32, i32, i32
  }
  func.func @transform_1(%arg0: i32) -> (i32, i32, i32) {
    %c0_i32 = arith.constant 0 : i32
    %c0_i32_0 = arith.constant 0 : i32
    %c0_i32_1 = arith.constant 0 : i32
    %c0_i32_2 = arith.constant 0 : i32
    return %c0_i32, %c0_i32_0, %c0_i32_1 : i32, i32, i32
  }
  func.func @transform_2(%arg0: i32) -> (i32, i32, i32) {
    %c0_i32 = arith.constant 0 : i32
    %c0_i32_0 = arith.constant 0 : i32
    %c0_i32_1 = arith.constant 0 : i32
    %c0_i32_2 = arith.constant 0 : i32
    return %c0_i32, %c0_i32_0, %c0_i32_1 : i32, i32, i32
  }
  func.func @transform_3(%arg0: i32) -> (i32, i32, i32) {
    %c0_i32 = arith.constant 0 : i32
    %c0_i32_0 = arith.constant 0 : i32
    %c0_i32_1 = arith.constant 0 : i32
    return %arg0, %c0_i32, %c0_i32_0 : i32, i32, i32
  }
  func.func @transform_4(%arg0: i32) -> (i32, i32, i32) {
    %c0_i32 = arith.constant 0 : i32
    %c0_i32_0 = arith.constant 0 : i32
    %c0_i32_1 = arith.constant 0 : i32
    return %arg0, %c0_i32, %c0_i32_0 : i32, i32, i32
  }
  func.func @transform_5(%arg0: i32) -> (i32, i32, i32) {
    %c0_i32 = arith.constant 0 : i32
    %c0_i32_0 = arith.constant 0 : i32
    %c0_i32_1 = arith.constant 0 : i32
    return %arg0, %c0_i32, %c0_i32_0 : i32, i32, i32
  }
}

module attributes {stable_mosaic.version = 11 : i64} {
  func.func @_bn_add_relu_kernel(%arg0: i32, %arg1: memref<24x128xf32, #tpu.memory_space<vmem>>, %arg2: memref<1x128xf32, #tpu.memory_space<vmem>>, %arg3: memref<1x128xf32, #tpu.memory_space<vmem>>, %arg4: memref<24x128xf32, #tpu.memory_space<vmem>>, %arg5: memref<1x128xf32, #tpu.memory_space<vmem>>, %arg6: memref<1x128xf32, #tpu.memory_space<vmem>>, %arg7: memref<24x128xf32, #tpu.memory_space<vmem>>, %arg8: memref<24x128xf32, #tpu.memory_space<vmem>>, %arg9: memref<24x128xf32, #tpu.memory_space<vmem>>) attributes {dimension_semantics = [#tpu.dimension_semantics<parallel>], iteration_bounds = array<i64: 2>, scalar_prefetch = 0 : i64, scratch_operands = 0 : i64, tpu.core_type = #tpu.core_type<tc>, window_params = [{transform_indices = @transform_0, window_bounds = array<i64: 24, 128>}, {pipeline_mode = #tpu.pipeline_mode<synchronous>, transform_indices = @transform_1, window_bounds = array<i64: 1, 128>}, {pipeline_mode = #tpu.pipeline_mode<synchronous>, transform_indices = @transform_2, window_bounds = array<i64: 1, 128>}, {transform_indices = @transform_3, window_bounds = array<i64: 24, 128>}, {pipeline_mode = #tpu.pipeline_mode<synchronous>, transform_indices = @transform_4, window_bounds = array<i64: 1, 128>}, {pipeline_mode = #tpu.pipeline_mode<synchronous>, transform_indices = @transform_5, window_bounds = array<i64: 1, 128>}, {transform_indices = @transform_6, window_bounds = array<i64: 24, 128>}, {transform_indices = @transform_7, window_bounds = array<i64: 24, 128>}, {transform_indices = @transform_8, window_bounds = array<i64: 24, 128>}]} {
    %c0 = arith.constant 0 : index
    %c0_0 = arith.constant 0 : index
    %0 = vector.load %arg1[%c0, %c0_0] : memref<24x128xf32, #tpu.memory_space<vmem>>, vector<24x128xf32>
    %c0_1 = arith.constant 0 : index
    %c0_2 = arith.constant 0 : index
    %1 = vector.load %arg2[%c0_1, %c0_2] : memref<1x128xf32, #tpu.memory_space<vmem>>, vector<1x128xf32>
    %2 = vector.broadcast %1 : vector<1x128xf32> to vector<24x128xf32>
    %3 = arith.mulf %0, %2 : vector<24x128xf32>
    %c0_3 = arith.constant 0 : index
    %c0_4 = arith.constant 0 : index
    %4 = vector.load %arg3[%c0_3, %c0_4] : memref<1x128xf32, #tpu.memory_space<vmem>>, vector<1x128xf32>
    %5 = vector.broadcast %4 : vector<1x128xf32> to vector<24x128xf32>
    %6 = arith.addf %3, %5 : vector<24x128xf32>
    %c0_5 = arith.constant 0 : index
    %c0_6 = arith.constant 0 : index
    %7 = vector.load %arg4[%c0_5, %c0_6] : memref<24x128xf32, #tpu.memory_space<vmem>>, vector<24x128xf32>
    %c0_7 = arith.constant 0 : index
    %c0_8 = arith.constant 0 : index
    %8 = vector.load %arg5[%c0_7, %c0_8] : memref<1x128xf32, #tpu.memory_space<vmem>>, vector<1x128xf32>
    %9 = vector.broadcast %8 : vector<1x128xf32> to vector<24x128xf32>
    %10 = arith.mulf %7, %9 : vector<24x128xf32>
    %c0_9 = arith.constant 0 : index
    %c0_10 = arith.constant 0 : index
    %11 = vector.load %arg6[%c0_9, %c0_10] : memref<1x128xf32, #tpu.memory_space<vmem>>, vector<1x128xf32>
    %12 = vector.broadcast %11 : vector<1x128xf32> to vector<24x128xf32>
    %13 = arith.addf %10, %12 : vector<24x128xf32>
    %14 = arith.addf %6, %13 : vector<24x128xf32>
    %c0_11 = arith.constant 0 : index
    %c0_12 = arith.constant 0 : index
    %15 = vector.load %arg7[%c0_11, %c0_12] : memref<24x128xf32, #tpu.memory_space<vmem>>, vector<24x128xf32>
    tpu.vector_store %arg7[%c0_11, %c0_12], %6 {strides = array<i32>} : memref<24x128xf32, #tpu.memory_space<vmem>>, vector<24x128xf32>,
    %c0_13 = arith.constant 0 : index
    %c0_14 = arith.constant 0 : index
    %16 = vector.load %arg8[%c0_13, %c0_14] : memref<24x128xf32, #tpu.memory_space<vmem>>, vector<24x128xf32>
    tpu.vector_store %arg8[%c0_13, %c0_14], %14 {strides = array<i32>} : memref<24x128xf32, #tpu.memory_space<vmem>>, vector<24x128xf32>,
    %cst = arith.constant 0.000000e+00 : f32
    %17 = vector.broadcast %cst : f32 to vector<24x128xf32>
    %18 = arith.maximumf %14, %17 : vector<24x128xf32>
    %c0_15 = arith.constant 0 : index
    %c0_16 = arith.constant 0 : index
    %19 = vector.load %arg9[%c0_15, %c0_16] : memref<24x128xf32, #tpu.memory_space<vmem>>, vector<24x128xf32>
    tpu.vector_store %arg9[%c0_15, %c0_16], %18 {strides = array<i32>} : memref<24x128xf32, #tpu.memory_space<vmem>>, vector<24x128xf32>,
    return
  }
  func.func @transform_0(%arg0: i32) -> (i32, i32) {
    %c0_i32 = arith.constant 0 : i32
    %c0_i32_0 = arith.constant 0 : i32
    return %arg0, %c0_i32 : i32, i32
  }
  func.func @transform_1(%arg0: i32) -> (i32, i32) {
    %c0_i32 = arith.constant 0 : i32
    %c0_i32_0 = arith.constant 0 : i32
    %c0_i32_1 = arith.constant 0 : i32
    return %c0_i32, %c0_i32_0 : i32, i32
  }
  func.func @transform_2(%arg0: i32) -> (i32, i32) {
    %c0_i32 = arith.constant 0 : i32
    %c0_i32_0 = arith.constant 0 : i32
    %c0_i32_1 = arith.constant 0 : i32
    return %c0_i32, %c0_i32_0 : i32, i32
  }
  func.func @transform_3(%arg0: i32) -> (i32, i32) {
    %c0_i32 = arith.constant 0 : i32
    %c0_i32_0 = arith.constant 0 : i32
    return %arg0, %c0_i32 : i32, i32
  }
  func.func @transform_4(%arg0: i32) -> (i32, i32) {
    %c0_i32 = arith.constant 0 : i32
    %c0_i32_0 = arith.constant 0 : i32
    %c0_i32_1 = arith.constant 0 : i32
    return %c0_i32, %c0_i32_0 : i32, i32
  }
  func.func @transform_5(%arg0: i32) -> (i32, i32) {
    %c0_i32 = arith.constant 0 : i32
    %c0_i32_0 = arith.constant 0 : i32
    %c0_i32_1 = arith.constant 0 : i32
    return %c0_i32, %c0_i32_0 : i32, i32
  }
  func.func @transform_6(%arg0: i32) -> (i32, i32) {
    %c0_i32 = arith.constant 0 : i32
    %c0_i32_0 = arith.constant 0 : i32
    return %arg0, %c0_i32 : i32, i32
  }
  func.func @transform_7(%arg0: i32) -> (i32, i32) {
    %c0_i32 = arith.constant 0 : i32
    %c0_i32_0 = arith.constant 0 : i32
    return %arg0, %c0_i32 : i32, i32
  }
  func.func @transform_8(%arg0: i32) -> (i32, i32) {
    %c0_i32 = arith.constant 0 : i32
    %c0_i32_0 = arith.constant 0 : i32
    return %arg0, %c0_i32 : i32, i32
  }
}

module attributes {stable_mosaic.version = 11 : i64} {
  func.func @_conv_rowpad_kernel(%arg0: i32, %arg1: memref<1x342x4xbf16, #tpu.memory_space<vmem>>, %arg2: memref<1x4x8xbf16, #tpu.memory_space<vmem>>, %arg3: memref<1x288x1xf32, #tpu.memory_space<vmem>>, %arg4: memref<1x288x8xf32, #tpu.memory_space<vmem>>, %arg5: memref<1x1x8xf32, #tpu.memory_space<vmem>>, %arg6: memref<1x1x8xf32, #tpu.memory_space<vmem>>) attributes {dimension_semantics = [#tpu.dimension_semantics<parallel>], iteration_bounds = array<i64: 2>, scalar_prefetch = 0 : i64, scratch_operands = 0 : i64, tpu.core_type = #tpu.core_type<tc>, window_params = [{transform_indices = @transform_0, window_bounds = array<i64: 1, 342, 4>}, {pipeline_mode = #tpu.pipeline_mode<synchronous>, transform_indices = @transform_1, window_bounds = array<i64: 1, 4, 8>}, {pipeline_mode = #tpu.pipeline_mode<synchronous>, transform_indices = @transform_2, window_bounds = array<i64: 1, 288, 1>}, {transform_indices = @transform_3, window_bounds = array<i64: 1, 288, 8>}, {transform_indices = @transform_4, window_bounds = array<i64: 1, 1, 8>}, {transform_indices = @transform_5, window_bounds = array<i64: 1, 1, 8>}]} {
    %c0 = arith.constant 0 : index
    %c0_0 = arith.constant 0 : index
    %c0_1 = arith.constant 0 : index
    %0 = vector.load %arg1[%c0, %c0_0, %c0_1] : memref<1x342x4xbf16, #tpu.memory_space<vmem>>, vector<1x342x4xbf16>
    %1 = vector.shape_cast %0 : vector<1x342x4xbf16> to vector<342x4xbf16>
    %2 = arith.extf %1 : vector<342x4xbf16> to vector<342x4xf32>
    %3 = vector.extract_strided_slice %2 {offsets = [19, 0], sizes = [288, 4], strides = [1, 1]} : vector<342x4xf32> to vector<288x4xf32>
    %4 = arith.truncf %3 : vector<288x4xf32> to vector<288x4xbf16>
    %c0_2 = arith.constant 0 : index
    %c0_3 = arith.constant 0 : index
    %c0_4 = arith.constant 0 : index
    %5 = vector.load %arg2[%c0_2, %c0_3, %c0_4] : memref<1x4x8xbf16, #tpu.memory_space<vmem>>, vector<1x4x8xbf16>
    %6 = vector.shape_cast %5 : vector<1x4x8xbf16> to vector<4x8xbf16>
    %cst = arith.constant dense<0.000000e+00> : vector<288x8xf32>
    %7 = tpu.matmul %4, %6, %cst {dimension_numbers = #tpu.dot_dimension_numbers<[1], [0], [0], [1], [0, 0, 1, 1], [], []>} : vector<288x4xbf16>, vector<4x8xbf16>, vector<288x8xf32> -> vector<288x8xf32>
    %c0_5 = arith.constant 0 : index
    %c0_6 = arith.constant 0 : index
    %c0_7 = arith.constant 0 : index
    %8 = vector.load %arg4[%c0_5, %c0_6, %c0_7] : memref<1x288x8xf32, #tpu.memory_space<vmem>>, vector<1x288x8xf32>
    %9 = vector.shape_cast %8 : vector<1x288x8xf32> to vector<288x8xf32>
    %10 = vector.shape_cast %7 : vector<288x8xf32> to vector<1x288x8xf32>
    tpu.vector_store %arg4[%c0_5, %c0_6, %c0_7], %10 {strides = array<i32>} : memref<1x288x8xf32, #tpu.memory_space<vmem>>, vector<1x288x8xf32>,
    %c0_8 = arith.constant 0 : index
    %c0_9 = arith.constant 0 : index
    %c0_10 = arith.constant 0 : index
    %11 = vector.load %arg3[%c0_8, %c0_9, %c0_10] : memref<1x288x1xf32, #tpu.memory_space<vmem>>, vector<1x288x1xf32>
    %12 = vector.shape_cast %11 : vector<1x288x1xf32> to vector<288x1xf32>
    %13 = vector.broadcast %12 : vector<288x1xf32> to vector<288x8xf32>
    %14 = arith.mulf %7, %13 : vector<288x8xf32>
    %cst_11 = arith.constant dense<0.000000e+00> : vector<8xf32>
    %15 = vector.multi_reduction <add>, %14, %cst_11 [0] : vector<288x8xf32> to vector<8xf32>
    %16 = vector.shape_cast %15 : vector<8xf32> to vector<1x8xf32>
    %c0_12 = arith.constant 0 : index
    %c0_13 = arith.constant 0 : index
    %c0_14 = arith.constant 0 : index
    %17 = vector.load %arg5[%c0_12, %c0_13, %c0_14] : memref<1x1x8xf32, #tpu.memory_space<vmem>>, vector<1x1x8xf32>
    %18 = vector.shape_cast %17 : vector<1x1x8xf32> to vector<1x8xf32>
    %19 = vector.shape_cast %16 : vector<1x8xf32> to vector<1x1x8xf32>
    tpu.vector_store %arg5[%c0_12, %c0_13, %c0_14], %19 {strides = array<i32>} : memref<1x1x8xf32, #tpu.memory_space<vmem>>, vector<1x1x8xf32>,
    %20 = arith.mulf %14, %7 : vector<288x8xf32>
    %cst_15 = arith.constant dense<0.000000e+00> : vector<8xf32>
    %21 = vector.multi_reduction <add>, %20, %cst_15 [0] : vector<288x8xf32> to vector<8xf32>
    %22 = vector.shape_cast %21 : vector<8xf32> to vector<1x8xf32>
    %c0_16 = arith.constant 0 : index
    %c0_17 = arith.constant 0 : index
    %c0_18 = arith.constant 0 : index
    %23 = vector.load %arg6[%c0_16, %c0_17, %c0_18] : memref<1x1x8xf32, #tpu.memory_space<vmem>>, vector<1x1x8xf32>
    %24 = vector.shape_cast %23 : vector<1x1x8xf32> to vector<1x8xf32>
    %25 = vector.shape_cast %22 : vector<1x8xf32> to vector<1x1x8xf32>
    tpu.vector_store %arg6[%c0_16, %c0_17, %c0_18], %25 {strides = array<i32>} : memref<1x1x8xf32, #tpu.memory_space<vmem>>, vector<1x1x8xf32>,
    return
  }
  func.func @transform_0(%arg0: i32) -> (i32, i32, i32) {
    %c0_i32 = arith.constant 0 : i32
    %c0_i32_0 = arith.constant 0 : i32
    %c0_i32_1 = arith.constant 0 : i32
    return %arg0, %c0_i32, %c0_i32_0 : i32, i32, i32
  }
  func.func @transform_1(%arg0: i32) -> (i32, i32, i32) {
    %c0_i32 = arith.constant 0 : i32
    %c0_i32_0 = arith.constant 0 : i32
    %c0_i32_1 = arith.constant 0 : i32
    %c0_i32_2 = arith.constant 0 : i32
    return %c0_i32, %c0_i32_0, %c0_i32_1 : i32, i32, i32
  }
  func.func @transform_2(%arg0: i32) -> (i32, i32, i32) {
    %c0_i32 = arith.constant 0 : i32
    %c0_i32_0 = arith.constant 0 : i32
    %c0_i32_1 = arith.constant 0 : i32
    %c0_i32_2 = arith.constant 0 : i32
    return %c0_i32, %c0_i32_0, %c0_i32_1 : i32, i32, i32
  }
  func.func @transform_3(%arg0: i32) -> (i32, i32, i32) {
    %c0_i32 = arith.constant 0 : i32
    %c0_i32_0 = arith.constant 0 : i32
    %c0_i32_1 = arith.constant 0 : i32
    return %arg0, %c0_i32, %c0_i32_0 : i32, i32, i32
  }
  func.func @transform_4(%arg0: i32) -> (i32, i32, i32) {
    %c0_i32 = arith.constant 0 : i32
    %c0_i32_0 = arith.constant 0 : i32
    %c0_i32_1 = arith.constant 0 : i32
    return %arg0, %c0_i32, %c0_i32_0 : i32, i32, i32
  }
  func.func @transform_5(%arg0: i32) -> (i32, i32, i32) {
    %c0_i32 = arith.constant 0 : i32
    %c0_i32_0 = arith.constant 0 : i32
    %c0_i32_1 = arith.constant 0 : i32
    return %arg0, %c0_i32, %c0_i32_0 : i32, i32, i32
  }
}

</mosaic_0001>

<llo_original>
// kernel: tile.33
$region0: #{tile.33}
  #allocation0 [shape = 's32[1]{0}', space=sflag, size = 0x4, scoped, tag = 'scoped memory for tile.33']
  %s0 = inlined_call_operand.vmem [shape: f32[8], index: 0, kind: input, shape index: {}]
  %s1 = inlined_call_operand.vmem [shape: f32[16,8], index: 1, kind: output, shape index: {}]
  // Predicated region
  $region2: #{tile.33} parent=0 // pred_check
    _
  $region3: #{tile.33} parent=0 // pred_check_branch
    %3 = sbr.rel (0) target = $region5
  $region4: #{tile.33} parent=0 // pred_region
    _
  $region5: #{tile.33} parent=0 // pred_fallthru
    _
  %v4 = vld [vmem:[%s0] ss:$0 sm:$0xff]
  %5 = vst [vmem:[%s1] sm:$0xff] %v4
  %s6 = scalar_lea.vmem %s1, 8
  %7 = vst [vmem:[%s6] sm:$0xff] %v4

// kernel: tile.34
$region0: #{tile.34}
  %s0 = inlined_call_operand.vmem [shape: f32[16,8], index: 0, kind: input, shape index: {}]
  %s1 = inlined_call_operand.vmem [shape: f32[1,128], index: 1, kind: output, shape index: {}]
  $region1: #{tile.34} parent=0
    #allocation0 [shape = 'u8[4096]{0}', space=vmem, size = 0x1000, scoped, tag = 'scoped mem for output reshape']
    %v2 = vld [vmem:[%s0] sm:$0x1]
    %vm3 = vcmask 64512
    %4 = vst.msk [vmem:[#allocation0] sm:$0x1] %vm3, %v2
    %s5 = scalar_lea.vmem %s0, 15
    %v6 = vld [vmem:[%s5] sm:$0x1]
    %7 = vrot.lane.b32.xlu0 %v6, 120
    %v8 = vpop.permute.xlu0 %7
    %vm9 = vcmask 1048512
    %10 = vst.msk [vmem:[#allocation0] sm:$0x1] %vm9, %v8
    %s11 = scalar_lea.vmem %s0, 14
    %v12 = vld [vmem:[%s11] sm:$0x1]
    %13 = vrot.lane.b32.xlu0 %v12, 112
    %v14 = vpop.permute.xlu0 %13
    %vm15 = vcmask 982912
    %16 = vst.msk [vmem:[#allocation0] sm:$0x1] %vm15, %v14
    %s17 = scalar_lea.vmem %s0, 13
    %v18 = vld [vmem:[%s17] sm:$0x1]
    %19 = vrot.lane.b32.xlu0 %v18, 104
    %v20 = vpop.permute.xlu0 %19
    %vm21 = vcmask 917312
    %22 = vst.msk [vmem:[#allocation0] sm:$0x1] %vm21, %v20
    %s23 = scalar_lea.vmem %s0, 12
    %v24 = vld [vmem:[%s23] sm:$0x1]
    %25 = vrot.lane.b32.xlu0 %v24, 96
    %v26 = vpop.permute.xlu0 %25
    %vm27 = vcmask 851712
    %28 = vst.msk [vmem:[#allocation0] sm:$0x1] %vm27, %v26
    %s29 = scalar_lea.vmem %s0, 11
    %v30 = vld [vmem:[%s29] sm:$0x1]
    %31 = vrot.lane.b32.xlu0 %v30, 88
    %v32 = vpop.permute.xlu0 %31
    %vm33 = vcmask 786112
    %34 = vst.msk [vmem:[#allocation0] sm:$0x1] %vm33, %v32
    %s35 = scalar_lea.vmem %s0, 10
    %v36 = vld [vmem:[%s35] sm:$0x1]
    %37 = vrot.lane.b32.xlu0 %v36, 80
    %v38 = vpop.permute.xlu0 %37
    %vm39 = vcmask 720512
    %40 = vst.msk [vmem:[#allocation0] sm:$0x1] %vm39, %v38
    %s41 = scalar_lea.vmem %s0, 9
    %v42 = vld [vmem:[%s41] sm:$0x1]
    %43 = vrot.lane.b32.xlu0 %v42, 72
    %v44 = vpop.permute.xlu0 %43
    %vm45 = vcmask 654912
    %46 = vst.msk [vmem:[#allocation0] sm:$0x1] %vm45, %v44
    %s47 = scalar_lea.vmem %s0, 8
    %v48 = vld [vmem:[%s47] sm:$0x1]
    %49 = vrot.lane.b32.xlu0 %v48, 64
    %v50 = vpop.permute.xlu0 %49
    %vm51 = vcmask 589312
    %52 = vst.msk [vmem:[#allocation0] sm:$0x1] %vm51, %v50
    %s53 = scalar_lea.vmem %s0, 7
    %v54 = vld [vmem:[%s53] sm:$0x1]
    %55 = vrot.lane.b32.xlu0 %v54, 56
    %v56 = vpop.permute.xlu0 %55
    %vm57 = vcmask 523712
    %58 = vst.msk [vmem:[#allocation0] sm:$0x1] %vm57, %v56
    %s59 = scalar_lea.vmem %s0, 6
    %v60 = vld [vmem:[%s59] sm:$0x1]
    %61 = vrot.lane.b32.xlu0 %v60, 48
    %v62 = vpop.permute.xlu0 %61
    %vm63 = vcmask 458112
    %64 = vst.msk [vmem:[#allocation0] sm:$0x1] %vm63, %v62
    %s65 = scalar_lea.vmem %s0, 5
    %v66 = vld [vmem:[%s65] sm:$0x1]
    %67 = vrot.lane.b32.xlu0 %v66, 40
    %v68 = vpop.permute.xlu0 %67
    %vm69 = vcmask 392512
    %70 = vst.msk [vmem:[#allocation0] sm:$0x1] %vm69, %v68
    %s71 = scalar_lea.vmem %s0, 4
    %v72 = vld [vmem:[%s71] sm:$0x1]
    %73 = vrot.lane.b32.xlu0 %v72, 32
    %v74 = vpop.permute.xlu0 %73
    %vm75 = vcmask 326912
    %76 = vst.msk [vmem:[#allocation0] sm:$0x1] %vm75, %v74
    %s77 = scalar_lea.vmem %s0, 3
    %v78 = vld [vmem:[%s77] sm:$0x1]
    %79 = vrot.lane.b32.xlu0 %v78, 24
    %v80 = vpop.permute.xlu0 %79
    %vm81 = vcmask 261312
    %82 = vst.msk [vmem:[#allocation0] sm:$0x1] %vm81, %v80
    %s83 = scalar_lea.vmem %s0, 2
    %v84 = vld [vmem:[%s83] sm:$0x1]
    %85 = vrot.lane.b32.xlu0 %v84, 16
    %v86 = vpop.permute.xlu0 %85
    %vm87 = vcmask 195712
    %88 = vst.msk [vmem:[#allocation0] sm:$0x1] %vm87, %v86
    %s89 = scalar_lea.vmem %s0, 1
    %v90 = vld [vmem:[%s89] sm:$0x1]
    %91 = vrot.lane.b32.xlu0 %v90, 8
    %v92 = vpop.permute.xlu0 %91
    %vm93 = vcmask 130112
    %94 = vst.msk [vmem:[#allocation0] sm:$0x1] %vm93, %v92
    %s96 = sshllo.u32 0, 1
    %v98 = vld [vmem:[#allocation0] sm:%s96]
    %s99 = sshllo.u32 0, 1
    %100 = vst [vmem:[%s1] sm:%s99] %v98

// kernel: basic_block_split_forward.6
$region0: #{basic_block_split_forward.6}
  #allocation0 [shape = 'u32[]', space=smem, size = 0x4, offset = 0x4, fixed_abs, tag = 'smem constant byte address 0x4 - core index']
  #allocation1 [shape = 'u32[144,128]{1,0:T(1,128)}', space=vmem, size = 0x12000, scoped, tag = 'internal scratch']
  %s0 = inlined_call_operand.vmem [shape: f32[36,128], index: 0, kind: input, shape index: {}]
  %s1 = inlined_call_operand.vmem [shape: f32[1,128], index: 1, kind: input, shape index: {}]
  %s2 = inlined_call_operand.vmem [shape: f32[1,128], index: 2, kind: input, shape index: {}]
  %s3 = inlined_call_operand.vmem [shape: f32[36,128], index: 3, kind: output, shape index: {0}]
  %s4 = inlined_call_operand.vmem [shape: bf16[36,128], index: 4, kind: output, shape index: {1}]
  %5 = xla_tuple %s3, %s4
  %s6 = sld [smem:[#allocation0]]
  $region145: #{basic_block_split_forward.6} parent=0
    _
  %s8 = ssub.s32 1, %s6
  %s9 = scalar_select 0, %s8, %s6
  $region1: #{basic_block_split_forward.6} parent=0
    #allocation2 [shape = 'u8[24576]{0}', space=vmem, size = 0x6000, scoped, tag = 'output window, operand 0']
    #allocation3 [shape = 'u8[12288]{0}', space=vmem, size = 0x3000, scoped, tag = 'output window, operand 1']
    loop: start=0, step=1, limit=4
    $region2: #{basic_block_split_forward.6} parent=1 // loop_pre_header
      _
    $region3: #{basic_block_split_forward.6} parent=1 // loop_header
      %s11 = sphi 0, %s15
      %p12 = scmp.ge.s32.totalorder %s11, 4
      %s21 = sphi 0, %s23
      %s24 = sphi 0, %s21
      %s25 = sphi 0, %s24
      %s41 = sphi 0, %s25
      %s45 = sphi 0, %s45
      %s47 = sphi 0, %s45
      %s48 = sphi 0, %s47
      %s62 = sphi 0, %s48
      %s66 = sphi 0, %s66
      %s68 = sphi 0, %s66
      %s69 = sphi 0, %s68
      %s83 = sphi 0, %s69
      %s89 = sphi 0, %s91
      %s92 = sphi 0, %s89
      %s93 = sphi 0, %s92
      %s109 = sphi 0, %s93
      %s115 = sphi 0, %s117
      %s118 = sphi 0, %s115
      %s119 = sphi 0, %s118
      %s135 = sphi 0, %s119
    $region4: #{basic_block_split_forward.6} parent=1 // loop_header_branch
      %14 = sbr.rel (%p12) target = $region8
    $region5: #{basic_block_split_forward.6} parent=1 // loop_body
      %s16 = ssub.s32 %s11, 1
      %s17 = ssub.s32 %s11, 2
      %s18 = sadd.s32 %s11, 1
      %s19 = ssub.s32 %s11, %s18
      %p20 = scmp.eq.s32.totalorder %s19, 0
      %s22 = sadd.s32 %s21, 1
      %s23 = scalar_select %p20, %s21, %s22
      %p26 = pneg %p20
      %p27 = scmp.eq.s32.totalorder %s11, 1
      %p28 = por %p26, %p27
      %p29 = scmp.ne.s32.totalorder %s21, %s24
      %p30 = scmp.eq.s32.totalorder %s11, 0
      %p31 = por %p29, %p30
      %p32 = scmp.ne.s32.totalorder %s21, %s24
      %p33 = scmp.eq.s32.totalorder %s16, 1
      %p34 = por %p32, %p33
      %p35 = scmp.ne.s32.totalorder %s24, %s25
      %p36 = scmp.eq.s32.totalorder %s16, 0
      %p37 = por %p35, %p36
      %p38 = scmp.ne.s32.totalorder %s24, %s25
      %p39 = scmp.eq.s32.totalorder %s17, 1
      %p40 = por %p38, %p39
      %p42 = scmp.ne.s32.totalorder %s25, %s41
      %p43 = scmp.eq.s32.totalorder %s17, 0
      %p44 = por %p42, %p43
      %s46 = sadd.s32 %s45, 1
      %p49 = scmp.eq.s32.totalorder %s11, 1
      %p50 = scmp.ne.s32.totalorder %s45, %s47
      %p51 = scmp.eq.s32.totalorder %s11, 0
      %p52 = por %p50, %p51
      %p53 = scmp.ne.s32.totalorder %s45, %s47
      %p54 = scmp.eq.s32.totalorder %s16, 1
      %p55 = por %p53, %p54
      %p56 = scmp.ne.s32.totalorder %s47, %s48
      %p57 = scmp.eq.s32.totalorder %s16, 0
      %p58 = por %p56, %p57
      %p59 = scmp.ne.s32.totalorder %s47, %s48
      %p60 = scmp.eq.s32.totalorder %s17, 1
      %p61 = por %p59, %p60
      %p63 = scmp.ne.s32.totalorder %s48, %s62
      %p64 = scmp.eq.s32.totalorder %s17, 0
      %p65 = por %p63, %p64
      %s67 = sadd.s32 %s66, 1
      %p70 = scmp.eq.s32.totalorder %s11, 1
      %p71 = scmp.ne.s32.totalorder %s66, %s68
      %p72 = scmp.eq.s32.totalorder %s11, 0
      %p73 = por %p71, %p72
      %p74 = scmp.ne.s32.totalorder %s66, %s68
      %p75 = scmp.eq.s32.totalorder %s16, 1
      %p76 = por %p74, %p75
      %p77 = scmp.ne.s32.totalorder %s68, %s69
      %p78 = scmp.eq.s32.totalorder %s16, 0
      %p79 = por %p77, %p78
      %p80 = scmp.ne.s32.totalorder %s68, %s69
      %p81 = scmp.eq.s32.totalorder %s17, 1
      %p82 = por %p80, %p81
      %p84 = scmp.ne.s32.totalorder %s69, %s83
      %p85 = scmp.eq.s32.totalorder %s17, 0
      %p86 = por %p84, %p85
      %s87 = ssub.s32 %s11, %s18
      %p88 = scmp.eq.s32.totalorder %s87, 0
      %s90 = sadd.s32 %s89, 1
      %s91 = scalar_select %p88, %s89, %s90
      %p94 = pneg %p88
      %p95 = scmp.eq.s32.totalorder %s11, 1
      %p96 = por %p94, %p95
      %p97 = scmp.ne.s32.totalorder %s89, %s92
      %p98 = scmp.eq.s32.totalorder %s11, 0
      %p99 = por %p97, %p98
      %p100 = scmp.ne.s32.totalorder %s89, %s92
      %p101 = scmp.eq.s32.totalorder %s16, 1
      %p102 = por %p100, %p101
      %p103 = scmp.ne.s32.totalorder %s92, %s93
      %p104 = scmp.eq.s32.totalorder %s16, 0
      %p105 = por %p103, %p104
      %p106 = scmp.ne.s32.totalorder %s92, %s93
      %p107 = scmp.eq.s32.totalorder %s17, 1
      %p108 = por %p106, %p107
      %p110 = scmp.ne.s32.totalorder %s93, %s109
      %p111 = scmp.eq.s32.totalorder %s17, 0
      %p112 = por %p110, %p111
      %s113 = ssub.s32 %s11, %s18
      %p114 = scmp.eq.s32.totalorder %s113, 0
      %s116 = sadd.s32 %s115, 1
      %s117 = scalar_select %p114, %s115, %s116
      %p120 = pneg %p114
      %p121 = scmp.eq.s32.totalorder %s11, 1
      %p122 = por %p120, %p121
      %p123 = scmp.ne.s32.totalorder %s115, %s118
      %p124 = scmp.eq.s32.totalorder %s11, 0
      %p125 = por %p123, %p124
      %p126 = scmp.ne.s32.totalorder %s115, %s118
      %p127 = scmp.eq.s32.totalorder %s16, 1
      %p128 = por %p126, %p127
      %p129 = scmp.ne.s32.totalorder %s118, %s119
      %p130 = scmp.eq.s32.totalorder %s16, 0
      %p131 = por %p129, %p130
      %p132 = scmp.ne.s32.totalorder %s118, %s119
      %p133 = scmp.eq.s32.totalorder %s17, 1
      %p134 = por %p132, %p133
      %p136 = scmp.ne.s32.totalorder %s119, %s135
      %p137 = scmp.eq.s32.totalorder %s17, 0
      %p138 = por %p136, %p137
      %p139 = scmp.le.s32.totalorder 1, %s11
      %p140 = scmp.lt.s32.totalorder %s11, 3
      %p141 = pnand %p139, %p140
      %p142 = pneg %p141
      // Predicated region
      $region9: #{basic_block_split_forward.6} parent=5 // pred_check
        _
      $region10: #{basic_block_split_forward.6} parent=5 // pred_check_branch
        %144 = sbr.rel (%p141) target = $region12
      $region11: #{basic_block_split_forward.6} parent=5 // pred_region
        %s145 = ssub.s32 %s11, 1
        // Predicated region
        $region13: #{basic_block_split_forward.6} parent=11 // pred_check
          %p146 = pneg %p58
        $region14: #{basic_block_split_forward.6} parent=11 // pred_check_branch
          %148 = sbr.rel (%p146) target = $region16
        $region15: #{basic_block_split_forward.6} parent=11 // pred_region
          _
        $region16: #{basic_block_split_forward.6} parent=11 // pred_fallthru
          _
        // Predicated region
        $region17: #{basic_block_split_forward.6} parent=11 // pred_check
          %p149 = pneg %p79
        $region18: #{basic_block_split_forward.6} parent=11 // pred_check_branch
          %151 = sbr.rel (%p149) target = $region20
        $region19: #{basic_block_split_forward.6} parent=11 // pred_region
          _
        $region20: #{basic_block_split_forward.6} parent=11 // pred_fallthru
          _
      $region12: #{basic_block_split_forward.6} parent=5 // pred_fallthru
        _
      %p152 = scmp.lt.s32.totalorder %s11, 2
      // Predicated region
      $region21: #{basic_block_split_forward.6} parent=5 // pred_check
        %p153 = pneg %p152
      $region22: #{basic_block_split_forward.6} parent=5 // pred_check_branch
        %155 = sbr.rel (%p153) target = $region24
      $region23: #{basic_block_split_forward.6} parent=5 // pred_region
        // Predicated region
        $region25: #{basic_block_split_forward.6} parent=23 // pred_check
          %p156 = pneg %p31
        $region26: #{basic_block_split_forward.6} parent=23 // pred_check_branch
          %158 = sbr.rel (%p156) target = $region28
        $region27: #{basic_block_split_forward.6} parent=23 // pred_region
          %s159 = smul.u32 3, %s11
          %s160 = ssub.s32 5, %s159
          %p161 = scmp.lt.s32.totalorder %s160, 3
          %s162 = scalar_select %p161, %s160, 3
          %s163 = smul.u32 128, %s162
          %p164 = scmp.lt.s32.totalorder %s159, 4
          %s165 = scalar_select %p164, %s159, 4
          %s166 = smul.addr %s165, 8
          %s167 = scalar_lea.vmem %s0, %s166
          %s168 = smul.u32 3, %s11
          %s169 = ssub.s32 5, %s168
          %p170 = scmp.lt.s32.totalorder %s169, 3
          %s171 = scalar_select %p170, %s169, 3
          %s172 = smul.u32 128, %s171
        $region28: #{basic_block_split_forward.6} parent=23 // pred_fallthru
          _
      $region24: #{basic_block_split_forward.6} parent=5 // pred_fallthru
        _
      %p173 = scmp.le.s32.totalorder 1, %s11
      %p174 = scmp.lt.s32.totalorder %s11, 3
      %p175 = pnand %p173, %p174
      %p176 = pneg %p175
      // Predicated region
      $region29: #{basic_block_split_forward.6} parent=5 // pred_check
        _
      $region30: #{basic_block_split_forward.6} parent=5 // pred_check_branch
        %178 = sbr.rel (%p175) target = $region32
      $region31: #{basic_block_split_forward.6} parent=5 // pred_region
        %s179 = ssub.s32 %s11, 1
        %s180 = smul.u32 3, %s16
        %s181 = ssub.s32 5, %s180
        %p182 = scmp.lt.s32.totalorder %s181, 3
        %s183 = scalar_select %p182, %s181, 3
        %s184 = smul.u32 128, %s183
        %p185 = scmp.lt.s32.totalorder %s180, 4
        %s186 = scalar_select %p185, %s180, 4
        %s187 = smul.addr %s186, 8
        %s188 = scalar_lea.vmem %s0, %s187
        %p189 = pneg %p37
        %p190 = pneg %p34
        %p191 = pneg %p58
        %p192 = pneg %p55
        %p193 = pneg %p79
        %p194 = pneg %p76
        %p195 = pneg %p105
        %p196 = pneg %p102
        %s197 = sand.u32 %s92, 1
        %s198 = sand.u32 %s92, 1
        %s199 = smul.addr %s198, 24
        %s200 = scalar_lea.vmem [#allocation2], %s199
        %p201 = pneg %p131
        %p202 = pneg %p128
        %s203 = sand.u32 %s118, 1
        %s204 = sand.u32 %s118, 1
        %s205 = smul.addr %s204, 12
        %s206 = scalar_lea.vmem [#allocation3], %s205
        %s207 = smul.u32 3, %s16
        %s208 = ssub.s32 5, %s207
        %p209 = scmp.lt.s32.totalorder %s208, 3
        %s210 = scalar_select %p209, %s208, 3
        %s211 = smul.u32 128, %s210
        %p212 = scmp.lt.s32.totalorder %s207, 4
        %s213 = scalar_select %p212, %s207, 4
        %s214 = smul.addr %s213, 8
        %s215 = scalar_lea.vmem %s0, %s214
        %s216 = smul.u32 3, %s16
        %s217 = ssub.s32 5, %s216
        %p218 = scmp.lt.s32.totalorder %s217, 3
        %s219 = scalar_select %p218, %s217, 3
        %s220 = smul.u32 128, %s219
        %s221 = smul.u32 3, %s16
        %s222 = ssub.s32 5, %s221
        %p223 = scmp.lt.s32.totalorder %s222, 3
        %s224 = scalar_select %p223, %s222, 3
        %s225 = smul.u32 128, %s224
        %s226 = smul.u32 3, %s16
        %s227 = ssub.s32 5, %s226
        %p228 = scmp.lt.s32.totalorder %s227, 3
        %s229 = scalar_select %p228, %s227, 3
        %s230 = smul.u32 64, %s229
        %v231 = vld [vmem:[%s215] sm:$0xff]
        %v232 = vld [vmem:[%s215 + $0x8] sm:$0xff]
        %v233 = vld [vmem:[%s215 + $0x10] sm:$0xff]
        %v234 = vld [vmem:[%s1] sm:$0x1]
        %v236 = vlaneseq
        %v237 = vshrl.u32 %v236, 7
        %v238 = vsub.s32 0, %v237
        %v239 = vrot.slane %v234, %v238
        %v241 = vmul.f32 %v231, %v239
        %v242 = vmul.f32 %v232, %v239
        %v243 = vmul.f32 %v233, %v239
        %v244 = vld [vmem:[%s2] sm:$0x1]
        %v246 = vlaneseq
        %v247 = vshrl.u32 %v246, 7
        %v248 = vsub.s32 0, %v247
        %v249 = vrot.slane %v244, %v248
        %v251 = vadd.f32 %v241, %v249
        %v252 = vadd.f32 %v242, %v249
        %v253 = vadd.f32 %v243, %v249
        %254 = vst [vmem:[%s200] sm:$0xff] %v251
        %255 = vst [vmem:[%s200 + $0x8] sm:$0xff] %v252
        %256 = vst [vmem:[%s200 + $0x10] sm:$0xff] %v253
        %v257 = vmax.f32 %v251, 0.0
        %v258 = vmax.f32 %v252, 0.0
        %v259 = vmax.f32 %v253, 0.0
        %v260 = vpack.c.bf16 %v258, %v257
        %v261 = vpack.c.bf16 %v259, %v259
        %v264 = vunpack.c.l.b16 %v260
        %v265 = vunpack.c.h.b16 %v260
        %v266 = vunpack.c.l.b16 %v261
        %v267 = vpack.c.b16 %v264, %v264
        %v268 = vpack.c.b16 %v265, %v265
        %v269 = vpack.c.b16 %v266, %v266
        %273 = vst [vmem:[%s206] sm:$0xf] %v267
        %274 = vst [vmem:[%s206 + $0x4] sm:$0xf] %v268
        %275 = vst [vmem:[%s206 + $0x8] sm:$0xf] %v269
        %s276 = sand.u32 %s92, 1
        %s277 = sand.u32 %s92, 1
        %s278 = smul.addr %s277, 24
        %s279 = scalar_lea.vmem [#allocation2], %s278
        %s280 = sand.u32 %s118, 1
        %s281 = sand.u32 %s118, 1
        %s282 = smul.addr %s281, 12
        %s283 = scalar_lea.vmem [#allocation3], %s282
        // Predicated region
        $region33: #{basic_block_split_forward.6} parent=31 // pred_check
          %p284 = pneg %p102
        $region34: #{basic_block_split_forward.6} parent=31 // pred_check_branch
          %286 = sbr.rel (%p284) target = $region36
        $region35: #{basic_block_split_forward.6} parent=31 // pred_region
          %s287 = smul.u32 3, %s16
          %s288 = ssub.s32 5, %s287
          %p289 = scmp.lt.s32.totalorder %s288, 3
          %s290 = scalar_select %p289, %s288, 3
          %s291 = smul.u32 128, %s290
          %p292 = scmp.ne.s32.totalorder 0, %s291
          %s293 = smul.addr %s287, 8
          %s294 = scalar_lea.vmem %s3, %s293
          // Predicated region
          $region37: #{basic_block_split_forward.6} parent=35 // pred_check
            %p295 = pneg %p292
          $region38: #{basic_block_split_forward.6} parent=35 // pred_check_branch
            %297 = sbr.rel (%p295) target = $region40
          $region39: #{basic_block_split_forward.6} parent=35 // pred_region
            // Predicated region
            $region41: #{basic_block_split_forward.6} parent=39 // pred_check
              _
            $region42: #{basic_block_split_forward.6} parent=39 // pred_check_branch
              %299 = sbr.rel (0) target = $region44
            $region43: #{basic_block_split_forward.6} parent=39 // pred_region
              // Predicated region
              $region63: #{basic_block_split_forward.6} parent=43 // pred_check
                _
              $region64: #{basic_block_split_forward.6} parent=43 // pred_check_branch
                %353 = sbr.rel (0) target = $region66
              $region65: #{basic_block_split_forward.6} parent=43 // pred_region
                %s354 = sdiv.u32.pop %s290, 3
                %s355 = srem.u32.pop %s290, 3
                // While loop
                $region67: #{basic_block_split_forward.6} parent=65 // loop_pre_header
                  _
                $region68: #{basic_block_split_forward.6} parent=65 // loop_header
                  %s357 = sphi 0, %s359
                  %p358 = scmp.ge.s32.totalorder %s357, %s354
                  %s362 = sphi 0, %s373
                  %s363 = sphi %s279, %s376
                  %s364 = sphi %s294, %s377
                $region69: #{basic_block_split_forward.6} parent=65 // loop_header_branch
                  %361 = sbr.rel (%p358) target = $region73
                $region70: #{basic_block_split_forward.6} parent=65 // loop_body
                  %v365 = vld [vmem:[%s363] sm:$0xff]
                  %366 = vst [vmem:[%s364] sm:$0xff] %v365
                  %v367 = vld [vmem:[%s363 + $0x8] sm:$0xff]
                  %368 = vst [vmem:[%s364 + $0x8] sm:$0xff] %v367
                  %v369 = vld [vmem:[%s363 + $0x10] sm:$0xff]
                  %370 = vst [vmem:[%s364 + $0x10] sm:$0xff] %v369
                  %s371 = sadd.s32 1, %s362
                  %p372 = scmp.ge.s32.totalorder %s371, %s354
                  %s373 = scalar_select %p372, 0, %s371
                  %s374 = smul.u32 %s373, 24
                  %s375 = smul.u32 %s373, 24
                  %s376 = scalar_lea.vmem %s279, %s374 [#allocation2]
                  %s377 = scalar_lea.vmem %s294, %s375
                $region71: #{basic_block_split_forward.6} parent=65 // loop_footer
                  %s359 = sadd.s32 %s357, 1
                $region72: #{basic_block_split_forward.6} parent=65 // loop_footer_branch
                  %356 = sbr.rel target = $region68
                $region73: #{basic_block_split_forward.6} parent=65 // loop_exit
                  _
                %s378 = sdiv.u32.pop %s290, 3
                %s379 = srem.u32.pop %s290, 3
                %s380 = smul.u32 %s378, 3
                %s381 = smul.u32 8, %s380
                %s382 = scalar_lea.vmem %s279, %s381 [#allocation2]
                %s383 = smul.u32 8, %s380
                %s384 = scalar_lea.vmem %s294, %s383
                // While loop
                $region74: #{basic_block_split_forward.6} parent=65 // loop_pre_header
                  _
                $region75: #{basic_block_split_forward.6} parent=65 // loop_header
                  %s386 = sphi 0, %s388
                  %p387 = scmp.ge.s32.totalorder %s386, %s379
                  %s391 = sphi 0, %s398
                  %s392 = sphi %s382, %s401
                  %s393 = sphi %s384, %s402
                $region76: #{basic_block_split_forward.6} parent=65 // loop_header_branch
                  %390 = sbr.rel (%p387) target = $region80
                $region77: #{basic_block_split_forward.6} parent=65 // loop_body
                  %v394 = vld [vmem:[%s392] sm:$0xff]
                  %395 = vst [vmem:[%s393] sm:$0xff] %v394
                  %s396 = sadd.s32 1, %s391
                  %p397 = scmp.ge.s32.totalorder %s396, %s379
                  %s398 = scalar_select %p397, 0, %s396
                  %s399 = smul.u32 %s398, 8
                  %s400 = smul.u32 %s398, 8
                  %s401 = scalar_lea.vmem %s382, %s399 [#allocation2]
                  %s402 = scalar_lea.vmem %s384, %s400
                $region78: #{basic_block_split_forward.6} parent=65 // loop_footer
                  %s388 = sadd.s32 %s386, 1
                $region79: #{basic_block_split_forward.6} parent=65 // loop_footer_branch
                  %385 = sbr.rel target = $region75
                $region80: #{basic_block_split_forward.6} parent=65 // loop_exit
                  _
              $region66: #{basic_block_split_forward.6} parent=43 // pred_fallthru
                _
              // Predicated region
              $region81: #{basic_block_split_forward.6} parent=43 // pred_check
                _
              $region82: #{basic_block_split_forward.6} parent=43 // pred_check_branch
                %404 = sbr.rel target = $region84
              $region83: #{basic_block_split_forward.6} parent=43 // pred_region
                _
              $region84: #{basic_block_split_forward.6} parent=43 // pred_fallthru
                _
            $region44: #{basic_block_split_forward.6} parent=39 // pred_fallthru
              _
            // Predicated region
            $region45: #{basic_block_split_forward.6} parent=39 // pred_check
              _
            $region46: #{basic_block_split_forward.6} parent=39 // pred_check_branch
              %301 = sbr.rel target = $region48
            $region47: #{basic_block_split_forward.6} parent=39 // pred_region
              %s303 = sdiv.u32.pop %s290, 3
              %s304 = srem.u32.pop %s290, 3
              // While loop
              $region49: #{basic_block_split_forward.6} parent=47 // loop_pre_header
                _
              $region50: #{basic_block_split_forward.6} parent=47 // loop_header
                %s306 = sphi 0, %s308
                %p307 = scmp.ge.s32.totalorder %s306, %s303
                %s311 = sphi 0, %s322
                %s312 = sphi %s279, %s325
                %s313 = sphi %s294, %s326
              $region51: #{basic_block_split_forward.6} parent=47 // loop_header_branch
                %310 = sbr.rel (%p307) target = $region55
              $region52: #{basic_block_split_forward.6} parent=47 // loop_body
                %v314 = vld [vmem:[%s312] sm:$0xff]
                %315 = vst [vmem:[%s313] sm:$0xff] %v314
                %v316 = vld [vmem:[%s312 + $0x8] sm:$0xff]
                %317 = vst [vmem:[%s313 + $0x8] sm:$0xff] %v316
                %v318 = vld [vmem:[%s312 + $0x10] sm:$0xff]
                %319 = vst [vmem:[%s313 + $0x10] sm:$0xff] %v318
                %s320 = sadd.s32 1, %s311
                %p321 = scmp.ge.s32.totalorder %s320, %s303
                %s322 = scalar_select %p321, 0, %s320
                %s323 = smul.u32 %s322, 24
                %s324 = smul.u32 %s322, 24
                %s325 = scalar_lea.vmem %s279, %s323 [#allocation2]
                %s326 = scalar_lea.vmem %s294, %s324
              $region53: #{basic_block_split_forward.6} parent=47 // loop_footer
                %s308 = sadd.s32 %s306, 1
              $region54: #{basic_block_split_forward.6} parent=47 // loop_footer_branch
                %305 = sbr.rel target = $region50
              $region55: #{basic_block_split_forward.6} parent=47 // loop_exit
                _
              %s327 = sdiv.u32.pop %s290, 3
              %s328 = srem.u32.pop %s290, 3
              %s329 = smul.u32 %s327, 3
              %s330 = smul.u32 8, %s329
              %s331 = scalar_lea.vmem %s279, %s330 [#allocation2]
              %s332 = smul.u32 8, %s329
              %s333 = scalar_lea.vmem %s294, %s332
              // While loop
              $region56: #{basic_block_split_forward.6} parent=47 // loop_pre_header
                _
              $region57: #{basic_block_split_forward.6} parent=47 // loop_header
                %s335 = sphi 0, %s337
                %p336 = scmp.ge.s32.totalorder %s335, %s328
                %s340 = sphi 0, %s347
                %s341 = sphi %s331, %s350
                %s342 = sphi %s333, %s351
              $region58: #{basic_block_split_forward.6} parent=47 // loop_header_branch
                %339 = sbr.rel (%p336) target = $region62
              $region59: #{basic_block_split_forward.6} parent=47 // loop_body
                %v343 = vld [vmem:[%s341] sm:$0xff]
                %344 = vst [vmem:[%s342] sm:$0xff] %v343
                %s345 = sadd.s32 1, %s340
                %p346 = scmp.ge.s32.totalorder %s345, %s328
                %s347 = scalar_select %p346, 0, %s345
                %s348 = smul.u32 %s347, 8
                %s349 = smul.u32 %s347, 8
                %s350 = scalar_lea.vmem %s331, %s348 [#allocation2]
                %s351 = scalar_lea.vmem %s333, %s349
              $region60: #{basic_block_split_forward.6} parent=47 // loop_footer
                %s337 = sadd.s32 %s335, 1
              $region61: #{basic_block_split_forward.6} parent=47 // loop_footer_branch
                %334 = sbr.rel target = $region57
              $region62: #{basic_block_split_forward.6} parent=47 // loop_exit
                _
            $region48: #{basic_block_split_forward.6} parent=39 // pred_fallthru
              _
          $region40: #{basic_block_split_forward.6} parent=35 // pred_fallthru
            _
          %405 = vnop
        $region36: #{basic_block_split_forward.6} parent=31 // pred_fallthru
          _
        // Predicated region
        $region85: #{basic_block_split_forward.6} parent=31 // pred_check
          %p406 = pneg %p128
        $region86: #{basic_block_split_forward.6} parent=31 // pred_check_branch
          %408 = sbr.rel (%p406) target = $region88
        $region87: #{basic_block_split_forward.6} parent=31 // pred_region
          %s409 = smul.u32 3, %s16
          %s410 = ssub.s32 5, %s409
          %p411 = scmp.lt.s32.totalorder %s410, 3
          %s412 = scalar_select %p411, %s410, 3
          %s413 = smul.u32 64, %s412
          %p414 = scmp.ne.s32.totalorder 0, %s413
          %s415 = smul.addr %s409, 4
          %s416 = scalar_lea.vmem %s4, %s415
          // Predicated region
          $region89: #{basic_block_split_forward.6} parent=87 // pred_check
            %p417 = pneg %p414
          $region90: #{basic_block_split_forward.6} parent=87 // pred_check_branch
            %419 = sbr.rel (%p417) target = $region92
          $region91: #{basic_block_split_forward.6} parent=87 // pred_region
            // Predicated region
            $region93: #{basic_block_split_forward.6} parent=91 // pred_check
              _
            $region94: #{basic_block_split_forward.6} parent=91 // pred_check_branch
              %421 = sbr.rel target = $region96
            $region95: #{basic_block_split_forward.6} parent=91 // pred_region
              // Predicated region
              $region115: #{basic_block_split_forward.6} parent=95 // pred_check
                _
              $region116: #{basic_block_split_forward.6} parent=95 // pred_check_branch
                %475 = sbr.rel (0) target = $region118
              $region117: #{basic_block_split_forward.6} parent=95 // pred_region
                %s477 = sdiv.u32.pop %s412, 3
                %s478 = srem.u32.pop %s412, 3
                // While loop
                $region119: #{basic_block_split_forward.6} parent=117 // loop_pre_header
                  _
                $region120: #{basic_block_split_forward.6} parent=117 // loop_header
                  %s480 = sphi 0, %s482
                  %p481 = scmp.ge.s32.totalorder %s480, %s477
                  %s485 = sphi 0, %s496
                  %s486 = sphi %s283, %s499
                  %s487 = sphi %s416, %s500
                $region121: #{basic_block_split_forward.6} parent=117 // loop_header_branch
                  %484 = sbr.rel (%p481) target = $region125
                $region122: #{basic_block_split_forward.6} parent=117 // loop_body
                  %v488 = vld [vmem:[%s486] sm:$0xf]
                  %489 = vst [vmem:[%s487] sm:$0xf] %v488
                  %v490 = vld [vmem:[%s486 + $0x4] sm:$0xf]
                  %491 = vst [vmem:[%s487 + $0x4] sm:$0xf] %v490
                  %v492 = vld [vmem:[%s486 + $0x8] sm:$0xf]
                  %493 = vst [vmem:[%s487 + $0x8] sm:$0xf] %v492
                  %s494 = sadd.s32 1, %s485
                  %p495 = scmp.ge.s32.totalorder %s494, %s477
                  %s496 = scalar_select %p495, 0, %s494
                  %s497 = smul.u32 %s496, 12
                  %s498 = smul.u32 %s496, 12
                  %s499 = scalar_lea.vmem %s283, %s497 [#allocation3]
                  %s500 = scalar_lea.vmem %s416, %s498
                $region123: #{basic_block_split_forward.6} parent=117 // loop_footer
                  %s482 = sadd.s32 %s480, 1
                $region124: #{basic_block_split_forward.6} parent=117 // loop_footer_branch
                  %479 = sbr.rel target = $region120
                $region125: #{basic_block_split_forward.6} parent=117 // loop_exit
                  _
                %s501 = sdiv.u32.pop %s412, 3
                %s502 = srem.u32.pop %s412, 3
                %s503 = smul.u32 %s501, 3
                %s504 = smul.u32 4, %s503
                %s505 = scalar_lea.vmem %s283, %s504 [#allocation3]
                %s506 = smul.u32 4, %s503
                %s507 = scalar_lea.vmem %s416, %s506
                // While loop
                $region126: #{basic_block_split_forward.6} parent=117 // loop_pre_header
                  _
                $region127: #{basic_block_split_forward.6} parent=117 // loop_header
                  %s509 = sphi 0, %s511
                  %p510 = scmp.ge.s32.totalorder %s509, %s502
                  %s514 = sphi 0, %s521
                  %s515 = sphi %s505, %s524
                  %s516 = sphi %s507, %s525
                $region128: #{basic_block_split_forward.6} parent=117 // loop_header_branch
                  %513 = sbr.rel (%p510) target = $region132
                $region129: #{basic_block_split_forward.6} parent=117 // loop_body
                  %v517 = vld [vmem:[%s515] sm:$0xf]
                  %518 = vst [vmem:[%s516] sm:$0xf] %v517
                  %s519 = sadd.s32 1, %s514
                  %p520 = scmp.ge.s32.totalorder %s519, %s502
                  %s521 = scalar_select %p520, 0, %s519
                  %s522 = smul.u32 %s521, 4
                  %s523 = smul.u32 %s521, 4
                  %s524 = scalar_lea.vmem %s505, %s522 [#allocation3]
                  %s525 = scalar_lea.vmem %s507, %s523
                $region130: #{basic_block_split_forward.6} parent=117 // loop_footer
                  %s511 = sadd.s32 %s509, 1
                $region131: #{basic_block_split_forward.6} parent=117 // loop_footer_branch
                  %508 = sbr.rel target = $region127
                $region132: #{basic_block_split_forward.6} parent=117 // loop_exit
                  _
              $region118: #{basic_block_split_forward.6} parent=95 // pred_fallthru
                _
            $region96: #{basic_block_split_forward.6} parent=91 // pred_fallthru
              _
            // Predicated region
            $region97: #{basic_block_split_forward.6} parent=91 // pred_check
              _
            $region98: #{basic_block_split_forward.6} parent=91 // pred_check_branch
              %423 = sbr.rel (0) target = $region100
            $region99: #{basic_block_split_forward.6} parent=91 // pred_region
              %s425 = sdiv.u32.pop %s412, 3
              %s426 = srem.u32.pop %s412, 3
              // While loop
              $region101: #{basic_block_split_forward.6} parent=99 // loop_pre_header
                _
              $region102: #{basic_block_split_forward.6} parent=99 // loop_header
                %s428 = sphi 0, %s430
                %p429 = scmp.ge.s32.totalorder %s428, %s425
                %s433 = sphi 0, %s444
                %s434 = sphi %s283, %s447
                %s435 = sphi %s416, %s448
              $region103: #{basic_block_split_forward.6} parent=99 // loop_header_branch
                %432 = sbr.rel (%p429) target = $region107
              $region104: #{basic_block_split_forward.6} parent=99 // loop_body
                %v436 = vld [vmem:[%s434] sm:$0xf]
                %437 = vst [vmem:[%s435] sm:$0xf] %v436
                %v438 = vld [vmem:[%s434 + $0x4] sm:$0xf]
                %439 = vst [vmem:[%s435 + $0x4] sm:$0xf] %v438
                %v440 = vld [vmem:[%s434 + $0x8] sm:$0xf]
                %441 = vst [vmem:[%s435 + $0x8] sm:$0xf] %v440
                %s442 = sadd.s32 1, %s433
                %p443 = scmp.ge.s32.totalorder %s442, %s425
                %s444 = scalar_select %p443, 0, %s442
                %s445 = smul.u32 %s444, 12
                %s446 = smul.u32 %s444, 12
                %s447 = scalar_lea.vmem %s283, %s445 [#allocation3]
                %s448 = scalar_lea.vmem %s416, %s446
              $region105: #{basic_block_split_forward.6} parent=99 // loop_footer
                %s430 = sadd.s32 %s428, 1
              $region106: #{basic_block_split_forward.6} parent=99 // loop_footer_branch
                %427 = sbr.rel target = $region102
              $region107: #{basic_block_split_forward.6} parent=99 // loop_exit
                _
              %s449 = sdiv.u32.pop %s412, 3
              %s450 = srem.u32.pop %s412, 3
              %s451 = smul.u32 %s449, 3
              %s452 = smul.u32 4, %s451
              %s453 = scalar_lea.vmem %s283, %s452 [#allocation3]
              %s454 = smul.u32 4, %s451
              %s455 = scalar_lea.vmem %s416, %s454
              // While loop
              $region108: #{basic_block_split_forward.6} parent=99 // loop_pre_header
                _
              $region109: #{basic_block_split_forward.6} parent=99 // loop_header
                %s457 = sphi 0, %s459
                %p458 = scmp.ge.s32.totalorder %s457, %s450
                %s462 = sphi 0, %s469
                %s463 = sphi %s453, %s472
                %s464 = sphi %s455, %s473
              $region110: #{basic_block_split_forward.6} parent=99 // loop_header_branch
                %461 = sbr.rel (%p458) target = $region114
              $region111: #{basic_block_split_forward.6} parent=99 // loop_body
                %v465 = vld [vmem:[%s463] sm:$0xf]
                %466 = vst [vmem:[%s464] sm:$0xf] %v465
                %s467 = sadd.s32 1, %s462
                %p468 = scmp.ge.s32.totalorder %s467, %s450
                %s469 = scalar_select %p468, 0, %s467
                %s470 = smul.u32 %s469, 4
                %s471 = smul.u32 %s469, 4
                %s472 = scalar_lea.vmem %s453, %s470 [#allocation3]
                %s473 = scalar_lea.vmem %s455, %s471
              $region112: #{basic_block_split_forward.6} parent=99 // loop_footer
                %s459 = sadd.s32 %s457, 1
              $region113: #{basic_block_split_forward.6} parent=99 // loop_footer_branch
                %456 = sbr.rel target = $region109
              $region114: #{basic_block_split_forward.6} parent=99 // loop_exit
                _
            $region100: #{basic_block_split_forward.6} parent=91 // pred_fallthru
              _
          $region92: #{basic_block_split_forward.6} parent=87 // pred_fallthru
            _
          %526 = vnop
        $region88: #{basic_block_split_forward.6} parent=31 // pred_fallthru
          _
      $region32: #{basic_block_split_forward.6} parent=5 // pred_fallthru
        _
      %p527 = scmp.le.s32.totalorder 2, %s11
      // Predicated region
      $region133: #{basic_block_split_forward.6} parent=5 // pred_check
        %p528 = pneg %p527
      $region134: #{basic_block_split_forward.6} parent=5 // pred_check_branch
        %530 = sbr.rel (%p528) target = $region136
      $region135: #{basic_block_split_forward.6} parent=5 // pred_region
        %s531 = ssub.s32 %s11, 2
        // Predicated region
        $region137: #{basic_block_split_forward.6} parent=135 // pred_check
          %p532 = pneg %p108
        $region138: #{basic_block_split_forward.6} parent=135 // pred_check_branch
          %534 = sbr.rel (%p532) target = $region140
        $region139: #{basic_block_split_forward.6} parent=135 // pred_region
          %s535 = sand.u32 %s93, 1
          %s536 = sand.u32 %s93, 1
          %s537 = smul.addr %s536, 24
          %s538 = scalar_lea.vmem [#allocation2], %s537
        $region140: #{basic_block_split_forward.6} parent=135 // pred_fallthru
          _
        // Predicated region
        $region141: #{basic_block_split_forward.6} parent=135 // pred_check
          %p539 = pneg %p134
        $region142: #{basic_block_split_forward.6} parent=135 // pred_check_branch
          %541 = sbr.rel (%p539) target = $region144
        $region143: #{basic_block_split_forward.6} parent=135 // pred_region
          %s542 = sand.u32 %s119, 1
          %s543 = sand.u32 %s119, 1
          %s544 = smul.addr %s543, 12
          %s545 = scalar_lea.vmem [#allocation3], %s544
        $region144: #{basic_block_split_forward.6} parent=135 // pred_fallthru
          _
      $region136: #{basic_block_split_forward.6} parent=5 // pred_fallthru
        _
    $region6: #{basic_block_split_forward.6} parent=1 // loop_footer
      %s15 = sadd.s32 1, %s11
    $region7: #{basic_block_split_forward.6} parent=1 // loop_footer_branch
      %10 = sbr.rel target = $region3
    $region8: #{basic_block_split_forward.6} parent=1 // loop_exit
      _

// kernel: basic_block_split_forward.9
$region0: #{basic_block_split_forward.9}
  #allocation0 [shape = 'u32[]', space=smem, size = 0x4, offset = 0x4, fixed_abs, tag = 'smem constant byte address 0x4 - core index']
  #allocation1 [shape = 'u32[144,128]{1,0:T(1,128)}', space=vmem, size = 0x12000, scoped, tag = 'internal scratch']
  %s0 = inlined_call_operand.vmem [shape: f32[36,128], index: 0, kind: input, shape index: {}]
  %s1 = inlined_call_operand.vmem [shape: f32[1,128], index: 1, kind: input, shape index: {}]
  %s2 = inlined_call_operand.vmem [shape: f32[1,128], index: 2, kind: input, shape index: {}]
  %s3 = inlined_call_operand.vmem [shape: f32[36,128], index: 3, kind: input, shape index: {}]
  %s4 = inlined_call_operand.vmem [shape: f32[1,128], index: 4, kind: input, shape index: {}]
  %s5 = inlined_call_operand.vmem [shape: f32[1,128], index: 5, kind: input, shape index: {}]
  %s6 = inlined_call_operand.vmem [shape: f32[36,128], index: 6, kind: output, shape index: {0}]
  %s7 = inlined_call_operand.vmem [shape: f32[36,128], index: 7, kind: output, shape index: {1}]
  %s8 = inlined_call_operand.vmem [shape: f32[36,128], index: 8, kind: output, shape index: {2}]
  %9 = xla_tuple %s6, %s7, %s8
  %s10 = sld [smem:[#allocation0]]
  $region217: #{basic_block_split_forward.9} parent=0
    _
  %s12 = ssub.s32 1, %s10
  %s13 = scalar_select 0, %s12, %s10
  $region1: #{basic_block_split_forward.9} parent=0
    #allocation2 [shape = 'u8[24576]{0}', space=vmem, size = 0x6000, scoped, tag = 'output window, operand 0']
    #allocation3 [shape = 'u8[24576]{0}', space=vmem, size = 0x6000, scoped, tag = 'output window, operand 1']
    #allocation4 [shape = 'u8[24576]{0}', space=vmem, size = 0x6000, scoped, tag = 'output window, operand 2']
    loop: start=0, step=1, limit=4
    $region2: #{basic_block_split_forward.9} parent=1 // loop_pre_header
      _
    $region3: #{basic_block_split_forward.9} parent=1 // loop_header
      %s15 = sphi 0, %s19
      %p16 = scmp.ge.s32.totalorder %s15, 4
      %s25 = sphi 0, %s27
      %s28 = sphi 0, %s25
      %s29 = sphi 0, %s28
      %s45 = sphi 0, %s29
      %s49 = sphi 0, %s49
      %s51 = sphi 0, %s49
      %s52 = sphi 0, %s51
      %s66 = sphi 0, %s52
      %s70 = sphi 0, %s70
      %s72 = sphi 0, %s70
      %s73 = sphi 0, %s72
      %s87 = sphi 0, %s73
      %s93 = sphi 0, %s95
      %s96 = sphi 0, %s93
      %s97 = sphi 0, %s96
      %s113 = sphi 0, %s97
      %s117 = sphi 0, %s117
      %s119 = sphi 0, %s117
      %s120 = sphi 0, %s119
      %s134 = sphi 0, %s120
      %s138 = sphi 0, %s138
      %s140 = sphi 0, %s138
      %s141 = sphi 0, %s140
      %s155 = sphi 0, %s141
      %s161 = sphi 0, %s163
      %s164 = sphi 0, %s161
      %s165 = sphi 0, %s164
      %s181 = sphi 0, %s165
      %s187 = sphi 0, %s189
      %s190 = sphi 0, %s187
      %s191 = sphi 0, %s190
      %s207 = sphi 0, %s191
      %s213 = sphi 0, %s215
      %s216 = sphi 0, %s213
      %s217 = sphi 0, %s216
      %s233 = sphi 0, %s217
    $region4: #{basic_block_split_forward.9} parent=1 // loop_header_branch
      %18 = sbr.rel (%p16) target = $region8
    $region5: #{basic_block_split_forward.9} parent=1 // loop_body
      %s20 = ssub.s32 %s15, 1
      %s21 = ssub.s32 %s15, 2
      %s22 = sadd.s32 %s15, 1
      %s23 = ssub.s32 %s15, %s22
      %p24 = scmp.eq.s32.totalorder %s23, 0
      %s26 = sadd.s32 %s25, 1
      %s27 = scalar_select %p24, %s25, %s26
      %p30 = pneg %p24
      %p31 = scmp.eq.s32.totalorder %s15, 1
      %p32 = por %p30, %p31
      %p33 = scmp.ne.s32.totalorder %s25, %s28
      %p34 = scmp.eq.s32.totalorder %s15, 0
      %p35 = por %p33, %p34
      %p36 = scmp.ne.s32.totalorder %s25, %s28
      %p37 = scmp.eq.s32.totalorder %s20, 1
      %p38 = por %p36, %p37
      %p39 = scmp.ne.s32.totalorder %s28, %s29
      %p40 = scmp.eq.s32.totalorder %s20, 0
      %p41 = por %p39, %p40
      %p42 = scmp.ne.s32.totalorder %s28, %s29
      %p43 = scmp.eq.s32.totalorder %s21, 1
      %p44 = por %p42, %p43
      %p46 = scmp.ne.s32.totalorder %s29, %s45
      %p47 = scmp.eq.s32.totalorder %s21, 0
      %p48 = por %p46, %p47
      %s50 = sadd.s32 %s49, 1
      %p53 = scmp.eq.s32.totalorder %s15, 1
      %p54 = scmp.ne.s32.totalorder %s49, %s51
      %p55 = scmp.eq.s32.totalorder %s15, 0
      %p56 = por %p54, %p55
      %p57 = scmp.ne.s32.totalorder %s49, %s51
      %p58 = scmp.eq.s32.totalorder %s20, 1
      %p59 = por %p57, %p58
      %p60 = scmp.ne.s32.totalorder %s51, %s52
      %p61 = scmp.eq.s32.totalorder %s20, 0
      %p62 = por %p60, %p61
      %p63 = scmp.ne.s32.totalorder %s51, %s52
      %p64 = scmp.eq.s32.totalorder %s21, 1
      %p65 = por %p63, %p64
      %p67 = scmp.ne.s32.totalorder %s52, %s66
      %p68 = scmp.eq.s32.totalorder %s21, 0
      %p69 = por %p67, %p68
      %s71 = sadd.s32 %s70, 1
      %p74 = scmp.eq.s32.totalorder %s15, 1
      %p75 = scmp.ne.s32.totalorder %s70, %s72
      %p76 = scmp.eq.s32.totalorder %s15, 0
      %p77 = por %p75, %p76
      %p78 = scmp.ne.s32.totalorder %s70, %s72
      %p79 = scmp.eq.s32.totalorder %s20, 1
      %p80 = por %p78, %p79
      %p81 = scmp.ne.s32.totalorder %s72, %s73
      %p82 = scmp.eq.s32.totalorder %s20, 0
      %p83 = por %p81, %p82
      %p84 = scmp.ne.s32.totalorder %s72, %s73
      %p85 = scmp.eq.s32.totalorder %s21, 1
      %p86 = por %p84, %p85
      %p88 = scmp.ne.s32.totalorder %s73, %s87
      %p89 = scmp.eq.s32.totalorder %s21, 0
      %p90 = por %p88, %p89
      %s91 = ssub.s32 %s15, %s22
      %p92 = scmp.eq.s32.totalorder %s91, 0
      %s94 = sadd.s32 %s93, 1
      %s95 = scalar_select %p92, %s93, %s94
      %p98 = pneg %p92
      %p99 = scmp.eq.s32.totalorder %s15, 1
      %p100 = por %p98, %p99
      %p101 = scmp.ne.s32.totalorder %s93, %s96
      %p102 = scmp.eq.s32.totalorder %s15, 0
      %p103 = por %p101, %p102
      %p104 = scmp.ne.s32.totalorder %s93, %s96
      %p105 = scmp.eq.s32.totalorder %s20, 1
      %p106 = por %p104, %p105
      %p107 = scmp.ne.s32.totalorder %s96, %s97
      %p108 = scmp.eq.s32.totalorder %s20, 0
      %p109 = por %p107, %p108
      %p110 = scmp.ne.s32.totalorder %s96, %s97
      %p111 = scmp.eq.s32.totalorder %s21, 1
      %p112 = por %p110, %p111
      %p114 = scmp.ne.s32.totalorder %s97, %s113
      %p115 = scmp.eq.s32.totalorder %s21, 0
      %p116 = por %p114, %p115
      %s118 = sadd.s32 %s117, 1
      %p121 = scmp.eq.s32.totalorder %s15, 1
      %p122 = scmp.ne.s32.totalorder %s117, %s119
      %p123 = scmp.eq.s32.totalorder %s15, 0
      %p124 = por %p122, %p123
      %p125 = scmp.ne.s32.totalorder %s117, %s119
      %p126 = scmp.eq.s32.totalorder %s20, 1
      %p127 = por %p125, %p126
      %p128 = scmp.ne.s32.totalorder %s119, %s120
      %p129 = scmp.eq.s32.totalorder %s20, 0
      %p130 = por %p128, %p129
      %p131 = scmp.ne.s32.totalorder %s119, %s120
      %p132 = scmp.eq.s32.totalorder %s21, 1
      %p133 = por %p131, %p132
      %p135 = scmp.ne.s32.totalorder %s120, %s134
      %p136 = scmp.eq.s32.totalorder %s21, 0
      %p137 = por %p135, %p136
      %s139 = sadd.s32 %s138, 1
      %p142 = scmp.eq.s32.totalorder %s15, 1
      %p143 = scmp.ne.s32.totalorder %s138, %s140
      %p144 = scmp.eq.s32.totalorder %s15, 0
      %p145 = por %p143, %p144
      %p146 = scmp.ne.s32.totalorder %s138, %s140
      %p147 = scmp.eq.s32.totalorder %s20, 1
      %p148 = por %p146, %p147
      %p149 = scmp.ne.s32.totalorder %s140, %s141
      %p150 = scmp.eq.s32.totalorder %s20, 0
      %p151 = por %p149, %p150
      %p152 = scmp.ne.s32.totalorder %s140, %s141
      %p153 = scmp.eq.s32.totalorder %s21, 1
      %p154 = por %p152, %p153
      %p156 = scmp.ne.s32.totalorder %s141, %s155
      %p157 = scmp.eq.s32.totalorder %s21, 0
      %p158 = por %p156, %p157
      %s159 = ssub.s32 %s15, %s22
      %p160 = scmp.eq.s32.totalorder %s159, 0
      %s162 = sadd.s32 %s161, 1
      %s163 = scalar_select %p160, %s161, %s162
      %p166 = pneg %p160
      %p167 = scmp.eq.s32.totalorder %s15, 1
      %p168 = por %p166, %p167
      %p169 = scmp.ne.s32.totalorder %s161, %s164
      %p170 = scmp.eq.s32.totalorder %s15, 0
      %p171 = por %p169, %p170
      %p172 = scmp.ne.s32.totalorder %s161, %s164
      %p173 = scmp.eq.s32.totalorder %s20, 1
      %p174 = por %p172, %p173
      %p175 = scmp.ne.s32.totalorder %s164, %s165
      %p176 = scmp.eq.s32.totalorder %s20, 0
      %p177 = por %p175, %p176
      %p178 = scmp.ne.s32.totalorder %s164, %s165
      %p179 = scmp.eq.s32.totalorder %s21, 1
      %p180 = por %p178, %p179
      %p182 = scmp.ne.s32.totalorder %s165, %s181
      %p183 = scmp.eq.s32.totalorder %s21, 0
      %p184 = por %p182, %p183
      %s185 = ssub.s32 %s15, %s22
      %p186 = scmp.eq.s32.totalorder %s185, 0
      %s188 = sadd.s32 %s187, 1
      %s189 = scalar_select %p186, %s187, %s188
      %p192 = pneg %p186
      %p193 = scmp.eq.s32.totalorder %s15, 1
      %p194 = por %p192, %p193
      %p195 = scmp.ne.s32.totalorder %s187, %s190
      %p196 = scmp.eq.s32.totalorder %s15, 0
      %p197 = por %p195, %p196
      %p198 = scmp.ne.s32.totalorder %s187, %s190
      %p199 = scmp.eq.s32.totalorder %s20, 1
      %p200 = por %p198, %p199
      %p201 = scmp.ne.s32.totalorder %s190, %s191
      %p202 = scmp.eq.s32.totalorder %s20, 0
      %p203 = por %p201, %p202
      %p204 = scmp.ne.s32.totalorder %s190, %s191
      %p205 = scmp.eq.s32.totalorder %s21, 1
      %p206 = por %p204, %p205
      %p208 = scmp.ne.s32.totalorder %s191, %s207
      %p209 = scmp.eq.s32.totalorder %s21, 0
      %p210 = por %p208, %p209
      %s211 = ssub.s32 %s15, %s22
      %p212 = scmp.eq.s32.totalorder %s211, 0
      %s214 = sadd.s32 %s213, 1
      %s215 = scalar_select %p212, %s213, %s214
      %p218 = pneg %p212
      %p219 = scmp.eq.s32.totalorder %s15, 1
      %p220 = por %p218, %p219
      %p221 = scmp.ne.s32.totalorder %s213, %s216
      %p222 = scmp.eq.s32.totalorder %s15, 0
      %p223 = por %p221, %p222
      %p224 = scmp.ne.s32.totalorder %s213, %s216
      %p225 = scmp.eq.s32.totalorder %s20, 1
      %p226 = por %p224, %p225
      %p227 = scmp.ne.s32.totalorder %s216, %s217
      %p228 = scmp.eq.s32.totalorder %s20, 0
      %p229 = por %p227, %p228
      %p230 = scmp.ne.s32.totalorder %s216, %s217
      %p231 = scmp.eq.s32.totalorder %s21, 1
      %p232 = por %p230, %p231
      %p234 = scmp.ne.s32.totalorder %s217, %s233
      %p235 = scmp.eq.s32.totalorder %s21, 0
      %p236 = por %p234, %p235
      %p237 = scmp.le.s32.totalorder 1, %s15
      %p238 = scmp.lt.s32.totalorder %s15, 3
      %p239 = pnand %p237, %p238
      %p240 = pneg %p239
      // Predicated region
      $region9: #{basic_block_split_forward.9} parent=5 // pred_check
        _
      $region10: #{basic_block_split_forward.9} parent=5 // pred_check_branch
        %242 = sbr.rel (%p239) target = $region12
      $region11: #{basic_block_split_forward.9} parent=5 // pred_region
        %s243 = ssub.s32 %s15, 1
        // Predicated region
        $region13: #{basic_block_split_forward.9} parent=11 // pred_check
          %p244 = pneg %p62
        $region14: #{basic_block_split_forward.9} parent=11 // pred_check_branch
          %246 = sbr.rel (%p244) target = $region16
        $region15: #{basic_block_split_forward.9} parent=11 // pred_region
          _
        $region16: #{basic_block_split_forward.9} parent=11 // pred_fallthru
          _
        // Predicated region
        $region17: #{basic_block_split_forward.9} parent=11 // pred_check
          %p247 = pneg %p83
        $region18: #{basic_block_split_forward.9} parent=11 // pred_check_branch
          %249 = sbr.rel (%p247) target = $region20
        $region19: #{basic_block_split_forward.9} parent=11 // pred_region
          _
        $region20: #{basic_block_split_forward.9} parent=11 // pred_fallthru
          _
        // Predicated region
        $region21: #{basic_block_split_forward.9} parent=11 // pred_check
          %p250 = pneg %p130
        $region22: #{basic_block_split_forward.9} parent=11 // pred_check_branch
          %252 = sbr.rel (%p250) target = $region24
        $region23: #{basic_block_split_forward.9} parent=11 // pred_region
          _
        $region24: #{basic_block_split_forward.9} parent=11 // pred_fallthru
          _
        // Predicated region
        $region25: #{basic_block_split_forward.9} parent=11 // pred_check
          %p253 = pneg %p151
        $region26: #{basic_block_split_forward.9} parent=11 // pred_check_branch
          %255 = sbr.rel (%p253) target = $region28
        $region27: #{basic_block_split_forward.9} parent=11 // pred_region
          _
        $region28: #{basic_block_split_forward.9} parent=11 // pred_fallthru
          _
      $region12: #{basic_block_split_forward.9} parent=5 // pred_fallthru
        _
      %p256 = scmp.lt.s32.totalorder %s15, 2
      // Predicated region
      $region29: #{basic_block_split_forward.9} parent=5 // pred_check
        %p257 = pneg %p256
      $region30: #{basic_block_split_forward.9} parent=5 // pred_check_branch
        %259 = sbr.rel (%p257) target = $region32
      $region31: #{basic_block_split_forward.9} parent=5 // pred_region
        // Predicated region
        $region33: #{basic_block_split_forward.9} parent=31 // pred_check
          %p260 = pneg %p35
        $region34: #{basic_block_split_forward.9} parent=31 // pred_check_branch
          %262 = sbr.rel (%p260) target = $region36
        $region35: #{basic_block_split_forward.9} parent=31 // pred_region
          %s263 = smul.u32 3, %s15
          %s264 = ssub.s32 5, %s263
          %p265 = scmp.lt.s32.totalorder %s264, 3
          %s266 = scalar_select %p265, %s264, 3
          %s267 = smul.u32 128, %s266
          %p268 = scmp.lt.s32.totalorder %s263, 4
          %s269 = scalar_select %p268, %s263, 4
          %s270 = smul.addr %s269, 8
          %s271 = scalar_lea.vmem %s0, %s270
          %s272 = smul.u32 3, %s15
          %s273 = ssub.s32 5, %s272
          %p274 = scmp.lt.s32.totalorder %s273, 3
          %s275 = scalar_select %p274, %s273, 3
          %s276 = smul.u32 128, %s275
        $region36: #{basic_block_split_forward.9} parent=31 // pred_fallthru
          _
        // Predicated region
        $region37: #{basic_block_split_forward.9} parent=31 // pred_check
          %p277 = pneg %p103
        $region38: #{basic_block_split_forward.9} parent=31 // pred_check_branch
          %279 = sbr.rel (%p277) target = $region40
        $region39: #{basic_block_split_forward.9} parent=31 // pred_region
          %s280 = smul.u32 3, %s15
          %s281 = ssub.s32 5, %s280
          %p282 = scmp.lt.s32.totalorder %s281, 3
          %s283 = scalar_select %p282, %s281, 3
          %s284 = smul.u32 128, %s283
          %p285 = scmp.lt.s32.totalorder %s280, 4
          %s286 = scalar_select %p285, %s280, 4
          %s287 = smul.addr %s286, 8
          %s288 = scalar_lea.vmem %s3, %s287
          %s289 = smul.u32 3, %s15
          %s290 = ssub.s32 5, %s289
          %p291 = scmp.lt.s32.totalorder %s290, 3
          %s292 = scalar_select %p291, %s290, 3
          %s293 = smul.u32 128, %s292
        $region40: #{basic_block_split_forward.9} parent=31 // pred_fallthru
          _
      $region32: #{basic_block_split_forward.9} parent=5 // pred_fallthru
        _
      %p294 = scmp.le.s32.totalorder 1, %s15
      %p295 = scmp.lt.s32.totalorder %s15, 3
      %p296 = pnand %p294, %p295
      %p297 = pneg %p296
      // Predicated region
      $region41: #{basic_block_split_forward.9} parent=5 // pred_check
        _
      $region42: #{basic_block_split_forward.9} parent=5 // pred_check_branch
        %299 = sbr.rel (%p296) target = $region44
      $region43: #{basic_block_split_forward.9} parent=5 // pred_region
        %s300 = ssub.s32 %s15, 1
        %s301 = smul.u32 3, %s20
        %s302 = ssub.s32 5, %s301
        %p303 = scmp.lt.s32.totalorder %s302, 3
        %s304 = scalar_select %p303, %s302, 3
        %s305 = smul.u32 128, %s304
        %p306 = scmp.lt.s32.totalorder %s301, 4
        %s307 = scalar_select %p306, %s301, 4
        %s308 = smul.addr %s307, 8
        %s309 = scalar_lea.vmem %s0, %s308
        %p310 = pneg %p41
        %p311 = pneg %p38
        %p312 = pneg %p62
        %p313 = pneg %p59
        %p314 = pneg %p83
        %p315 = pneg %p80
        %s316 = smul.u32 3, %s20
        %s317 = ssub.s32 5, %s316
        %p318 = scmp.lt.s32.totalorder %s317, 3
        %s319 = scalar_select %p318, %s317, 3
        %s320 = smul.u32 128, %s319
        %p321 = scmp.lt.s32.totalorder %s316, 4
        %s322 = scalar_select %p321, %s316, 4
        %s323 = smul.addr %s322, 8
        %s324 = scalar_lea.vmem %s3, %s323
        %p325 = pneg %p109
        %p326 = pneg %p106
        %p327 = pneg %p130
        %p328 = pneg %p127
        %p329 = pneg %p151
        %p330 = pneg %p148
        %p331 = pneg %p177
        %p332 = pneg %p174
        %s333 = sand.u32 %s164, 1
        %s334 = sand.u32 %s164, 1
        %s335 = smul.addr %s334, 24
        %s336 = scalar_lea.vmem [#allocation2], %s335
        %p337 = pneg %p203
        %p338 = pneg %p200
        %s339 = sand.u32 %s190, 1
        %s340 = sand.u32 %s190, 1
        %s341 = smul.addr %s340, 24
        %s342 = scalar_lea.vmem [#allocation3], %s341
        %p343 = pneg %p229
        %p344 = pneg %p226
        %s345 = sand.u32 %s216, 1
        %s346 = sand.u32 %s216, 1
        %s347 = smul.addr %s346, 24
        %s348 = scalar_lea.vmem [#allocation4], %s347
        %s349 = smul.u32 3, %s20
        %s350 = ssub.s32 5, %s349
        %p351 = scmp.lt.s32.totalorder %s350, 3
        %s352 = scalar_select %p351, %s350, 3
        %s353 = smul.u32 128, %s352
        %p354 = scmp.lt.s32.totalorder %s349, 4
        %s355 = scalar_select %p354, %s349, 4
        %s356 = smul.addr %s355, 8
        %s357 = scalar_lea.vmem %s0, %s356
        %s358 = smul.u32 3, %s20
        %s359 = ssub.s32 5, %s358
        %p360 = scmp.lt.s32.totalorder %s359, 3
        %s361 = scalar_select %p360, %s359, 3
        %s362 = smul.u32 128, %s361
        %s363 = smul.u32 3, %s20
        %s364 = ssub.s32 5, %s363
        %p365 = scmp.lt.s32.totalorder %s364, 3
        %s366 = scalar_select %p365, %s364, 3
        %s367 = smul.u32 128, %s366
        %p368 = scmp.lt.s32.totalorder %s363, 4
        %s369 = scalar_select %p368, %s363, 4
        %s370 = smul.addr %s369, 8
        %s371 = scalar_lea.vmem %s3, %s370
        %s372 = smul.u32 3, %s20
        %s373 = ssub.s32 5, %s372
        %p374 = scmp.lt.s32.totalorder %s373, 3
        %s375 = scalar_select %p374, %s373, 3
        %s376 = smul.u32 128, %s375
        %s377 = smul.u32 3, %s20
        %s378 = ssub.s32 5, %s377
        %p379 = scmp.lt.s32.totalorder %s378, 3
        %s380 = scalar_select %p379, %s378, 3
        %s381 = smul.u32 128, %s380
        %s382 = smul.u32 3, %s20
        %s383 = ssub.s32 5, %s382
        %p384 = scmp.lt.s32.totalorder %s383, 3
        %s385 = scalar_select %p384, %s383, 3
        %s386 = smul.u32 128, %s385
        %s387 = smul.u32 3, %s20
        %s388 = ssub.s32 5, %s387
        %p389 = scmp.lt.s32.totalorder %s388, 3
        %s390 = scalar_select %p389, %s388, 3
        %s391 = smul.u32 128, %s390
        %v392 = vld [vmem:[%s357] sm:$0xff]
        %v393 = vld [vmem:[%s357 + $0x8] sm:$0xff]
        %v394 = vld [vmem:[%s357 + $0x10] sm:$0xff]
        %v395 = vld [vmem:[%s1] sm:$0x1]
        %v397 = vlaneseq
        %v398 = vshrl.u32 %v397, 7
        %v399 = vsub.s32 0, %v398
        %v400 = vrot.slane %v395, %v399
        %v402 = vmul.f32 %v392, %v400
        %v403 = vmul.f32 %v393, %v400
        %v404 = vmul.f32 %v394, %v400
        %v405 = vld [vmem:[%s2] sm:$0x1]
        %v407 = vlaneseq
        %v408 = vshrl.u32 %v407, 7
        %v409 = vsub.s32 0, %v408
        %v410 = vrot.slane %v405, %v409
        %v412 = vadd.f32 %v402, %v410
        %v413 = vadd.f32 %v403, %v410
        %v414 = vadd.f32 %v404, %v410
        %v415 = vld [vmem:[%s371] sm:$0xff]
        %v416 = vld [vmem:[%s371 + $0x8] sm:$0xff]
        %v417 = vld [vmem:[%s371 + $0x10] sm:$0xff]
        %v418 = vld [vmem:[%s4] sm:$0x1]
        %v420 = vlaneseq
        %v421 = vshrl.u32 %v420, 7
        %v422 = vsub.s32 0, %v421
        %v423 = vrot.slane %v418, %v422
        %v425 = vmul.f32 %v415, %v423
        %v426 = vmul.f32 %v416, %v423
        %v427 = vmul.f32 %v417, %v423
        %v428 = vld [vmem:[%s5] sm:$0x1]
        %v430 = vlaneseq
        %v431 = vshrl.u32 %v430, 7
        %v432 = vsub.s32 0, %v431
        %v433 = vrot.slane %v428, %v432
        %v435 = vadd.f32 %v425, %v433
        %v436 = vadd.f32 %v426, %v433
        %v437 = vadd.f32 %v427, %v433
        %v438 = vadd.f32 %v412, %v435
        %v439 = vadd.f32 %v413, %v436
        %v440 = vadd.f32 %v414, %v437
        %441 = vst [vmem:[%s336] sm:$0xff] %v412
        %442 = vst [vmem:[%s336 + $0x8] sm:$0xff] %v413
        %443 = vst [vmem:[%s336 + $0x10] sm:$0xff] %v414
        %444 = vst [vmem:[%s342] sm:$0xff] %v438
        %445 = vst [vmem:[%s342 + $0x8] sm:$0xff] %v439
        %446 = vst [vmem:[%s342 + $0x10] sm:$0xff] %v440
        %v447 = vmax.f32 %v438, 0.0
        %v448 = vmax.f32 %v439, 0.0
        %v449 = vmax.f32 %v440, 0.0
        %450 = vst [vmem:[%s348] sm:$0xff] %v447
        %451 = vst [vmem:[%s348 + $0x8] sm:$0xff] %v448
        %452 = vst [vmem:[%s348 + $0x10] sm:$0xff] %v449
        %s453 = sand.u32 %s164, 1
        %s454 = sand.u32 %s164, 1
        %s455 = smul.addr %s454, 24
        %s456 = scalar_lea.vmem [#allocation2], %s455
        %s457 = sand.u32 %s190, 1
        %s458 = sand.u32 %s190, 1
        %s459 = smul.addr %s458, 24
        %s460 = scalar_lea.vmem [#allocation3], %s459
        %s461 = sand.u32 %s216, 1
        %s462 = sand.u32 %s216, 1
        %s463 = smul.addr %s462, 24
        %s464 = scalar_lea.vmem [#allocation4], %s463
        // Predicated region
        $region45: #{basic_block_split_forward.9} parent=43 // pred_check
          %p465 = pneg %p174
        $region46: #{basic_block_split_forward.9} parent=43 // pred_check_branch
          %467 = sbr.rel (%p465) target = $region48
        $region47: #{basic_block_split_forward.9} parent=43 // pred_region
          %s468 = smul.u32 3, %s20
          %s469 = ssub.s32 5, %s468
          %p470 = scmp.lt.s32.totalorder %s469, 3
          %s471 = scalar_select %p470, %s469, 3
          %s472 = smul.u32 128, %s471
          %p473 = scmp.ne.s32.totalorder 0, %s472
          %s474 = smul.addr %s468, 8
          %s475 = scalar_lea.vmem %s6, %s474
          // Predicated region
          $region49: #{basic_block_split_forward.9} parent=47 // pred_check
            %p476 = pneg %p473
          $region50: #{basic_block_split_forward.9} parent=47 // pred_check_branch
            %478 = sbr.rel (%p476) target = $region52
          $region51: #{basic_block_split_forward.9} parent=47 // pred_region
            // Predicated region
            $region53: #{basic_block_split_forward.9} parent=51 // pred_check
              _
            $region54: #{basic_block_split_forward.9} parent=51 // pred_check_branch
              %480 = sbr.rel (0) target = $region56
            $region55: #{basic_block_split_forward.9} parent=51 // pred_region
              // Predicated region
              $region75: #{basic_block_split_forward.9} parent=55 // pred_check
                _
              $region76: #{basic_block_split_forward.9} parent=55 // pred_check_branch
                %534 = sbr.rel (0) target = $region78
              $region77: #{basic_block_split_forward.9} parent=55 // pred_region
                %s535 = sdiv.u32.pop %s471, 3
                %s536 = srem.u32.pop %s471, 3
                // While loop
                $region79: #{basic_block_split_forward.9} parent=77 // loop_pre_header
                  _
                $region80: #{basic_block_split_forward.9} parent=77 // loop_header
                  %s538 = sphi 0, %s540
                  %p539 = scmp.ge.s32.totalorder %s538, %s535
                  %s543 = sphi 0, %s554
                  %s544 = sphi %s456, %s557
                  %s545 = sphi %s475, %s558
                $region81: #{basic_block_split_forward.9} parent=77 // loop_header_branch
                  %542 = sbr.rel (%p539) target = $region85
                $region82: #{basic_block_split_forward.9} parent=77 // loop_body
                  %v546 = vld [vmem:[%s544] sm:$0xff]
                  %547 = vst [vmem:[%s545] sm:$0xff] %v546
                  %v548 = vld [vmem:[%s544 + $0x8] sm:$0xff]
                  %549 = vst [vmem:[%s545 + $0x8] sm:$0xff] %v548
                  %v550 = vld [vmem:[%s544 + $0x10] sm:$0xff]
                  %551 = vst [vmem:[%s545 + $0x10] sm:$0xff] %v550
                  %s552 = sadd.s32 1, %s543
                  %p553 = scmp.ge.s32.totalorder %s552, %s535
                  %s554 = scalar_select %p553, 0, %s552
                  %s555 = smul.u32 %s554, 24
                  %s556 = smul.u32 %s554, 24
                  %s557 = scalar_lea.vmem %s456, %s555 [#allocation2]
                  %s558 = scalar_lea.vmem %s475, %s556
                $region83: #{basic_block_split_forward.9} parent=77 // loop_footer
                  %s540 = sadd.s32 %s538, 1
                $region84: #{basic_block_split_forward.9} parent=77 // loop_footer_branch
                  %537 = sbr.rel target = $region80
                $region85: #{basic_block_split_forward.9} parent=77 // loop_exit
                  _
                %s559 = sdiv.u32.pop %s471, 3
                %s560 = srem.u32.pop %s471, 3
                %s561 = smul.u32 %s559, 3
                %s562 = smul.u32 8, %s561
                %s563 = scalar_lea.vmem %s456, %s562 [#allocation2]
                %s564 = smul.u32 8, %s561
                %s565 = scalar_lea.vmem %s475, %s564
                // While loop
                $region86: #{basic_block_split_forward.9} parent=77 // loop_pre_header
                  _
                $region87: #{basic_block_split_forward.9} parent=77 // loop_header
                  %s567 = sphi 0, %s569
                  %p568 = scmp.ge.s32.totalorder %s567, %s560
                  %s572 = sphi 0, %s579
                  %s573 = sphi %s563, %s582
                  %s574 = sphi %s565, %s583
                $region88: #{basic_block_split_forward.9} parent=77 // loop_header_branch
                  %571 = sbr.rel (%p568) target = $region92
                $region89: #{basic_block_split_forward.9} parent=77 // loop_body
                  %v575 = vld [vmem:[%s573] sm:$0xff]
                  %576 = vst [vmem:[%s574] sm:$0xff] %v575
                  %s577 = sadd.s32 1, %s572
                  %p578 = scmp.ge.s32.totalorder %s577, %s560
                  %s579 = scalar_select %p578, 0, %s577
                  %s580 = smul.u32 %s579, 8
                  %s581 = smul.u32 %s579, 8
                  %s582 = scalar_lea.vmem %s563, %s580 [#allocation2]
                  %s583 = scalar_lea.vmem %s565, %s581
                $region90: #{basic_block_split_forward.9} parent=77 // loop_footer
                  %s569 = sadd.s32 %s567, 1
                $region91: #{basic_block_split_forward.9} parent=77 // loop_footer_branch
                  %566 = sbr.rel target = $region87
                $region92: #{basic_block_split_forward.9} parent=77 // loop_exit
                  _
              $region78: #{basic_block_split_forward.9} parent=55 // pred_fallthru
                _
              // Predicated region
              $region93: #{basic_block_split_forward.9} parent=55 // pred_check
                _
              $region94: #{basic_block_split_forward.9} parent=55 // pred_check_branch
                %585 = sbr.rel target = $region96
              $region95: #{basic_block_split_forward.9} parent=55 // pred_region
                _
              $region96: #{basic_block_split_forward.9} parent=55 // pred_fallthru
                _
            $region56: #{basic_block_split_forward.9} parent=51 // pred_fallthru
              _
            // Predicated region
            $region57: #{basic_block_split_forward.9} parent=51 // pred_check
              _
            $region58: #{basic_block_split_forward.9} parent=51 // pred_check_branch
              %482 = sbr.rel target = $region60
            $region59: #{basic_block_split_forward.9} parent=51 // pred_region
              %s484 = sdiv.u32.pop %s471, 3
              %s485 = srem.u32.pop %s471, 3
              // While loop
              $region61: #{basic_block_split_forward.9} parent=59 // loop_pre_header
                _
              $region62: #{basic_block_split_forward.9} parent=59 // loop_header
                %s487 = sphi 0, %s489
                %p488 = scmp.ge.s32.totalorder %s487, %s484
                %s492 = sphi 0, %s503
                %s493 = sphi %s456, %s506
                %s494 = sphi %s475, %s507
              $region63: #{basic_block_split_forward.9} parent=59 // loop_header_branch
                %491 = sbr.rel (%p488) target = $region67
              $region64: #{basic_block_split_forward.9} parent=59 // loop_body
                %v495 = vld [vmem:[%s493] sm:$0xff]
                %496 = vst [vmem:[%s494] sm:$0xff] %v495
                %v497 = vld [vmem:[%s493 + $0x8] sm:$0xff]
                %498 = vst [vmem:[%s494 + $0x8] sm:$0xff] %v497
                %v499 = vld [vmem:[%s493 + $0x10] sm:$0xff]
                %500 = vst [vmem:[%s494 + $0x10] sm:$0xff] %v499
                %s501 = sadd.s32 1, %s492
                %p502 = scmp.ge.s32.totalorder %s501, %s484
                %s503 = scalar_select %p502, 0, %s501
                %s504 = smul.u32 %s503, 24
                %s505 = smul.u32 %s503, 24
                %s506 = scalar_lea.vmem %s456, %s504 [#allocation2]
                %s507 = scalar_lea.vmem %s475, %s505
              $region65: #{basic_block_split_forward.9} parent=59 // loop_footer
                %s489 = sadd.s32 %s487, 1
              $region66: #{basic_block_split_forward.9} parent=59 // loop_footer_branch
                %486 = sbr.rel target = $region62
              $region67: #{basic_block_split_forward.9} parent=59 // loop_exit
                _
              %s508 = sdiv.u32.pop %s471, 3
              %s509 = srem.u32.pop %s471, 3
              %s510 = smul.u32 %s508, 3
              %s511 = smul.u32 8, %s510
              %s512 = scalar_lea.vmem %s456, %s511 [#allocation2]
              %s513 = smul.u32 8, %s510
              %s514 = scalar_lea.vmem %s475, %s513
              // While loop
              $region68: #{basic_block_split_forward.9} parent=59 // loop_pre_header
                _
              $region69: #{basic_block_split_forward.9} parent=59 // loop_header
                %s516 = sphi 0, %s518
                %p517 = scmp.ge.s32.totalorder %s516, %s509
                %s521 = sphi 0, %s528
                %s522 = sphi %s512, %s531
                %s523 = sphi %s514, %s532
              $region70: #{basic_block_split_forward.9} parent=59 // loop_header_branch
                %520 = sbr.rel (%p517) target = $region74
              $region71: #{basic_block_split_forward.9} parent=59 // loop_body
                %v524 = vld [vmem:[%s522] sm:$0xff]
                %525 = vst [vmem:[%s523] sm:$0xff] %v524
                %s526 = sadd.s32 1, %s521
                %p527 = scmp.ge.s32.totalorder %s526, %s509
                %s528 = scalar_select %p527, 0, %s526
                %s529 = smul.u32 %s528, 8
                %s530 = smul.u32 %s528, 8
                %s531 = scalar_lea.vmem %s512, %s529 [#allocation2]
                %s532 = scalar_lea.vmem %s514, %s530
              $region72: #{basic_block_split_forward.9} parent=59 // loop_footer
                %s518 = sadd.s32 %s516, 1
              $region73: #{basic_block_split_forward.9} parent=59 // loop_footer_branch
                %515 = sbr.rel target = $region69
              $region74: #{basic_block_split_forward.9} parent=59 // loop_exit
                _
            $region60: #{basic_block_split_forward.9} parent=51 // pred_fallthru
              _
          $region52: #{basic_block_split_forward.9} parent=47 // pred_fallthru
            _
          %586 = vnop
        $region48: #{basic_block_split_forward.9} parent=43 // pred_fallthru
          _
        // Predicated region
        $region97: #{basic_block_split_forward.9} parent=43 // pred_check
          %p587 = pneg %p200
        $region98: #{basic_block_split_forward.9} parent=43 // pred_check_branch
          %589 = sbr.rel (%p587) target = $region100
        $region99: #{basic_block_split_forward.9} parent=43 // pred_region
          %s590 = smul.u32 3, %s20
          %s591 = ssub.s32 5, %s590
          %p592 = scmp.lt.s32.totalorder %s591, 3
          %s593 = scalar_select %p592, %s591, 3
          %s594 = smul.u32 128, %s593
          %p595 = scmp.ne.s32.totalorder 0, %s594
          %s596 = smul.addr %s590, 8
          %s597 = scalar_lea.vmem %s7, %s596
          // Predicated region
          $region101: #{basic_block_split_forward.9} parent=99 // pred_check
            %p598 = pneg %p595
          $region102: #{basic_block_split_forward.9} parent=99 // pred_check_branch
            %600 = sbr.rel (%p598) target = $region104
          $region103: #{basic_block_split_forward.9} parent=99 // pred_region
            // Predicated region
            $region105: #{basic_block_split_forward.9} parent=103 // pred_check
              _
            $region106: #{basic_block_split_forward.9} parent=103 // pred_check_branch
              %602 = sbr.rel (0) target = $region108
            $region107: #{basic_block_split_forward.9} parent=103 // pred_region
              // Predicated region
              $region127: #{basic_block_split_forward.9} parent=107 // pred_check
                _
              $region128: #{basic_block_split_forward.9} parent=107 // pred_check_branch
                %656 = sbr.rel (0) target = $region130
              $region129: #{basic_block_split_forward.9} parent=107 // pred_region
                %s657 = sdiv.u32.pop %s593, 3
                %s658 = srem.u32.pop %s593, 3
                // While loop
                $region131: #{basic_block_split_forward.9} parent=129 // loop_pre_header
                  _
                $region132: #{basic_block_split_forward.9} parent=129 // loop_header
                  %s660 = sphi 0, %s662
                  %p661 = scmp.ge.s32.totalorder %s660, %s657
                  %s665 = sphi 0, %s676
                  %s666 = sphi %s460, %s679
                  %s667 = sphi %s597, %s680
                $region133: #{basic_block_split_forward.9} parent=129 // loop_header_branch
                  %664 = sbr.rel (%p661) target = $region137
                $region134: #{basic_block_split_forward.9} parent=129 // loop_body
                  %v668 = vld [vmem:[%s666] sm:$0xff]
                  %669 = vst [vmem:[%s667] sm:$0xff] %v668
                  %v670 = vld [vmem:[%s666 + $0x8] sm:$0xff]
                  %671 = vst [vmem:[%s667 + $0x8] sm:$0xff] %v670
                  %v672 = vld [vmem:[%s666 + $0x10] sm:$0xff]
                  %673 = vst [vmem:[%s667 + $0x10] sm:$0xff] %v672
                  %s674 = sadd.s32 1, %s665
                  %p675 = scmp.ge.s32.totalorder %s674, %s657
                  %s676 = scalar_select %p675, 0, %s674
                  %s677 = smul.u32 %s676, 24
                  %s678 = smul.u32 %s676, 24
                  %s679 = scalar_lea.vmem %s460, %s677 [#allocation3]
                  %s680 = scalar_lea.vmem %s597, %s678
                $region135: #{basic_block_split_forward.9} parent=129 // loop_footer
                  %s662 = sadd.s32 %s660, 1
                $region136: #{basic_block_split_forward.9} parent=129 // loop_footer_branch
                  %659 = sbr.rel target = $region132
                $region137: #{basic_block_split_forward.9} parent=129 // loop_exit
                  _
                %s681 = sdiv.u32.pop %s593, 3
                %s682 = srem.u32.pop %s593, 3
                %s683 = smul.u32 %s681, 3
                %s684 = smul.u32 8, %s683
                %s685 = scalar_lea.vmem %s460, %s684 [#allocation3]
                %s686 = smul.u32 8, %s683
                %s687 = scalar_lea.vmem %s597, %s686
                // While loop
                $region138: #{basic_block_split_forward.9} parent=129 // loop_pre_header
                  _
                $region139: #{basic_block_split_forward.9} parent=129 // loop_header
                  %s689 = sphi 0, %s691
                  %p690 = scmp.ge.s32.totalorder %s689, %s682
                  %s694 = sphi 0, %s701
                  %s695 = sphi %s685, %s704
                  %s696 = sphi %s687, %s705
                $region140: #{basic_block_split_forward.9} parent=129 // loop_header_branch
                  %693 = sbr.rel (%p690) target = $region144
                $region141: #{basic_block_split_forward.9} parent=129 // loop_body
                  %v697 = vld [vmem:[%s695] sm:$0xff]
                  %698 = vst [vmem:[%s696] sm:$0xff] %v697
                  %s699 = sadd.s32 1, %s694
                  %p700 = scmp.ge.s32.totalorder %s699, %s682
                  %s701 = scalar_select %p700, 0, %s699
                  %s702 = smul.u32 %s701, 8
                  %s703 = smul.u32 %s701, 8
                  %s704 = scalar_lea.vmem %s685, %s702 [#allocation3]
                  %s705 = scalar_lea.vmem %s687, %s703
                $region142: #{basic_block_split_forward.9} parent=129 // loop_footer
                  %s691 = sadd.s32 %s689, 1
                $region143: #{basic_block_split_forward.9} parent=129 // loop_footer_branch
                  %688 = sbr.rel target = $region139
                $region144: #{basic_block_split_forward.9} parent=129 // loop_exit
                  _
              $region130: #{basic_block_split_forward.9} parent=107 // pred_fallthru
                _
              // Predicated region
              $region145: #{basic_block_split_forward.9} parent=107 // pred_check
                _
              $region146: #{basic_block_split_forward.9} parent=107 // pred_check_branch
                %707 = sbr.rel target = $region148
              $region147: #{basic_block_split_forward.9} parent=107 // pred_region
                _
              $region148: #{basic_block_split_forward.9} parent=107 // pred_fallthru
                _
            $region108: #{basic_block_split_forward.9} parent=103 // pred_fallthru
              _
            // Predicated region
            $region109: #{basic_block_split_forward.9} parent=103 // pred_check
              _
            $region110: #{basic_block_split_forward.9} parent=103 // pred_check_branch
              %604 = sbr.rel target = $region112
            $region111: #{basic_block_split_forward.9} parent=103 // pred_region
              %s606 = sdiv.u32.pop %s593, 3
              %s607 = srem.u32.pop %s593, 3
              // While loop
              $region113: #{basic_block_split_forward.9} parent=111 // loop_pre_header
                _
              $region114: #{basic_block_split_forward.9} parent=111 // loop_header
                %s609 = sphi 0, %s611
                %p610 = scmp.ge.s32.totalorder %s609, %s606
                %s614 = sphi 0, %s625
                %s615 = sphi %s460, %s628
                %s616 = sphi %s597, %s629
              $region115: #{basic_block_split_forward.9} parent=111 // loop_header_branch
                %613 = sbr.rel (%p610) target = $region119
              $region116: #{basic_block_split_forward.9} parent=111 // loop_body
                %v617 = vld [vmem:[%s615] sm:$0xff]
                %618 = vst [vmem:[%s616] sm:$0xff] %v617
                %v619 = vld [vmem:[%s615 + $0x8] sm:$0xff]
                %620 = vst [vmem:[%s616 + $0x8] sm:$0xff] %v619
                %v621 = vld [vmem:[%s615 + $0x10] sm:$0xff]
                %622 = vst [vmem:[%s616 + $0x10] sm:$0xff] %v621
                %s623 = sadd.s32 1, %s614
                %p624 = scmp.ge.s32.totalorder %s623, %s606
                %s625 = scalar_select %p624, 0, %s623
                %s626 = smul.u32 %s625, 24
                %s627 = smul.u32 %s625, 24
                %s628 = scalar_lea.vmem %s460, %s626 [#allocation3]
                %s629 = scalar_lea.vmem %s597, %s627
              $region117: #{basic_block_split_forward.9} parent=111 // loop_footer
                %s611 = sadd.s32 %s609, 1
              $region118: #{basic_block_split_forward.9} parent=111 // loop_footer_branch
                %608 = sbr.rel target = $region114
              $region119: #{basic_block_split_forward.9} parent=111 // loop_exit
                _
              %s630 = sdiv.u32.pop %s593, 3
              %s631 = srem.u32.pop %s593, 3
              %s632 = smul.u32 %s630, 3
              %s633 = smul.u32 8, %s632
              %s634 = scalar_lea.vmem %s460, %s633 [#allocation3]
              %s635 = smul.u32 8, %s632
              %s636 = scalar_lea.vmem %s597, %s635
              // While loop
              $region120: #{basic_block_split_forward.9} parent=111 // loop_pre_header
                _
              $region121: #{basic_block_split_forward.9} parent=111 // loop_header
                %s638 = sphi 0, %s640
                %p639 = scmp.ge.s32.totalorder %s638, %s631
                %s643 = sphi 0, %s650
                %s644 = sphi %s634, %s653
                %s645 = sphi %s636, %s654
              $region122: #{basic_block_split_forward.9} parent=111 // loop_header_branch
                %642 = sbr.rel (%p639) target = $region126
              $region123: #{basic_block_split_forward.9} parent=111 // loop_body
                %v646 = vld [vmem:[%s644] sm:$0xff]
                %647 = vst [vmem:[%s645] sm:$0xff] %v646
                %s648 = sadd.s32 1, %s643
                %p649 = scmp.ge.s32.totalorder %s648, %s631
                %s650 = scalar_select %p649, 0, %s648
                %s651 = smul.u32 %s650, 8
                %s652 = smul.u32 %s650, 8
                %s653 = scalar_lea.vmem %s634, %s651 [#allocation3]
                %s654 = scalar_lea.vmem %s636, %s652
              $region124: #{basic_block_split_forward.9} parent=111 // loop_footer
                %s640 = sadd.s32 %s638, 1
              $region125: #{basic_block_split_forward.9} parent=111 // loop_footer_branch
                %637 = sbr.rel target = $region121
              $region126: #{basic_block_split_forward.9} parent=111 // loop_exit
                _
            $region112: #{basic_block_split_forward.9} parent=103 // pred_fallthru
              _
          $region104: #{basic_block_split_forward.9} parent=99 // pred_fallthru
            _
          %708 = vnop
        $region100: #{basic_block_split_forward.9} parent=43 // pred_fallthru
          _
        // Predicated region
        $region149: #{basic_block_split_forward.9} parent=43 // pred_check
          %p709 = pneg %p226
        $region150: #{basic_block_split_forward.9} parent=43 // pred_check_branch
          %711 = sbr.rel (%p709) target = $region152
        $region151: #{basic_block_split_forward.9} parent=43 // pred_region
          %s712 = smul.u32 3, %s20
          %s713 = ssub.s32 5, %s712
          %p714 = scmp.lt.s32.totalorder %s713, 3
          %s715 = scalar_select %p714, %s713, 3
          %s716 = smul.u32 128, %s715
          %p717 = scmp.ne.s32.totalorder 0, %s716
          %s718 = smul.addr %s712, 8
          %s719 = scalar_lea.vmem %s8, %s718
          // Predicated region
          $region153: #{basic_block_split_forward.9} parent=151 // pred_check
            %p720 = pneg %p717
          $region154: #{basic_block_split_forward.9} parent=151 // pred_check_branch
            %722 = sbr.rel (%p720) target = $region156
          $region155: #{basic_block_split_forward.9} parent=151 // pred_region
            // Predicated region
            $region157: #{basic_block_split_forward.9} parent=155 // pred_check
              _
            $region158: #{basic_block_split_forward.9} parent=155 // pred_check_branch
              %724 = sbr.rel (0) target = $region160
            $region159: #{basic_block_split_forward.9} parent=155 // pred_region
              // Predicated region
              $region179: #{basic_block_split_forward.9} parent=159 // pred_check
                _
              $region180: #{basic_block_split_forward.9} parent=159 // pred_check_branch
                %778 = sbr.rel (0) target = $region182
              $region181: #{basic_block_split_forward.9} parent=159 // pred_region
                %s779 = sdiv.u32.pop %s715, 3
                %s780 = srem.u32.pop %s715, 3
                // While loop
                $region183: #{basic_block_split_forward.9} parent=181 // loop_pre_header
                  _
                $region184: #{basic_block_split_forward.9} parent=181 // loop_header
                  %s782 = sphi 0, %s784
                  %p783 = scmp.ge.s32.totalorder %s782, %s779
                  %s787 = sphi 0, %s798
                  %s788 = sphi %s464, %s801
                  %s789 = sphi %s719, %s802
                $region185: #{basic_block_split_forward.9} parent=181 // loop_header_branch
                  %786 = sbr.rel (%p783) target = $region189
                $region186: #{basic_block_split_forward.9} parent=181 // loop_body
                  %v790 = vld [vmem:[%s788] sm:$0xff]
                  %791 = vst [vmem:[%s789] sm:$0xff] %v790
                  %v792 = vld [vmem:[%s788 + $0x8] sm:$0xff]
                  %793 = vst [vmem:[%s789 + $0x8] sm:$0xff] %v792
                  %v794 = vld [vmem:[%s788 + $0x10] sm:$0xff]
                  %795 = vst [vmem:[%s789 + $0x10] sm:$0xff] %v794
                  %s796 = sadd.s32 1, %s787
                  %p797 = scmp.ge.s32.totalorder %s796, %s779
                  %s798 = scalar_select %p797, 0, %s796
                  %s799 = smul.u32 %s798, 24
                  %s800 = smul.u32 %s798, 24
                  %s801 = scalar_lea.vmem %s464, %s799 [#allocation4]
                  %s802 = scalar_lea.vmem %s719, %s800
                $region187: #{basic_block_split_forward.9} parent=181 // loop_footer
                  %s784 = sadd.s32 %s782, 1
                $region188: #{basic_block_split_forward.9} parent=181 // loop_footer_branch
                  %781 = sbr.rel target = $region184
                $region189: #{basic_block_split_forward.9} parent=181 // loop_exit
                  _
                %s803 = sdiv.u32.pop %s715, 3
                %s804 = srem.u32.pop %s715, 3
                %s805 = smul.u32 %s803, 3
                %s806 = smul.u32 8, %s805
                %s807 = scalar_lea.vmem %s464, %s806 [#allocation4]
                %s808 = smul.u32 8, %s805
                %s809 = scalar_lea.vmem %s719, %s808
                // While loop
                $region190: #{basic_block_split_forward.9} parent=181 // loop_pre_header
                  _
                $region191: #{basic_block_split_forward.9} parent=181 // loop_header
                  %s811 = sphi 0, %s813
                  %p812 = scmp.ge.s32.totalorder %s811, %s804
                  %s816 = sphi 0, %s823
                  %s817 = sphi %s807, %s826
                  %s818 = sphi %s809, %s827
                $region192: #{basic_block_split_forward.9} parent=181 // loop_header_branch
                  %815 = sbr.rel (%p812) target = $region196
                $region193: #{basic_block_split_forward.9} parent=181 // loop_body
                  %v819 = vld [vmem:[%s817] sm:$0xff]
                  %820 = vst [vmem:[%s818] sm:$0xff] %v819
                  %s821 = sadd.s32 1, %s816
                  %p822 = scmp.ge.s32.totalorder %s821, %s804
                  %s823 = scalar_select %p822, 0, %s821
                  %s824 = smul.u32 %s823, 8
                  %s825 = smul.u32 %s823, 8
                  %s826 = scalar_lea.vmem %s807, %s824 [#allocation4]
                  %s827 = scalar_lea.vmem %s809, %s825
                $region194: #{basic_block_split_forward.9} parent=181 // loop_footer
                  %s813 = sadd.s32 %s811, 1
                $region195: #{basic_block_split_forward.9} parent=181 // loop_footer_branch
                  %810 = sbr.rel target = $region191
                $region196: #{basic_block_split_forward.9} parent=181 // loop_exit
                  _
              $region182: #{basic_block_split_forward.9} parent=159 // pred_fallthru
                _
              // Predicated region
              $region197: #{basic_block_split_forward.9} parent=159 // pred_check
                _
              $region198: #{basic_block_split_forward.9} parent=159 // pred_check_branch
                %829 = sbr.rel target = $region200
              $region199: #{basic_block_split_forward.9} parent=159 // pred_region
                _
              $region200: #{basic_block_split_forward.9} parent=159 // pred_fallthru
                _
            $region160: #{basic_block_split_forward.9} parent=155 // pred_fallthru
              _
            // Predicated region
            $region161: #{basic_block_split_forward.9} parent=155 // pred_check
              _
            $region162: #{basic_block_split_forward.9} parent=155 // pred_check_branch
              %726 = sbr.rel target = $region164
            $region163: #{basic_block_split_forward.9} parent=155 // pred_region
              %s728 = sdiv.u32.pop %s715, 3
              %s729 = srem.u32.pop %s715, 3
              // While loop
              $region165: #{basic_block_split_forward.9} parent=163 // loop_pre_header
                _
              $region166: #{basic_block_split_forward.9} parent=163 // loop_header
                %s731 = sphi 0, %s733
                %p732 = scmp.ge.s32.totalorder %s731, %s728
                %s736 = sphi 0, %s747
                %s737 = sphi %s464, %s750
                %s738 = sphi %s719, %s751
              $region167: #{basic_block_split_forward.9} parent=163 // loop_header_branch
                %735 = sbr.rel (%p732) target = $region171
              $region168: #{basic_block_split_forward.9} parent=163 // loop_body
                %v739 = vld [vmem:[%s737] sm:$0xff]
                %740 = vst [vmem:[%s738] sm:$0xff] %v739
                %v741 = vld [vmem:[%s737 + $0x8] sm:$0xff]
                %742 = vst [vmem:[%s738 + $0x8] sm:$0xff] %v741
                %v743 = vld [vmem:[%s737 + $0x10] sm:$0xff]
                %744 = vst [vmem:[%s738 + $0x10] sm:$0xff] %v743
                %s745 = sadd.s32 1, %s736
                %p746 = scmp.ge.s32.totalorder %s745, %s728
                %s747 = scalar_select %p746, 0, %s745
                %s748 = smul.u32 %s747, 24
                %s749 = smul.u32 %s747, 24
                %s750 = scalar_lea.vmem %s464, %s748 [#allocation4]
                %s751 = scalar_lea.vmem %s719, %s749
              $region169: #{basic_block_split_forward.9} parent=163 // loop_footer
                %s733 = sadd.s32 %s731, 1
              $region170: #{basic_block_split_forward.9} parent=163 // loop_footer_branch
                %730 = sbr.rel target = $region166
              $region171: #{basic_block_split_forward.9} parent=163 // loop_exit
                _
              %s752 = sdiv.u32.pop %s715, 3
              %s753 = srem.u32.pop %s715, 3
              %s754 = smul.u32 %s752, 3
              %s755 = smul.u32 8, %s754
              %s756 = scalar_lea.vmem %s464, %s755 [#allocation4]
              %s757 = smul.u32 8, %s754
              %s758 = scalar_lea.vmem %s719, %s757
              // While loop
              $region172: #{basic_block_split_forward.9} parent=163 // loop_pre_header
                _
              $region173: #{basic_block_split_forward.9} parent=163 // loop_header
                %s760 = sphi 0, %s762
                %p761 = scmp.ge.s32.totalorder %s760, %s753
                %s765 = sphi 0, %s772
                %s766 = sphi %s756, %s775
                %s767 = sphi %s758, %s776
              $region174: #{basic_block_split_forward.9} parent=163 // loop_header_branch
                %764 = sbr.rel (%p761) target = $region178
              $region175: #{basic_block_split_forward.9} parent=163 // loop_body
                %v768 = vld [vmem:[%s766] sm:$0xff]
                %769 = vst [vmem:[%s767] sm:$0xff] %v768
                %s770 = sadd.s32 1, %s765
                %p771 = scmp.ge.s32.totalorder %s770, %s753
                %s772 = scalar_select %p771, 0, %s770
                %s773 = smul.u32 %s772, 8
                %s774 = smul.u32 %s772, 8
                %s775 = scalar_lea.vmem %s756, %s773 [#allocation4]
                %s776 = scalar_lea.vmem %s758, %s774
              $region176: #{basic_block_split_forward.9} parent=163 // loop_footer
                %s762 = sadd.s32 %s760, 1
              $region177: #{basic_block_split_forward.9} parent=163 // loop_footer_branch
                %759 = sbr.rel target = $region173
              $region178: #{basic_block_split_forward.9} parent=163 // loop_exit
                _
            $region164: #{basic_block_split_forward.9} parent=155 // pred_fallthru
              _
          $region156: #{basic_block_split_forward.9} parent=151 // pred_fallthru
            _
          %830 = vnop
        $region152: #{basic_block_split_forward.9} parent=43 // pred_fallthru
          _
      $region44: #{basic_block_split_forward.9} parent=5 // pred_fallthru
        _
      %p831 = scmp.le.s32.totalorder 2, %s15
      // Predicated region
      $region201: #{basic_block_split_forward.9} parent=5 // pred_check
        %p832 = pneg %p831
      $region202: #{basic_block_split_forward.9} parent=5 // pred_check_branch
        %834 = sbr.rel (%p832) target = $region204
      $region203: #{basic_block_split_forward.9} parent=5 // pred_region
        %s835 = ssub.s32 %s15, 2
        // Predicated region
        $region205: #{basic_block_split_forward.9} parent=203 // pred_check
          %p836 = pneg %p180
        $region206: #{basic_block_split_forward.9} parent=203 // pred_check_branch
          %838 = sbr.rel (%p836) target = $region208
        $region207: #{basic_block_split_forward.9} parent=203 // pred_region
          %s839 = sand.u32 %s165, 1
          %s840 = sand.u32 %s165, 1
          %s841 = smul.addr %s840, 24
          %s842 = scalar_lea.vmem [#allocation2], %s841
        $region208: #{basic_block_split_forward.9} parent=203 // pred_fallthru
          _
        // Predicated region
        $region209: #{basic_block_split_forward.9} parent=203 // pred_check
          %p843 = pneg %p206
        $region210: #{basic_block_split_forward.9} parent=203 // pred_check_branch
          %845 = sbr.rel (%p843) target = $region212
        $region211: #{basic_block_split_forward.9} parent=203 // pred_region
          %s846 = sand.u32 %s191, 1
          %s847 = sand.u32 %s191, 1
          %s848 = smul.addr %s847, 24
          %s849 = scalar_lea.vmem [#allocation3], %s848
        $region212: #{basic_block_split_forward.9} parent=203 // pred_fallthru
          _
        // Predicated region
        $region213: #{basic_block_split_forward.9} parent=203 // pred_check
          %p850 = pneg %p232
        $region214: #{basic_block_split_forward.9} parent=203 // pred_check_branch
          %852 = sbr.rel (%p850) target = $region216
        $region215: #{basic_block_split_forward.9} parent=203 // pred_region
          %s853 = sand.u32 %s217, 1
          %s854 = sand.u32 %s217, 1
          %s855 = smul.addr %s854, 24
          %s856 = scalar_lea.vmem [#allocation4], %s855
        $region216: #{basic_block_split_forward.9} parent=203 // pred_fallthru
          _
      $region204: #{basic_block_split_forward.9} parent=5 // pred_fallthru
        _
    $region6: #{basic_block_split_forward.9} parent=1 // loop_footer
      %s19 = sadd.s32 1, %s15
    $region7: #{basic_block_split_forward.9} parent=1 // loop_footer_branch
      %14 = sbr.rel target = $region3
    $region8: #{basic_block_split_forward.9} parent=1 // loop_exit
      _

// kernel: basic_block_split_forward.5
$region0: #{basic_block_split_forward.5}
  #allocation0 [shape = 'u32[]', space=smem, size = 0x4, offset = 0x4, fixed_abs, tag = 'smem constant byte address 0x4 - core index']
  #allocation1 [shape = 'u32[144,128]{1,0:T(1,128)}', space=vmem, size = 0x12000, scoped, tag = 'internal scratch']
  %s0 = inlined_call_operand.vmem [shape: bf16[2,342,4], index: 0, kind: input, shape index: {}]
  %s1 = inlined_call_operand.vmem [shape: bf16[9,4,8], index: 1, kind: input, shape index: {}]
  %s2 = inlined_call_operand.vmem [shape: f32[1,288,1], index: 2, kind: input, shape index: {}]
  %s3 = inlined_call_operand.vmem [shape: f32[2,288,8], index: 3, kind: output, shape index: {0}]
  %s4 = inlined_call_operand.vmem [shape: f32[2,1,8], index: 4, kind: output, shape index: {1}]
  %s5 = inlined_call_operand.vmem [shape: f32[2,1,8], index: 5, kind: output, shape index: {2}]
  %6 = xla_tuple %s3, %s4, %s5
  %s7 = sld [smem:[#allocation0]]
  $region61: #{basic_block_split_forward.5} parent=0
    _
  %s9 = ssub.s32 1, %s7
  %s10 = scalar_select 0, %s9, %s7
  loop: start=0, step=1, limit=4
  $region2: #{basic_block_split_forward.5} parent=0 // loop_pre_header
    _
  $region3: #{basic_block_split_forward.5} parent=0 // loop_header
    %s12 = sphi 0, %s16
    %p13 = scmp.ge.s32.totalorder %s12, 4
    %s22 = sphi 0, %s24
    %s25 = sphi 0, %s22
    %s26 = sphi 0, %s25
    %s42 = sphi 0, %s26
    %s46 = sphi 0, %s46
    %s48 = sphi 0, %s46
    %s49 = sphi 0, %s48
    %s63 = sphi 0, %s49
    %s67 = sphi 0, %s67
    %s69 = sphi 0, %s67
    %s70 = sphi 0, %s69
    %s84 = sphi 0, %s70
    %s90 = sphi 0, %s92
    %s93 = sphi 0, %s90
    %s94 = sphi 0, %s93
    %s110 = sphi 0, %s94
    %s116 = sphi 0, %s118
    %s119 = sphi 0, %s116
    %s120 = sphi 0, %s119
    %s136 = sphi 0, %s120
    %s142 = sphi 0, %s144
    %s145 = sphi 0, %s142
    %s146 = sphi 0, %s145
    %s162 = sphi 0, %s146
  $region4: #{basic_block_split_forward.5} parent=0 // loop_header_branch
    %15 = sbr.rel (%p13) target = $region8
  $region5: #{basic_block_split_forward.5} parent=0 // loop_body
    %s17 = ssub.s32 %s12, 1
    %s18 = ssub.s32 %s12, 2
    %s19 = sadd.s32 %s12, 1
    %s20 = ssub.s32 %s12, %s19
    %p21 = scmp.eq.s32.totalorder %s20, 0
    %s23 = sadd.s32 %s22, 1
    %s24 = scalar_select %p21, %s22, %s23
    %p27 = pneg %p21
    %p28 = scmp.eq.s32.totalorder %s12, 1
    %p29 = por %p27, %p28
    %p30 = scmp.ne.s32.totalorder %s22, %s25
    %p31 = scmp.eq.s32.totalorder %s12, 0
    %p32 = por %p30, %p31
    %p33 = scmp.ne.s32.totalorder %s22, %s25
    %p34 = scmp.eq.s32.totalorder %s17, 1
    %p35 = por %p33, %p34
    %p36 = scmp.ne.s32.totalorder %s25, %s26
    %p37 = scmp.eq.s32.totalorder %s17, 0
    %p38 = por %p36, %p37
    %p39 = scmp.ne.s32.totalorder %s25, %s26
    %p40 = scmp.eq.s32.totalorder %s18, 1
    %p41 = por %p39, %p40
    %p43 = scmp.ne.s32.totalorder %s26, %s42
    %p44 = scmp.eq.s32.totalorder %s18, 0
    %p45 = por %p43, %p44
    %s47 = sadd.s32 %s46, 1
    %p50 = scmp.eq.s32.totalorder %s12, 1
    %p51 = scmp.ne.s32.totalorder %s46, %s48
    %p52 = scmp.eq.s32.totalorder %s12, 0
    %p53 = por %p51, %p52
    %p54 = scmp.ne.s32.totalorder %s46, %s48
    %p55 = scmp.eq.s32.totalorder %s17, 1
    %p56 = por %p54, %p55
    %p57 = scmp.ne.s32.totalorder %s48, %s49
    %p58 = scmp.eq.s32.totalorder %s17, 0
    %p59 = por %p57, %p58
    %p60 = scmp.ne.s32.totalorder %s48, %s49
    %p61 = scmp.eq.s32.totalorder %s18, 1
    %p62 = por %p60, %p61
    %p64 = scmp.ne.s32.totalorder %s49, %s63
    %p65 = scmp.eq.s32.totalorder %s18, 0
    %p66 = por %p64, %p65
    %s68 = sadd.s32 %s67, 1
    %p71 = scmp.eq.s32.totalorder %s12, 1
    %p72 = scmp.ne.s32.totalorder %s67, %s69
    %p73 = scmp.eq.s32.totalorder %s12, 0
    %p74 = por %p72, %p73
    %p75 = scmp.ne.s32.totalorder %s67, %s69
    %p76 = scmp.eq.s32.totalorder %s17, 1
    %p77 = por %p75, %p76
    %p78 = scmp.ne.s32.totalorder %s69, %s70
    %p79 = scmp.eq.s32.totalorder %s17, 0
    %p80 = por %p78, %p79
    %p81 = scmp.ne.s32.totalorder %s69, %s70
    %p82 = scmp.eq.s32.totalorder %s18, 1
    %p83 = por %p81, %p82
    %p85 = scmp.ne.s32.totalorder %s70, %s84
    %p86 = scmp.eq.s32.totalorder %s18, 0
    %p87 = por %p85, %p86
    %s88 = ssub.s32 %s12, %s19
    %p89 = scmp.eq.s32.totalorder %s88, 0
    %s91 = sadd.s32 %s90, 1
    %s92 = scalar_select %p89, %s90, %s91
    %p95 = pneg %p89
    %p96 = scmp.eq.s32.totalorder %s12, 1
    %p97 = por %p95, %p96
    %p98 = scmp.ne.s32.totalorder %s90, %s93
    %p99 = scmp.eq.s32.totalorder %s12, 0
    %p100 = por %p98, %p99
    %p101 = scmp.ne.s32.totalorder %s90, %s93
    %p102 = scmp.eq.s32.totalorder %s17, 1
    %p103 = por %p101, %p102
    %p104 = scmp.ne.s32.totalorder %s93, %s94
    %p105 = scmp.eq.s32.totalorder %s17, 0
    %p106 = por %p104, %p105
    %p107 = scmp.ne.s32.totalorder %s93, %s94
    %p108 = scmp.eq.s32.totalorder %s18, 1
    %p109 = por %p107, %p108
    %p111 = scmp.ne.s32.totalorder %s94, %s110
    %p112 = scmp.eq.s32.totalorder %s18, 0
    %p113 = por %p111, %p112
    %s114 = ssub.s32 %s12, %s19
    %p115 = scmp.eq.s32.totalorder %s114, 0
    %s117 = sadd.s32 %s116, 1
    %s118 = scalar_select %p115, %s116, %s117
    %p121 = pneg %p115
    %p122 = scmp.eq.s32.totalorder %s12, 1
    %p123 = por %p121, %p122
    %p124 = scmp.ne.s32.totalorder %s116, %s119
    %p125 = scmp.eq.s32.totalorder %s12, 0
    %p126 = por %p124, %p125
    %p127 = scmp.ne.s32.totalorder %s116, %s119
    %p128 = scmp.eq.s32.totalorder %s17, 1
    %p129 = por %p127, %p128
    %p130 = scmp.ne.s32.totalorder %s119, %s120
    %p131 = scmp.eq.s32.totalorder %s17, 0
    %p132 = por %p130, %p131
    %p133 = scmp.ne.s32.totalorder %s119, %s120
    %p134 = scmp.eq.s32.totalorder %s18, 1
    %p135 = por %p133, %p134
    %p137 = scmp.ne.s32.totalorder %s120, %s136
    %p138 = scmp.eq.s32.totalorder %s18, 0
    %p139 = por %p137, %p138
    %s140 = ssub.s32 %s12, %s19
    %p141 = scmp.eq.s32.totalorder %s140, 0
    %s143 = sadd.s32 %s142, 1
    %s144 = scalar_select %p141, %s142, %s143
    %p147 = pneg %p141
    %p148 = scmp.eq.s32.totalorder %s12, 1
    %p149 = por %p147, %p148
    %p150 = scmp.ne.s32.totalorder %s142, %s145
    %p151 = scmp.eq.s32.totalorder %s12, 0
    %p152 = por %p150, %p151
    %p153 = scmp.ne.s32.totalorder %s142, %s145
    %p154 = scmp.eq.s32.totalorder %s17, 1
    %p155 = por %p153, %p154
    %p156 = scmp.ne.s32.totalorder %s145, %s146
    %p157 = scmp.eq.s32.totalorder %s17, 0
    %p158 = por %p156, %p157
    %p159 = scmp.ne.s32.totalorder %s145, %s146
    %p160 = scmp.eq.s32.totalorder %s18, 1
    %p161 = por %p159, %p160
    %p163 = scmp.ne.s32.totalorder %s146, %s162
    %p164 = scmp.eq.s32.totalorder %s18, 0
    %p165 = por %p163, %p164
    %p166 = scmp.le.s32.totalorder 1, %s12
    %p167 = scmp.lt.s32.totalorder %s12, 3
    %p168 = pnand %p166, %p167
    %p169 = pneg %p168
    // Predicated region
    $region9: #{basic_block_split_forward.5} parent=5 // pred_check
      _
    $region10: #{basic_block_split_forward.5} parent=5 // pred_check_branch
      %171 = sbr.rel (%p168) target = $region12
    $region11: #{basic_block_split_forward.5} parent=5 // pred_region
      %s172 = ssub.s32 %s12, 1
      // Predicated region
      $region13: #{basic_block_split_forward.5} parent=11 // pred_check
        %p173 = pneg %p59
      $region14: #{basic_block_split_forward.5} parent=11 // pred_check_branch
        %175 = sbr.rel (%p173) target = $region16
      $region15: #{basic_block_split_forward.5} parent=11 // pred_region
        _
      $region16: #{basic_block_split_forward.5} parent=11 // pred_fallthru
        _
      // Predicated region
      $region17: #{basic_block_split_forward.5} parent=11 // pred_check
        %p176 = pneg %p80
      $region18: #{basic_block_split_forward.5} parent=11 // pred_check_branch
        %178 = sbr.rel (%p176) target = $region20
      $region19: #{basic_block_split_forward.5} parent=11 // pred_region
        _
      $region20: #{basic_block_split_forward.5} parent=11 // pred_fallthru
        _
    $region12: #{basic_block_split_forward.5} parent=5 // pred_fallthru
      _
    %p179 = scmp.lt.s32.totalorder %s12, 2
    // Predicated region
    $region21: #{basic_block_split_forward.5} parent=5 // pred_check
      %p180 = pneg %p179
    $region22: #{basic_block_split_forward.5} parent=5 // pred_check_branch
      %182 = sbr.rel (%p180) target = $region24
    $region23: #{basic_block_split_forward.5} parent=5 // pred_region
      // Predicated region
      $region25: #{basic_block_split_forward.5} parent=23 // pred_check
        %p183 = pneg %p32
      $region26: #{basic_block_split_forward.5} parent=23 // pred_check_branch
        %185 = sbr.rel (%p183) target = $region28
      $region27: #{basic_block_split_forward.5} parent=23 // pred_region
        %p186 = scmp.lt.s32.totalorder %s12, 1
        %s187 = scalar_select %p186, %s12, 1
        %s188 = smul.addr %s187, 43
        %s189 = smul.addr %s188, 4
        %s190 = scalar_lea.vmem %s0, %s189
      $region28: #{basic_block_split_forward.5} parent=23 // pred_fallthru
        _
    $region24: #{basic_block_split_forward.5} parent=5 // pred_fallthru
      _
    %p191 = scmp.le.s32.totalorder 1, %s12
    %p192 = scmp.lt.s32.totalorder %s12, 3
    %p193 = pnand %p191, %p192
    %p194 = pneg %p193
    // Predicated region
    $region29: #{basic_block_split_forward.5} parent=5 // pred_check
      _
    $region30: #{basic_block_split_forward.5} parent=5 // pred_check_branch
      %196 = sbr.rel (%p193) target = $region32
    $region31: #{basic_block_split_forward.5} parent=5 // pred_region
      %s197 = ssub.s32 %s12, 1
      %p198 = scmp.lt.s32.totalorder %s17, 1
      %s199 = scalar_select %p198, %s17, 1
      %s200 = smul.addr %s199, 43
      %s201 = smul.addr %s200, 4
      %s202 = scalar_lea.vmem %s0, %s201
      %p203 = pneg %p38
      %p204 = pneg %p35
      %p205 = pneg %p59
      %p206 = pneg %p56
      %p207 = pneg %p80
      %p208 = pneg %p77
      %p209 = pneg %p106
      %p210 = pneg %p103
      %p211 = scmp.lt.s32.totalorder %s17, 1
      %s212 = scalar_select %p211, %s17, 1
      %s213 = smul.addr %s212, 36
      %s214 = smul.addr %s213, 8
      %s215 = scalar_lea.vmem %s3, %s214
      %p216 = pneg %p132
      %p217 = pneg %p129
      %p218 = scmp.lt.s32.totalorder %s17, 1
      %s219 = scalar_select %p218, %s17, 1
      %s220 = scalar_lea.vmem %s4, %s219
      %p221 = pneg %p158
      %p222 = pneg %p155
      %p223 = scmp.lt.s32.totalorder %s17, 1
      %s224 = scalar_select %p223, %s17, 1
      %s225 = scalar_lea.vmem %s5, %s224
      %p226 = scmp.lt.s32.totalorder %s17, 1
      %s227 = scalar_select %p226, %s17, 1
      %s228 = smul.addr %s227, 43
      %s229 = smul.addr %s228, 4
      %s230 = scalar_lea.vmem %s0, %s229
      %p231 = scmp.lt.s32.totalorder %s17, 1
      %s232 = scalar_select %p231, %s17, 1
      %s233 = smul.addr %s232, 36
      %s234 = smul.addr %s233, 8
      %s235 = scalar_lea.vmem %s3, %s234
      %p236 = scmp.lt.s32.totalorder %s17, 1
      %s237 = scalar_select %p236, %s17, 1
      %s238 = scalar_lea.vmem %s4, %s237
      %p239 = scmp.lt.s32.totalorder %s17, 1
      %s240 = scalar_select %p239, %s17, 1
      %s241 = scalar_lea.vmem %s5, %s240
      %v243 = vld [vmem:[%s230] sm:$0xf]
      %v244 = vld [vmem:[%s230 + $0x4] sm:$0xf]
      %v245 = vld [vmem:[%s230 + $0x8] sm:$0xf]
      %v246 = vld [vmem:[%s230 + $0xc] sm:$0xf]
      %v247 = vld [vmem:[%s230 + $0x10] sm:$0xf]
      %v248 = vld [vmem:[%s230 + $0x14] sm:$0xf]
      %v249 = vld [vmem:[%s230 + $0x18] sm:$0xf]
      %v250 = vld [vmem:[%s230 + $0x1c] sm:$0xf]
      %v251 = vld [vmem:[%s230 + $0x20] sm:$0xf]
      %v252 = vld [vmem:[%s230 + $0x24] sm:$0xf]
      %v253 = vld [vmem:[%s230 + $0x28] sm:$0xf]
      %v254 = vld [vmem:[%s230 + $0x2c] sm:$0xf]
      %v255 = vld [vmem:[%s230 + $0x30] sm:$0xf]
      %v256 = vld [vmem:[%s230 + $0x34] sm:$0xf]
      %v257 = vld [vmem:[%s230 + $0x38] sm:$0xf]
      %v258 = vld [vmem:[%s230 + $0x3c] sm:$0xf]
      %v259 = vld [vmem:[%s230 + $0x40] sm:$0xf]
      %v260 = vld [vmem:[%s230 + $0x44] sm:$0xf]
      %v261 = vld [vmem:[%s230 + $0x48] sm:$0xf]
      %v262 = vld [vmem:[%s230 + $0x4c] sm:$0xf]
      %v263 = vld [vmem:[%s230 + $0x50] sm:$0xf]
      %v264 = vld [vmem:[%s230 + $0x54] sm:$0xf]
      %v265 = vld [vmem:[%s230 + $0x58] sm:$0xf]
      %v266 = vld [vmem:[%s230 + $0x5c] sm:$0xf]
      %v267 = vld [vmem:[%s230 + $0x60] sm:$0xf]
      %v268 = vld [vmem:[%s230 + $0x64] sm:$0xf]
      %v269 = vld [vmem:[%s230 + $0x68] sm:$0xf]
      %v270 = vld [vmem:[%s230 + $0x6c] sm:$0xf]
      %v271 = vld [vmem:[%s230 + $0x70] sm:$0xf]
      %v272 = vld [vmem:[%s230 + $0x74] sm:$0xf]
      %v273 = vld [vmem:[%s230 + $0x78] sm:$0xf]
      %v274 = vld [vmem:[%s230 + $0x7c] sm:$0xf]
      %v275 = vld [vmem:[%s230 + $0x80] sm:$0xf]
      %v276 = vld [vmem:[%s230 + $0x84] sm:$0xf]
      %v277 = vld [vmem:[%s230 + $0x88] sm:$0xf]
      %v278 = vld [vmem:[%s230 + $0x8c] sm:$0xf]
      %v279 = vld [vmem:[%s230 + $0x90] sm:$0xf]
      %v280 = vld [vmem:[%s230 + $0x94] sm:$0xf]
      %v281 = vld [vmem:[%s230 + $0x98] sm:$0xf]
      %v282 = vld [vmem:[%s230 + $0x9c] sm:$0xf]
      %v283 = vld [vmem:[%s230 + $0xa0] sm:$0xf]
      %v284 = vunpack.c.l.bf16 %v243
      %v285 = vunpack.c.l.bf16 %v244
      %v286 = vunpack.c.l.bf16 %v245
      %v287 = vunpack.c.l.bf16 %v246
      %v288 = vunpack.c.l.bf16 %v247
      %v289 = vunpack.c.l.bf16 %v248
      %v290 = vunpack.c.l.bf16 %v249
      %v291 = vunpack.c.l.bf16 %v250
      %v292 = vunpack.c.l.bf16 %v251
      %v293 = vunpack.c.l.bf16 %v252
      %v294 = vunpack.c.l.bf16 %v253
      %v295 = vunpack.c.l.bf16 %v254
      %v296 = vunpack.c.l.bf16 %v255
      %v297 = vunpack.c.l.bf16 %v256
      %v298 = vunpack.c.l.bf16 %v257
      %v299 = vunpack.c.l.bf16 %v258
      %v300 = vunpack.c.l.bf16 %v259
      %v301 = vunpack.c.l.bf16 %v260
      %v302 = vunpack.c.l.bf16 %v261
      %v303 = vunpack.c.l.bf16 %v262
      %v304 = vunpack.c.l.bf16 %v263
      %v305 = vunpack.c.l.bf16 %v264
      %v306 = vunpack.c.l.bf16 %v265
      %v307 = vunpack.c.l.bf16 %v266
      %v308 = vunpack.c.l.bf16 %v267
      %v309 = vunpack.c.l.bf16 %v268
      %v310 = vunpack.c.l.bf16 %v269
      %v311 = vunpack.c.l.bf16 %v270
      %v312 = vunpack.c.l.bf16 %v271
      %v313 = vunpack.c.l.bf16 %v272
      %v314 = vunpack.c.l.bf16 %v273
      %v315 = vunpack.c.l.bf16 %v274
      %v316 = vunpack.c.l.bf16 %v275
      %v317 = vunpack.c.l.bf16 %v276
      %v318 = vunpack.c.l.bf16 %v277
      %v319 = vunpack.c.l.bf16 %v278
      %v320 = vunpack.c.l.bf16 %v279
      %v321 = vunpack.c.l.bf16 %v280
      %v322 = vunpack.c.l.bf16 %v281
      %v323 = vunpack.c.l.bf16 %v282
      %v324 = vunpack.c.l.bf16 %v283
      %v325 = vpack.c.bf16 %v285, %v284
      %v326 = vpack.c.bf16 %v287, %v286
      %v327 = vpack.c.bf16 %v289, %v288
      %v328 = vpack.c.bf16 %v291, %v290
      %v329 = vpack.c.bf16 %v293, %v292
      %v330 = vpack.c.bf16 %v295, %v294
      %v331 = vpack.c.bf16 %v297, %v296
      %v332 = vpack.c.bf16 %v299, %v298
      %v333 = vpack.c.bf16 %v301, %v300
      %v334 = vpack.c.bf16 %v303, %v302
      %v335 = vpack.c.bf16 %v305, %v304
      %v336 = vpack.c.bf16 %v307, %v306
      %v337 = vpack.c.bf16 %v309, %v308
      %v338 = vpack.c.bf16 %v311, %v310
      %v339 = vpack.c.bf16 %v313, %v312
      %v340 = vpack.c.bf16 %v315, %v314
      %v341 = vpack.c.bf16 %v317, %v316
      %v342 = vpack.c.bf16 %v319, %v318
      %v343 = vld [vmem:[%s1] sm:$0x3]
      %v344 = vpack.c.bf16 %v320, %v320
      %s345 = scalar_lea.vmem %s1, 2
      %v346 = vld [vmem:[%s345] sm:$0x3]
      %vm347 = vsmask.f32 7424
      %v349 = vshrl.u32 %v325, 16
      %v351 = vshll.u32 %v325, 16
      %v353 = vrot.slane %v351, 1
      %v354 = vor.u32 %v349, %v353
      %v356 = vshll.u32 %v326, 16
      %v358 = vrot.slane %v356, 1
      %v359 = vsel %vm347, %v354, %v358
      %v360 = vshrl.u32 %v326, 16
      %v362 = vor.u32 %v360, %v358
      %v364 = vshll.u32 %v327, 16
      %v366 = vrot.slane %v364, 1
      %v367 = vsel %vm347, %v362, %v366
      %v368 = vshrl.u32 %v327, 16
      %v370 = vor.u32 %v368, %v366
      %v372 = vshll.u32 %v328, 16
      %v374 = vrot.slane %v372, 1
      %v375 = vsel %vm347, %v370, %v374
      %v376 = vshrl.u32 %v328, 16
      %v378 = vor.u32 %v376, %v374
      %v380 = vshll.u32 %v329, 16
      %v382 = vrot.slane %v380, 1
      %v383 = vsel %vm347, %v378, %v382
      %v384 = vshrl.u32 %v329, 16
      %v386 = vor.u32 %v384, %v382
      %v388 = vshll.u32 %v330, 16
      %v390 = vrot.slane %v388, 1
      %v391 = vsel %vm347, %v386, %v390
      %v392 = vshrl.u32 %v330, 16
      %v394 = vor.u32 %v392, %v390
      %v396 = vshll.u32 %v331, 16
      %v398 = vrot.slane %v396, 1
      %v399 = vsel %vm347, %v394, %v398
      %v400 = vshrl.u32 %v331, 16
      %v402 = vor.u32 %v400, %v398
      %v404 = vshll.u32 %v332, 16
      %v406 = vrot.slane %v404, 1
      %v407 = vsel %vm347, %v402, %v406
      %v408 = vshrl.u32 %v332, 16
      %v410 = vor.u32 %v408, %v406
      %v412 = vshll.u32 %v333, 16
      %v414 = vrot.slane %v412, 1
      %v415 = vsel %vm347, %v410, %v414
      %v416 = vshrl.u32 %v333, 16
      %v418 = vor.u32 %v416, %v414
      %v420 = vshll.u32 %v334, 16
      %v422 = vrot.slane %v420, 1
      %v423 = vsel %vm347, %v418, %v422
      %v424 = vshrl.u32 %v334, 16
      %v426 = vor.u32 %v424, %v422
      %v428 = vshll.u32 %v335, 16
      %v430 = vrot.slane %v428, 1
      %v431 = vsel %vm347, %v426, %v430
      %v432 = vshrl.u32 %v335, 16
      %v434 = vor.u32 %v432, %v430
      %v436 = vshll.u32 %v336, 16
      %v438 = vrot.slane %v436, 1
      %v439 = vsel %vm347, %v434, %v438
      %v440 = vshrl.u32 %v336, 16
      %v442 = vor.u32 %v440, %v438
      %v444 = vshll.u32 %v337, 16
      %v446 = vrot.slane %v444, 1
      %v447 = vsel %vm347, %v442, %v446
      %v448 = vshrl.u32 %v337, 16
      %v450 = vor.u32 %v448, %v446
      %v452 = vshll.u32 %v338, 16
      %v454 = vrot.slane %v452, 1
      %v455 = vsel %vm347, %v450, %v454
      %v456 = vshrl.u32 %v338, 16
      %v458 = vor.u32 %v456, %v454
      %v460 = vshll.u32 %v339, 16
      %v462 = vrot.slane %v460, 1
      %v463 = vsel %vm347, %v458, %v462
      %v464 = vshrl.u32 %v339, 16
      %v466 = vor.u32 %v464, %v462
      %v468 = vshll.u32 %v340, 16
      %v470 = vrot.slane %v468, 1
      %v471 = vsel %vm347, %v466, %v470
      %v472 = vshrl.u32 %v340, 16
      %v474 = vor.u32 %v472, %v470
      %v476 = vshll.u32 %v341, 16
      %v478 = vrot.slane %v476, 1
      %v479 = vsel %vm347, %v474, %v478
      %v480 = vshrl.u32 %v341, 16
      %v482 = vor.u32 %v480, %v478
      %v484 = vshll.u32 %v342, 16
      %v486 = vrot.slane %v484, 1
      %v487 = vsel %vm347, %v482, %v486
      %v488 = vshrl.u32 %v342, 16
      %v490 = vor.u32 %v488, %v486
      %v492 = vshll.u32 %v344, 16
      %v494 = vrot.slane %v492, 1
      %v495 = vsel %vm347, %v490, %v494
      %vm496 = vcmask 31744
      %v498 = vsel %vm496, %v359, 0
      %v501 = vsel %vm496, %v367, 0
      %v504 = vsel %vm496, %v375, 0
      %v507 = vsel %vm496, %v383, 0
      %v510 = vsel %vm496, %v391, 0
      %v513 = vsel %vm496, %v399, 0
      %v516 = vsel %vm496, %v407, 0
      %v519 = vsel %vm496, %v415, 0
      %v522 = vsel %vm496, %v423, 0
      %v525 = vsel %vm496, %v431, 0
      %v528 = vsel %vm496, %v439, 0
      %v531 = vsel %vm496, %v447, 0
      %v534 = vsel %vm496, %v455, 0
      %v537 = vsel %vm496, %v463, 0
      %v540 = vsel %vm496, %v471, 0
      %v543 = vsel %vm496, %v479, 0
      %v546 = vsel %vm496, %v487, 0
      %v549 = vsel %vm496, %v495, 0
      %vm551 = vcmask 1041408
      %v553 = vsel %vm551, %v346, 0
      %555 = vmatprep.subr.bf16.mxu0 0
      %556 = vmatpush1.bf16.msra.mxu0 %v553
      %557 = vmatprep.subr.bf16.mxu0 0
      %558 = vmatpush1.bf16.msra.mxu0 0
      %559 = vmatprep.subr.bf16.mxu0 0
      %560 = vmatpush1.bf16.msra.mxu0 0
      %561 = vmatprep.subr.bf16.mxu0 0
      %562 = vmatpush1.bf16.msra.mxu0 0
      %563 = vmatprep.subr.bf16.mxu0 0
      %564 = vmatpush1.bf16.msra.mxu0 0
      %565 = vmatprep.subr.bf16.mxu0 0
      %566 = vmatpush1.bf16.msra.mxu0 0
      %567 = vmatprep.subr.bf16.mxu0 0
      %568 = vmatpush1.bf16.msra.mxu0 0
      %569 = vmatprep.subr.bf16.mxu0 0
      %570 = vmatpush1.bf16.msra.mxu0 0
      %571 = vmatprep.subr.bf16.mxu0 0
      %572 = vmatpush1.bf16.msra.mxu0 0
      %573 = vmatprep.subr.bf16.mxu0 0
      %574 = vmatpush1.bf16.msra.mxu0 0
      %575 = vmatprep.subr.bf16.mxu0 0
      %576 = vmatpush1.bf16.msra.mxu0 0
      %577 = vmatprep.subr.bf16.mxu0 0
      %578 = vmatpush1.bf16.msra.mxu0 0
      %579 = vmatprep.subr.bf16.mxu0 0
      %580 = vmatpush1.bf16.msra.mxu0 0
      %581 = vmatprep.subr.bf16.mxu0 0
      %582 = vmatpush1.bf16.msra.mxu0 0
      %583 = vmatprep.subr.bf16.mxu0 0
      %584 = vmatpush1.bf16.msra.mxu0 0
      %585 = vmatprep.subr.bf16.mxu0 0
      %586 = vmatpush1.bf16.msra.mxu0 0
      %587 = vmatprep.mubr.bf16.mxu0 0
      %588 = vmatmul.mubr.bf16.gmra.mrb[0].mxu0 %v498
      %v589 = vpop.f32.mrb[0].mxu0
      %v590 = vadd.f32 0.0, %v589
      %v591 = vpop.f32.mrb[0].mxu0
      %v592 = vpop.f32.mrb[0].mxu0
      %v593 = vadd.f32 0.0, %v592
      %v594 = vpop.f32.mrb[0].mxu0
      %595 = vmatprep.mubr.bf16.mxu0 0
      %596 = vmatmul.mubr.bf16.gmra.mrb[0].mxu0 %v501
      %v597 = vpop.f32.mrb[0].mxu0
      %v598 = vadd.f32 0.0, %v597
      %v599 = vpop.f32.mrb[0].mxu0
      %v600 = vpop.f32.mrb[0].mxu0
      %v601 = vadd.f32 0.0, %v600
      %v602 = vpop.f32.mrb[0].mxu0
      %603 = vmatprep.mubr.bf16.mxu0 0
      %604 = vmatmul.mubr.bf16.gmra.mrb[0].mxu0 %v504
      %v605 = vpop.f32.mrb[0].mxu0
      %v606 = vadd.f32 0.0, %v605
      %v607 = vpop.f32.mrb[0].mxu0
      %v608 = vpop.f32.mrb[0].mxu0
      %v609 = vadd.f32 0.0, %v608
      %v610 = vpop.f32.mrb[0].mxu0
      %611 = vmatprep.mubr.bf16.mxu0 0
      %612 = vmatmul.mubr.bf16.gmra.mrb[0].mxu0 %v507
      %v613 = vpop.f32.mrb[0].mxu0
      %v614 = vadd.f32 0.0, %v613
      %v615 = vpop.f32.mrb[0].mxu0
      %v616 = vpop.f32.mrb[0].mxu0
      %v617 = vadd.f32 0.0, %v616
      %v618 = vpop.f32.mrb[0].mxu0
      %619 = vmatprep.mubr.bf16.mxu0 0
      %620 = vmatmul.mubr.bf16.gmra.mrb[0].mxu0 %v510
      %v621 = vpop.f32.mrb[0].mxu0
      %v622 = vadd.f32 0.0, %v621
      %v623 = vpop.f32.mrb[0].mxu0
      %v624 = vpop.f32.mrb[0].mxu0
      %v625 = vadd.f32 0.0, %v624
      %v626 = vpop.f32.mrb[0].mxu0
      %627 = vmatprep.mubr.bf16.mxu0 0
      %628 = vmatmul.mubr.bf16.gmra.mrb[0].mxu0 %v513
      %v629 = vpop.f32.mrb[0].mxu0
      %v630 = vadd.f32 0.0, %v629
      %v631 = vpop.f32.mrb[0].mxu0
      %v632 = vpop.f32.mrb[0].mxu0
      %v633 = vadd.f32 0.0, %v632
      %v634 = vpop.f32.mrb[0].mxu0
      %635 = vmatprep.mubr.bf16.mxu0 0
      %636 = vmatmul.mubr.bf16.gmra.mrb[0].mxu0 %v516
      %v637 = vpop.f32.mrb[0].mxu0
      %v638 = vadd.f32 0.0, %v637
      %v639 = vpop.f32.mrb[0].mxu0
      %v640 = vpop.f32.mrb[0].mxu0
      %v641 = vadd.f32 0.0, %v640
      %v642 = vpop.f32.mrb[0].mxu0
      %643 = vmatprep.mubr.bf16.mxu0 0
      %644 = vmatmul.mubr.bf16.gmra.mrb[0].mxu0 %v519
      %v645 = vpop.f32.mrb[0].mxu0
      %v646 = vadd.f32 0.0, %v645
      %v647 = vpop.f32.mrb[0].mxu0
      %v648 = vpop.f32.mrb[0].mxu0
      %v649 = vadd.f32 0.0, %v648
      %v650 = vpop.f32.mrb[0].mxu0
      %651 = vmatprep.mubr.bf16.mxu0 0
      %652 = vmatmul.mubr.bf16.gmra.mrb[0].mxu0 %v522
      %v653 = vpop.f32.mrb[0].mxu0
      %v654 = vadd.f32 0.0, %v653
      %v655 = vpop.f32.mrb[0].mxu0
      %v656 = vpop.f32.mrb[0].mxu0
      %v657 = vadd.f32 0.0, %v656
      %v658 = vpop.f32.mrb[0].mxu0
      %659 = vmatprep.mubr.bf16.mxu0 0
      %660 = vmatmul.mubr.bf16.gmra.mrb[0].mxu0 %v525
      %v661 = vpop.f32.mrb[0].mxu0
      %v662 = vadd.f32 0.0, %v661
      %v663 = vpop.f32.mrb[0].mxu0
      %v664 = vpop.f32.mrb[0].mxu0
      %v665 = vadd.f32 0.0, %v664
      %v666 = vpop.f32.mrb[0].mxu0
      %667 = vmatprep.mubr.bf16.mxu0 0
      %668 = vmatmul.mubr.bf16.gmra.mrb[0].mxu0 %v528
      %v669 = vpop.f32.mrb[0].mxu0
      %v670 = vadd.f32 0.0, %v669
      %v671 = vpop.f32.mrb[0].mxu0
      %v672 = vpop.f32.mrb[0].mxu0
      %v673 = vadd.f32 0.0, %v672
      %v674 = vpop.f32.mrb[0].mxu0
      %675 = vmatprep.mubr.bf16.mxu0 0
      %676 = vmatmul.mubr.bf16.gmra.mrb[0].mxu0 %v531
      %v677 = vpop.f32.mrb[0].mxu0
      %v678 = vadd.f32 0.0, %v677
      %v679 = vpop.f32.mrb[0].mxu0
      %v680 = vpop.f32.mrb[0].mxu0
      %v681 = vadd.f32 0.0, %v680
      %v682 = vpop.f32.mrb[0].mxu0
      %683 = vmatprep.mubr.bf16.mxu0 0
      %684 = vmatmul.mubr.bf16.gmra.mrb[0].mxu0 %v534
      %v685 = vpop.f32.mrb[0].mxu0
      %v686 = vadd.f32 0.0, %v685
      %v687 = vpop.f32.mrb[0].mxu0
      %v688 = vpop.f32.mrb[0].mxu0
      %v689 = vadd.f32 0.0, %v688
      %v690 = vpop.f32.mrb[0].mxu0
      %691 = vmatprep.mubr.bf16.mxu0 0
      %692 = vmatmul.mubr.bf16.gmra.mrb[0].mxu0 %v537
      %v693 = vpop.f32.mrb[0].mxu0
      %v694 = vadd.f32 0.0, %v693
      %v695 = vpop.f32.mrb[0].mxu0
      %v696 = vpop.f32.mrb[0].mxu0
      %v697 = vadd.f32 0.0, %v696
      %v698 = vpop.f32.mrb[0].mxu0
      %699 = vmatprep.mubr.bf16.mxu0 0
      %700 = vmatmul.mubr.bf16.gmra.mrb[0].mxu0 %v540
      %v701 = vpop.f32.mrb[0].mxu0
      %v702 = vadd.f32 0.0, %v701
      %v703 = vpop.f32.mrb[0].mxu0
      %v704 = vpop.f32.mrb[0].mxu0
      %v705 = vadd.f32 0.0, %v704
      %v706 = vpop.f32.mrb[0].mxu0
      %707 = vmatprep.mubr.bf16.mxu0 0
      %708 = vmatmul.mubr.bf16.gmra.mrb[0].mxu0 %v543
      %v709 = vpop.f32.mrb[0].mxu0
      %v710 = vadd.f32 0.0, %v709
      %v711 = vpop.f32.mrb[0].mxu0
      %v712 = vpop.f32.mrb[0].mxu0
      %v713 = vadd.f32 0.0, %v712
      %v714 = vpop.f32.mrb[0].mxu0
      %715 = vmatprep.mubr.bf16.mxu0 0
      %716 = vmatmul.mubr.bf16.gmra.mrb[0].mxu0 %v546
      %v717 = vpop.f32.mrb[0].mxu0
      %v718 = vadd.f32 0.0, %v717
      %v719 = vpop.f32.mrb[0].mxu0
      %v720 = vpop.f32.mrb[0].mxu0
      %v721 = vadd.f32 0.0, %v720
      %v722 = vpop.f32.mrb[0].mxu0
      %723 = vmatprep.mubr.bf16.mxu0 0
      %724 = vmatmul.mubr.bf16.gmra.mrb[0].mxu0 %v549
      %v725 = vpop.f32.mrb[0].mxu0
      %v726 = vadd.f32 0.0, %v725
      %v727 = vpop.f32.mrb[0].mxu0
      %v728 = vpop.f32.mrb[0].mxu0
      %v729 = vadd.f32 0.0, %v728
      %v730 = vpop.f32.mrb[0].mxu0
      %731 = vdwg.mxu0
      %v732 = vsel %vm496, %v325, 0
      %v734 = vsel %vm496, %v326, 0
      %v736 = vsel %vm496, %v327, 0
      %v738 = vsel %vm496, %v328, 0
      %v740 = vsel %vm496, %v329, 0
      %v742 = vsel %vm496, %v330, 0
      %v744 = vsel %vm496, %v331, 0
      %v746 = vsel %vm496, %v332, 0
      %v748 = vsel %vm496, %v333, 0
      %v750 = vsel %vm496, %v334, 0
      %v752 = vsel %vm496, %v335, 0
      %v754 = vsel %vm496, %v336, 0
      %v756 = vsel %vm496, %v337, 0
      %v758 = vsel %vm496, %v338, 0
      %v760 = vsel %vm496, %v339, 0
      %v762 = vsel %vm496, %v340, 0
      %v764 = vsel %vm496, %v341, 0
      %v766 = vsel %vm496, %v342, 0
      %v769 = vsel %vm551, %v343, 0
      %771 = vmatprep.subr.bf16.mxu0 0
      %772 = vmatpush1.bf16.msra.mxu0 %v769
      %773 = vmatprep.subr.bf16.mxu0 0
      %774 = vmatpush1.bf16.msra.mxu0 0
      %775 = vmatprep.subr.bf16.mxu0 0
      %776 = vmatpush1.bf16.msra.mxu0 0
      %777 = vmatprep.subr.bf16.mxu0 0
      %778 = vmatpush1.bf16.msra.mxu0 0
      %779 = vmatprep.subr.bf16.mxu0 0
      %780 = vmatpush1.bf16.msra.mxu0 0
      %781 = vmatprep.subr.bf16.mxu0 0
      %782 = vmatpush1.bf16.msra.mxu0 0
      %783 = vmatprep.subr.bf16.mxu0 0
      %784 = vmatpush1.bf16.msra.mxu0 0
      %785 = vmatprep.subr.bf16.mxu0 0
      %786 = vmatpush1.bf16.msra.mxu0 0
      %787 = vmatprep.subr.bf16.mxu0 0
      %788 = vmatpush1.bf16.msra.mxu0 0
      %789 = vmatprep.subr.bf16.mxu0 0
      %790 = vmatpush1.bf16.msra.mxu0 0
      %791 = vmatprep.subr.bf16.mxu0 0
      %792 = vmatpush1.bf16.msra.mxu0 0
      %793 = vmatprep.subr.bf16.mxu0 0
      %794 = vmatpush1.bf16.msra.mxu0 0
      %795 = vmatprep.subr.bf16.mxu0 0
      %796 = vmatpush1.bf16.msra.mxu0 0
      %797 = vmatprep.subr.bf16.mxu0 0
      %798 = vmatpush1.bf16.msra.mxu0 0
      %799 = vmatprep.subr.bf16.mxu0 0
      %800 = vmatpush1.bf16.msra.mxu0 0
      %801 = vmatprep.subr.bf16.mxu0 0
      %802 = vmatpush1.bf16.msra.mxu0 0
      %803 = vmatprep.mubr.bf16.mxu0 0
      %804 = vmatmul.mubr.bf16.gmra.mrb[0].mxu0 %v732
      %v805 = vpop.f32.mrb[0].mxu0
      %v806 = vadd.f32 %v590, %v805
      %v807 = vpop.f32.mrb[0].mxu0
      %v808 = vpop.f32.mrb[0].mxu0
      %v809 = vadd.f32 %v593, %v808
      %v810 = vpop.f32.mrb[0].mxu0
      %811 = vmatprep.mubr.bf16.mxu0 0
      %812 = vmatmul.mubr.bf16.gmra.mrb[0].mxu0 %v734
      %v813 = vpop.f32.mrb[0].mxu0
      %v814 = vadd.f32 %v598, %v813
      %v815 = vpop.f32.mrb[0].mxu0
      %v816 = vpop.f32.mrb[0].mxu0
      %v817 = vadd.f32 %v601, %v816
      %v818 = vpop.f32.mrb[0].mxu0
      %819 = vmatprep.mubr.bf16.mxu0 0
      %820 = vmatmul.mubr.bf16.gmra.mrb[0].mxu0 %v736
      %v821 = vpop.f32.mrb[0].mxu0
      %v822 = vadd.f32 %v606, %v821
      %v823 = vpop.f32.mrb[0].mxu0
      %v824 = vpop.f32.mrb[0].mxu0
      %v825 = vadd.f32 %v609, %v824
      %v826 = vpop.f32.mrb[0].mxu0
      %827 = vmatprep.mubr.bf16.mxu0 0
      %828 = vmatmul.mubr.bf16.gmra.mrb[0].mxu0 %v738
      %v829 = vpop.f32.mrb[0].mxu0
      %v830 = vadd.f32 %v614, %v829
      %v831 = vpop.f32.mrb[0].mxu0
      %v832 = vpop.f32.mrb[0].mxu0
      %v833 = vadd.f32 %v617, %v832
      %v834 = vpop.f32.mrb[0].mxu0
      %835 = vmatprep.mubr.bf16.mxu0 0
      %836 = vmatmul.mubr.bf16.gmra.mrb[0].mxu0 %v740
      %v837 = vpop.f32.mrb[0].mxu0
      %v838 = vadd.f32 %v622, %v837
      %v839 = vpop.f32.mrb[0].mxu0
      %v840 = vpop.f32.mrb[0].mxu0
      %v841 = vadd.f32 %v625, %v840
      %v842 = vpop.f32.mrb[0].mxu0
      %843 = vmatprep.mubr.bf16.mxu0 0
      %844 = vmatmul.mubr.bf16.gmra.mrb[0].mxu0 %v742
      %v845 = vpop.f32.mrb[0].mxu0
      %v846 = vadd.f32 %v630, %v845
      %v847 = vpop.f32.mrb[0].mxu0
      %v848 = vpop.f32.mrb[0].mxu0
      %v849 = vadd.f32 %v633, %v848
      %v850 = vpop.f32.mrb[0].mxu0
      %851 = vmatprep.mubr.bf16.mxu0 0
      %852 = vmatmul.mubr.bf16.gmra.mrb[0].mxu0 %v744
      %v853 = vpop.f32.mrb[0].mxu0
      %v854 = vadd.f32 %v638, %v853
      %v855 = vpop.f32.mrb[0].mxu0
      %v856 = vpop.f32.mrb[0].mxu0
      %v857 = vadd.f32 %v641, %v856
      %v858 = vpop.f32.mrb[0].mxu0
      %859 = vmatprep.mubr.bf16.mxu0 0
      %860 = vmatmul.mubr.bf16.gmra.mrb[0].mxu0 %v746
      %v861 = vpop.f32.mrb[0].mxu0
      %v862 = vadd.f32 %v646, %v861
      %v863 = vpop.f32.mrb[0].mxu0
      %v864 = vpop.f32.mrb[0].mxu0
      %v865 = vadd.f32 %v649, %v864
      %v866 = vpop.f32.mrb[0].mxu0
      %867 = vmatprep.mubr.bf16.mxu0 0
      %868 = vmatmul.mubr.bf16.gmra.mrb[0].mxu0 %v748
      %v869 = vpop.f32.mrb[0].mxu0
      %v870 = vadd.f32 %v654, %v869
      %v871 = vpop.f32.mrb[0].mxu0
      %v872 = vpop.f32.mrb[0].mxu0
      %v873 = vadd.f32 %v657, %v872
      %v874 = vpop.f32.mrb[0].mxu0
      %875 = vmatprep.mubr.bf16.mxu0 0
      %876 = vmatmul.mubr.bf16.gmra.mrb[0].mxu0 %v750
      %v877 = vpop.f32.mrb[0].mxu0
      %v878 = vadd.f32 %v662, %v877
      %v879 = vpop.f32.mrb[0].mxu0
      %v880 = vpop.f32.mrb[0].mxu0
      %v881 = vadd.f32 %v665, %v880
      %v882 = vpop.f32.mrb[0].mxu0
      %883 = vmatprep.mubr.bf16.mxu0 0
      %884 = vmatmul.mubr.bf16.gmra.mrb[0].mxu0 %v752
      %v885 = vpop.f32.mrb[0].mxu0
      %v886 = vadd.f32 %v670, %v885
      %v887 = vpop.f32.mrb[0].mxu0
      %v888 = vpop.f32.mrb[0].mxu0
      %v889 = vadd.f32 %v673, %v888
      %v890 = vpop.f32.mrb[0].mxu0
      %891 = vmatprep.mubr.bf16.mxu0 0
      %892 = vmatmul.mubr.bf16.gmra.mrb[0].mxu0 %v754
      %v893 = vpop.f32.mrb[0].mxu0
      %v894 = vadd.f32 %v678, %v893
      %v895 = vpop.f32.mrb[0].mxu0
      %v896 = vpop.f32.mrb[0].mxu0
      %v897 = vadd.f32 %v681, %v896
      %v898 = vpop.f32.mrb[0].mxu0
      %899 = vmatprep.mubr.bf16.mxu0 0
      %900 = vmatmul.mubr.bf16.gmra.mrb[0].mxu0 %v756
      %v901 = vpop.f32.mrb[0].mxu0
      %v902 = vadd.f32 %v686, %v901
      %v903 = vpop.f32.mrb[0].mxu0
      %v904 = vpop.f32.mrb[0].mxu0
      %v905 = vadd.f32 %v689, %v904
      %v906 = vpop.f32.mrb[0].mxu0
      %907 = vmatprep.mubr.bf16.mxu0 0
      %908 = vmatmul.mubr.bf16.gmra.mrb[0].mxu0 %v758
      %v909 = vpop.f32.mrb[0].mxu0
      %v910 = vadd.f32 %v694, %v909
      %v911 = vpop.f32.mrb[0].mxu0
      %v912 = vpop.f32.mrb[0].mxu0
      %v913 = vadd.f32 %v697, %v912
      %v914 = vpop.f32.mrb[0].mxu0
      %915 = vmatprep.mubr.bf16.mxu0 0
      %916 = vmatmul.mubr.bf16.gmra.mrb[0].mxu0 %v760
      %v917 = vpop.f32.mrb[0].mxu0
      %v918 = vadd.f32 %v702, %v917
      %v919 = vpop.f32.mrb[0].mxu0
      %v920 = vpop.f32.mrb[0].mxu0
      %v921 = vadd.f32 %v705, %v920
      %v922 = vpop.f32.mrb[0].mxu0
      %923 = vmatprep.mubr.bf16.mxu0 0
      %924 = vmatmul.mubr.bf16.gmra.mrb[0].mxu0 %v762
      %v925 = vpop.f32.mrb[0].mxu0
      %v926 = vadd.f32 %v710, %v925
      %v927 = vpop.f32.mrb[0].mxu0
      %v928 = vpop.f32.mrb[0].mxu0
      %v929 = vadd.f32 %v713, %v928
      %v930 = vpop.f32.mrb[0].mxu0
      %931 = vmatprep.mubr.bf16.mxu0 0
      %932 = vmatmul.mubr.bf16.gmra.mrb[0].mxu0 %v764
      %v933 = vpop.f32.mrb[0].mxu0
      %v934 = vadd.f32 %v718, %v933
      %v935 = vpop.f32.mrb[0].mxu0
      %v936 = vpop.f32.mrb[0].mxu0
      %v937 = vadd.f32 %v721, %v936
      %v938 = vpop.f32.mrb[0].mxu0
      %939 = vmatprep.mubr.bf16.mxu0 0
      %940 = vmatmul.mubr.bf16.gmra.mrb[0].mxu0 %v766
      %v941 = vpop.f32.mrb[0].mxu0
      %v942 = vadd.f32 %v726, %v941
      %v943 = vpop.f32.mrb[0].mxu0
      %v944 = vpop.f32.mrb[0].mxu0
      %v945 = vadd.f32 %v729, %v944
      %v946 = vpop.f32.mrb[0].mxu0
      %947 = vdwg.mxu0
      %s948 = scalar_lea.vmem %s1, 4
      %v949 = vld [vmem:[%s948] sm:$0x3]
      %vm969 = vcmask 1046528
      %v970 = vrot.slane %v325, 1
      %v971 = vrot.slane %v326, 1
      %v972 = vsel %vm969, %v970, %v971
      %v973 = vrot.slane %v327, 1
      %v974 = vsel %vm969, %v971, %v973
      %v975 = vrot.slane %v328, 1
      %v976 = vsel %vm969, %v973, %v975
      %v977 = vrot.slane %v329, 1
      %v978 = vsel %vm969, %v975, %v977
      %v979 = vrot.slane %v330, 1
      %v980 = vsel %vm969, %v977, %v979
      %v981 = vrot.slane %v331, 1
      %v982 = vsel %vm969, %v979, %v981
      %v983 = vrot.slane %v332, 1
      %v984 = vsel %vm969, %v981, %v983
      %v985 = vrot.slane %v333, 1
      %v986 = vsel %vm969, %v983, %v985
      %v987 = vrot.slane %v334, 1
      %v988 = vsel %vm969, %v985, %v987
      %v989 = vrot.slane %v335, 1
      %v990 = vsel %vm969, %v987, %v989
      %v991 = vrot.slane %v336, 1
      %v992 = vsel %vm969, %v989, %v991
      %v993 = vrot.slane %v337, 1
      %v994 = vsel %vm969, %v991, %v993
      %v995 = vrot.slane %v338, 1
      %v996 = vsel %vm969, %v993, %v995
      %v997 = vrot.slane %v339, 1
      %v998 = vsel %vm969, %v995, %v997
      %v999 = vrot.slane %v340, 1
      %v1000 = vsel %vm969, %v997, %v999
      %v1001 = vrot.slane %v341, 1
      %v1002 = vsel %vm969, %v999, %v1001
      %v1003 = vrot.slane %v342, 1
      %v1004 = vsel %vm969, %v1001, %v1003
      %v1005 = vrot.slane %v344, 1
      %v1006 = vsel %vm969, %v1003, %v1005
      %v1008 = vsel %vm496, %v972, 0
      %v1011 = vsel %vm496, %v974, 0
      %v1014 = vsel %vm496, %v976, 0
      %v1017 = vsel %vm496, %v978, 0
      %v1020 = vsel %vm496, %v980, 0
      %v1023 = vsel %vm496, %v982, 0
      %v1026 = vsel %vm496, %v984, 0
      %v1029 = vsel %vm496, %v986, 0
      %v1032 = vsel %vm496, %v988, 0
      %v1035 = vsel %vm496, %v990, 0
      %v1038 = vsel %vm496, %v992, 0
      %v1041 = vsel %vm496, %v994, 0
      %v1044 = vsel %vm496, %v996, 0
      %v1047 = vsel %vm496, %v998, 0
      %v1050 = vsel %vm496, %v1000, 0
      %v1053 = vsel %vm496, %v1002, 0
      %v1056 = vsel %vm496, %v1004, 0
      %v1059 = vsel %vm496, %v1006, 0
      %v1062 = vsel %vm551, %v949, 0
      %1064 = vmatprep.subr.bf16.mxu0 0
      %1065 = vmatpush1.bf16.msra.mxu0 %v1062
      %1066 = vmatprep.subr.bf16.mxu0 0
      %1067 = vmatpush1.bf16.msra.mxu0 0
      %1068 = vmatprep.subr.bf16.mxu0 0
      %1069 = vmatpush1.bf16.msra.mxu0 0
      %1070 = vmatprep.subr.bf16.mxu0 0
      %1071 = vmatpush1.bf16.msra.mxu0 0
      %1072 = vmatprep.subr.bf16.mxu0 0
      %1073 = vmatpush1.bf16.msra.mxu0 0
      %1074 = vmatprep.subr.bf16.mxu0 0
      %1075 = vmatpush1.bf16.msra.mxu0 0
      %1076 = vmatprep.subr.bf16.mxu0 0
      %1077 = vmatpush1.bf16.msra.mxu0 0
      %1078 = vmatprep.subr.bf16.mxu0 0
      %1079 = vmatpush1.bf16.msra.mxu0 0
      %1080 = vmatprep.subr.bf16.mxu0 0
      %1081 = vmatpush1.bf16.msra.mxu0 0
      %1082 = vmatprep.subr.bf16.mxu0 0
      %1083 = vmatpush1.bf16.msra.mxu0 0
      %1084 = vmatprep.subr.bf16.mxu0 0
      %1085 = vmatpush1.bf16.msra.mxu0 0
      %1086 = vmatprep.subr.bf16.mxu0 0
      %1087 = vmatpush1.bf16.msra.mxu0 0
      %1088 = vmatprep.subr.bf16.mxu0 0
      %1089 = vmatpush1.bf16.msra.mxu0 0
      %1090 = vmatprep.subr.bf16.mxu0 0
      %1091 = vmatpush1.bf16.msra.mxu0 0
      %1092 = vmatprep.subr.bf16.mxu0 0
      %1093 = vmatpush1.bf16.msra.mxu0 0
      %1094 = vmatprep.subr.bf16.mxu0 0
      %1095 = vmatpush1.bf16.msra.mxu0 0
      %1096 = vmatprep.mubr.bf16.mxu0 0
      %1097 = vmatmul.mubr.bf16.gmra.mrb[0].mxu0 %v1008
      %v1098 = vpop.f32.mrb[0].mxu0
      %v1099 = vadd.f32 0.0, %v1098
      %v1100 = vpop.f32.mrb[0].mxu0
      %v1101 = vpop.f32.mrb[0].mxu0
      %v1102 = vadd.f32 0.0, %v1101
      %v1103 = vpop.f32.mrb[0].mxu0
      %1104 = vmatprep.mubr.bf16.mxu0 0
      %1105 = vmatmul.mubr.bf16.gmra.mrb[0].mxu0 %v1011
      %v1106 = vpop.f32.mrb[0].mxu0
      %v1107 = vadd.f32 0.0, %v1106
      %v1108 = vpop.f32.mrb[0].mxu0
      %v1109 = vpop.f32.mrb[0].mxu0
      %v1110 = vadd.f32 0.0, %v1109
      %v1111 = vpop.f32.mrb[0].mxu0
      %1112 = vmatprep.mubr.bf16.mxu0 0
      %1113 = vmatmul.mubr.bf16.gmra.mrb[0].mxu0 %v1014
      %v1114 = vpop.f32.mrb[0].mxu0
      %v1115 = vadd.f32 0.0, %v1114
      %v1116 = vpop.f32.mrb[0].mxu0
      %v1117 = vpop.f32.mrb[0].mxu0
      %v1118 = vadd.f32 0.0, %v1117
      %v1119 = vpop.f32.mrb[0].mxu0
      %1120 = vmatprep.mubr.bf16.mxu0 0
      %1121 = vmatmul.mubr.bf16.gmra.mrb[0].mxu0 %v1017
      %v1122 = vpop.f32.mrb[0].mxu0
      %v1123 = vadd.f32 0.0, %v1122
      %v1124 = vpop.f32.mrb[0].mxu0
      %v1125 = vpop.f32.mrb[0].mxu0
      %v1126 = vadd.f32 0.0, %v1125
      %v1127 = vpop.f32.mrb[0].mxu0
      %1128 = vmatprep.mubr.bf16.mxu0 0
      %1129 = vmatmul.mubr.bf16.gmra.mrb[0].mxu0 %v1020
      %v1130 = vpop.f32.mrb[0].mxu0
      %v1131 = vadd.f32 0.0, %v1130
      %v1132 = vpop.f32.mrb[0].mxu0
      %v1133 = vpop.f32.mrb[0].mxu0
      %v1134 = vadd.f32 0.0, %v1133
      %v1135 = vpop.f32.mrb[0].mxu0
      %1136 = vmatprep.mubr.bf16.mxu0 0
      %1137 = vmatmul.mubr.bf16.gmra.mrb[0].mxu0 %v1023
      %v1138 = vpop.f32.mrb[0].mxu0
      %v1139 = vadd.f32 0.0, %v1138
      %v1140 = vpop.f32.mrb[0].mxu0
      %v1141 = vpop.f32.mrb[0].mxu0
      %v1142 = vadd.f32 0.0, %v1141
      %v1143 = vpop.f32.mrb[0].mxu0
      %1144 = vmatprep.mubr.bf16.mxu0 0
      %1145 = vmatmul.mubr.bf16.gmra.mrb[0].mxu0 %v1026
      %v1146 = vpop.f32.mrb[0].mxu0
      %v1147 = vadd.f32 0.0, %v1146
      %v1148 = vpop.f32.mrb[0].mxu0
      %v1149 = vpop.f32.mrb[0].mxu0
      %v1150 = vadd.f32 0.0, %v1149
      %v1151 = vpop.f32.mrb[0].mxu0
      %1152 = vmatprep.mubr.bf16.mxu0 0
      %1153 = vmatmul.mubr.bf16.gmra.mrb[0].mxu0 %v1029
      %v1154 = vpop.f32.mrb[0].mxu0
      %v1155 = vadd.f32 0.0, %v1154
      %v1156 = vpop.f32.mrb[0].mxu0
      %v1157 = vpop.f32.mrb[0].mxu0
      %v1158 = vadd.f32 0.0, %v1157
      %v1159 = vpop.f32.mrb[0].mxu0
      %1160 = vmatprep.mubr.bf16.mxu0 0
      %1161 = vmatmul.mubr.bf16.gmra.mrb[0].mxu0 %v1032
      %v1162 = vpop.f32.mrb[0].mxu0
      %v1163 = vadd.f32 0.0, %v1162
      %v1164 = vpop.f32.mrb[0].mxu0
      %v1165 = vpop.f32.mrb[0].mxu0
      %v1166 = vadd.f32 0.0, %v1165
      %v1167 = vpop.f32.mrb[0].mxu0
      %1168 = vmatprep.mubr.bf16.mxu0 0
      %1169 = vmatmul.mubr.bf16.gmra.mrb[0].mxu0 %v1035
      %v1170 = vpop.f32.mrb[0].mxu0
      %v1171 = vadd.f32 0.0, %v1170
      %v1172 = vpop.f32.mrb[0].mxu0
      %v1173 = vpop.f32.mrb[0].mxu0
      %v1174 = vadd.f32 0.0, %v1173
      %v1175 = vpop.f32.mrb[0].mxu0
      %1176 = vmatprep.mubr.bf16.mxu0 0
      %1177 = vmatmul.mubr.bf16.gmra.mrb[0].mxu0 %v1038
      %v1178 = vpop.f32.mrb[0].mxu0
      %v1179 = vadd.f32 0.0, %v1178
      %v1180 = vpop.f32.mrb[0].mxu0
      %v1181 = vpop.f32.mrb[0].mxu0
      %v1182 = vadd.f32 0.0, %v1181
      %v1183 = vpop.f32.mrb[0].mxu0
      %1184 = vmatprep.mubr.bf16.mxu0 0
      %1185 = vmatmul.mubr.bf16.gmra.mrb[0].mxu0 %v1041
      %v1186 = vpop.f32.mrb[0].mxu0
      %v1187 = vadd.f32 0.0, %v1186
      %v1188 = vpop.f32.mrb[0].mxu0
      %v1189 = vpop.f32.mrb[0].mxu0
      %v1190 = vadd.f32 0.0, %v1189
      %v1191 = vpop.f32.mrb[0].mxu0
      %1192 = vmatprep.mubr.bf16.mxu0 0
      %1193 = vmatmul.mubr.bf16.gmra.mrb[0].mxu0 %v1044
      %v1194 = vpop.f32.mrb[0].mxu0
      %v1195 = vadd.f32 0.0, %v1194
      %v1196 = vpop.f32.mrb[0].mxu0
      %v1197 = vpop.f32.mrb[0].mxu0
      %v1198 = vadd.f32 0.0, %v1197
      %v1199 = vpop.f32.mrb[0].mxu0
      %1200 = vmatprep.mubr.bf16.mxu0 0
      %1201 = vmatmul.mubr.bf16.gmra.mrb[0].mxu0 %v1047
      %v1202 = vpop.f32.mrb[0].mxu0
      %v1203 = vadd.f32 0.0, %v1202
      %v1204 = vpop.f32.mrb[0].mxu0
      %v1205 = vpop.f32.mrb[0].mxu0
      %v1206 = vadd.f32 0.0, %v1205
      %v1207 = vpop.f32.mrb[0].mxu0
      %1208 = vmatprep.mubr.bf16.mxu0 0
      %1209 = vmatmul.mubr.bf16.gmra.mrb[0].mxu0 %v1050
      %v1210 = vpop.f32.mrb[0].mxu0
      %v1211 = vadd.f32 0.0, %v1210
      %v1212 = vpop.f32.mrb[0].mxu0
      %v1213 = vpop.f32.mrb[0].mxu0
      %v1214 = vadd.f32 0.0, %v1213
      %v1215 = vpop.f32.mrb[0].mxu0
      %1216 = vmatprep.mubr.bf16.mxu0 0
      %1217 = vmatmul.mubr.bf16.gmra.mrb[0].mxu0 %v1053
      %v1218 = vpop.f32.mrb[0].mxu0
      %v1219 = vadd.f32 0.0, %v1218
      %v1220 = vpop.f32.mrb[0].mxu0
      %v1221 = vpop.f32.mrb[0].mxu0
      %v1222 = vadd.f32 0.0, %v1221
      %v1223 = vpop.f32.mrb[0].mxu0
      %1224 = vmatprep.mubr.bf16.mxu0 0
      %1225 = vmatmul.mubr.bf16.gmra.mrb[0].mxu0 %v1056
      %v1226 = vpop.f32.mrb[0].mxu0
      %v1227 = vadd.f32 0.0, %v1226
      %v1228 = vpop.f32.mrb[0].mxu0
      %v1229 = vpop.f32.mrb[0].mxu0
      %v1230 = vadd.f32 0.0, %v1229
      %v1231 = vpop.f32.mrb[0].mxu0
      %1232 = vmatprep.mubr.bf16.mxu0 0
      %1233 = vmatmul.mubr.bf16.gmra.mrb[0].mxu0 %v1059
      %v1234 = vpop.f32.mrb[0].mxu0
      %v1235 = vadd.f32 0.0, %v1234
      %v1236 = vpop.f32.mrb[0].mxu0
      %v1237 = vpop.f32.mrb[0].mxu0
      %v1238 = vadd.f32 0.0, %v1237
      %v1239 = vpop.f32.mrb[0].mxu0
      %1240 = vdwg.mxu0
      %v1241 = vadd.f32 %v806, %v1099
      %v1242 = vadd.f32 %v809, %v1102
      %v1243 = vadd.f32 %v814, %v1107
      %v1244 = vadd.f32 %v817, %v1110
      %v1245 = vadd.f32 %v822, %v1115
      %v1246 = vadd.f32 %v825, %v1118
      %v1247 = vadd.f32 %v830, %v1123
      %v1248 = vadd.f32 %v833, %v1126
      %v1249 = vadd.f32 %v838, %v1131
      %v1250 = vadd.f32 %v841, %v1134
      %v1251 = vadd.f32 %v846, %v1139
      %v1252 = vadd.f32 %v849, %v1142
      %v1253 = vadd.f32 %v854, %v1147
      %v1254 = vadd.f32 %v857, %v1150
      %v1255 = vadd.f32 %v862, %v1155
      %v1256 = vadd.f32 %v865, %v1158
      %v1257 = vadd.f32 %v870, %v1163
      %v1258 = vadd.f32 %v873, %v1166
      %v1259 = vadd.f32 %v878, %v1171
      %v1260 = vadd.f32 %v881, %v1174
      %v1261 = vadd.f32 %v886, %v1179
      %v1262 = vadd.f32 %v889, %v1182
      %v1263 = vadd.f32 %v894, %v1187
      %v1264 = vadd.f32 %v897, %v1190
      %v1265 = vadd.f32 %v902, %v1195
      %v1266 = vadd.f32 %v905, %v1198
      %v1267 = vadd.f32 %v910, %v1203
      %v1268 = vadd.f32 %v913, %v1206
      %v1269 = vadd.f32 %v918, %v1211
      %v1270 = vadd.f32 %v921, %v1214
      %v1271 = vadd.f32 %v926, %v1219
      %v1272 = vadd.f32 %v929, %v1222
      %v1273 = vadd.f32 %v934, %v1227
      %v1274 = vadd.f32 %v937, %v1230
      %v1275 = vadd.f32 %v942, %v1235
      %v1276 = vadd.f32 %v945, %v1238
      %v1277 = vpack.c.bf16 %v321, %v320
      %v1278 = vpack.c.bf16 %v322, %v322
      %s1279 = scalar_lea.vmem %s1, 6
      %v1280 = vld [vmem:[%s1279] sm:$0x3]
      %v1283 = vrot.slane %v1277, 1
      %v1284 = vsel %vm969, %v1003, %v1283
      %v1285 = vrot.slane %v1278, 1
      %v1286 = vsel %vm969, %v1283, %v1285
      %v1288 = vsel %vm496, %v1284, 0
      %v1291 = vsel %vm496, %v1286, 0
      %v1294 = vsel %vm551, %v1280, 0
      %1296 = vmatprep.subr.bf16.mxu0 0
      %1297 = vmatpush1.bf16.msra.mxu0 %v1294
      %1298 = vmatprep.subr.bf16.mxu0 0
      %1299 = vmatpush1.bf16.msra.mxu0 0
      %1300 = vmatprep.subr.bf16.mxu0 0
      %1301 = vmatpush1.bf16.msra.mxu0 0
      %1302 = vmatprep.subr.bf16.mxu0 0
      %1303 = vmatpush1.bf16.msra.mxu0 0
      %1304 = vmatprep.subr.bf16.mxu0 0
      %1305 = vmatpush1.bf16.msra.mxu0 0
      %1306 = vmatprep.subr.bf16.mxu0 0
      %1307 = vmatpush1.bf16.msra.mxu0 0
      %1308 = vmatprep.subr.bf16.mxu0 0
      %1309 = vmatpush1.bf16.msra.mxu0 0
      %1310 = vmatprep.subr.bf16.mxu0 0
      %1311 = vmatpush1.bf16.msra.mxu0 0
      %1312 = vmatprep.subr.bf16.mxu0 0
      %1313 = vmatpush1.bf16.msra.mxu0 0
      %1314 = vmatprep.subr.bf16.mxu0 0
      %1315 = vmatpush1.bf16.msra.mxu0 0
      %1316 = vmatprep.subr.bf16.mxu0 0
      %1317 = vmatpush1.bf16.msra.mxu0 0
      %1318 = vmatprep.subr.bf16.mxu0 0
      %1319 = vmatpush1.bf16.msra.mxu0 0
      %1320 = vmatprep.subr.bf16.mxu0 0
      %1321 = vmatpush1.bf16.msra.mxu0 0
      %1322 = vmatprep.subr.bf16.mxu0 0
      %1323 = vmatpush1.bf16.msra.mxu0 0
      %1324 = vmatprep.subr.bf16.mxu0 0
      %1325 = vmatpush1.bf16.msra.mxu0 0
      %1326 = vmatprep.subr.bf16.mxu0 0
      %1327 = vmatpush1.bf16.msra.mxu0 0
      %1328 = vmatprep.mubr.bf16.mxu0 0
      %1329 = vmatmul.mubr.bf16.gmra.mrb[0].mxu0 %v1011
      %v1330 = vpop.f32.mrb[0].mxu0
      %v1331 = vadd.f32 0.0, %v1330
      %v1332 = vpop.f32.mrb[0].mxu0
      %v1333 = vpop.f32.mrb[0].mxu0
      %v1334 = vadd.f32 0.0, %v1333
      %v1335 = vpop.f32.mrb[0].mxu0
      %1336 = vmatprep.mubr.bf16.mxu0 0
      %1337 = vmatmul.mubr.bf16.gmra.mrb[0].mxu0 %v1014
      %v1338 = vpop.f32.mrb[0].mxu0
      %v1339 = vadd.f32 0.0, %v1338
      %v1340 = vpop.f32.mrb[0].mxu0
      %v1341 = vpop.f32.mrb[0].mxu0
      %v1342 = vadd.f32 0.0, %v1341
      %v1343 = vpop.f32.mrb[0].mxu0
      %1344 = vmatprep.mubr.bf16.mxu0 0
      %1345 = vmatmul.mubr.bf16.gmra.mrb[0].mxu0 %v1017
      %v1346 = vpop.f32.mrb[0].mxu0
      %v1347 = vadd.f32 0.0, %v1346
      %v1348 = vpop.f32.mrb[0].mxu0
      %v1349 = vpop.f32.mrb[0].mxu0
      %v1350 = vadd.f32 0.0, %v1349
      %v1351 = vpop.f32.mrb[0].mxu0
      %1352 = vmatprep.mubr.bf16.mxu0 0
      %1353 = vmatmul.mubr.bf16.gmra.mrb[0].mxu0 %v1020
      %v1354 = vpop.f32.mrb[0].mxu0
      %v1355 = vadd.f32 0.0, %v1354
      %v1356 = vpop.f32.mrb[0].mxu0
      %v1357 = vpop.f32.mrb[0].mxu0
      %v1358 = vadd.f32 0.0, %v1357
      %v1359 = vpop.f32.mrb[0].mxu0
      %1360 = vmatprep.mubr.bf16.mxu0 0
      %1361 = vmatmul.mubr.bf16.gmra.mrb[0].mxu0 %v1023
      %v1362 = vpop.f32.mrb[0].mxu0
      %v1363 = vadd.f32 0.0, %v1362
      %v1364 = vpop.f32.mrb[0].mxu0
      %v1365 = vpop.f32.mrb[0].mxu0
      %v1366 = vadd.f32 0.0, %v1365
      %v1367 = vpop.f32.mrb[0].mxu0
      %1368 = vmatprep.mubr.bf16.mxu0 0
      %1369 = vmatmul.mubr.bf16.gmra.mrb[0].mxu0 %v1026
      %v1370 = vpop.f32.mrb[0].mxu0
      %v1371 = vadd.f32 0.0, %v1370
      %v1372 = vpop.f32.mrb[0].mxu0
      %v1373 = vpop.f32.mrb[0].mxu0
      %v1374 = vadd.f32 0.0, %v1373
      %v1375 = vpop.f32.mrb[0].mxu0
      %1376 = vmatprep.mubr.bf16.mxu0 0
      %1377 = vmatmul.mubr.bf16.gmra.mrb[0].mxu0 %v1029
      %v1378 = vpop.f32.mrb[0].mxu0
      %v1379 = vadd.f32 0.0, %v1378
      %v1380 = vpop.f32.mrb[0].mxu0
      %v1381 = vpop.f32.mrb[0].mxu0
      %v1382 = vadd.f32 0.0, %v1381
      %v1383 = vpop.f32.mrb[0].mxu0
      %1384 = vmatprep.mubr.bf16.mxu0 0
      %1385 = vmatmul.mubr.bf16.gmra.mrb[0].mxu0 %v1032
      %v1386 = vpop.f32.mrb[0].mxu0
      %v1387 = vadd.f32 0.0, %v1386
      %v1388 = vpop.f32.mrb[0].mxu0
      %v1389 = vpop.f32.mrb[0].mxu0
      %v1390 = vadd.f32 0.0, %v1389
      %v1391 = vpop.f32.mrb[0].mxu0
      %1392 = vmatprep.mubr.bf16.mxu0 0
      %1393 = vmatmul.mubr.bf16.gmra.mrb[0].mxu0 %v1035
      %v1394 = vpop.f32.mrb[0].mxu0
      %v1395 = vadd.f32 0.0, %v1394
      %v1396 = vpop.f32.mrb[0].mxu0
      %v1397 = vpop.f32.mrb[0].mxu0
      %v1398 = vadd.f32 0.0, %v1397
      %v1399 = vpop.f32.mrb[0].mxu0
      %1400 = vmatprep.mubr.bf16.mxu0 0
      %1401 = vmatmul.mubr.bf16.gmra.mrb[0].mxu0 %v1038
      %v1402 = vpop.f32.mrb[0].mxu0
      %v1403 = vadd.f32 0.0, %v1402
      %v1404 = vpop.f32.mrb[0].mxu0
      %v1405 = vpop.f32.mrb[0].mxu0
      %v1406 = vadd.f32 0.0, %v1405
      %v1407 = vpop.f32.mrb[0].mxu0
      %1408 = vmatprep.mubr.bf16.mxu0 0
      %1409 = vmatmul.mubr.bf16.gmra.mrb[0].mxu0 %v1041
      %v1410 = vpop.f32.mrb[0].mxu0
      %v1411 = vadd.f32 0.0, %v1410
      %v1412 = vpop.f32.mrb[0].mxu0
      %v1413 = vpop.f32.mrb[0].mxu0
      %v1414 = vadd.f32 0.0, %v1413
      %v1415 = vpop.f32.mrb[0].mxu0
      %1416 = vmatprep.mubr.bf16.mxu0 0
      %1417 = vmatmul.mubr.bf16.gmra.mrb[0].mxu0 %v1044
      %v1418 = vpop.f32.mrb[0].mxu0
      %v1419 = vadd.f32 0.0, %v1418
      %v1420 = vpop.f32.mrb[0].mxu0
      %v1421 = vpop.f32.mrb[0].mxu0
      %v1422 = vadd.f32 0.0, %v1421
      %v1423 = vpop.f32.mrb[0].mxu0
      %1424 = vmatprep.mubr.bf16.mxu0 0
      %1425 = vmatmul.mubr.bf16.gmra.mrb[0].mxu0 %v1047
      %v1426 = vpop.f32.mrb[0].mxu0
      %v1427 = vadd.f32 0.0, %v1426
      %v1428 = vpop.f32.mrb[0].mxu0
      %v1429 = vpop.f32.mrb[0].mxu0
      %v1430 = vadd.f32 0.0, %v1429
      %v1431 = vpop.f32.mrb[0].mxu0
      %1432 = vmatprep.mubr.bf16.mxu0 0
      %1433 = vmatmul.mubr.bf16.gmra.mrb[0].mxu0 %v1050
      %v1434 = vpop.f32.mrb[0].mxu0
      %v1435 = vadd.f32 0.0, %v1434
      %v1436 = vpop.f32.mrb[0].mxu0
      %v1437 = vpop.f32.mrb[0].mxu0
      %v1438 = vadd.f32 0.0, %v1437
      %v1439 = vpop.f32.mrb[0].mxu0
      %1440 = vmatprep.mubr.bf16.mxu0 0
      %1441 = vmatmul.mubr.bf16.gmra.mrb[0].mxu0 %v1053
      %v1442 = vpop.f32.mrb[0].mxu0
      %v1443 = vadd.f32 0.0, %v1442
      %v1444 = vpop.f32.mrb[0].mxu0
      %v1445 = vpop.f32.mrb[0].mxu0
      %v1446 = vadd.f32 0.0, %v1445
      %v1447 = vpop.f32.mrb[0].mxu0
      %1448 = vmatprep.mubr.bf16.mxu0 0
      %1449 = vmatmul.mubr.bf16.gmra.mrb[0].mxu0 %v1056
      %v1450 = vpop.f32.mrb[0].mxu0
      %v1451 = vadd.f32 0.0, %v1450
      %v1452 = vpop.f32.mrb[0].mxu0
      %v1453 = vpop.f32.mrb[0].mxu0
      %v1454 = vadd.f32 0.0, %v1453
      %v1455 = vpop.f32.mrb[0].mxu0
      %1456 = vmatprep.mubr.bf16.mxu0 0
      %1457 = vmatmul.mubr.bf16.gmra.mrb[0].mxu0 %v1288
      %v1458 = vpop.f32.mrb[0].mxu0
      %v1459 = vadd.f32 0.0, %v1458
      %v1460 = vpop.f32.mrb[0].mxu0
      %v1461 = vpop.f32.mrb[0].mxu0
      %v1462 = vadd.f32 0.0, %v1461
      %v1463 = vpop.f32.mrb[0].mxu0
      %1464 = vmatprep.mubr.bf16.mxu0 0
      %1465 = vmatmul.mubr.bf16.gmra.mrb[0].mxu0 %v1291
      %v1466 = vpop.f32.mrb[0].mxu0
      %v1467 = vadd.f32 0.0, %v1466
      %v1468 = vpop.f32.mrb[0].mxu0
      %v1469 = vpop.f32.mrb[0].mxu0
      %v1470 = vadd.f32 0.0, %v1469
      %v1471 = vpop.f32.mrb[0].mxu0
      %1472 = vdwg.mxu0
      %v1473 = vadd.f32 %v1241, %v1331
      %v1474 = vadd.f32 %v1242, %v1334
      %v1475 = vadd.f32 %v1243, %v1339
      %v1476 = vadd.f32 %v1244, %v1342
      %v1477 = vadd.f32 %v1245, %v1347
      %v1478 = vadd.f32 %v1246, %v1350
      %v1479 = vadd.f32 %v1247, %v1355
      %v1480 = vadd.f32 %v1248, %v1358
      %v1481 = vadd.f32 %v1249, %v1363
      %v1482 = vadd.f32 %v1250, %v1366
      %v1483 = vadd.f32 %v1251, %v1371
      %v1484 = vadd.f32 %v1252, %v1374
      %v1485 = vadd.f32 %v1253, %v1379
      %v1486 = vadd.f32 %v1254, %v1382
      %v1487 = vadd.f32 %v1255, %v1387
      %v1488 = vadd.f32 %v1256, %v1390
      %v1489 = vadd.f32 %v1257, %v1395
      %v1490 = vadd.f32 %v1258, %v1398
      %v1491 = vadd.f32 %v1259, %v1403
      %v1492 = vadd.f32 %v1260, %v1406
      %v1493 = vadd.f32 %v1261, %v1411
      %v1494 = vadd.f32 %v1262, %v1414
      %v1495 = vadd.f32 %v1263, %v1419
      %v1496 = vadd.f32 %v1264, %v1422
      %v1497 = vadd.f32 %v1265, %v1427
      %v1498 = vadd.f32 %v1266, %v1430
      %v1499 = vadd.f32 %v1267, %v1435
      %v1500 = vadd.f32 %v1268, %v1438
      %v1501 = vadd.f32 %v1269, %v1443
      %v1502 = vadd.f32 %v1270, %v1446
      %v1503 = vadd.f32 %v1271, %v1451
      %v1504 = vadd.f32 %v1272, %v1454
      %v1505 = vadd.f32 %v1273, %v1459
      %v1506 = vadd.f32 %v1274, %v1462
      %v1507 = vadd.f32 %v1275, %v1467
      %v1508 = vadd.f32 %v1276, %v1470
      %s1509 = scalar_lea.vmem %s1, 8
      %v1510 = vld [vmem:[%s1509] sm:$0x3]
      %vm1511 = vsmask.f32 6400
      %v1512 = vrot.slane %v360, 1
      %v1513 = vrot.slane %v356, 2
      %v1514 = vor.u32 %v1512, %v1513
      %v1515 = vrot.slane %v368, 1
      %v1516 = vrot.slane %v364, 2
      %v1517 = vor.u32 %v1515, %v1516
      %v1518 = vsel %vm1511, %v1514, %v1517
      %v1519 = vrot.slane %v376, 1
      %v1520 = vrot.slane %v372, 2
      %v1521 = vor.u32 %v1519, %v1520
      %v1522 = vsel %vm1511, %v1517, %v1521
      %v1523 = vrot.slane %v384, 1
      %v1524 = vrot.slane %v380, 2
      %v1525 = vor.u32 %v1523, %v1524
      %v1526 = vsel %vm1511, %v1521, %v1525
      %v1527 = vrot.slane %v392, 1
      %v1528 = vrot.slane %v388, 2
      %v1529 = vor.u32 %v1527, %v1528
      %v1530 = vsel %vm1511, %v1525, %v1529
      %v1531 = vrot.slane %v400, 1
      %v1532 = vrot.slane %v396, 2
      %v1533 = vor.u32 %v1531, %v1532
      %v1534 = vsel %vm1511, %v1529, %v1533
      %v1535 = vrot.slane %v408, 1
      %v1536 = vrot.slane %v404, 2
      %v1537 = vor.u32 %v1535, %v1536
      %v1538 = vsel %vm1511, %v1533, %v1537
      %v1539 = vrot.slane %v416, 1
      %v1540 = vrot.slane %v412, 2
      %v1541 = vor.u32 %v1539, %v1540
      %v1542 = vsel %vm1511, %v1537, %v1541
      %v1543 = vrot.slane %v424, 1
      %v1544 = vrot.slane %v420, 2
      %v1545 = vor.u32 %v1543, %v1544
      %v1546 = vsel %vm1511, %v1541, %v1545
      %v1547 = vrot.slane %v432, 1
      %v1548 = vrot.slane %v428, 2
      %v1549 = vor.u32 %v1547, %v1548
      %v1550 = vsel %vm1511, %v1545, %v1549
      %v1551 = vrot.slane %v440, 1
      %v1552 = vrot.slane %v436, 2
      %v1553 = vor.u32 %v1551, %v1552
      %v1554 = vsel %vm1511, %v1549, %v1553
      %v1555 = vrot.slane %v448, 1
      %v1556 = vrot.slane %v444, 2
      %v1557 = vor.u32 %v1555, %v1556
      %v1558 = vsel %vm1511, %v1553, %v1557
      %v1559 = vrot.slane %v456, 1
      %v1560 = vrot.slane %v452, 2
      %v1561 = vor.u32 %v1559, %v1560
      %v1562 = vsel %vm1511, %v1557, %v1561
      %v1563 = vrot.slane %v464, 1
      %v1564 = vrot.slane %v460, 2
      %v1565 = vor.u32 %v1563, %v1564
      %v1566 = vsel %vm1511, %v1561, %v1565
      %v1567 = vrot.slane %v472, 1
      %v1568 = vrot.slane %v468, 2
      %v1569 = vor.u32 %v1567, %v1568
      %v1570 = vsel %vm1511, %v1565, %v1569
      %v1571 = vrot.slane %v480, 1
      %v1572 = vrot.slane %v476, 2
      %v1573 = vor.u32 %v1571, %v1572
      %v1574 = vsel %vm1511, %v1569, %v1573
      %v1575 = vrot.slane %v488, 1
      %v1576 = vrot.slane %v484, 2
      %v1577 = vor.u32 %v1575, %v1576
      %v1578 = vsel %vm1511, %v1573, %v1577
      %v1580 = vshrl.u32 %v1277, 16
      %v1582 = vrot.slane %v1580, 1
      %v1583 = vshll.u32 %v1277, 16
      %v1585 = vrot.slane %v1583, 2
      %v1586 = vor.u32 %v1582, %v1585
      %v1587 = vsel %vm1511, %v1577, %v1586
      %v1589 = vshrl.u32 %v1278, 16
      %v1591 = vrot.slane %v1589, 1
      %v1592 = vshll.u32 %v1278, 16
      %v1594 = vrot.slane %v1592, 2
      %v1595 = vor.u32 %v1591, %v1594
      %v1596 = vsel %vm1511, %v1586, %v1595
      %v1598 = vsel %vm496, %v1518, 0
      %v1601 = vsel %vm496, %v1522, 0
      %v1604 = vsel %vm496, %v1526, 0
      %v1607 = vsel %vm496, %v1530, 0
      %v1610 = vsel %vm496, %v1534, 0
      %v1613 = vsel %vm496, %v1538, 0
      %v1616 = vsel %vm496, %v1542, 0
      %v1619 = vsel %vm496, %v1546, 0
      %v1622 = vsel %vm496, %v1550, 0
      %v1625 = vsel %vm496, %v1554, 0
      %v1628 = vsel %vm496, %v1558, 0
      %v1631 = vsel %vm496, %v1562, 0
      %v1634 = vsel %vm496, %v1566, 0
      %v1637 = vsel %vm496, %v1570, 0
      %v1640 = vsel %vm496, %v1574, 0
      %v1643 = vsel %vm496, %v1578, 0
      %v1646 = vsel %vm496, %v1587, 0
      %v1649 = vsel %vm496, %v1596, 0
      %v1652 = vsel %vm551, %v1510, 0
      %1654 = vmatprep.subr.bf16.mxu0 0
      %1655 = vmatpush1.bf16.msra.mxu0 %v1652
      %1656 = vmatprep.subr.bf16.mxu0 0
      %1657 = vmatpush1.bf16.msra.mxu0 0
      %1658 = vmatprep.subr.bf16.mxu0 0
      %1659 = vmatpush1.bf16.msra.mxu0 0
      %1660 = vmatprep.subr.bf16.mxu0 0
      %1661 = vmatpush1.bf16.msra.mxu0 0
      %1662 = vmatprep.subr.bf16.mxu0 0
      %1663 = vmatpush1.bf16.msra.mxu0 0
      %1664 = vmatprep.subr.bf16.mxu0 0
      %1665 = vmatpush1.bf16.msra.mxu0 0
      %1666 = vmatprep.subr.bf16.mxu0 0
      %1667 = vmatpush1.bf16.msra.mxu0 0
      %1668 = vmatprep.subr.bf16.mxu0 0
      %1669 = vmatpush1.bf16.msra.mxu0 0
      %1670 = vmatprep.subr.bf16.mxu0 0
      %1671 = vmatpush1.bf16.msra.mxu0 0
      %1672 = vmatprep.subr.bf16.mxu0 0
      %1673 = vmatpush1.bf16.msra.mxu0 0
      %1674 = vmatprep.subr.bf16.mxu0 0
      %1675 = vmatpush1.bf16.msra.mxu0 0
      %1676 = vmatprep.subr.bf16.mxu0 0
      %1677 = vmatpush1.bf16.msra.mxu0 0
      %1678 = vmatprep.subr.bf16.mxu0 0
      %1679 = vmatpush1.bf16.msra.mxu0 0
      %1680 = vmatprep.subr.bf16.mxu0 0
      %1681 = vmatpush1.bf16.msra.mxu0 0
      %1682 = vmatprep.subr.bf16.mxu0 0
      %1683 = vmatpush1.bf16.msra.mxu0 0
      %1684 = vmatprep.subr.bf16.mxu0 0
      %1685 = vmatpush1.bf16.msra.mxu0 0
      %1686 = vmatprep.mubr.bf16.mxu0 0
      %1687 = vmatmul.mubr.bf16.gmra.mrb[0].mxu0 %v1598
      %v1688 = vpop.f32.mrb[0].mxu0
      %v1689 = vadd.f32 0.0, %v1688
      %v1690 = vpop.f32.mrb[0].mxu0
      %v1691 = vpop.f32.mrb[0].mxu0
      %v1692 = vadd.f32 0.0, %v1691
      %v1693 = vpop.f32.mrb[0].mxu0
      %1694 = vmatprep.mubr.bf16.mxu0 0
      %1695 = vmatmul.mubr.bf16.gmra.mrb[0].mxu0 %v1601
      %v1696 = vpop.f32.mrb[0].mxu0
      %v1697 = vadd.f32 0.0, %v1696
      %v1698 = vpop.f32.mrb[0].mxu0
      %v1699 = vpop.f32.mrb[0].mxu0
      %v1700 = vadd.f32 0.0, %v1699
      %v1701 = vpop.f32.mrb[0].mxu0
      %1702 = vmatprep.mubr.bf16.mxu0 0
      %1703 = vmatmul.mubr.bf16.gmra.mrb[0].mxu0 %v1604
      %v1704 = vpop.f32.mrb[0].mxu0
      %v1705 = vadd.f32 0.0, %v1704
      %v1706 = vpop.f32.mrb[0].mxu0
      %v1707 = vpop.f32.mrb[0].mxu0
      %v1708 = vadd.f32 0.0, %v1707
      %v1709 = vpop.f32.mrb[0].mxu0
      %1710 = vmatprep.mubr.bf16.mxu0 0
      %1711 = vmatmul.mubr.bf16.gmra.mrb[0].mxu0 %v1607
      %v1712 = vpop.f32.mrb[0].mxu0
      %v1713 = vadd.f32 0.0, %v1712
      %v1714 = vpop.f32.mrb[0].mxu0
      %v1715 = vpop.f32.mrb[0].mxu0
      %v1716 = vadd.f32 0.0, %v1715
      %v1717 = vpop.f32.mrb[0].mxu0
      %1718 = vmatprep.mubr.bf16.mxu0 0
      %1719 = vmatmul.mubr.bf16.gmra.mrb[0].mxu0 %v1610
      %v1720 = vpop.f32.mrb[0].mxu0
      %v1721 = vadd.f32 0.0, %v1720
      %v1722 = vpop.f32.mrb[0].mxu0
      %v1723 = vpop.f32.mrb[0].mxu0
      %v1724 = vadd.f32 0.0, %v1723
      %v1725 = vpop.f32.mrb[0].mxu0
      %1726 = vmatprep.mubr.bf16.mxu0 0
      %1727 = vmatmul.mubr.bf16.gmra.mrb[0].mxu0 %v1613
      %v1728 = vpop.f32.mrb[0].mxu0
      %v1729 = vadd.f32 0.0, %v1728
      %v1730 = vpop.f32.mrb[0].mxu0
      %v1731 = vpop.f32.mrb[0].mxu0
      %v1732 = vadd.f32 0.0, %v1731
      %v1733 = vpop.f32.mrb[0].mxu0
      %1734 = vmatprep.mubr.bf16.mxu0 0
      %1735 = vmatmul.mubr.bf16.gmra.mrb[0].mxu0 %v1616
      %v1736 = vpop.f32.mrb[0].mxu0
      %v1737 = vadd.f32 0.0, %v1736
      %v1738 = vpop.f32.mrb[0].mxu0
      %v1739 = vpop.f32.mrb[0].mxu0
      %v1740 = vadd.f32 0.0, %v1739
      %v1741 = vpop.f32.mrb[0].mxu0
      %1742 = vmatprep.mubr.bf16.mxu0 0
      %1743 = vmatmul.mubr.bf16.gmra.mrb[0].mxu0 %v1619
      %v1744 = vpop.f32.mrb[0].mxu0
      %v1745 = vadd.f32 0.0, %v1744
      %v1746 = vpop.f32.mrb[0].mxu0
      %v1747 = vpop.f32.mrb[0].mxu0
      %v1748 = vadd.f32 0.0, %v1747
      %v1749 = vpop.f32.mrb[0].mxu0
      %1750 = vmatprep.mubr.bf16.mxu0 0
      %1751 = vmatmul.mubr.bf16.gmra.mrb[0].mxu0 %v1622
      %v1752 = vpop.f32.mrb[0].mxu0
      %v1753 = vadd.f32 0.0, %v1752
      %v1754 = vpop.f32.mrb[0].mxu0
      %v1755 = vpop.f32.mrb[0].mxu0
      %v1756 = vadd.f32 0.0, %v1755
      %v1757 = vpop.f32.mrb[0].mxu0
      %1758 = vmatprep.mubr.bf16.mxu0 0
      %1759 = vmatmul.mubr.bf16.gmra.mrb[0].mxu0 %v1625
      %v1760 = vpop.f32.mrb[0].mxu0
      %v1761 = vadd.f32 0.0, %v1760
      %v1762 = vpop.f32.mrb[0].mxu0
      %v1763 = vpop.f32.mrb[0].mxu0
      %v1764 = vadd.f32 0.0, %v1763
      %v1765 = vpop.f32.mrb[0].mxu0
      %1766 = vmatprep.mubr.bf16.mxu0 0
      %1767 = vmatmul.mubr.bf16.gmra.mrb[0].mxu0 %v1628
      %v1768 = vpop.f32.mrb[0].mxu0
      %v1769 = vadd.f32 0.0, %v1768
      %v1770 = vpop.f32.mrb[0].mxu0
      %v1771 = vpop.f32.mrb[0].mxu0
      %v1772 = vadd.f32 0.0, %v1771
      %v1773 = vpop.f32.mrb[0].mxu0
      %1774 = vmatprep.mubr.bf16.mxu0 0
      %1775 = vmatmul.mubr.bf16.gmra.mrb[0].mxu0 %v1631
      %v1776 = vpop.f32.mrb[0].mxu0
      %v1777 = vadd.f32 0.0, %v1776
      %v1778 = vpop.f32.mrb[0].mxu0
      %v1779 = vpop.f32.mrb[0].mxu0
      %v1780 = vadd.f32 0.0, %v1779
      %v1781 = vpop.f32.mrb[0].mxu0
      %1782 = vmatprep.mubr.bf16.mxu0 0
      %1783 = vmatmul.mubr.bf16.gmra.mrb[0].mxu0 %v1634
      %v1784 = vpop.f32.mrb[0].mxu0
      %v1785 = vadd.f32 0.0, %v1784
      %v1786 = vpop.f32.mrb[0].mxu0
      %v1787 = vpop.f32.mrb[0].mxu0
      %v1788 = vadd.f32 0.0, %v1787
      %v1789 = vpop.f32.mrb[0].mxu0
      %1790 = vmatprep.mubr.bf16.mxu0 0
      %1791 = vmatmul.mubr.bf16.gmra.mrb[0].mxu0 %v1637
      %v1792 = vpop.f32.mrb[0].mxu0
      %v1793 = vadd.f32 0.0, %v1792
      %v1794 = vpop.f32.mrb[0].mxu0
      %v1795 = vpop.f32.mrb[0].mxu0
      %v1796 = vadd.f32 0.0, %v1795
      %v1797 = vpop.f32.mrb[0].mxu0
      %1798 = vmatprep.mubr.bf16.mxu0 0
      %1799 = vmatmul.mubr.bf16.gmra.mrb[0].mxu0 %v1640
      %v1800 = vpop.f32.mrb[0].mxu0
      %v1801 = vadd.f32 0.0, %v1800
      %v1802 = vpop.f32.mrb[0].mxu0
      %v1803 = vpop.f32.mrb[0].mxu0
      %v1804 = vadd.f32 0.0, %v1803
      %v1805 = vpop.f32.mrb[0].mxu0
      %1806 = vmatprep.mubr.bf16.mxu0 0
      %1807 = vmatmul.mubr.bf16.gmra.mrb[0].mxu0 %v1643
      %v1808 = vpop.f32.mrb[0].mxu0
      %v1809 = vadd.f32 0.0, %v1808
      %v1810 = vpop.f32.mrb[0].mxu0
      %v1811 = vpop.f32.mrb[0].mxu0
      %v1812 = vadd.f32 0.0, %v1811
      %v1813 = vpop.f32.mrb[0].mxu0
      %1814 = vmatprep.mubr.bf16.mxu0 0
      %1815 = vmatmul.mubr.bf16.gmra.mrb[0].mxu0 %v1646
      %v1816 = vpop.f32.mrb[0].mxu0
      %v1817 = vadd.f32 0.0, %v1816
      %v1818 = vpop.f32.mrb[0].mxu0
      %v1819 = vpop.f32.mrb[0].mxu0
      %v1820 = vadd.f32 0.0, %v1819
      %v1821 = vpop.f32.mrb[0].mxu0
      %1822 = vmatprep.mubr.bf16.mxu0 0
      %1823 = vmatmul.mubr.bf16.gmra.mrb[0].mxu0 %v1649
      %v1824 = vpop.f32.mrb[0].mxu0
      %v1825 = vadd.f32 0.0, %v1824
      %v1826 = vpop.f32.mrb[0].mxu0
      %v1827 = vpop.f32.mrb[0].mxu0
      %v1828 = vadd.f32 0.0, %v1827
      %v1829 = vpop.f32.mrb[0].mxu0
      %1830 = vdwg.mxu0
      %v1831 = vadd.f32 %v1473, %v1689
      %v1832 = vadd.f32 %v1474, %v1692
      %v1833 = vadd.f32 %v1475, %v1697
      %v1834 = vadd.f32 %v1476, %v1700
      %v1835 = vadd.f32 %v1477, %v1705
      %v1836 = vadd.f32 %v1478, %v1708
      %v1837 = vadd.f32 %v1479, %v1713
      %v1838 = vadd.f32 %v1480, %v1716
      %v1839 = vadd.f32 %v1481, %v1721
      %v1840 = vadd.f32 %v1482, %v1724
      %v1841 = vadd.f32 %v1483, %v1729
      %v1842 = vadd.f32 %v1484, %v1732
      %v1843 = vadd.f32 %v1485, %v1737
      %v1844 = vadd.f32 %v1486, %v1740
      %v1845 = vadd.f32 %v1487, %v1745
      %v1846 = vadd.f32 %v1488, %v1748
      %v1847 = vadd.f32 %v1489, %v1753
      %v1848 = vadd.f32 %v1490, %v1756
      %v1849 = vadd.f32 %v1491, %v1761
      %v1850 = vadd.f32 %v1492, %v1764
      %v1851 = vadd.f32 %v1493, %v1769
      %v1852 = vadd.f32 %v1494, %v1772
      %v1853 = vadd.f32 %v1495, %v1777
      %v1854 = vadd.f32 %v1496, %v1780
      %v1855 = vadd.f32 %v1497, %v1785
      %v1856 = vadd.f32 %v1498, %v1788
      %v1857 = vadd.f32 %v1499, %v1793
      %v1858 = vadd.f32 %v1500, %v1796
      %v1859 = vadd.f32 %v1501, %v1801
      %v1860 = vadd.f32 %v1502, %v1804
      %v1861 = vadd.f32 %v1503, %v1809
      %v1862 = vadd.f32 %v1504, %v1812
      %v1863 = vadd.f32 %v1505, %v1817
      %v1864 = vadd.f32 %v1506, %v1820
      %v1865 = vadd.f32 %v1507, %v1825
      %v1866 = vadd.f32 %v1508, %v1828
      %s1867 = scalar_lea.vmem %s1, 10
      %v1868 = vld [vmem:[%s1867] sm:$0x3]
      %vm1869 = vcmask 1045504
      %v1870 = vrot.slane %v326, 2
      %v1871 = vrot.slane %v327, 2
      %v1872 = vsel %vm1869, %v1870, %v1871
      %v1873 = vrot.slane %v328, 2
      %v1874 = vsel %vm1869, %v1871, %v1873
      %v1875 = vrot.slane %v329, 2
      %v1876 = vsel %vm1869, %v1873, %v1875
      %v1877 = vrot.slane %v330, 2
      %v1878 = vsel %vm1869, %v1875, %v1877
      %v1879 = vrot.slane %v331, 2
      %v1880 = vsel %vm1869, %v1877, %v1879
      %v1881 = vrot.slane %v332, 2
      %v1882 = vsel %vm1869, %v1879, %v1881
      %v1883 = vrot.slane %v333, 2
      %v1884 = vsel %vm1869, %v1881, %v1883
      %v1885 = vrot.slane %v334, 2
      %v1886 = vsel %vm1869, %v1883, %v1885
      %v1887 = vrot.slane %v335, 2
      %v1888 = vsel %vm1869, %v1885, %v1887
      %v1889 = vrot.slane %v336, 2
      %v1890 = vsel %vm1869, %v1887, %v1889
      %v1891 = vrot.slane %v337, 2
      %v1892 = vsel %vm1869, %v1889, %v1891
      %v1893 = vrot.slane %v338, 2
      %v1894 = vsel %vm1869, %v1891, %v1893
      %v1895 = vrot.slane %v339, 2
      %v1896 = vsel %vm1869, %v1893, %v1895
      %v1897 = vrot.slane %v340, 2
      %v1898 = vsel %vm1869, %v1895, %v1897
      %v1899 = vrot.slane %v341, 2
      %v1900 = vsel %vm1869, %v1897, %v1899
      %v1901 = vrot.slane %v342, 2
      %v1902 = vsel %vm1869, %v1899, %v1901
      %v1903 = vrot.slane %v1277, 2
      %v1904 = vsel %vm1869, %v1901, %v1903
      %v1905 = vrot.slane %v1278, 2
      %v1906 = vsel %vm1869, %v1903, %v1905
      %v1908 = vsel %vm496, %v1872, 0
      %v1911 = vsel %vm496, %v1874, 0
      %v1914 = vsel %vm496, %v1876, 0
      %v1917 = vsel %vm496, %v1878, 0
      %v1920 = vsel %vm496, %v1880, 0
      %v1923 = vsel %vm496, %v1882, 0
      %v1926 = vsel %vm496, %v1884, 0
      %v1929 = vsel %vm496, %v1886, 0
      %v1932 = vsel %vm496, %v1888, 0
      %v1935 = vsel %vm496, %v1890, 0
      %v1938 = vsel %vm496, %v1892, 0
      %v1941 = vsel %vm496, %v1894, 0
      %v1944 = vsel %vm496, %v1896, 0
      %v1947 = vsel %vm496, %v1898, 0
      %v1950 = vsel %vm496, %v1900, 0
      %v1953 = vsel %vm496, %v1902, 0
      %v1956 = vsel %vm496, %v1904, 0
      %v1959 = vsel %vm496, %v1906, 0
      %v1962 = vsel %vm551, %v1868, 0
      %1964 = vmatprep.subr.bf16.mxu0 0
      %1965 = vmatpush1.bf16.msra.mxu0 %v1962
      %1966 = vmatprep.subr.bf16.mxu0 0
      %1967 = vmatpush1.bf16.msra.mxu0 0
      %1968 = vmatprep.subr.bf16.mxu0 0
      %1969 = vmatpush1.bf16.msra.mxu0 0
      %1970 = vmatprep.subr.bf16.mxu0 0
      %1971 = vmatpush1.bf16.msra.mxu0 0
      %1972 = vmatprep.subr.bf16.mxu0 0
      %1973 = vmatpush1.bf16.msra.mxu0 0
      %1974 = vmatprep.subr.bf16.mxu0 0
      %1975 = vmatpush1.bf16.msra.mxu0 0
      %1976 = vmatprep.subr.bf16.mxu0 0
      %1977 = vmatpush1.bf16.msra.mxu0 0
      %1978 = vmatprep.subr.bf16.mxu0 0
      %1979 = vmatpush1.bf16.msra.mxu0 0
      %1980 = vmatprep.subr.bf16.mxu0 0
      %1981 = vmatpush1.bf16.msra.mxu0 0
      %1982 = vmatprep.subr.bf16.mxu0 0
      %1983 = vmatpush1.bf16.msra.mxu0 0
      %1984 = vmatprep.subr.bf16.mxu0 0
      %1985 = vmatpush1.bf16.msra.mxu0 0
      %1986 = vmatprep.subr.bf16.mxu0 0
      %1987 = vmatpush1.bf16.msra.mxu0 0
      %1988 = vmatprep.subr.bf16.mxu0 0
      %1989 = vmatpush1.bf16.msra.mxu0 0
      %1990 = vmatprep.subr.bf16.mxu0 0
      %1991 = vmatpush1.bf16.msra.mxu0 0
      %1992 = vmatprep.subr.bf16.mxu0 0
      %1993 = vmatpush1.bf16.msra.mxu0 0
      %1994 = vmatprep.subr.bf16.mxu0 0
      %1995 = vmatpush1.bf16.msra.mxu0 0
      %1996 = vmatprep.mubr.bf16.mxu0 0
      %1997 = vmatmul.mubr.bf16.gmra.mrb[0].mxu0 %v1908
      %v1998 = vpop.f32.mrb[0].mxu0
      %v1999 = vadd.f32 0.0, %v1998
      %v2000 = vpop.f32.mrb[0].mxu0
      %v2001 = vpop.f32.mrb[0].mxu0
      %v2002 = vadd.f32 0.0, %v2001
      %v2003 = vpop.f32.mrb[0].mxu0
      %2004 = vmatprep.mubr.bf16.mxu0 0
      %2005 = vmatmul.mubr.bf16.gmra.mrb[0].mxu0 %v1911
      %v2006 = vpop.f32.mrb[0].mxu0
      %v2007 = vadd.f32 0.0, %v2006
      %v2008 = vpop.f32.mrb[0].mxu0
      %v2009 = vpop.f32.mrb[0].mxu0
      %v2010 = vadd.f32 0.0, %v2009
      %v2011 = vpop.f32.mrb[0].mxu0
      %2012 = vmatprep.mubr.bf16.mxu0 0
      %2013 = vmatmul.mubr.bf16.gmra.mrb[0].mxu0 %v1914
      %v2014 = vpop.f32.mrb[0].mxu0
      %v2015 = vadd.f32 0.0, %v2014
      %v2016 = vpop.f32.mrb[0].mxu0
      %v2017 = vpop.f32.mrb[0].mxu0
      %v2018 = vadd.f32 0.0, %v2017
      %v2019 = vpop.f32.mrb[0].mxu0
      %2020 = vmatprep.mubr.bf16.mxu0 0
      %2021 = vmatmul.mubr.bf16.gmra.mrb[0].mxu0 %v1917
      %v2022 = vpop.f32.mrb[0].mxu0
      %v2023 = vadd.f32 0.0, %v2022
      %v2024 = vpop.f32.mrb[0].mxu0
      %v2025 = vpop.f32.mrb[0].mxu0
      %v2026 = vadd.f32 0.0, %v2025
      %v2027 = vpop.f32.mrb[0].mxu0
      %2028 = vmatprep.mubr.bf16.mxu0 0
      %2029 = vmatmul.mubr.bf16.gmra.mrb[0].mxu0 %v1920
      %v2030 = vpop.f32.mrb[0].mxu0
      %v2031 = vadd.f32 0.0, %v2030
      %v2032 = vpop.f32.mrb[0].mxu0
      %v2033 = vpop.f32.mrb[0].mxu0
      %v2034 = vadd.f32 0.0, %v2033
      %v2035 = vpop.f32.mrb[0].mxu0
      %2036 = vmatprep.mubr.bf16.mxu0 0
      %2037 = vmatmul.mubr.bf16.gmra.mrb[0].mxu0 %v1923
      %v2038 = vpop.f32.mrb[0].mxu0
      %v2039 = vadd.f32 0.0, %v2038
      %v2040 = vpop.f32.mrb[0].mxu0
      %v2041 = vpop.f32.mrb[0].mxu0
      %v2042 = vadd.f32 0.0, %v2041
      %v2043 = vpop.f32.mrb[0].mxu0
      %2044 = vmatprep.mubr.bf16.mxu0 0
      %2045 = vmatmul.mubr.bf16.gmra.mrb[0].mxu0 %v1926
      %v2046 = vpop.f32.mrb[0].mxu0
      %v2047 = vadd.f32 0.0, %v2046
      %v2048 = vpop.f32.mrb[0].mxu0
      %v2049 = vpop.f32.mrb[0].mxu0
      %v2050 = vadd.f32 0.0, %v2049
      %v2051 = vpop.f32.mrb[0].mxu0
      %2052 = vmatprep.mubr.bf16.mxu0 0
      %2053 = vmatmul.mubr.bf16.gmra.mrb[0].mxu0 %v1929
      %v2054 = vpop.f32.mrb[0].mxu0
      %v2055 = vadd.f32 0.0, %v2054
      %v2056 = vpop.f32.mrb[0].mxu0
      %v2057 = vpop.f32.mrb[0].mxu0
      %v2058 = vadd.f32 0.0, %v2057
      %v2059 = vpop.f32.mrb[0].mxu0
      %2060 = vmatprep.mubr.bf16.mxu0 0
      %2061 = vmatmul.mubr.bf16.gmra.mrb[0].mxu0 %v1932
      %v2062 = vpop.f32.mrb[0].mxu0
      %v2063 = vadd.f32 0.0, %v2062
      %v2064 = vpop.f32.mrb[0].mxu0
      %v2065 = vpop.f32.mrb[0].mxu0
      %v2066 = vadd.f32 0.0, %v2065
      %v2067 = vpop.f32.mrb[0].mxu0
      %2068 = vmatprep.mubr.bf16.mxu0 0
      %2069 = vmatmul.mubr.bf16.gmra.mrb[0].mxu0 %v1935
      %v2070 = vpop.f32.mrb[0].mxu0
      %v2071 = vadd.f32 0.0, %v2070
      %v2072 = vpop.f32.mrb[0].mxu0
      %v2073 = vpop.f32.mrb[0].mxu0
      %v2074 = vadd.f32 0.0, %v2073
      %v2075 = vpop.f32.mrb[0].mxu0
      %2076 = vmatprep.mubr.bf16.mxu0 0
      %2077 = vmatmul.mubr.bf16.gmra.mrb[0].mxu0 %v1938
      %v2078 = vpop.f32.mrb[0].mxu0
      %v2079 = vadd.f32 0.0, %v2078
      %v2080 = vpop.f32.mrb[0].mxu0
      %v2081 = vpop.f32.mrb[0].mxu0
      %v2082 = vadd.f32 0.0, %v2081
      %v2083 = vpop.f32.mrb[0].mxu0
      %2084 = vmatprep.mubr.bf16.mxu0 0
      %2085 = vmatmul.mubr.bf16.gmra.mrb[0].mxu0 %v1941
      %v2086 = vpop.f32.mrb[0].mxu0
      %v2087 = vadd.f32 0.0, %v2086
      %v2088 = vpop.f32.mrb[0].mxu0
      %v2089 = vpop.f32.mrb[0].mxu0
      %v2090 = vadd.f32 0.0, %v2089
      %v2091 = vpop.f32.mrb[0].mxu0
      %2092 = vmatprep.mubr.bf16.mxu0 0
      %2093 = vmatmul.mubr.bf16.gmra.mrb[0].mxu0 %v1944
      %v2094 = vpop.f32.mrb[0].mxu0
      %v2095 = vadd.f32 0.0, %v2094
      %v2096 = vpop.f32.mrb[0].mxu0
      %v2097 = vpop.f32.mrb[0].mxu0
      %v2098 = vadd.f32 0.0, %v2097
      %v2099 = vpop.f32.mrb[0].mxu0
      %2100 = vmatprep.mubr.bf16.mxu0 0
      %2101 = vmatmul.mubr.bf16.gmra.mrb[0].mxu0 %v1947
      %v2102 = vpop.f32.mrb[0].mxu0
      %v2103 = vadd.f32 0.0, %v2102
      %v2104 = vpop.f32.mrb[0].mxu0
      %v2105 = vpop.f32.mrb[0].mxu0
      %v2106 = vadd.f32 0.0, %v2105
      %v2107 = vpop.f32.mrb[0].mxu0
      %2108 = vmatprep.mubr.bf16.mxu0 0
      %2109 = vmatmul.mubr.bf16.gmra.mrb[0].mxu0 %v1950
      %v2110 = vpop.f32.mrb[0].mxu0
      %v2111 = vadd.f32 0.0, %v2110
      %v2112 = vpop.f32.mrb[0].mxu0
      %v2113 = vpop.f32.mrb[0].mxu0
      %v2114 = vadd.f32 0.0, %v2113
      %v2115 = vpop.f32.mrb[0].mxu0
      %2116 = vmatprep.mubr.bf16.mxu0 0
      %2117 = vmatmul.mubr.bf16.gmra.mrb[0].mxu0 %v1953
      %v2118 = vpop.f32.mrb[0].mxu0
      %v2119 = vadd.f32 0.0, %v2118
      %v2120 = vpop.f32.mrb[0].mxu0
      %v2121 = vpop.f32.mrb[0].mxu0
      %v2122 = vadd.f32 0.0, %v2121
      %v2123 = vpop.f32.mrb[0].mxu0
      %2124 = vmatprep.mubr.bf16.mxu0 0
      %2125 = vmatmul.mubr.bf16.gmra.mrb[0].mxu0 %v1956
      %v2126 = vpop.f32.mrb[0].mxu0
      %v2127 = vadd.f32 0.0, %v2126
      %v2128 = vpop.f32.mrb[0].mxu0
      %v2129 = vpop.f32.mrb[0].mxu0
      %v2130 = vadd.f32 0.0, %v2129
      %v2131 = vpop.f32.mrb[0].mxu0
      %2132 = vmatprep.mubr.bf16.mxu0 0
      %2133 = vmatmul.mubr.bf16.gmra.mrb[0].mxu0 %v1959
      %v2134 = vpop.f32.mrb[0].mxu0
      %v2135 = vadd.f32 0.0, %v2134
      %v2136 = vpop.f32.mrb[0].mxu0
      %v2137 = vpop.f32.mrb[0].mxu0
      %v2138 = vadd.f32 0.0, %v2137
      %v2139 = vpop.f32.mrb[0].mxu0
      %2140 = vdwg.mxu0
      %v2141 = vadd.f32 %v1831, %v1999
      %v2142 = vadd.f32 %v1832, %v2002
      %v2143 = vadd.f32 %v1833, %v2007
      %v2144 = vadd.f32 %v1834, %v2010
      %v2145 = vadd.f32 %v1835, %v2015
      %v2146 = vadd.f32 %v1836, %v2018
      %v2147 = vadd.f32 %v1837, %v2023
      %v2148 = vadd.f32 %v1838, %v2026
      %v2149 = vadd.f32 %v1839, %v2031
      %v2150 = vadd.f32 %v1840, %v2034
      %v2151 = vadd.f32 %v1841, %v2039
      %v2152 = vadd.f32 %v1842, %v2042
      %v2153 = vadd.f32 %v1843, %v2047
      %v2154 = vadd.f32 %v1844, %v2050
      %v2155 = vadd.f32 %v1845, %v2055
      %v2156 = vadd.f32 %v1846, %v2058
      %v2157 = vadd.f32 %v1847, %v2063
      %v2158 = vadd.f32 %v1848, %v2066
      %v2159 = vadd.f32 %v1849, %v2071
      %v2160 = vadd.f32 %v1850, %v2074
      %v2161 = vadd.f32 %v1851, %v2079
      %v2162 = vadd.f32 %v1852, %v2082
      %v2163 = vadd.f32 %v1853, %v2087
      %v2164 = vadd.f32 %v1854, %v2090
      %v2165 = vadd.f32 %v1855, %v2095
      %v2166 = vadd.f32 %v1856, %v2098
      %v2167 = vadd.f32 %v1857, %v2103
      %v2168 = vadd.f32 %v1858, %v2106
      %v2169 = vadd.f32 %v1859, %v2111
      %v2170 = vadd.f32 %v1860, %v2114
      %v2171 = vadd.f32 %v1861, %v2119
      %v2172 = vadd.f32 %v1862, %v2122
      %v2173 = vadd.f32 %v1863, %v2127
      %v2174 = vadd.f32 %v1864, %v2130
      %v2175 = vadd.f32 %v1865, %v2135
      %v2176 = vadd.f32 %v1866, %v2138
      %v2177 = vpack.c.bf16 %v323, %v322
      %v2178 = vpack.c.bf16 %v324, %v324
      %s2179 = scalar_lea.vmem %s1, 12
      %v2180 = vld [vmem:[%s2179] sm:$0x3]
      %v2183 = vrot.slane %v2177, 2
      %v2184 = vsel %vm1869, %v1903, %v2183
      %v2185 = vrot.slane %v2178, 2
      %v2186 = vsel %vm1869, %v2183, %v2185
      %v2188 = vsel %vm496, %v2184, 0
      %v2191 = vsel %vm496, %v2186, 0
      %v2194 = vsel %vm551, %v2180, 0
      %2196 = vmatprep.subr.bf16.mxu0 0
      %2197 = vmatpush1.bf16.msra.mxu0 %v2194
      %2198 = vmatprep.subr.bf16.mxu0 0
      %2199 = vmatpush1.bf16.msra.mxu0 0
      %2200 = vmatprep.subr.bf16.mxu0 0
      %2201 = vmatpush1.bf16.msra.mxu0 0
      %2202 = vmatprep.subr.bf16.mxu0 0
      %2203 = vmatpush1.bf16.msra.mxu0 0
      %2204 = vmatprep.subr.bf16.mxu0 0
      %2205 = vmatpush1.bf16.msra.mxu0 0
      %2206 = vmatprep.subr.bf16.mxu0 0
      %2207 = vmatpush1.bf16.msra.mxu0 0
      %2208 = vmatprep.subr.bf16.mxu0 0
      %2209 = vmatpush1.bf16.msra.mxu0 0
      %2210 = vmatprep.subr.bf16.mxu0 0
      %2211 = vmatpush1.bf16.msra.mxu0 0
      %2212 = vmatprep.subr.bf16.mxu0 0
      %2213 = vmatpush1.bf16.msra.mxu0 0
      %2214 = vmatprep.subr.bf16.mxu0 0
      %2215 = vmatpush1.bf16.msra.mxu0 0
      %2216 = vmatprep.subr.bf16.mxu0 0
      %2217 = vmatpush1.bf16.msra.mxu0 0
      %2218 = vmatprep.subr.bf16.mxu0 0
      %2219 = vmatpush1.bf16.msra.mxu0 0
      %2220 = vmatprep.subr.bf16.mxu0 0
      %2221 = vmatpush1.bf16.msra.mxu0 0
      %2222 = vmatprep.subr.bf16.mxu0 0
      %2223 = vmatpush1.bf16.msra.mxu0 0
      %2224 = vmatprep.subr.bf16.mxu0 0
      %2225 = vmatpush1.bf16.msra.mxu0 0
      %2226 = vmatprep.subr.bf16.mxu0 0
      %2227 = vmatpush1.bf16.msra.mxu0 0
      %2228 = vmatprep.mubr.bf16.mxu0 0
      %2229 = vmatmul.mubr.bf16.gmra.mrb[0].mxu0 %v1911
      %v2230 = vpop.f32.mrb[0].mxu0
      %v2231 = vadd.f32 0.0, %v2230
      %v2232 = vpop.f32.mrb[0].mxu0
      %v2233 = vpop.f32.mrb[0].mxu0
      %v2234 = vadd.f32 0.0, %v2233
      %v2235 = vpop.f32.mrb[0].mxu0
      %2236 = vmatprep.mubr.bf16.mxu0 0
      %2237 = vmatmul.mubr.bf16.gmra.mrb[0].mxu0 %v1914
      %v2238 = vpop.f32.mrb[0].mxu0
      %v2239 = vadd.f32 0.0, %v2238
      %v2240 = vpop.f32.mrb[0].mxu0
      %v2241 = vpop.f32.mrb[0].mxu0
      %v2242 = vadd.f32 0.0, %v2241
      %v2243 = vpop.f32.mrb[0].mxu0
      %2244 = vmatprep.mubr.bf16.mxu0 0
      %2245 = vmatmul.mubr.bf16.gmra.mrb[0].mxu0 %v1917
      %v2246 = vpop.f32.mrb[0].mxu0
      %v2247 = vadd.f32 0.0, %v2246
      %v2248 = vpop.f32.mrb[0].mxu0
      %v2249 = vpop.f32.mrb[0].mxu0
      %v2250 = vadd.f32 0.0, %v2249
      %v2251 = vpop.f32.mrb[0].mxu0
      %2252 = vmatprep.mubr.bf16.mxu0 0
      %2253 = vmatmul.mubr.bf16.gmra.mrb[0].mxu0 %v1920
      %v2254 = vpop.f32.mrb[0].mxu0
      %v2255 = vadd.f32 0.0, %v2254
      %v2256 = vpop.f32.mrb[0].mxu0
      %v2257 = vpop.f32.mrb[0].mxu0
      %v2258 = vadd.f32 0.0, %v2257
      %v2259 = vpop.f32.mrb[0].mxu0
      %2260 = vmatprep.mubr.bf16.mxu0 0
      %2261 = vmatmul.mubr.bf16.gmra.mrb[0].mxu0 %v1923
      %v2262 = vpop.f32.mrb[0].mxu0
      %v2263 = vadd.f32 0.0, %v2262
      %v2264 = vpop.f32.mrb[0].mxu0
      %v2265 = vpop.f32.mrb[0].mxu0
      %v2266 = vadd.f32 0.0, %v2265
      %v2267 = vpop.f32.mrb[0].mxu0
      %2268 = vmatprep.mubr.bf16.mxu0 0
      %2269 = vmatmul.mubr.bf16.gmra.mrb[0].mxu0 %v1926
      %v2270 = vpop.f32.mrb[0].mxu0
      %v2271 = vadd.f32 0.0, %v2270
      %v2272 = vpop.f32.mrb[0].mxu0
      %v2273 = vpop.f32.mrb[0].mxu0
      %v2274 = vadd.f32 0.0, %v2273
      %v2275 = vpop.f32.mrb[0].mxu0
      %2276 = vmatprep.mubr.bf16.mxu0 0
      %2277 = vmatmul.mubr.bf16.gmra.mrb[0].mxu0 %v1929
      %v2278 = vpop.f32.mrb[0].mxu0
      %v2279 = vadd.f32 0.0, %v2278
      %v2280 = vpop.f32.mrb[0].mxu0
      %v2281 = vpop.f32.mrb[0].mxu0
      %v2282 = vadd.f32 0.0, %v2281
      %v2283 = vpop.f32.mrb[0].mxu0
      %2284 = vmatprep.mubr.bf16.mxu0 0
      %2285 = vmatmul.mubr.bf16.gmra.mrb[0].mxu0 %v1932
      %v2286 = vpop.f32.mrb[0].mxu0
      %v2287 = vadd.f32 0.0, %v2286
      %v2288 = vpop.f32.mrb[0].mxu0
      %v2289 = vpop.f32.mrb[0].mxu0
      %v2290 = vadd.f32 0.0, %v2289
      %v2291 = vpop.f32.mrb[0].mxu0
      %2292 = vmatprep.mubr.bf16.mxu0 0
      %2293 = vmatmul.mubr.bf16.gmra.mrb[0].mxu0 %v1935
      %v2294 = vpop.f32.mrb[0].mxu0
      %v2295 = vadd.f32 0.0, %v2294
      %v2296 = vpop.f32.mrb[0].mxu0
      %v2297 = vpop.f32.mrb[0].mxu0
      %v2298 = vadd.f32 0.0, %v2297
      %v2299 = vpop.f32.mrb[0].mxu0
      %2300 = vmatprep.mubr.bf16.mxu0 0
      %2301 = vmatmul.mubr.bf16.gmra.mrb[0].mxu0 %v1938
      %v2302 = vpop.f32.mrb[0].mxu0
      %v2303 = vadd.f32 0.0, %v2302
      %v2304 = vpop.f32.mrb[0].mxu0
      %v2305 = vpop.f32.mrb[0].mxu0
      %v2306 = vadd.f32 0.0, %v2305
      %v2307 = vpop.f32.mrb[0].mxu0
      %2308 = vmatprep.mubr.bf16.mxu0 0
      %2309 = vmatmul.mubr.bf16.gmra.mrb[0].mxu0 %v1941
      %v2310 = vpop.f32.mrb[0].mxu0
      %v2311 = vadd.f32 0.0, %v2310
      %v2312 = vpop.f32.mrb[0].mxu0
      %v2313 = vpop.f32.mrb[0].mxu0
      %v2314 = vadd.f32 0.0, %v2313
      %v2315 = vpop.f32.mrb[0].mxu0
      %2316 = vmatprep.mubr.bf16.mxu0 0
      %2317 = vmatmul.mubr.bf16.gmra.mrb[0].mxu0 %v1944
      %v2318 = vpop.f32.mrb[0].mxu0
      %v2319 = vadd.f32 0.0, %v2318
      %v2320 = vpop.f32.mrb[0].mxu0
      %v2321 = vpop.f32.mrb[0].mxu0
      %v2322 = vadd.f32 0.0, %v2321
      %v2323 = vpop.f32.mrb[0].mxu0
      %2324 = vmatprep.mubr.bf16.mxu0 0
      %2325 = vmatmul.mubr.bf16.gmra.mrb[0].mxu0 %v1947
      %v2326 = vpop.f32.mrb[0].mxu0
      %v2327 = vadd.f32 0.0, %v2326
      %v2328 = vpop.f32.mrb[0].mxu0
      %v2329 = vpop.f32.mrb[0].mxu0
      %v2330 = vadd.f32 0.0, %v2329
      %v2331 = vpop.f32.mrb[0].mxu0
      %2332 = vmatprep.mubr.bf16.mxu0 0
      %2333 = vmatmul.mubr.bf16.gmra.mrb[0].mxu0 %v1950
      %v2334 = vpop.f32.mrb[0].mxu0
      %v2335 = vadd.f32 0.0, %v2334
      %v2336 = vpop.f32.mrb[0].mxu0
      %v2337 = vpop.f32.mrb[0].mxu0
      %v2338 = vadd.f32 0.0, %v2337
      %v2339 = vpop.f32.mrb[0].mxu0
      %2340 = vmatprep.mubr.bf16.mxu0 0
      %2341 = vmatmul.mubr.bf16.gmra.mrb[0].mxu0 %v1953
      %v2342 = vpop.f32.mrb[0].mxu0
      %v2343 = vadd.f32 0.0, %v2342
      %v2344 = vpop.f32.mrb[0].mxu0
      %v2345 = vpop.f32.mrb[0].mxu0
      %v2346 = vadd.f32 0.0, %v2345
      %v2347 = vpop.f32.mrb[0].mxu0
      %2348 = vmatprep.mubr.bf16.mxu0 0
      %2349 = vmatmul.mubr.bf16.gmra.mrb[0].mxu0 %v1956
      %v2350 = vpop.f32.mrb[0].mxu0
      %v2351 = vadd.f32 0.0, %v2350
      %v2352 = vpop.f32.mrb[0].mxu0
      %v2353 = vpop.f32.mrb[0].mxu0
      %v2354 = vadd.f32 0.0, %v2353
      %v2355 = vpop.f32.mrb[0].mxu0
      %2356 = vmatprep.mubr.bf16.mxu0 0
      %2357 = vmatmul.mubr.bf16.gmra.mrb[0].mxu0 %v2188
      %v2358 = vpop.f32.mrb[0].mxu0
      %v2359 = vadd.f32 0.0, %v2358
      %v2360 = vpop.f32.mrb[0].mxu0
      %v2361 = vpop.f32.mrb[0].mxu0
      %v2362 = vadd.f32 0.0, %v2361
      %v2363 = vpop.f32.mrb[0].mxu0
      %2364 = vmatprep.mubr.bf16.mxu0 0
      %2365 = vmatmul.mubr.bf16.gmra.mrb[0].mxu0 %v2191
      %v2366 = vpop.f32.mrb[0].mxu0
      %v2367 = vadd.f32 0.0, %v2366
      %v2368 = vpop.f32.mrb[0].mxu0
      %v2369 = vpop.f32.mrb[0].mxu0
      %v2370 = vadd.f32 0.0, %v2369
      %v2371 = vpop.f32.mrb[0].mxu0
      %2372 = vdwg.mxu0
      %v2373 = vadd.f32 %v2141, %v2231
      %v2374 = vadd.f32 %v2142, %v2234
      %v2375 = vadd.f32 %v2143, %v2239
      %v2376 = vadd.f32 %v2144, %v2242
      %v2377 = vadd.f32 %v2145, %v2247
      %v2378 = vadd.f32 %v2146, %v2250
      %v2379 = vadd.f32 %v2147, %v2255
      %v2380 = vadd.f32 %v2148, %v2258
      %v2381 = vadd.f32 %v2149, %v2263
      %v2382 = vadd.f32 %v2150, %v2266
      %v2383 = vadd.f32 %v2151, %v2271
      %v2384 = vadd.f32 %v2152, %v2274
      %v2385 = vadd.f32 %v2153, %v2279
      %v2386 = vadd.f32 %v2154, %v2282
      %v2387 = vadd.f32 %v2155, %v2287
      %v2388 = vadd.f32 %v2156, %v2290
      %v2389 = vadd.f32 %v2157, %v2295
      %v2390 = vadd.f32 %v2158, %v2298
      %v2391 = vadd.f32 %v2159, %v2303
      %v2392 = vadd.f32 %v2160, %v2306
      %v2393 = vadd.f32 %v2161, %v2311
      %v2394 = vadd.f32 %v2162, %v2314
      %v2395 = vadd.f32 %v2163, %v2319
      %v2396 = vadd.f32 %v2164, %v2322
      %v2397 = vadd.f32 %v2165, %v2327
      %v2398 = vadd.f32 %v2166, %v2330
      %v2399 = vadd.f32 %v2167, %v2335
      %v2400 = vadd.f32 %v2168, %v2338
      %v2401 = vadd.f32 %v2169, %v2343
      %v2402 = vadd.f32 %v2170, %v2346
      %v2403 = vadd.f32 %v2171, %v2351
      %v2404 = vadd.f32 %v2172, %v2354
      %v2405 = vadd.f32 %v2173, %v2359
      %v2406 = vadd.f32 %v2174, %v2362
      %v2407 = vadd.f32 %v2175, %v2367
      %v2408 = vadd.f32 %v2176, %v2370
      %s2409 = scalar_lea.vmem %s1, 14
      %v2410 = vld [vmem:[%s2409] sm:$0x3]
      %vm2411 = vsmask.f32 5376
      %v2412 = vrot.slane %v368, 2
      %v2413 = vrot.slane %v364, 3
      %v2414 = vor.u32 %v2412, %v2413
      %v2415 = vrot.slane %v376, 2
      %v2416 = vrot.slane %v372, 3
      %v2417 = vor.u32 %v2415, %v2416
      %v2418 = vsel %vm2411, %v2414, %v2417
      %v2419 = vrot.slane %v384, 2
      %v2420 = vrot.slane %v380, 3
      %v2421 = vor.u32 %v2419, %v2420
      %v2422 = vsel %vm2411, %v2417, %v2421
      %v2423 = vrot.slane %v392, 2
      %v2424 = vrot.slane %v388, 3
      %v2425 = vor.u32 %v2423, %v2424
      %v2426 = vsel %vm2411, %v2421, %v2425
      %v2427 = vrot.slane %v400, 2
      %v2428 = vrot.slane %v396, 3
      %v2429 = vor.u32 %v2427, %v2428
      %v2430 = vsel %vm2411, %v2425, %v2429
      %v2431 = vrot.slane %v408, 2
      %v2432 = vrot.slane %v404, 3
      %v2433 = vor.u32 %v2431, %v2432
      %v2434 = vsel %vm2411, %v2429, %v2433
      %v2435 = vrot.slane %v416, 2
      %v2436 = vrot.slane %v412, 3
      %v2437 = vor.u32 %v2435, %v2436
      %v2438 = vsel %vm2411, %v2433, %v2437
      %v2439 = vrot.slane %v424, 2
      %v2440 = vrot.slane %v420, 3
      %v2441 = vor.u32 %v2439, %v2440
      %v2442 = vsel %vm2411, %v2437, %v2441
      %v2443 = vrot.slane %v432, 2
      %v2444 = vrot.slane %v428, 3
      %v2445 = vor.u32 %v2443, %v2444
      %v2446 = vsel %vm2411, %v2441, %v2445
      %v2447 = vrot.slane %v440, 2
      %v2448 = vrot.slane %v436, 3
      %v2449 = vor.u32 %v2447, %v2448
      %v2450 = vsel %vm2411, %v2445, %v2449
      %v2451 = vrot.slane %v448, 2
      %v2452 = vrot.slane %v444, 3
      %v2453 = vor.u32 %v2451, %v2452
      %v2454 = vsel %vm2411, %v2449, %v2453
      %v2455 = vrot.slane %v456, 2
      %v2456 = vrot.slane %v452, 3
      %v2457 = vor.u32 %v2455, %v2456
      %v2458 = vsel %vm2411, %v2453, %v2457
      %v2459 = vrot.slane %v464, 2
      %v2460 = vrot.slane %v460, 3
      %v2461 = vor.u32 %v2459, %v2460
      %v2462 = vsel %vm2411, %v2457, %v2461
      %v2463 = vrot.slane %v472, 2
      %v2464 = vrot.slane %v468, 3
      %v2465 = vor.u32 %v2463, %v2464
      %v2466 = vsel %vm2411, %v2461, %v2465
      %v2467 = vrot.slane %v480, 2
      %v2468 = vrot.slane %v476, 3
      %v2469 = vor.u32 %v2467, %v2468
      %v2470 = vsel %vm2411, %v2465, %v2469
      %v2471 = vrot.slane %v488, 2
      %v2472 = vrot.slane %v484, 3
      %v2473 = vor.u32 %v2471, %v2472
      %v2474 = vsel %vm2411, %v2469, %v2473
      %v2475 = vrot.slane %v1580, 2
      %v2476 = vrot.slane %v1583, 3
      %v2477 = vor.u32 %v2475, %v2476
      %v2478 = vsel %vm2411, %v2473, %v2477
      %v2480 = vshrl.u32 %v2177, 16
      %v2482 = vrot.slane %v2480, 2
      %v2483 = vshll.u32 %v2177, 16
      %v2485 = vrot.slane %v2483, 3
      %v2486 = vor.u32 %v2482, %v2485
      %v2487 = vsel %vm2411, %v2477, %v2486
      %v2489 = vshrl.u32 %v2178, 16
      %v2491 = vrot.slane %v2489, 2
      %v2492 = vshll.u32 %v2178, 16
      %v2494 = vrot.slane %v2492, 3
      %v2495 = vor.u32 %v2491, %v2494
      %v2496 = vsel %vm2411, %v2486, %v2495
      %v2498 = vsel %vm496, %v2418, 0
      %v2501 = vsel %vm496, %v2422, 0
      %v2504 = vsel %vm496, %v2426, 0
      %v2507 = vsel %vm496, %v2430, 0
      %v2510 = vsel %vm496, %v2434, 0
      %v2513 = vsel %vm496, %v2438, 0
      %v2516 = vsel %vm496, %v2442, 0
      %v2519 = vsel %vm496, %v2446, 0
      %v2522 = vsel %vm496, %v2450, 0
      %v2525 = vsel %vm496, %v2454, 0
      %v2528 = vsel %vm496, %v2458, 0
      %v2531 = vsel %vm496, %v2462, 0
      %v2534 = vsel %vm496, %v2466, 0
      %v2537 = vsel %vm496, %v2470, 0
      %v2540 = vsel %vm496, %v2474, 0
      %v2543 = vsel %vm496, %v2478, 0
      %v2546 = vsel %vm496, %v2487, 0
      %v2549 = vsel %vm496, %v2496, 0
      %v2552 = vsel %vm551, %v2410, 0
      %2554 = vmatprep.subr.bf16.mxu0 0
      %2555 = vmatpush1.bf16.msra.mxu0 %v2552
      %2556 = vmatprep.subr.bf16.mxu0 0
      %2557 = vmatpush1.bf16.msra.mxu0 0
      %2558 = vmatprep.subr.bf16.mxu0 0
      %2559 = vmatpush1.bf16.msra.mxu0 0
      %2560 = vmatprep.subr.bf16.mxu0 0
      %2561 = vmatpush1.bf16.msra.mxu0 0
      %2562 = vmatprep.subr.bf16.mxu0 0
      %2563 = vmatpush1.bf16.msra.mxu0 0
      %2564 = vmatprep.subr.bf16.mxu0 0
      %2565 = vmatpush1.bf16.msra.mxu0 0
      %2566 = vmatprep.subr.bf16.mxu0 0
      %2567 = vmatpush1.bf16.msra.mxu0 0
      %2568 = vmatprep.subr.bf16.mxu0 0
      %2569 = vmatpush1.bf16.msra.mxu0 0
      %2570 = vmatprep.subr.bf16.mxu0 0
      %2571 = vmatpush1.bf16.msra.mxu0 0
      %2572 = vmatprep.subr.bf16.mxu0 0
      %2573 = vmatpush1.bf16.msra.mxu0 0
      %2574 = vmatprep.subr.bf16.mxu0 0
      %2575 = vmatpush1.bf16.msra.mxu0 0
      %2576 = vmatprep.subr.bf16.mxu0 0
      %2577 = vmatpush1.bf16.msra.mxu0 0
      %2578 = vmatprep.subr.bf16.mxu0 0
      %2579 = vmatpush1.bf16.msra.mxu0 0
      %2580 = vmatprep.subr.bf16.mxu0 0
      %2581 = vmatpush1.bf16.msra.mxu0 0
      %2582 = vmatprep.subr.bf16.mxu0 0
      %2583 = vmatpush1.bf16.msra.mxu0 0
      %2584 = vmatprep.subr.bf16.mxu0 0
      %2585 = vmatpush1.bf16.msra.mxu0 0
      %2586 = vmatprep.mubr.bf16.mxu0 0
      %2587 = vmatmul.mubr.bf16.gmra.mrb[0].mxu0 %v2498
      %v2588 = vpop.f32.mrb[0].mxu0
      %v2589 = vadd.f32 0.0, %v2588
      %v2590 = vpop.f32.mrb[0].mxu0
      %v2591 = vpop.f32.mrb[0].mxu0
      %v2592 = vadd.f32 0.0, %v2591
      %v2593 = vpop.f32.mrb[0].mxu0
      %2594 = vmatprep.mubr.bf16.mxu0 0
      %2595 = vmatmul.mubr.bf16.gmra.mrb[0].mxu0 %v2501
      %v2596 = vpop.f32.mrb[0].mxu0
      %v2597 = vadd.f32 0.0, %v2596
      %v2598 = vpop.f32.mrb[0].mxu0
      %v2599 = vpop.f32.mrb[0].mxu0
      %v2600 = vadd.f32 0.0, %v2599
      %v2601 = vpop.f32.mrb[0].mxu0
      %2602 = vmatprep.mubr.bf16.mxu0 0
      %2603 = vmatmul.mubr.bf16.gmra.mrb[0].mxu0 %v2504
      %v2604 = vpop.f32.mrb[0].mxu0
      %v2605 = vadd.f32 0.0, %v2604
      %v2606 = vpop.f32.mrb[0].mxu0
      %v2607 = vpop.f32.mrb[0].mxu0
      %v2608 = vadd.f32 0.0, %v2607
      %v2609 = vpop.f32.mrb[0].mxu0
      %2610 = vmatprep.mubr.bf16.mxu0 0
      %2611 = vmatmul.mubr.bf16.gmra.mrb[0].mxu0 %v2507
      %v2612 = vpop.f32.mrb[0].mxu0
      %v2613 = vadd.f32 0.0, %v2612
      %v2614 = vpop.f32.mrb[0].mxu0
      %v2615 = vpop.f32.mrb[0].mxu0
      %v2616 = vadd.f32 0.0, %v2615
      %v2617 = vpop.f32.mrb[0].mxu0
      %2618 = vmatprep.mubr.bf16.mxu0 0
      %2619 = vmatmul.mubr.bf16.gmra.mrb[0].mxu0 %v2510
      %v2620 = vpop.f32.mrb[0].mxu0
      %v2621 = vadd.f32 0.0, %v2620
      %v2622 = vpop.f32.mrb[0].mxu0
      %v2623 = vpop.f32.mrb[0].mxu0
      %v2624 = vadd.f32 0.0, %v2623
      %v2625 = vpop.f32.mrb[0].mxu0
      %2626 = vmatprep.mubr.bf16.mxu0 0
      %2627 = vmatmul.mubr.bf16.gmra.mrb[0].mxu0 %v2513
      %v2628 = vpop.f32.mrb[0].mxu0
      %v2629 = vadd.f32 0.0, %v2628
      %v2630 = vpop.f32.mrb[0].mxu0
      %v2631 = vpop.f32.mrb[0].mxu0
      %v2632 = vadd.f32 0.0, %v2631
      %v2633 = vpop.f32.mrb[0].mxu0
      %2634 = vmatprep.mubr.bf16.mxu0 0
      %2635 = vmatmul.mubr.bf16.gmra.mrb[0].mxu0 %v2516
      %v2636 = vpop.f32.mrb[0].mxu0
      %v2637 = vadd.f32 0.0, %v2636
      %v2638 = vpop.f32.mrb[0].mxu0
      %v2639 = vpop.f32.mrb[0].mxu0
      %v2640 = vadd.f32 0.0, %v2639
      %v2641 = vpop.f32.mrb[0].mxu0
      %2642 = vmatprep.mubr.bf16.mxu0 0
      %2643 = vmatmul.mubr.bf16.gmra.mrb[0].mxu0 %v2519
      %v2644 = vpop.f32.mrb[0].mxu0
      %v2645 = vadd.f32 0.0, %v2644
      %v2646 = vpop.f32.mrb[0].mxu0
      %v2647 = vpop.f32.mrb[0].mxu0
      %v2648 = vadd.f32 0.0, %v2647
      %v2649 = vpop.f32.mrb[0].mxu0
      %2650 = vmatprep.mubr.bf16.mxu0 0
      %2651 = vmatmul.mubr.bf16.gmra.mrb[0].mxu0 %v2522
      %v2652 = vpop.f32.mrb[0].mxu0
      %v2653 = vadd.f32 0.0, %v2652
      %v2654 = vpop.f32.mrb[0].mxu0
      %v2655 = vpop.f32.mrb[0].mxu0
      %v2656 = vadd.f32 0.0, %v2655
      %v2657 = vpop.f32.mrb[0].mxu0
      %2658 = vmatprep.mubr.bf16.mxu0 0
      %2659 = vmatmul.mubr.bf16.gmra.mrb[0].mxu0 %v2525
      %v2660 = vpop.f32.mrb[0].mxu0
      %v2661 = vadd.f32 0.0, %v2660
      %v2662 = vpop.f32.mrb[0].mxu0
      %v2663 = vpop.f32.mrb[0].mxu0
      %v2664 = vadd.f32 0.0, %v2663
      %v2665 = vpop.f32.mrb[0].mxu0
      %2666 = vmatprep.mubr.bf16.mxu0 0
      %2667 = vmatmul.mubr.bf16.gmra.mrb[0].mxu0 %v2528
      %v2668 = vpop.f32.mrb[0].mxu0
      %v2669 = vadd.f32 0.0, %v2668
      %v2670 = vpop.f32.mrb[0].mxu0
      %v2671 = vpop.f32.mrb[0].mxu0
      %v2672 = vadd.f32 0.0, %v2671
      %v2673 = vpop.f32.mrb[0].mxu0
      %2674 = vmatprep.mubr.bf16.mxu0 0
      %2675 = vmatmul.mubr.bf16.gmra.mrb[0].mxu0 %v2531
      %v2676 = vpop.f32.mrb[0].mxu0
      %v2677 = vadd.f32 0.0, %v2676
      %v2678 = vpop.f32.mrb[0].mxu0
      %v2679 = vpop.f32.mrb[0].mxu0
      %v2680 = vadd.f32 0.0, %v2679
      %v2681 = vpop.f32.mrb[0].mxu0
      %2682 = vmatprep.mubr.bf16.mxu0 0
      %2683 = vmatmul.mubr.bf16.gmra.mrb[0].mxu0 %v2534
      %v2684 = vpop.f32.mrb[0].mxu0
      %v2685 = vadd.f32 0.0, %v2684
      %v2686 = vpop.f32.mrb[0].mxu0
      %v2687 = vpop.f32.mrb[0].mxu0
      %v2688 = vadd.f32 0.0, %v2687
      %v2689 = vpop.f32.mrb[0].mxu0
      %2690 = vmatprep.mubr.bf16.mxu0 0
      %2691 = vmatmul.mubr.bf16.gmra.mrb[0].mxu0 %v2537
      %v2692 = vpop.f32.mrb[0].mxu0
      %v2693 = vadd.f32 0.0, %v2692
      %v2694 = vpop.f32.mrb[0].mxu0
      %v2695 = vpop.f32.mrb[0].mxu0
      %v2696 = vadd.f32 0.0, %v2695
      %v2697 = vpop.f32.mrb[0].mxu0
      %2698 = vmatprep.mubr.bf16.mxu0 0
      %2699 = vmatmul.mubr.bf16.gmra.mrb[0].mxu0 %v2540
      %v2700 = vpop.f32.mrb[0].mxu0
      %v2701 = vadd.f32 0.0, %v2700
      %v2702 = vpop.f32.mrb[0].mxu0
      %v2703 = vpop.f32.mrb[0].mxu0
      %v2704 = vadd.f32 0.0, %v2703
      %v2705 = vpop.f32.mrb[0].mxu0
      %2706 = vmatprep.mubr.bf16.mxu0 0
      %2707 = vmatmul.mubr.bf16.gmra.mrb[0].mxu0 %v2543
      %v2708 = vpop.f32.mrb[0].mxu0
      %v2709 = vadd.f32 0.0, %v2708
      %v2710 = vpop.f32.mrb[0].mxu0
      %v2711 = vpop.f32.mrb[0].mxu0
      %v2712 = vadd.f32 0.0, %v2711
      %v2713 = vpop.f32.mrb[0].mxu0
      %2714 = vmatprep.mubr.bf16.mxu0 0
      %2715 = vmatmul.mubr.bf16.gmra.mrb[0].mxu0 %v2546
      %v2716 = vpop.f32.mrb[0].mxu0
      %v2717 = vadd.f32 0.0, %v2716
      %v2718 = vpop.f32.mrb[0].mxu0
      %v2719 = vpop.f32.mrb[0].mxu0
      %v2720 = vadd.f32 0.0, %v2719
      %v2721 = vpop.f32.mrb[0].mxu0
      %2722 = vmatprep.mubr.bf16.mxu0 0
      %2723 = vmatmul.mubr.bf16.gmra.mrb[0].mxu0 %v2549
      %v2724 = vpop.f32.mrb[0].mxu0
      %v2725 = vadd.f32 0.0, %v2724
      %v2726 = vpop.f32.mrb[0].mxu0
      %v2727 = vpop.f32.mrb[0].mxu0
      %v2728 = vadd.f32 0.0, %v2727
      %v2729 = vpop.f32.mrb[0].mxu0
      %2730 = vdwg.mxu0
      %v2731 = vadd.f32 %v2373, %v2589
      %v2732 = vadd.f32 %v2374, %v2592
      %v2733 = vadd.f32 %v2375, %v2597
      %v2734 = vadd.f32 %v2376, %v2600
      %v2735 = vadd.f32 %v2377, %v2605
      %v2736 = vadd.f32 %v2378, %v2608
      %v2737 = vadd.f32 %v2379, %v2613
      %v2738 = vadd.f32 %v2380, %v2616
      %v2739 = vadd.f32 %v2381, %v2621
      %v2740 = vadd.f32 %v2382, %v2624
      %v2741 = vadd.f32 %v2383, %v2629
      %v2742 = vadd.f32 %v2384, %v2632
      %v2743 = vadd.f32 %v2385, %v2637
      %v2744 = vadd.f32 %v2386, %v2640
      %v2745 = vadd.f32 %v2387, %v2645
      %v2746 = vadd.f32 %v2388, %v2648
      %v2747 = vadd.f32 %v2389, %v2653
      %v2748 = vadd.f32 %v2390, %v2656
      %v2749 = vadd.f32 %v2391, %v2661
      %v2750 = vadd.f32 %v2392, %v2664
      %v2751 = vadd.f32 %v2393, %v2669
      %v2752 = vadd.f32 %v2394, %v2672
      %v2753 = vadd.f32 %v2395, %v2677
      %v2754 = vadd.f32 %v2396, %v2680
      %v2755 = vadd.f32 %v2397, %v2685
      %v2756 = vadd.f32 %v2398, %v2688
      %v2757 = vadd.f32 %v2399, %v2693
      %v2758 = vadd.f32 %v2400, %v2696
      %v2759 = vadd.f32 %v2401, %v2701
      %v2760 = vadd.f32 %v2402, %v2704
      %v2761 = vadd.f32 %v2403, %v2709
      %v2762 = vadd.f32 %v2404, %v2712
      %v2763 = vadd.f32 %v2405, %v2717
      %v2764 = vadd.f32 %v2406, %v2720
      %v2765 = vadd.f32 %v2407, %v2725
      %v2766 = vadd.f32 %v2408, %v2728
      %s2767 = scalar_lea.vmem %s1, 16
      %v2768 = vld [vmem:[%s2767] sm:$0x3]
      %vm2769 = vcmask 1044480
      %v2770 = vrot.slane %v327, 3
      %v2771 = vrot.slane %v328, 3
      %v2772 = vsel %vm2769, %v2770, %v2771
      %v2773 = vrot.slane %v329, 3
      %v2774 = vsel %vm2769, %v2771, %v2773
      %v2775 = vrot.slane %v330, 3
      %v2776 = vsel %vm2769, %v2773, %v2775
      %v2777 = vrot.slane %v331, 3
      %v2778 = vsel %vm2769, %v2775, %v2777
      %v2779 = vrot.slane %v332, 3
      %v2780 = vsel %vm2769, %v2777, %v2779
      %v2781 = vrot.slane %v333, 3
      %v2782 = vsel %vm2769, %v2779, %v2781
      %v2783 = vrot.slane %v334, 3
      %v2784 = vsel %vm2769, %v2781, %v2783
      %v2785 = vrot.slane %v335, 3
      %v2786 = vsel %vm2769, %v2783, %v2785
      %v2787 = vrot.slane %v336, 3
      %v2788 = vsel %vm2769, %v2785, %v2787
      %v2789 = vrot.slane %v337, 3
      %v2790 = vsel %vm2769, %v2787, %v2789
      %v2791 = vrot.slane %v338, 3
      %v2792 = vsel %vm2769, %v2789, %v2791
      %v2793 = vrot.slane %v339, 3
      %v2794 = vsel %vm2769, %v2791, %v2793
      %v2795 = vrot.slane %v340, 3
      %v2796 = vsel %vm2769, %v2793, %v2795
      %v2797 = vrot.slane %v341, 3
      %v2798 = vsel %vm2769, %v2795, %v2797
      %v2799 = vrot.slane %v342, 3
      %v2800 = vsel %vm2769, %v2797, %v2799
      %v2801 = vrot.slane %v1277, 3
      %v2802 = vsel %vm2769, %v2799, %v2801
      %v2803 = vrot.slane %v2177, 3
      %v2804 = vsel %vm2769, %v2801, %v2803
      %v2805 = vrot.slane %v2178, 3
      %v2806 = vsel %vm2769, %v2803, %v2805
      %v2808 = vsel %vm496, %v2772, 0
      %v2811 = vsel %vm496, %v2774, 0
      %v2814 = vsel %vm496, %v2776, 0
      %v2817 = vsel %vm496, %v2778, 0
      %v2820 = vsel %vm496, %v2780, 0
      %v2823 = vsel %vm496, %v2782, 0
      %v2826 = vsel %vm496, %v2784, 0
      %v2829 = vsel %vm496, %v2786, 0
      %v2832 = vsel %vm496, %v2788, 0
      %v2835 = vsel %vm496, %v2790, 0
      %v2838 = vsel %vm496, %v2792, 0
      %v2841 = vsel %vm496, %v2794, 0
      %v2844 = vsel %vm496, %v2796, 0
      %v2847 = vsel %vm496, %v2798, 0
      %v2850 = vsel %vm496, %v2800, 0
      %v2853 = vsel %vm496, %v2802, 0
      %v2856 = vsel %vm496, %v2804, 0
      %v2859 = vsel %vm496, %v2806, 0
      %v2862 = vsel %vm551, %v2768, 0
      %2864 = vmatprep.subr.bf16.mxu0 0
      %2865 = vmatpush1.bf16.msra.mxu0 %v2862
      %2866 = vmatprep.subr.bf16.mxu0 0
      %2867 = vmatpush1.bf16.msra.mxu0 0
      %2868 = vmatprep.subr.bf16.mxu0 0
      %2869 = vmatpush1.bf16.msra.mxu0 0
      %2870 = vmatprep.subr.bf16.mxu0 0
      %2871 = vmatpush1.bf16.msra.mxu0 0
      %2872 = vmatprep.subr.bf16.mxu0 0
      %2873 = vmatpush1.bf16.msra.mxu0 0
      %2874 = vmatprep.subr.bf16.mxu0 0
      %2875 = vmatpush1.bf16.msra.mxu0 0
      %2876 = vmatprep.subr.bf16.mxu0 0
      %2877 = vmatpush1.bf16.msra.mxu0 0
      %2878 = vmatprep.subr.bf16.mxu0 0
      %2879 = vmatpush1.bf16.msra.mxu0 0
      %2880 = vmatprep.subr.bf16.mxu0 0
      %2881 = vmatpush1.bf16.msra.mxu0 0
      %2882 = vmatprep.subr.bf16.mxu0 0
      %2883 = vmatpush1.bf16.msra.mxu0 0
      %2884 = vmatprep.subr.bf16.mxu0 0
      %2885 = vmatpush1.bf16.msra.mxu0 0
      %2886 = vmatprep.subr.bf16.mxu0 0
      %2887 = vmatpush1.bf16.msra.mxu0 0
      %2888 = vmatprep.subr.bf16.mxu0 0
      %2889 = vmatpush1.bf16.msra.mxu0 0
      %2890 = vmatprep.subr.bf16.mxu0 0
      %2891 = vmatpush1.bf16.msra.mxu0 0
      %2892 = vmatprep.subr.bf16.mxu0 0
      %2893 = vmatpush1.bf16.msra.mxu0 0
      %2894 = vmatprep.subr.bf16.mxu0 0
      %2895 = vmatpush1.bf16.msra.mxu0 0
      %2896 = vmatprep.mubr.bf16.mxu0 0
      %2897 = vmatmul.mubr.bf16.gmra.mrb[0].mxu0 %v2808
      %v2898 = vpop.f32.mrb[0].mxu0
      %v2899 = vadd.f32 0.0, %v2898
      %v2900 = vpop.f32.mrb[0].mxu0
      %v2901 = vpop.f32.mrb[0].mxu0
      %v2902 = vadd.f32 0.0, %v2901
      %v2903 = vpop.f32.mrb[0].mxu0
      %2904 = vmatprep.mubr.bf16.mxu0 0
      %2905 = vmatmul.mubr.bf16.gmra.mrb[0].mxu0 %v2811
      %v2906 = vpop.f32.mrb[0].mxu0
      %v2907 = vadd.f32 0.0, %v2906
      %v2908 = vpop.f32.mrb[0].mxu0
      %v2909 = vpop.f32.mrb[0].mxu0
      %v2910 = vadd.f32 0.0, %v2909
      %v2911 = vpop.f32.mrb[0].mxu0
      %2912 = vmatprep.mubr.bf16.mxu0 0
      %2913 = vmatmul.mubr.bf16.gmra.mrb[0].mxu0 %v2814
      %v2914 = vpop.f32.mrb[0].mxu0
      %v2915 = vadd.f32 0.0, %v2914
      %v2916 = vpop.f32.mrb[0].mxu0
      %v2917 = vpop.f32.mrb[0].mxu0
      %v2918 = vadd.f32 0.0, %v2917
      %v2919 = vpop.f32.mrb[0].mxu0
      %2920 = vmatprep.mubr.bf16.mxu0 0
      %2921 = vmatmul.mubr.bf16.gmra.mrb[0].mxu0 %v2817
      %v2922 = vpop.f32.mrb[0].mxu0
      %v2923 = vadd.f32 0.0, %v2922
      %v2924 = vpop.f32.mrb[0].mxu0
      %v2925 = vpop.f32.mrb[0].mxu0
      %v2926 = vadd.f32 0.0, %v2925
      %v2927 = vpop.f32.mrb[0].mxu0
      %2928 = vmatprep.mubr.bf16.mxu0 0
      %2929 = vmatmul.mubr.bf16.gmra.mrb[0].mxu0 %v2820
      %v2930 = vpop.f32.mrb[0].mxu0
      %v2931 = vadd.f32 0.0, %v2930
      %v2932 = vpop.f32.mrb[0].mxu0
      %v2933 = vpop.f32.mrb[0].mxu0
      %v2934 = vadd.f32 0.0, %v2933
      %v2935 = vpop.f32.mrb[0].mxu0
      %2936 = vmatprep.mubr.bf16.mxu0 0
      %2937 = vmatmul.mubr.bf16.gmra.mrb[0].mxu0 %v2823
      %v2938 = vpop.f32.mrb[0].mxu0
      %v2939 = vadd.f32 0.0, %v2938
      %v2940 = vpop.f32.mrb[0].mxu0
      %v2941 = vpop.f32.mrb[0].mxu0
      %v2942 = vadd.f32 0.0, %v2941
      %v2943 = vpop.f32.mrb[0].mxu0
      %2944 = vmatprep.mubr.bf16.mxu0 0
      %2945 = vmatmul.mubr.bf16.gmra.mrb[0].mxu0 %v2826
      %v2946 = vpop.f32.mrb[0].mxu0
      %v2947 = vadd.f32 0.0, %v2946
      %v2948 = vpop.f32.mrb[0].mxu0
      %v2949 = vpop.f32.mrb[0].mxu0
      %v2950 = vadd.f32 0.0, %v2949
      %v2951 = vpop.f32.mrb[0].mxu0
      %2952 = vmatprep.mubr.bf16.mxu0 0
      %2953 = vmatmul.mubr.bf16.gmra.mrb[0].mxu0 %v2829
      %v2954 = vpop.f32.mrb[0].mxu0
      %v2955 = vadd.f32 0.0, %v2954
      %v2956 = vpop.f32.mrb[0].mxu0
      %v2957 = vpop.f32.mrb[0].mxu0
      %v2958 = vadd.f32 0.0, %v2957
      %v2959 = vpop.f32.mrb[0].mxu0
      %2960 = vmatprep.mubr.bf16.mxu0 0
      %2961 = vmatmul.mubr.bf16.gmra.mrb[0].mxu0 %v2832
      %v2962 = vpop.f32.mrb[0].mxu0
      %v2963 = vadd.f32 0.0, %v2962
      %v2964 = vpop.f32.mrb[0].mxu0
      %v2965 = vpop.f32.mrb[0].mxu0
      %v2966 = vadd.f32 0.0, %v2965
      %v2967 = vpop.f32.mrb[0].mxu0
      %2968 = vmatprep.mubr.bf16.mxu0 0
      %2969 = vmatmul.mubr.bf16.gmra.mrb[0].mxu0 %v2835
      %v2970 = vpop.f32.mrb[0].mxu0
      %v2971 = vadd.f32 0.0, %v2970
      %v2972 = vpop.f32.mrb[0].mxu0
      %v2973 = vpop.f32.mrb[0].mxu0
      %v2974 = vadd.f32 0.0, %v2973
      %v2975 = vpop.f32.mrb[0].mxu0
      %2976 = vmatprep.mubr.bf16.mxu0 0
      %2977 = vmatmul.mubr.bf16.gmra.mrb[0].mxu0 %v2838
      %v2978 = vpop.f32.mrb[0].mxu0
      %v2979 = vadd.f32 0.0, %v2978
      %v2980 = vpop.f32.mrb[0].mxu0
      %v2981 = vpop.f32.mrb[0].mxu0
      %v2982 = vadd.f32 0.0, %v2981
      %v2983 = vpop.f32.mrb[0].mxu0
      %2984 = vmatprep.mubr.bf16.mxu0 0
      %2985 = vmatmul.mubr.bf16.gmra.mrb[0].mxu0 %v2841
      %v2986 = vpop.f32.mrb[0].mxu0
      %v2987 = vadd.f32 0.0, %v2986
      %v2988 = vpop.f32.mrb[0].mxu0
      %v2989 = vpop.f32.mrb[0].mxu0
      %v2990 = vadd.f32 0.0, %v2989
      %v2991 = vpop.f32.mrb[0].mxu0
      %2992 = vmatprep.mubr.bf16.mxu0 0
      %2993 = vmatmul.mubr.bf16.gmra.mrb[0].mxu0 %v2844
      %v2994 = vpop.f32.mrb[0].mxu0
      %v2995 = vadd.f32 0.0, %v2994
      %v2996 = vpop.f32.mrb[0].mxu0
      %v2997 = vpop.f32.mrb[0].mxu0
      %v2998 = vadd.f32 0.0, %v2997
      %v2999 = vpop.f32.mrb[0].mxu0
      %3000 = vmatprep.mubr.bf16.mxu0 0
      %3001 = vmatmul.mubr.bf16.gmra.mrb[0].mxu0 %v2847
      %v3002 = vpop.f32.mrb[0].mxu0
      %v3003 = vadd.f32 0.0, %v3002
      %v3004 = vpop.f32.mrb[0].mxu0
      %v3005 = vpop.f32.mrb[0].mxu0
      %v3006 = vadd.f32 0.0, %v3005
      %v3007 = vpop.f32.mrb[0].mxu0
      %3008 = vmatprep.mubr.bf16.mxu0 0
      %3009 = vmatmul.mubr.bf16.gmra.mrb[0].mxu0 %v2850
      %v3010 = vpop.f32.mrb[0].mxu0
      %v3011 = vadd.f32 0.0, %v3010
      %v3012 = vpop.f32.mrb[0].mxu0
      %v3013 = vpop.f32.mrb[0].mxu0
      %v3014 = vadd.f32 0.0, %v3013
      %v3015 = vpop.f32.mrb[0].mxu0
      %3016 = vmatprep.mubr.bf16.mxu0 0
      %3017 = vmatmul.mubr.bf16.gmra.mrb[0].mxu0 %v2853
      %v3018 = vpop.f32.mrb[0].mxu0
      %v3019 = vadd.f32 0.0, %v3018
      %v3020 = vpop.f32.mrb[0].mxu0
      %v3021 = vpop.f32.mrb[0].mxu0
      %v3022 = vadd.f32 0.0, %v3021
      %v3023 = vpop.f32.mrb[0].mxu0
      %3024 = vmatprep.mubr.bf16.mxu0 0
      %3025 = vmatmul.mubr.bf16.gmra.mrb[0].mxu0 %v2856
      %v3026 = vpop.f32.mrb[0].mxu0
      %v3027 = vadd.f32 0.0, %v3026
      %v3028 = vpop.f32.mrb[0].mxu0
      %v3029 = vpop.f32.mrb[0].mxu0
      %v3030 = vadd.f32 0.0, %v3029
      %v3031 = vpop.f32.mrb[0].mxu0
      %3032 = vmatprep.mubr.bf16.mxu0 0
      %3033 = vmatmul.mubr.bf16.gmra.mrb[0].mxu0 %v2859
      %v3034 = vpop.f32.mrb[0].mxu0
      %v3035 = vadd.f32 0.0, %v3034
      %v3036 = vpop.f32.mrb[0].mxu0
      %v3037 = vpop.f32.mrb[0].mxu0
      %v3038 = vadd.f32 0.0, %v3037
      %v3039 = vpop.f32.mrb[0].mxu0
      %3040 = vdwg.mxu0
      %v3041 = vadd.f32 %v2731, %v2899
      %v3042 = vadd.f32 %v2732, %v2902
      %v3043 = vadd.f32 %v2733, %v2907
      %v3044 = vadd.f32 %v2734, %v2910
      %v3045 = vadd.f32 %v2735, %v2915
      %v3046 = vadd.f32 %v2736, %v2918
      %v3047 = vadd.f32 %v2737, %v2923
      %v3048 = vadd.f32 %v2738, %v2926
      %v3049 = vadd.f32 %v2739, %v2931
      %v3050 = vadd.f32 %v2740, %v2934
      %v3051 = vadd.f32 %v2741, %v2939
      %v3052 = vadd.f32 %v2742, %v2942
      %v3053 = vadd.f32 %v2743, %v2947
      %v3054 = vadd.f32 %v2744, %v2950
      %v3055 = vadd.f32 %v2745, %v2955
      %v3056 = vadd.f32 %v2746, %v2958
      %v3057 = vadd.f32 %v2747, %v2963
      %v3058 = vadd.f32 %v2748, %v2966
      %v3059 = vadd.f32 %v2749, %v2971
      %v3060 = vadd.f32 %v2750, %v2974
      %v3061 = vadd.f32 %v2751, %v2979
      %v3062 = vadd.f32 %v2752, %v2982
      %v3063 = vadd.f32 %v2753, %v2987
      %v3064 = vadd.f32 %v2754, %v2990
      %v3065 = vadd.f32 %v2755, %v2995
      %v3066 = vadd.f32 %v2756, %v2998
      %v3067 = vadd.f32 %v2757, %v3003
      %v3068 = vadd.f32 %v2758, %v3006
      %v3069 = vadd.f32 %v2759, %v3011
      %v3070 = vadd.f32 %v2760, %v3014
      %v3071 = vadd.f32 %v2761, %v3019
      %v3072 = vadd.f32 %v2762, %v3022
      %v3073 = vadd.f32 %v2763, %v3027
      %v3074 = vadd.f32 %v2764, %v3030
      %v3075 = vadd.f32 %v2765, %v3035
      %v3076 = vadd.f32 %v2766, %v3038
      %vm3077 = vcmask 64512
      %3078 = vst.msk [vmem:[%s235] sm:$0xff] %vm3077, %v3041
      %3079 = vst.msk [vmem:[%s235 + $0x8] sm:$0xff] %vm3077, %v3042
      %3080 = vst.msk [vmem:[%s235 + $0x10] sm:$0xff] %vm3077, %v3043
      %3081 = vst.msk [vmem:[%s235 + $0x18] sm:$0xff] %vm3077, %v3044
      %3082 = vst.msk [vmem:[%s235 + $0x20] sm:$0xff] %vm3077, %v3045
      %3083 = vst.msk [vmem:[%s235 + $0x28] sm:$0xff] %vm3077, %v3046
      %3084 = vst.msk [vmem:[%s235 + $0x30] sm:$0xff] %vm3077, %v3047
      %3085 = vst.msk [vmem:[%s235 + $0x38] sm:$0xff] %vm3077, %v3048
      %3086 = vst.msk [vmem:[%s235 + $0x40] sm:$0xff] %vm3077, %v3049
      %3087 = vst.msk [vmem:[%s235 + $0x48] sm:$0xff] %vm3077, %v3050
      %3088 = vst.msk [vmem:[%s235 + $0x50] sm:$0xff] %vm3077, %v3051
      %3089 = vst.msk [vmem:[%s235 + $0x58] sm:$0xff] %vm3077, %v3052
      %3090 = vst.msk [vmem:[%s235 + $0x60] sm:$0xff] %vm3077, %v3053
      %3091 = vst.msk [vmem:[%s235 + $0x68] sm:$0xff] %vm3077, %v3054
      %3092 = vst.msk [vmem:[%s235 + $0x70] sm:$0xff] %vm3077, %v3055
      %3093 = vst.msk [vmem:[%s235 + $0x78] sm:$0xff] %vm3077, %v3056
      %3094 = vst.msk [vmem:[%s235 + $0x80] sm:$0xff] %vm3077, %v3057
      %3095 = vst.msk [vmem:[%s235 + $0x88] sm:$0xff] %vm3077, %v3058
      %3096 = vst.msk [vmem:[%s235 + $0x90] sm:$0xff] %vm3077, %v3059
      %3097 = vst.msk [vmem:[%s235 + $0x98] sm:$0xff] %vm3077, %v3060
      %3098 = vst.msk [vmem:[%s235 + $0xa0] sm:$0xff] %vm3077, %v3061
      %3099 = vst.msk [vmem:[%s235 + $0xa8] sm:$0xff] %vm3077, %v3062
      %3100 = vst.msk [vmem:[%s235 + $0xb0] sm:$0xff] %vm3077, %v3063
      %3101 = vst.msk [vmem:[%s235 + $0xb8] sm:$0xff] %vm3077, %v3064
      %3102 = vst.msk [vmem:[%s235 + $0xc0] sm:$0xff] %vm3077, %v3065
      %3103 = vst.msk [vmem:[%s235 + $0xc8] sm:$0xff] %vm3077, %v3066
      %3104 = vst.msk [vmem:[%s235 + $0xd0] sm:$0xff] %vm3077, %v3067
      %3105 = vst.msk [vmem:[%s235 + $0xd8] sm:$0xff] %vm3077, %v3068
      %3106 = vst.msk [vmem:[%s235 + $0xe0] sm:$0xff] %vm3077, %v3069
      %3107 = vst.msk [vmem:[%s235 + $0xe8] sm:$0xff] %vm3077, %v3070
      %3108 = vst.msk [vmem:[%s235 + $0xf0] sm:$0xff] %vm3077, %v3071
      %3109 = vst.msk [vmem:[%s235 + $0xf8] sm:$0xff] %vm3077, %v3072
      %3110 = vst.msk [vmem:[%s235 + $0x100] sm:$0xff] %vm3077, %v3073
      %3111 = vst.msk [vmem:[%s235 + $0x108] sm:$0xff] %vm3077, %v3074
      %3112 = vst.msk [vmem:[%s235 + $0x110] sm:$0xff] %vm3077, %v3075
      %3113 = vst.msk [vmem:[%s235 + $0x118] sm:$0xff] %vm3077, %v3076
      %v3114 = vld [vmem:[%s2] sm:$0xff]
      %v3115 = vld [vmem:[%s2 + $0x8] sm:$0xff]
      %v3116 = vld [vmem:[%s2 + $0x10] sm:$0xff]
      %v3117 = vld [vmem:[%s2 + $0x18] sm:$0xff]
      %v3118 = vld [vmem:[%s2 + $0x20] sm:$0xff]
      %v3119 = vld [vmem:[%s2 + $0x28] sm:$0xff]
      %v3120 = vld [vmem:[%s2 + $0x30] sm:$0xff]
      %v3121 = vld [vmem:[%s2 + $0x38] sm:$0xff]
      %v3122 = vld [vmem:[%s2 + $0x40] sm:$0xff]
      %v3123 = vld [vmem:[%s2 + $0x48] sm:$0xff]
      %v3124 = vld [vmem:[%s2 + $0x50] sm:$0xff]
      %v3125 = vld [vmem:[%s2 + $0x58] sm:$0xff]
      %v3126 = vld [vmem:[%s2 + $0x60] sm:$0xff]
      %v3127 = vld [vmem:[%s2 + $0x68] sm:$0xff]
      %v3128 = vld [vmem:[%s2 + $0x70] sm:$0xff]
      %v3129 = vld [vmem:[%s2 + $0x78] sm:$0xff]
      %v3130 = vld [vmem:[%s2 + $0x80] sm:$0xff]
      %v3131 = vld [vmem:[%s2 + $0x88] sm:$0xff]
      %v3132 = vld [vmem:[%s2 + $0x90] sm:$0xff]
      %v3133 = vld [vmem:[%s2 + $0x98] sm:$0xff]
      %v3134 = vld [vmem:[%s2 + $0xa0] sm:$0xff]
      %v3135 = vld [vmem:[%s2 + $0xa8] sm:$0xff]
      %v3136 = vld [vmem:[%s2 + $0xb0] sm:$0xff]
      %v3137 = vld [vmem:[%s2 + $0xb8] sm:$0xff]
      %v3138 = vld [vmem:[%s2 + $0xc0] sm:$0xff]
      %v3139 = vld [vmem:[%s2 + $0xc8] sm:$0xff]
      %v3140 = vld [vmem:[%s2 + $0xd0] sm:$0xff]
      %v3141 = vld [vmem:[%s2 + $0xd8] sm:$0xff]
      %v3142 = vld [vmem:[%s2 + $0xe0] sm:$0xff]
      %v3143 = vld [vmem:[%s2 + $0xe8] sm:$0xff]
      %v3144 = vld [vmem:[%s2 + $0xf0] sm:$0xff]
      %v3145 = vld [vmem:[%s2 + $0xf8] sm:$0xff]
      %v3146 = vld [vmem:[%s2 + $0x100] sm:$0xff]
      %v3147 = vld [vmem:[%s2 + $0x108] sm:$0xff]
      %v3148 = vld [vmem:[%s2 + $0x110] sm:$0xff]
      %v3149 = vld [vmem:[%s2 + $0x118] sm:$0xff]
      %3151 = vset.pattern.permute.xlu0 0
      %3152 = vperm.xlu0 %3151, %v3114
      %v3153 = vpop.permute.xlu0 %3152
      %3156 = vset.pattern.permute.xlu0 0
      %3157 = vperm.xlu0 %3156, %v3115
      %v3158 = vpop.permute.xlu0 %3157
      %3161 = vset.pattern.permute.xlu0 0
      %3162 = vperm.xlu0 %3161, %v3116
      %v3163 = vpop.permute.xlu0 %3162
      %3166 = vset.pattern.permute.xlu0 0
      %3167 = vperm.xlu0 %3166, %v3117
      %v3168 = vpop.permute.xlu0 %3167
      %3171 = vset.pattern.permute.xlu0 0
      %3172 = vperm.xlu0 %3171, %v3118
      %v3173 = vpop.permute.xlu0 %3172
      %3176 = vset.pattern.permute.xlu0 0
      %3177 = vperm.xlu0 %3176, %v3119
      %v3178 = vpop.permute.xlu0 %3177
      %3181 = vset.pattern.permute.xlu0 0
      %3182 = vperm.xlu0 %3181, %v3120
      %v3183 = vpop.permute.xlu0 %3182
      %3186 = vset.pattern.permute.xlu0 0
      %3187 = vperm.xlu0 %3186, %v3121
      %v3188 = vpop.permute.xlu0 %3187
      %3191 = vset.pattern.permute.xlu0 0
      %3192 = vperm.xlu0 %3191, %v3122
      %v3193 = vpop.permute.xlu0 %3192
      %3196 = vset.pattern.permute.xlu0 0
      %3197 = vperm.xlu0 %3196, %v3123
      %v3198 = vpop.permute.xlu0 %3197
      %3201 = vset.pattern.permute.xlu0 0
      %3202 = vperm.xlu0 %3201, %v3124
      %v3203 = vpop.permute.xlu0 %3202
      %3206 = vset.pattern.permute.xlu0 0
      %3207 = vperm.xlu0 %3206, %v3125
      %v3208 = vpop.permute.xlu0 %3207
      %3211 = vset.pattern.permute.xlu0 0
      %3212 = vperm.xlu0 %3211, %v3126
      %v3213 = vpop.permute.xlu0 %3212
      %3216 = vset.pattern.permute.xlu0 0
      %3217 = vperm.xlu0 %3216, %v3127
      %v3218 = vpop.permute.xlu0 %3217
      %3221 = vset.pattern.permute.xlu0 0
      %3222 = vperm.xlu0 %3221, %v3128
      %v3223 = vpop.permute.xlu0 %3222
      %3226 = vset.pattern.permute.xlu0 0
      %3227 = vperm.xlu0 %3226, %v3129
      %v3228 = vpop.permute.xlu0 %3227
      %3231 = vset.pattern.permute.xlu0 0
      %3232 = vperm.xlu0 %3231, %v3130
      %v3233 = vpop.permute.xlu0 %3232
      %3236 = vset.pattern.permute.xlu0 0
      %3237 = vperm.xlu0 %3236, %v3131
      %v3238 = vpop.permute.xlu0 %3237
      %3241 = vset.pattern.permute.xlu0 0
      %3242 = vperm.xlu0 %3241, %v3132
      %v3243 = vpop.permute.xlu0 %3242
      %3246 = vset.pattern.permute.xlu0 0
      %3247 = vperm.xlu0 %3246, %v3133
      %v3248 = vpop.permute.xlu0 %3247
      %3251 = vset.pattern.permute.xlu0 0
      %3252 = vperm.xlu0 %3251, %v3134
      %v3253 = vpop.permute.xlu0 %3252
      %3256 = vset.pattern.permute.xlu0 0
      %3257 = vperm.xlu0 %3256, %v3135
      %v3258 = vpop.permute.xlu0 %3257
      %3261 = vset.pattern.permute.xlu0 0
      %3262 = vperm.xlu0 %3261, %v3136
      %v3263 = vpop.permute.xlu0 %3262
      %3266 = vset.pattern.permute.xlu0 0
      %3267 = vperm.xlu0 %3266, %v3137
      %v3268 = vpop.permute.xlu0 %3267
      %3271 = vset.pattern.permute.xlu0 0
      %3272 = vperm.xlu0 %3271, %v3138
      %v3273 = vpop.permute.xlu0 %3272
      %3276 = vset.pattern.permute.xlu0 0
      %3277 = vperm.xlu0 %3276, %v3139
      %v3278 = vpop.permute.xlu0 %3277
      %3281 = vset.pattern.permute.xlu0 0
      %3282 = vperm.xlu0 %3281, %v3140
      %v3283 = vpop.permute.xlu0 %3282
      %3286 = vset.pattern.permute.xlu0 0
      %3287 = vperm.xlu0 %3286, %v3141
      %v3288 = vpop.permute.xlu0 %3287
      %3291 = vset.pattern.permute.xlu0 0
      %3292 = vperm.xlu0 %3291, %v3142
      %v3293 = vpop.permute.xlu0 %3292
      %3296 = vset.pattern.permute.xlu0 0
      %3297 = vperm.xlu0 %3296, %v3143
      %v3298 = vpop.permute.xlu0 %3297
      %3301 = vset.pattern.permute.xlu0 0
      %3302 = vperm.xlu0 %3301, %v3144
      %v3303 = vpop.permute.xlu0 %3302
      %3306 = vset.pattern.permute.xlu0 0
      %3307 = vperm.xlu0 %3306, %v3145
      %v3308 = vpop.permute.xlu0 %3307
      %3311 = vset.pattern.permute.xlu0 0
      %3312 = vperm.xlu0 %3311, %v3146
      %v3313 = vpop.permute.xlu0 %3312
      %3316 = vset.pattern.permute.xlu0 0
      %3317 = vperm.xlu0 %3316, %v3147
      %v3318 = vpop.permute.xlu0 %3317
      %3321 = vset.pattern.permute.xlu0 0
      %3322 = vperm.xlu0 %3321, %v3148
      %v3323 = vpop.permute.xlu0 %3322
      %3326 = vset.pattern.permute.xlu0 0
      %3327 = vperm.xlu0 %3326, %v3149
      %v3328 = vpop.permute.xlu0 %3327
      %v3330 = vmul.f32 %v3041, %v3153
      %v3331 = vmul.f32 %v3042, %v3158
      %v3332 = vmul.f32 %v3043, %v3163
      %v3333 = vmul.f32 %v3044, %v3168
      %v3334 = vmul.f32 %v3045, %v3173
      %v3335 = vmul.f32 %v3046, %v3178
      %v3336 = vmul.f32 %v3047, %v3183
      %v3337 = vmul.f32 %v3048, %v3188
      %v3338 = vmul.f32 %v3049, %v3193
      %v3339 = vmul.f32 %v3050, %v3198
      %v3340 = vmul.f32 %v3051, %v3203
      %v3341 = vmul.f32 %v3052, %v3208
      %v3342 = vmul.f32 %v3053, %v3213
      %v3343 = vmul.f32 %v3054, %v3218
      %v3344 = vmul.f32 %v3055, %v3223
      %v3345 = vmul.f32 %v3056, %v3228
      %v3346 = vmul.f32 %v3057, %v3233
      %v3347 = vmul.f32 %v3058, %v3238
      %v3348 = vmul.f32 %v3059, %v3243
      %v3349 = vmul.f32 %v3060, %v3248
      %v3350 = vmul.f32 %v3061, %v3253
      %v3351 = vmul.f32 %v3062, %v3258
      %v3352 = vmul.f32 %v3063, %v3263
      %v3353 = vmul.f32 %v3064, %v3268
      %v3354 = vmul.f32 %v3065, %v3273
      %v3355 = vmul.f32 %v3066, %v3278
      %v3356 = vmul.f32 %v3067, %v3283
      %v3357 = vmul.f32 %v3068, %v3288
      %v3358 = vmul.f32 %v3069, %v3293
      %v3359 = vmul.f32 %v3070, %v3298
      %v3360 = vmul.f32 %v3071, %v3303
      %v3361 = vmul.f32 %v3072, %v3308
      %v3362 = vmul.f32 %v3073, %v3313
      %v3363 = vmul.f32 %v3074, %v3318
      %v3364 = vmul.f32 %v3075, %v3323
      %v3365 = vmul.f32 %v3076, %v3328
      %v3366 = vsel %vm3077, %v3330, 0.0
      %v3367 = vsel %vm3077, %v3331, 0.0
      %v3368 = vadd.f32 %v3366, %v3367
      %v3369 = vsel %vm3077, %v3332, 0.0
      %v3370 = vadd.f32 %v3368, %v3369
      %v3371 = vsel %vm3077, %v3333, 0.0
      %v3372 = vadd.f32 %v3370, %v3371
      %v3373 = vsel %vm3077, %v3334, 0.0
      %v3374 = vadd.f32 %v3372, %v3373
      %v3375 = vsel %vm3077, %v3335, 0.0
      %v3376 = vadd.f32 %v3374, %v3375
      %v3377 = vsel %vm3077, %v3336, 0.0
      %v3378 = vadd.f32 %v3376, %v3377
      %v3379 = vsel %vm3077, %v3337, 0.0
      %v3380 = vadd.f32 %v3378, %v3379
      %v3381 = vsel %vm3077, %v3338, 0.0
      %v3382 = vadd.f32 %v3380, %v3381
      %v3383 = vsel %vm3077, %v3339, 0.0
      %v3384 = vadd.f32 %v3382, %v3383
      %v3385 = vsel %vm3077, %v3340, 0.0
      %v3386 = vadd.f32 %v3384, %v3385
      %v3387 = vsel %vm3077, %v3341, 0.0
      %v3388 = vadd.f32 %v3386, %v3387
      %v3389 = vsel %vm3077, %v3342, 0.0
      %v3390 = vadd.f32 %v3388, %v3389
      %v3391 = vsel %vm3077, %v3343, 0.0
      %v3392 = vadd.f32 %v3390, %v3391
      %v3393 = vsel %vm3077, %v3344, 0.0
      %v3394 = vadd.f32 %v3392, %v3393
      %v3395 = vsel %vm3077, %v3345, 0.0
      %v3396 = vadd.f32 %v3394, %v3395
      %v3397 = vsel %vm3077, %v3346, 0.0
      %v3398 = vadd.f32 %v3396, %v3397
      %v3399 = vsel %vm3077, %v3347, 0.0
      %v3400 = vadd.f32 %v3398, %v3399
      %v3401 = vsel %vm3077, %v3348, 0.0
      %v3402 = vadd.f32 %v3400, %v3401
      %v3403 = vsel %vm3077, %v3349, 0.0
      %v3404 = vadd.f32 %v3402, %v3403
      %v3405 = vsel %vm3077, %v3350, 0.0
      %v3406 = vadd.f32 %v3404, %v3405
      %v3407 = vsel %vm3077, %v3351, 0.0
      %v3408 = vadd.f32 %v3406, %v3407
      %v3409 = vsel %vm3077, %v3352, 0.0
      %v3410 = vadd.f32 %v3408, %v3409
      %v3411 = vsel %vm3077, %v3353, 0.0
      %v3412 = vadd.f32 %v3410, %v3411
      %v3413 = vsel %vm3077, %v3354, 0.0
      %v3414 = vadd.f32 %v3412, %v3413
      %v3415 = vsel %vm3077, %v3355, 0.0
      %v3416 = vadd.f32 %v3414, %v3415
      %v3417 = vsel %vm3077, %v3356, 0.0
      %v3418 = vadd.f32 %v3416, %v3417
      %v3419 = vsel %vm3077, %v3357, 0.0
      %v3420 = vadd.f32 %v3418, %v3419
      %v3421 = vsel %vm3077, %v3358, 0.0
      %v3422 = vadd.f32 %v3420, %v3421
      %v3423 = vsel %vm3077, %v3359, 0.0
      %v3424 = vadd.f32 %v3422, %v3423
      %v3425 = vsel %vm3077, %v3360, 0.0
      %v3426 = vadd.f32 %v3424, %v3425
      %v3427 = vsel %vm3077, %v3361, 0.0
      %v3428 = vadd.f32 %v3426, %v3427
      %v3429 = vsel %vm3077, %v3362, 0.0
      %v3430 = vadd.f32 %v3428, %v3429
      %v3431 = vsel %vm3077, %v3363, 0.0
      %v3432 = vadd.f32 %v3430, %v3431
      %v3433 = vsel %vm3077, %v3364, 0.0
      %v3434 = vadd.f32 %v3432, %v3433
      %v3435 = vsel %vm3077, %v3365, 0.0
      %v3436 = vadd.f32 %v3434, %v3435
      %v3437 = vrot.slane %v3436, 4
      %v3438 = vadd.f32 %v3436, %v3437
      %v3439 = vrot.slane %v3438, 2
      %v3440 = vadd.f32 %v3438, %v3439
      %v3441 = vrot.slane %v3440, 1
      %v3442 = vadd.f32 %v3440, %v3441
      %vm3443 = vcmask 57344
      %3444 = vst.msk [vmem:[%s238] sm:$0x1] %vm3443, %v3442
      %v3445 = vmul.f32 %v3330, %v3041
      %v3446 = vmul.f32 %v3331, %v3042
      %v3447 = vmul.f32 %v3332, %v3043
      %v3448 = vmul.f32 %v3333, %v3044
      %v3449 = vmul.f32 %v3334, %v3045
      %v3450 = vmul.f32 %v3335, %v3046
      %v3451 = vmul.f32 %v3336, %v3047
      %v3452 = vmul.f32 %v3337, %v3048
      %v3453 = vmul.f32 %v3338, %v3049
      %v3454 = vmul.f32 %v3339, %v3050
      %v3455 = vmul.f32 %v3340, %v3051
      %v3456 = vmul.f32 %v3341, %v3052
      %v3457 = vmul.f32 %v3342, %v3053
      %v3458 = vmul.f32 %v3343, %v3054
      %v3459 = vmul.f32 %v3344, %v3055
      %v3460 = vmul.f32 %v3345, %v3056
      %v3461 = vmul.f32 %v3346, %v3057
      %v3462 = vmul.f32 %v3347, %v3058
      %v3463 = vmul.f32 %v3348, %v3059
      %v3464 = vmul.f32 %v3349, %v3060
      %v3465 = vmul.f32 %v3350, %v3061
      %v3466 = vmul.f32 %v3351, %v3062
      %v3467 = vmul.f32 %v3352, %v3063
      %v3468 = vmul.f32 %v3353, %v3064
      %v3469 = vmul.f32 %v3354, %v3065
      %v3470 = vmul.f32 %v3355, %v3066
      %v3471 = vmul.f32 %v3356, %v3067
      %v3472 = vmul.f32 %v3357, %v3068
      %v3473 = vmul.f32 %v3358, %v3069
      %v3474 = vmul.f32 %v3359, %v3070
      %v3475 = vmul.f32 %v3360, %v3071
      %v3476 = vmul.f32 %v3361, %v3072
      %v3477 = vmul.f32 %v3362, %v3073
      %v3478 = vmul.f32 %v3363, %v3074
      %v3479 = vmul.f32 %v3364, %v3075
      %v3480 = vmul.f32 %v3365, %v3076
      %v3481 = vsel %vm3077, %v3445, 0.0
      %v3482 = vsel %vm3077, %v3446, 0.0
      %v3483 = vadd.f32 %v3481, %v3482
      %v3484 = vsel %vm3077, %v3447, 0.0
      %v3485 = vadd.f32 %v3483, %v3484
      %v3486 = vsel %vm3077, %v3448, 0.0
      %v3487 = vadd.f32 %v3485, %v3486
      %v3488 = vsel %vm3077, %v3449, 0.0
      %v3489 = vadd.f32 %v3487, %v3488
      %v3490 = vsel %vm3077, %v3450, 0.0
      %v3491 = vadd.f32 %v3489, %v3490
      %v3492 = vsel %vm3077, %v3451, 0.0
      %v3493 = vadd.f32 %v3491, %v3492
      %v3494 = vsel %vm3077, %v3452, 0.0
      %v3495 = vadd.f32 %v3493, %v3494
      %v3496 = vsel %vm3077, %v3453, 0.0
      %v3497 = vadd.f32 %v3495, %v3496
      %v3498 = vsel %vm3077, %v3454, 0.0
      %v3499 = vadd.f32 %v3497, %v3498
      %v3500 = vsel %vm3077, %v3455, 0.0
      %v3501 = vadd.f32 %v3499, %v3500
      %v3502 = vsel %vm3077, %v3456, 0.0
      %v3503 = vadd.f32 %v3501, %v3502
      %v3504 = vsel %vm3077, %v3457, 0.0
      %v3505 = vadd.f32 %v3503, %v3504
      %v3506 = vsel %vm3077, %v3458, 0.0
      %v3507 = vadd.f32 %v3505, %v3506
      %v3508 = vsel %vm3077, %v3459, 0.0
      %v3509 = vadd.f32 %v3507, %v3508
      %v3510 = vsel %vm3077, %v3460, 0.0
      %v3511 = vadd.f32 %v3509, %v3510
      %v3512 = vsel %vm3077, %v3461, 0.0
      %v3513 = vadd.f32 %v3511, %v3512
      %v3514 = vsel %vm3077, %v3462, 0.0
      %v3515 = vadd.f32 %v3513, %v3514
      %v3516 = vsel %vm3077, %v3463, 0.0
      %v3517 = vadd.f32 %v3515, %v3516
      %v3518 = vsel %vm3077, %v3464, 0.0
      %v3519 = vadd.f32 %v3517, %v3518
      %v3520 = vsel %vm3077, %v3465, 0.0
      %v3521 = vadd.f32 %v3519, %v3520
      %v3522 = vsel %vm3077, %v3466, 0.0
      %v3523 = vadd.f32 %v3521, %v3522
      %v3524 = vsel %vm3077, %v3467, 0.0
      %v3525 = vadd.f32 %v3523, %v3524
      %v3526 = vsel %vm3077, %v3468, 0.0
      %v3527 = vadd.f32 %v3525, %v3526
      %v3528 = vsel %vm3077, %v3469, 0.0
      %v3529 = vadd.f32 %v3527, %v3528
      %v3530 = vsel %vm3077, %v3470, 0.0
      %v3531 = vadd.f32 %v3529, %v3530
      %v3532 = vsel %vm3077, %v3471, 0.0
      %v3533 = vadd.f32 %v3531, %v3532
      %v3534 = vsel %vm3077, %v3472, 0.0
      %v3535 = vadd.f32 %v3533, %v3534
      %v3536 = vsel %vm3077, %v3473, 0.0
      %v3537 = vadd.f32 %v3535, %v3536
      %v3538 = vsel %vm3077, %v3474, 0.0
      %v3539 = vadd.f32 %v3537, %v3538
      %v3540 = vsel %vm3077, %v3475, 0.0
      %v3541 = vadd.f32 %v3539, %v3540
      %v3542 = vsel %vm3077, %v3476, 0.0
      %v3543 = vadd.f32 %v3541, %v3542
      %v3544 = vsel %vm3077, %v3477, 0.0
      %v3545 = vadd.f32 %v3543, %v3544
      %v3546 = vsel %vm3077, %v3478, 0.0
      %v3547 = vadd.f32 %v3545, %v3546
      %v3548 = vsel %vm3077, %v3479, 0.0
      %v3549 = vadd.f32 %v3547, %v3548
      %v3550 = vsel %vm3077, %v3480, 0.0
      %v3551 = vadd.f32 %v3549, %v3550
      %v3552 = vrot.slane %v3551, 4
      %v3553 = vadd.f32 %v3551, %v3552
      %v3554 = vrot.slane %v3553, 2
      %v3555 = vadd.f32 %v3553, %v3554
      %v3556 = vrot.slane %v3555, 1
      %v3557 = vadd.f32 %v3555, %v3556
      %3558 = vst.msk [vmem:[%s241] sm:$0x1] %vm3443, %v3557
      %p3559 = scmp.lt.s32.totalorder %s17, 1
      %s3560 = scalar_select %p3559, %s17, 1
      %s3561 = smul.addr %s3560, 36
      %s3562 = smul.addr %s3561, 8
      %s3563 = scalar_lea.vmem %s3, %s3562
      %p3564 = scmp.lt.s32.totalorder %s17, 1
      %s3565 = scalar_select %p3564, %s17, 1
      %s3566 = scalar_lea.vmem %s4, %s3565
      %p3567 = scmp.lt.s32.totalorder %s17, 1
      %s3568 = scalar_select %p3567, %s17, 1
      %s3569 = scalar_lea.vmem %s5, %s3568
      // Predicated region
      $region33: #{basic_block_split_forward.5} parent=31 // pred_check
        %p3570 = pneg %p103
      $region34: #{basic_block_split_forward.5} parent=31 // pred_check_branch
        %3572 = sbr.rel (%p3570) target = $region36
      $region35: #{basic_block_split_forward.5} parent=31 // pred_region
        _
      $region36: #{basic_block_split_forward.5} parent=31 // pred_fallthru
        _
      // Predicated region
      $region37: #{basic_block_split_forward.5} parent=31 // pred_check
        %p3573 = pneg %p129
      $region38: #{basic_block_split_forward.5} parent=31 // pred_check_branch
        %3575 = sbr.rel (%p3573) target = $region40
      $region39: #{basic_block_split_forward.5} parent=31 // pred_region
        _
      $region40: #{basic_block_split_forward.5} parent=31 // pred_fallthru
        _
      // Predicated region
      $region41: #{basic_block_split_forward.5} parent=31 // pred_check
        %p3576 = pneg %p155
      $region42: #{basic_block_split_forward.5} parent=31 // pred_check_branch
        %3578 = sbr.rel (%p3576) target = $region44
      $region43: #{basic_block_split_forward.5} parent=31 // pred_region
        _
      $region44: #{basic_block_split_forward.5} parent=31 // pred_fallthru
        _
    $region32: #{basic_block_split_forward.5} parent=5 // pred_fallthru
      _
    %p3579 = scmp.le.s32.totalorder 2, %s12
    // Predicated region
    $region45: #{basic_block_split_forward.5} parent=5 // pred_check
      %p3580 = pneg %p3579
    $region46: #{basic_block_split_forward.5} parent=5 // pred_check_branch
      %3582 = sbr.rel (%p3580) target = $region48
    $region47: #{basic_block_split_forward.5} parent=5 // pred_region
      %s3583 = ssub.s32 %s12, 2
      // Predicated region
      $region49: #{basic_block_split_forward.5} parent=47 // pred_check
        %p3584 = pneg %p109
      $region50: #{basic_block_split_forward.5} parent=47 // pred_check_branch
        %3586 = sbr.rel (%p3584) target = $region52
      $region51: #{basic_block_split_forward.5} parent=47 // pred_region
        %p3587 = scmp.lt.s32.totalorder %s18, 1
        %s3588 = scalar_select %p3587, %s18, 1
        %s3589 = smul.addr %s3588, 36
        %s3590 = smul.addr %s3589, 8
        %s3591 = scalar_lea.vmem %s3, %s3590
      $region52: #{basic_block_split_forward.5} parent=47 // pred_fallthru
        _
      // Predicated region
      $region53: #{basic_block_split_forward.5} parent=47 // pred_check
        %p3592 = pneg %p135
      $region54: #{basic_block_split_forward.5} parent=47 // pred_check_branch
        %3594 = sbr.rel (%p3592) target = $region56
      $region55: #{basic_block_split_forward.5} parent=47 // pred_region
        %p3595 = scmp.lt.s32.totalorder %s18, 1
        %s3596 = scalar_select %p3595, %s18, 1
        %s3597 = scalar_lea.vmem %s4, %s3596
      $region56: #{basic_block_split_forward.5} parent=47 // pred_fallthru
        _
      // Predicated region
      $region57: #{basic_block_split_forward.5} parent=47 // pred_check
        %p3598 = pneg %p161
      $region58: #{basic_block_split_forward.5} parent=47 // pred_check_branch
        %3600 = sbr.rel (%p3598) target = $region60
      $region59: #{basic_block_split_forward.5} parent=47 // pred_region
        %p3601 = scmp.lt.s32.totalorder %s18, 1
        %s3602 = scalar_select %p3601, %s18, 1
        %s3603 = scalar_lea.vmem %s5, %s3602
      $region60: #{basic_block_split_forward.5} parent=47 // pred_fallthru
        _
    $region48: #{basic_block_split_forward.5} parent=5 // pred_fallthru
      _
  $region6: #{basic_block_split_forward.5} parent=0 // loop_footer
    %s16 = sadd.s32 1, %s12
  $region7: #{basic_block_split_forward.5} parent=0 // loop_footer_branch
    %11 = sbr.rel target = $region3
  $region8: #{basic_block_split_forward.5} parent=0 // loop_exit
    _

// kernel: basic_block_split_forward.8
$region0: #{basic_block_split_forward.8}
  #allocation0 [shape = 'u32[]', space=smem, size = 0x4, offset = 0x4, fixed_abs, tag = 'smem constant byte address 0x4 - core index']
  #allocation1 [shape = 'u32[144,128]{1,0:T(1,128)}', space=vmem, size = 0x12000, scoped, tag = 'internal scratch']
  %s0 = inlined_call_operand.vmem [shape: bf16[2,342,4], index: 0, kind: input, shape index: {}]
  %s1 = inlined_call_operand.vmem [shape: bf16[1,4,8], index: 1, kind: input, shape index: {}]
  %s2 = inlined_call_operand.vmem [shape: f32[1,288,1], index: 2, kind: input, shape index: {}]
  %s3 = inlined_call_operand.vmem [shape: f32[2,288,8], index: 3, kind: output, shape index: {0}]
  %s4 = inlined_call_operand.vmem [shape: f32[2,1,8], index: 4, kind: output, shape index: {1}]
  %s5 = inlined_call_operand.vmem [shape: f32[2,1,8], index: 5, kind: output, shape index: {2}]
  %6 = xla_tuple %s3, %s4, %s5
  %s7 = sld [smem:[#allocation0]]
  $region61: #{basic_block_split_forward.8} parent=0
    _
  %s9 = ssub.s32 1, %s7
  %s10 = scalar_select 0, %s9, %s7
  loop: start=0, step=1, limit=4
  $region2: #{basic_block_split_forward.8} parent=0 // loop_pre_header
    _
  $region3: #{basic_block_split_forward.8} parent=0 // loop_header
    %s12 = sphi 0, %s16
    %p13 = scmp.ge.s32.totalorder %s12, 4
    %s22 = sphi 0, %s24
    %s25 = sphi 0, %s22
    %s26 = sphi 0, %s25
    %s42 = sphi 0, %s26
    %s46 = sphi 0, %s46
    %s48 = sphi 0, %s46
    %s49 = sphi 0, %s48
    %s63 = sphi 0, %s49
    %s67 = sphi 0, %s67
    %s69 = sphi 0, %s67
    %s70 = sphi 0, %s69
    %s84 = sphi 0, %s70
    %s90 = sphi 0, %s92
    %s93 = sphi 0, %s90
    %s94 = sphi 0, %s93
    %s110 = sphi 0, %s94
    %s116 = sphi 0, %s118
    %s119 = sphi 0, %s116
    %s120 = sphi 0, %s119
    %s136 = sphi 0, %s120
    %s142 = sphi 0, %s144
    %s145 = sphi 0, %s142
    %s146 = sphi 0, %s145
    %s162 = sphi 0, %s146
  $region4: #{basic_block_split_forward.8} parent=0 // loop_header_branch
    %15 = sbr.rel (%p13) target = $region8
  $region5: #{basic_block_split_forward.8} parent=0 // loop_body
    %s17 = ssub.s32 %s12, 1
    %s18 = ssub.s32 %s12, 2
    %s19 = sadd.s32 %s12, 1
    %s20 = ssub.s32 %s12, %s19
    %p21 = scmp.eq.s32.totalorder %s20, 0
    %s23 = sadd.s32 %s22, 1
    %s24 = scalar_select %p21, %s22, %s23
    %p27 = pneg %p21
    %p28 = scmp.eq.s32.totalorder %s12, 1
    %p29 = por %p27, %p28
    %p30 = scmp.ne.s32.totalorder %s22, %s25
    %p31 = scmp.eq.s32.totalorder %s12, 0
    %p32 = por %p30, %p31
    %p33 = scmp.ne.s32.totalorder %s22, %s25
    %p34 = scmp.eq.s32.totalorder %s17, 1
    %p35 = por %p33, %p34
    %p36 = scmp.ne.s32.totalorder %s25, %s26
    %p37 = scmp.eq.s32.totalorder %s17, 0
    %p38 = por %p36, %p37
    %p39 = scmp.ne.s32.totalorder %s25, %s26
    %p40 = scmp.eq.s32.totalorder %s18, 1
    %p41 = por %p39, %p40
    %p43 = scmp.ne.s32.totalorder %s26, %s42
    %p44 = scmp.eq.s32.totalorder %s18, 0
    %p45 = por %p43, %p44
    %s47 = sadd.s32 %s46, 1
    %p50 = scmp.eq.s32.totalorder %s12, 1
    %p51 = scmp.ne.s32.totalorder %s46, %s48
    %p52 = scmp.eq.s32.totalorder %s12, 0
    %p53 = por %p51, %p52
    %p54 = scmp.ne.s32.totalorder %s46, %s48
    %p55 = scmp.eq.s32.totalorder %s17, 1
    %p56 = por %p54, %p55
    %p57 = scmp.ne.s32.totalorder %s48, %s49
    %p58 = scmp.eq.s32.totalorder %s17, 0
    %p59 = por %p57, %p58
    %p60 = scmp.ne.s32.totalorder %s48, %s49
    %p61 = scmp.eq.s32.totalorder %s18, 1
    %p62 = por %p60, %p61
    %p64 = scmp.ne.s32.totalorder %s49, %s63
    %p65 = scmp.eq.s32.totalorder %s18, 0
    %p66 = por %p64, %p65
    %s68 = sadd.s32 %s67, 1
    %p71 = scmp.eq.s32.totalorder %s12, 1
    %p72 = scmp.ne.s32.totalorder %s67, %s69
    %p73 = scmp.eq.s32.totalorder %s12, 0
    %p74 = por %p72, %p73
    %p75 = scmp.ne.s32.totalorder %s67, %s69
    %p76 = scmp.eq.s32.totalorder %s17, 1
    %p77 = por %p75, %p76
    %p78 = scmp.ne.s32.totalorder %s69, %s70
    %p79 = scmp.eq.s32.totalorder %s17, 0
    %p80 = por %p78, %p79
    %p81 = scmp.ne.s32.totalorder %s69, %s70
    %p82 = scmp.eq.s32.totalorder %s18, 1
    %p83 = por %p81, %p82
    %p85 = scmp.ne.s32.totalorder %s70, %s84
    %p86 = scmp.eq.s32.totalorder %s18, 0
    %p87 = por %p85, %p86
    %s88 = ssub.s32 %s12, %s19
    %p89 = scmp.eq.s32.totalorder %s88, 0
    %s91 = sadd.s32 %s90, 1
    %s92 = scalar_select %p89, %s90, %s91
    %p95 = pneg %p89
    %p96 = scmp.eq.s32.totalorder %s12, 1
    %p97 = por %p95, %p96
    %p98 = scmp.ne.s32.totalorder %s90, %s93
    %p99 = scmp.eq.s32.totalorder %s12, 0
    %p100 = por %p98, %p99
    %p101 = scmp.ne.s32.totalorder %s90, %s93
    %p102 = scmp.eq.s32.totalorder %s17, 1
    %p103 = por %p101, %p102
    %p104 = scmp.ne.s32.totalorder %s93, %s94
    %p105 = scmp.eq.s32.totalorder %s17, 0
    %p106 = por %p104, %p105
    %p107 = scmp.ne.s32.totalorder %s93, %s94
    %p108 = scmp.eq.s32.totalorder %s18, 1
    %p109 = por %p107, %p108
    %p111 = scmp.ne.s32.totalorder %s94, %s110
    %p112 = scmp.eq.s32.totalorder %s18, 0
    %p113 = por %p111, %p112
    %s114 = ssub.s32 %s12, %s19
    %p115 = scmp.eq.s32.totalorder %s114, 0
    %s117 = sadd.s32 %s116, 1
    %s118 = scalar_select %p115, %s116, %s117
    %p121 = pneg %p115
    %p122 = scmp.eq.s32.totalorder %s12, 1
    %p123 = por %p121, %p122
    %p124 = scmp.ne.s32.totalorder %s116, %s119
    %p125 = scmp.eq.s32.totalorder %s12, 0
    %p126 = por %p124, %p125
    %p127 = scmp.ne.s32.totalorder %s116, %s119
    %p128 = scmp.eq.s32.totalorder %s17, 1
    %p129 = por %p127, %p128
    %p130 = scmp.ne.s32.totalorder %s119, %s120
    %p131 = scmp.eq.s32.totalorder %s17, 0
    %p132 = por %p130, %p131
    %p133 = scmp.ne.s32.totalorder %s119, %s120
    %p134 = scmp.eq.s32.totalorder %s18, 1
    %p135 = por %p133, %p134
    %p137 = scmp.ne.s32.totalorder %s120, %s136
    %p138 = scmp.eq.s32.totalorder %s18, 0
    %p139 = por %p137, %p138
    %s140 = ssub.s32 %s12, %s19
    %p141 = scmp.eq.s32.totalorder %s140, 0
    %s143 = sadd.s32 %s142, 1
    %s144 = scalar_select %p141, %s142, %s143
    %p147 = pneg %p141
    %p148 = scmp.eq.s32.totalorder %s12, 1
    %p149 = por %p147, %p148
    %p150 = scmp.ne.s32.totalorder %s142, %s145
    %p151 = scmp.eq.s32.totalorder %s12, 0
    %p152 = por %p150, %p151
    %p153 = scmp.ne.s32.totalorder %s142, %s145
    %p154 = scmp.eq.s32.totalorder %s17, 1
    %p155 = por %p153, %p154
    %p156 = scmp.ne.s32.totalorder %s145, %s146
    %p157 = scmp.eq.s32.totalorder %s17, 0
    %p158 = por %p156, %p157
    %p159 = scmp.ne.s32.totalorder %s145, %s146
    %p160 = scmp.eq.s32.totalorder %s18, 1
    %p161 = por %p159, %p160
    %p163 = scmp.ne.s32.totalorder %s146, %s162
    %p164 = scmp.eq.s32.totalorder %s18, 0
    %p165 = por %p163, %p164
    %p166 = scmp.le.s32.totalorder 1, %s12
    %p167 = scmp.lt.s32.totalorder %s12, 3
    %p168 = pnand %p166, %p167
    %p169 = pneg %p168
    // Predicated region
    $region9: #{basic_block_split_forward.8} parent=5 // pred_check
      _
    $region10: #{basic_block_split_forward.8} parent=5 // pred_check_branch
      %171 = sbr.rel (%p168) target = $region12
    $region11: #{basic_block_split_forward.8} parent=5 // pred_region
      %s172 = ssub.s32 %s12, 1
      // Predicated region
      $region13: #{basic_block_split_forward.8} parent=11 // pred_check
        %p173 = pneg %p59
      $region14: #{basic_block_split_forward.8} parent=11 // pred_check_branch
        %175 = sbr.rel (%p173) target = $region16
      $region15: #{basic_block_split_forward.8} parent=11 // pred_region
        _
      $region16: #{basic_block_split_forward.8} parent=11 // pred_fallthru
        _
      // Predicated region
      $region17: #{basic_block_split_forward.8} parent=11 // pred_check
        %p176 = pneg %p80
      $region18: #{basic_block_split_forward.8} parent=11 // pred_check_branch
        %178 = sbr.rel (%p176) target = $region20
      $region19: #{basic_block_split_forward.8} parent=11 // pred_region
        _
      $region20: #{basic_block_split_forward.8} parent=11 // pred_fallthru
        _
    $region12: #{basic_block_split_forward.8} parent=5 // pred_fallthru
      _
    %p179 = scmp.lt.s32.totalorder %s12, 2
    // Predicated region
    $region21: #{basic_block_split_forward.8} parent=5 // pred_check
      %p180 = pneg %p179
    $region22: #{basic_block_split_forward.8} parent=5 // pred_check_branch
      %182 = sbr.rel (%p180) target = $region24
    $region23: #{basic_block_split_forward.8} parent=5 // pred_region
      // Predicated region
      $region25: #{basic_block_split_forward.8} parent=23 // pred_check
        %p183 = pneg %p32
      $region26: #{basic_block_split_forward.8} parent=23 // pred_check_branch
        %185 = sbr.rel (%p183) target = $region28
      $region27: #{basic_block_split_forward.8} parent=23 // pred_region
        %p186 = scmp.lt.s32.totalorder %s12, 1
        %s187 = scalar_select %p186, %s12, 1
        %s188 = smul.addr %s187, 43
        %s189 = smul.addr %s188, 4
        %s190 = scalar_lea.vmem %s0, %s189
      $region28: #{basic_block_split_forward.8} parent=23 // pred_fallthru
        _
    $region24: #{basic_block_split_forward.8} parent=5 // pred_fallthru
      _
    %p191 = scmp.le.s32.totalorder 1, %s12
    %p192 = scmp.lt.s32.totalorder %s12, 3
    %p193 = pnand %p191, %p192
    %p194 = pneg %p193
    // Predicated region
    $region29: #{basic_block_split_forward.8} parent=5 // pred_check
      _
    $region30: #{basic_block_split_forward.8} parent=5 // pred_check_branch
      %196 = sbr.rel (%p193) target = $region32
    $region31: #{basic_block_split_forward.8} parent=5 // pred_region
      %s197 = ssub.s32 %s12, 1
      %p198 = scmp.lt.s32.totalorder %s17, 1
      %s199 = scalar_select %p198, %s17, 1
      %s200 = smul.addr %s199, 43
      %s201 = smul.addr %s200, 4
      %s202 = scalar_lea.vmem %s0, %s201
      %p203 = pneg %p38
      %p204 = pneg %p35
      %p205 = pneg %p59
      %p206 = pneg %p56
      %p207 = pneg %p80
      %p208 = pneg %p77
      %p209 = pneg %p106
      %p210 = pneg %p103
      %p211 = scmp.lt.s32.totalorder %s17, 1
      %s212 = scalar_select %p211, %s17, 1
      %s213 = smul.addr %s212, 36
      %s214 = smul.addr %s213, 8
      %s215 = scalar_lea.vmem %s3, %s214
      %p216 = pneg %p132
      %p217 = pneg %p129
      %p218 = scmp.lt.s32.totalorder %s17, 1
      %s219 = scalar_select %p218, %s17, 1
      %s220 = scalar_lea.vmem %s4, %s219
      %p221 = pneg %p158
      %p222 = pneg %p155
      %p223 = scmp.lt.s32.totalorder %s17, 1
      %s224 = scalar_select %p223, %s17, 1
      %s225 = scalar_lea.vmem %s5, %s224
      %p226 = scmp.lt.s32.totalorder %s17, 1
      %s227 = scalar_select %p226, %s17, 1
      %s228 = smul.addr %s227, 43
      %s229 = smul.addr %s228, 4
      %s230 = scalar_lea.vmem %s0, %s229
      %p231 = scmp.lt.s32.totalorder %s17, 1
      %s232 = scalar_select %p231, %s17, 1
      %s233 = smul.addr %s232, 36
      %s234 = smul.addr %s233, 8
      %s235 = scalar_lea.vmem %s3, %s234
      %p236 = scmp.lt.s32.totalorder %s17, 1
      %s237 = scalar_select %p236, %s17, 1
      %s238 = scalar_lea.vmem %s4, %s237
      %p239 = scmp.lt.s32.totalorder %s17, 1
      %s240 = scalar_select %p239, %s17, 1
      %s241 = scalar_lea.vmem %s5, %s240
      %v243 = vld [vmem:[%s230 + $0x8] sm:$0xf]
      %v244 = vld [vmem:[%s230 + $0xc] sm:$0xf]
      %v245 = vld [vmem:[%s230 + $0x10] sm:$0xf]
      %v246 = vld [vmem:[%s230 + $0x14] sm:$0xf]
      %v247 = vld [vmem:[%s230 + $0x18] sm:$0xf]
      %v248 = vld [vmem:[%s230 + $0x1c] sm:$0xf]
      %v249 = vld [vmem:[%s230 + $0x20] sm:$0xf]
      %v250 = vld [vmem:[%s230 + $0x24] sm:$0xf]
      %v251 = vld [vmem:[%s230 + $0x28] sm:$0xf]
      %v252 = vld [vmem:[%s230 + $0x2c] sm:$0xf]
      %v253 = vld [vmem:[%s230 + $0x30] sm:$0xf]
      %v254 = vld [vmem:[%s230 + $0x34] sm:$0xf]
      %v255 = vld [vmem:[%s230 + $0x38] sm:$0xf]
      %v256 = vld [vmem:[%s230 + $0x3c] sm:$0xf]
      %v257 = vld [vmem:[%s230 + $0x40] sm:$0xf]
      %v258 = vld [vmem:[%s230 + $0x44] sm:$0xf]
      %v259 = vld [vmem:[%s230 + $0x48] sm:$0xf]
      %v260 = vld [vmem:[%s230 + $0x4c] sm:$0xf]
      %v261 = vld [vmem:[%s230 + $0x50] sm:$0xf]
      %v262 = vld [vmem:[%s230 + $0x54] sm:$0xf]
      %v263 = vld [vmem:[%s230 + $0x58] sm:$0xf]
      %v264 = vld [vmem:[%s230 + $0x5c] sm:$0xf]
      %v265 = vld [vmem:[%s230 + $0x60] sm:$0xf]
      %v266 = vld [vmem:[%s230 + $0x64] sm:$0xf]
      %v267 = vld [vmem:[%s230 + $0x68] sm:$0xf]
      %v268 = vld [vmem:[%s230 + $0x6c] sm:$0xf]
      %v269 = vld [vmem:[%s230 + $0x70] sm:$0xf]
      %v270 = vld [vmem:[%s230 + $0x74] sm:$0xf]
      %v271 = vld [vmem:[%s230 + $0x78] sm:$0xf]
      %v272 = vld [vmem:[%s230 + $0x7c] sm:$0xf]
      %v273 = vld [vmem:[%s230 + $0x80] sm:$0xf]
      %v274 = vld [vmem:[%s230 + $0x84] sm:$0xf]
      %v275 = vld [vmem:[%s230 + $0x88] sm:$0xf]
      %v276 = vld [vmem:[%s230 + $0x8c] sm:$0xf]
      %v277 = vld [vmem:[%s230 + $0x90] sm:$0xf]
      %v278 = vld [vmem:[%s230 + $0x94] sm:$0xf]
      %v279 = vld [vmem:[%s230 + $0x98] sm:$0xf]
      %v280 = vunpack.c.l.bf16 %v243
      %v281 = vunpack.c.l.bf16 %v244
      %v282 = vunpack.c.l.bf16 %v245
      %v283 = vunpack.c.l.bf16 %v246
      %v284 = vunpack.c.l.bf16 %v247
      %v285 = vunpack.c.l.bf16 %v248
      %v286 = vunpack.c.l.bf16 %v249
      %v287 = vunpack.c.l.bf16 %v250
      %v288 = vunpack.c.l.bf16 %v251
      %v289 = vunpack.c.l.bf16 %v252
      %v290 = vunpack.c.l.bf16 %v253
      %v291 = vunpack.c.l.bf16 %v254
      %v292 = vunpack.c.l.bf16 %v255
      %v293 = vunpack.c.l.bf16 %v256
      %v294 = vunpack.c.l.bf16 %v257
      %v295 = vunpack.c.l.bf16 %v258
      %v296 = vunpack.c.l.bf16 %v259
      %v297 = vunpack.c.l.bf16 %v260
      %v298 = vunpack.c.l.bf16 %v261
      %v299 = vunpack.c.l.bf16 %v262
      %v300 = vunpack.c.l.bf16 %v263
      %v301 = vunpack.c.l.bf16 %v264
      %v302 = vunpack.c.l.bf16 %v265
      %v303 = vunpack.c.l.bf16 %v266
      %v304 = vunpack.c.l.bf16 %v267
      %v305 = vunpack.c.l.bf16 %v268
      %v306 = vunpack.c.l.bf16 %v269
      %v307 = vunpack.c.l.bf16 %v270
      %v308 = vunpack.c.l.bf16 %v271
      %v309 = vunpack.c.l.bf16 %v272
      %v310 = vunpack.c.l.bf16 %v273
      %v311 = vunpack.c.l.bf16 %v274
      %v312 = vunpack.c.l.bf16 %v275
      %v313 = vunpack.c.l.bf16 %v276
      %v314 = vunpack.c.l.bf16 %v277
      %v315 = vunpack.c.l.bf16 %v278
      %v316 = vunpack.c.l.bf16 %v279
      %v317 = vpack.c.bf16 %v281, %v280
      %v318 = vpack.c.bf16 %v283, %v282
      %v319 = vpack.c.bf16 %v285, %v284
      %v320 = vpack.c.bf16 %v287, %v286
      %v321 = vpack.c.bf16 %v289, %v288
      %v322 = vpack.c.bf16 %v291, %v290
      %v323 = vpack.c.bf16 %v293, %v292
      %v324 = vpack.c.bf16 %v295, %v294
      %v325 = vpack.c.bf16 %v297, %v296
      %v326 = vpack.c.bf16 %v299, %v298
      %v327 = vpack.c.bf16 %v301, %v300
      %v328 = vpack.c.bf16 %v303, %v302
      %v329 = vpack.c.bf16 %v305, %v304
      %v330 = vpack.c.bf16 %v307, %v306
      %v331 = vpack.c.bf16 %v309, %v308
      %v332 = vpack.c.bf16 %v311, %v310
      %v333 = vpack.c.bf16 %v313, %v312
      %v334 = vpack.c.bf16 %v315, %v314
      %v335 = vpack.c.bf16 %v316, %v316
      %v336 = vld [vmem:[%s1] sm:$0x3]
      %vm337 = vsmask.f32 6400
      %v339 = vshrl.u32 %v317, 16
      %v341 = vrot.slane %v339, 1
      %v342 = vshll.u32 %v317, 16
      %v344 = vrot.slane %v342, 2
      %v345 = vor.u32 %v341, %v344
      %v347 = vshrl.u32 %v318, 16
      %v349 = vrot.slane %v347, 1
      %v350 = vshll.u32 %v318, 16
      %v352 = vrot.slane %v350, 2
      %v353 = vor.u32 %v349, %v352
      %v354 = vsel %vm337, %v345, %v353
      %v356 = vshrl.u32 %v319, 16
      %v358 = vrot.slane %v356, 1
      %v359 = vshll.u32 %v319, 16
      %v361 = vrot.slane %v359, 2
      %v362 = vor.u32 %v358, %v361
      %v363 = vsel %vm337, %v353, %v362
      %v365 = vshrl.u32 %v320, 16
      %v367 = vrot.slane %v365, 1
      %v368 = vshll.u32 %v320, 16
      %v370 = vrot.slane %v368, 2
      %v371 = vor.u32 %v367, %v370
      %v372 = vsel %vm337, %v362, %v371
      %v374 = vshrl.u32 %v321, 16
      %v376 = vrot.slane %v374, 1
      %v377 = vshll.u32 %v321, 16
      %v379 = vrot.slane %v377, 2
      %v380 = vor.u32 %v376, %v379
      %v381 = vsel %vm337, %v371, %v380
      %v383 = vshrl.u32 %v322, 16
      %v385 = vrot.slane %v383, 1
      %v386 = vshll.u32 %v322, 16
      %v388 = vrot.slane %v386, 2
      %v389 = vor.u32 %v385, %v388
      %v390 = vsel %vm337, %v380, %v389
      %v392 = vshrl.u32 %v323, 16
      %v394 = vrot.slane %v392, 1
      %v395 = vshll.u32 %v323, 16
      %v397 = vrot.slane %v395, 2
      %v398 = vor.u32 %v394, %v397
      %v399 = vsel %vm337, %v389, %v398
      %v401 = vshrl.u32 %v324, 16
      %v403 = vrot.slane %v401, 1
      %v404 = vshll.u32 %v324, 16
      %v406 = vrot.slane %v404, 2
      %v407 = vor.u32 %v403, %v406
      %v408 = vsel %vm337, %v398, %v407
      %v410 = vshrl.u32 %v325, 16
      %v412 = vrot.slane %v410, 1
      %v413 = vshll.u32 %v325, 16
      %v415 = vrot.slane %v413, 2
      %v416 = vor.u32 %v412, %v415
      %v417 = vsel %vm337, %v407, %v416
      %v419 = vshrl.u32 %v326, 16
      %v421 = vrot.slane %v419, 1
      %v422 = vshll.u32 %v326, 16
      %v424 = vrot.slane %v422, 2
      %v425 = vor.u32 %v421, %v424
      %v426 = vsel %vm337, %v416, %v425
      %v428 = vshrl.u32 %v327, 16
      %v430 = vrot.slane %v428, 1
      %v431 = vshll.u32 %v327, 16
      %v433 = vrot.slane %v431, 2
      %v434 = vor.u32 %v430, %v433
      %v435 = vsel %vm337, %v425, %v434
      %v437 = vshrl.u32 %v328, 16
      %v439 = vrot.slane %v437, 1
      %v440 = vshll.u32 %v328, 16
      %v442 = vrot.slane %v440, 2
      %v443 = vor.u32 %v439, %v442
      %v444 = vsel %vm337, %v434, %v443
      %v446 = vshrl.u32 %v329, 16
      %v448 = vrot.slane %v446, 1
      %v449 = vshll.u32 %v329, 16
      %v451 = vrot.slane %v449, 2
      %v452 = vor.u32 %v448, %v451
      %v453 = vsel %vm337, %v443, %v452
      %v455 = vshrl.u32 %v330, 16
      %v457 = vrot.slane %v455, 1
      %v458 = vshll.u32 %v330, 16
      %v460 = vrot.slane %v458, 2
      %v461 = vor.u32 %v457, %v460
      %v462 = vsel %vm337, %v452, %v461
      %v464 = vshrl.u32 %v331, 16
      %v466 = vrot.slane %v464, 1
      %v467 = vshll.u32 %v331, 16
      %v469 = vrot.slane %v467, 2
      %v470 = vor.u32 %v466, %v469
      %v471 = vsel %vm337, %v461, %v470
      %v473 = vshrl.u32 %v332, 16
      %v475 = vrot.slane %v473, 1
      %v476 = vshll.u32 %v332, 16
      %v478 = vrot.slane %v476, 2
      %v479 = vor.u32 %v475, %v478
      %v480 = vsel %vm337, %v470, %v479
      %v482 = vshrl.u32 %v333, 16
      %v484 = vrot.slane %v482, 1
      %v485 = vshll.u32 %v333, 16
      %v487 = vrot.slane %v485, 2
      %v488 = vor.u32 %v484, %v487
      %v489 = vsel %vm337, %v479, %v488
      %v491 = vshrl.u32 %v334, 16
      %v493 = vrot.slane %v491, 1
      %v494 = vshll.u32 %v334, 16
      %v496 = vrot.slane %v494, 2
      %v497 = vor.u32 %v493, %v496
      %v498 = vsel %vm337, %v488, %v497
      %v500 = vshrl.u32 %v335, 16
      %v502 = vrot.slane %v500, 1
      %v503 = vshll.u32 %v335, 16
      %v505 = vrot.slane %v503, 2
      %v506 = vor.u32 %v502, %v505
      %v507 = vsel %vm337, %v497, %v506
      %vm508 = vcmask 31744
      %v510 = vsel %vm508, %v354, 0
      %v513 = vsel %vm508, %v363, 0
      %v516 = vsel %vm508, %v372, 0
      %v519 = vsel %vm508, %v381, 0
      %v522 = vsel %vm508, %v390, 0
      %v525 = vsel %vm508, %v399, 0
      %v528 = vsel %vm508, %v408, 0
      %v531 = vsel %vm508, %v417, 0
      %v534 = vsel %vm508, %v426, 0
      %v537 = vsel %vm508, %v435, 0
      %v540 = vsel %vm508, %v444, 0
      %v543 = vsel %vm508, %v453, 0
      %v546 = vsel %vm508, %v462, 0
      %v549 = vsel %vm508, %v471, 0
      %v552 = vsel %vm508, %v480, 0
      %v555 = vsel %vm508, %v489, 0
      %v558 = vsel %vm508, %v498, 0
      %v561 = vsel %vm508, %v507, 0
      %vm563 = vcmask 1041408
      %v565 = vsel %vm563, %v336, 0
      %567 = vmatprep.subr.bf16.mxu0 0
      %568 = vmatpush1.bf16.msra.mxu0 %v565
      %569 = vmatprep.subr.bf16.mxu0 0
      %570 = vmatpush1.bf16.msra.mxu0 0
      %571 = vmatprep.subr.bf16.mxu0 0
      %572 = vmatpush1.bf16.msra.mxu0 0
      %573 = vmatprep.subr.bf16.mxu0 0
      %574 = vmatpush1.bf16.msra.mxu0 0
      %575 = vmatprep.subr.bf16.mxu0 0
      %576 = vmatpush1.bf16.msra.mxu0 0
      %577 = vmatprep.subr.bf16.mxu0 0
      %578 = vmatpush1.bf16.msra.mxu0 0
      %579 = vmatprep.subr.bf16.mxu0 0
      %580 = vmatpush1.bf16.msra.mxu0 0
      %581 = vmatprep.subr.bf16.mxu0 0
      %582 = vmatpush1.bf16.msra.mxu0 0
      %583 = vmatprep.subr.bf16.mxu0 0
      %584 = vmatpush1.bf16.msra.mxu0 0
      %585 = vmatprep.subr.bf16.mxu0 0
      %586 = vmatpush1.bf16.msra.mxu0 0
      %587 = vmatprep.subr.bf16.mxu0 0
      %588 = vmatpush1.bf16.msra.mxu0 0
      %589 = vmatprep.subr.bf16.mxu0 0
      %590 = vmatpush1.bf16.msra.mxu0 0
      %591 = vmatprep.subr.bf16.mxu0 0
      %592 = vmatpush1.bf16.msra.mxu0 0
      %593 = vmatprep.subr.bf16.mxu0 0
      %594 = vmatpush1.bf16.msra.mxu0 0
      %595 = vmatprep.subr.bf16.mxu0 0
      %596 = vmatpush1.bf16.msra.mxu0 0
      %597 = vmatprep.subr.bf16.mxu0 0
      %598 = vmatpush1.bf16.msra.mxu0 0
      %599 = vmatprep.mubr.bf16.mxu0 0
      %600 = vmatmul.mubr.bf16.gmra.mrb[0].mxu0 %v510
      %v601 = vpop.f32.mrb[0].mxu0
      %v602 = vadd.f32 0.0, %v601
      %v603 = vpop.f32.mrb[0].mxu0
      %v604 = vpop.f32.mrb[0].mxu0
      %v605 = vadd.f32 0.0, %v604
      %v606 = vpop.f32.mrb[0].mxu0
      %607 = vmatprep.mubr.bf16.mxu0 0
      %608 = vmatmul.mubr.bf16.gmra.mrb[0].mxu0 %v513
      %v609 = vpop.f32.mrb[0].mxu0
      %v610 = vadd.f32 0.0, %v609
      %v611 = vpop.f32.mrb[0].mxu0
      %v612 = vpop.f32.mrb[0].mxu0
      %v613 = vadd.f32 0.0, %v612
      %v614 = vpop.f32.mrb[0].mxu0
      %615 = vmatprep.mubr.bf16.mxu0 0
      %616 = vmatmul.mubr.bf16.gmra.mrb[0].mxu0 %v516
      %v617 = vpop.f32.mrb[0].mxu0
      %v618 = vadd.f32 0.0, %v617
      %v619 = vpop.f32.mrb[0].mxu0
      %v620 = vpop.f32.mrb[0].mxu0
      %v621 = vadd.f32 0.0, %v620
      %v622 = vpop.f32.mrb[0].mxu0
      %623 = vmatprep.mubr.bf16.mxu0 0
      %624 = vmatmul.mubr.bf16.gmra.mrb[0].mxu0 %v519
      %v625 = vpop.f32.mrb[0].mxu0
      %v626 = vadd.f32 0.0, %v625
      %v627 = vpop.f32.mrb[0].mxu0
      %v628 = vpop.f32.mrb[0].mxu0
      %v629 = vadd.f32 0.0, %v628
      %v630 = vpop.f32.mrb[0].mxu0
      %631 = vmatprep.mubr.bf16.mxu0 0
      %632 = vmatmul.mubr.bf16.gmra.mrb[0].mxu0 %v522
      %v633 = vpop.f32.mrb[0].mxu0
      %v634 = vadd.f32 0.0, %v633
      %v635 = vpop.f32.mrb[0].mxu0
      %v636 = vpop.f32.mrb[0].mxu0
      %v637 = vadd.f32 0.0, %v636
      %v638 = vpop.f32.mrb[0].mxu0
      %639 = vmatprep.mubr.bf16.mxu0 0
      %640 = vmatmul.mubr.bf16.gmra.mrb[0].mxu0 %v525
      %v641 = vpop.f32.mrb[0].mxu0
      %v642 = vadd.f32 0.0, %v641
      %v643 = vpop.f32.mrb[0].mxu0
      %v644 = vpop.f32.mrb[0].mxu0
      %v645 = vadd.f32 0.0, %v644
      %v646 = vpop.f32.mrb[0].mxu0
      %647 = vmatprep.mubr.bf16.mxu0 0
      %648 = vmatmul.mubr.bf16.gmra.mrb[0].mxu0 %v528
      %v649 = vpop.f32.mrb[0].mxu0
      %v650 = vadd.f32 0.0, %v649
      %v651 = vpop.f32.mrb[0].mxu0
      %v652 = vpop.f32.mrb[0].mxu0
      %v653 = vadd.f32 0.0, %v652
      %v654 = vpop.f32.mrb[0].mxu0
      %655 = vmatprep.mubr.bf16.mxu0 0
      %656 = vmatmul.mubr.bf16.gmra.mrb[0].mxu0 %v531
      %v657 = vpop.f32.mrb[0].mxu0
      %v658 = vadd.f32 0.0, %v657
      %v659 = vpop.f32.mrb[0].mxu0
      %v660 = vpop.f32.mrb[0].mxu0
      %v661 = vadd.f32 0.0, %v660
      %v662 = vpop.f32.mrb[0].mxu0
      %663 = vmatprep.mubr.bf16.mxu0 0
      %664 = vmatmul.mubr.bf16.gmra.mrb[0].mxu0 %v534
      %v665 = vpop.f32.mrb[0].mxu0
      %v666 = vadd.f32 0.0, %v665
      %v667 = vpop.f32.mrb[0].mxu0
      %v668 = vpop.f32.mrb[0].mxu0
      %v669 = vadd.f32 0.0, %v668
      %v670 = vpop.f32.mrb[0].mxu0
      %671 = vmatprep.mubr.bf16.mxu0 0
      %672 = vmatmul.mubr.bf16.gmra.mrb[0].mxu0 %v537
      %v673 = vpop.f32.mrb[0].mxu0
      %v674 = vadd.f32 0.0, %v673
      %v675 = vpop.f32.mrb[0].mxu0
      %v676 = vpop.f32.mrb[0].mxu0
      %v677 = vadd.f32 0.0, %v676
      %v678 = vpop.f32.mrb[0].mxu0
      %679 = vmatprep.mubr.bf16.mxu0 0
      %680 = vmatmul.mubr.bf16.gmra.mrb[0].mxu0 %v540
      %v681 = vpop.f32.mrb[0].mxu0
      %v682 = vadd.f32 0.0, %v681
      %v683 = vpop.f32.mrb[0].mxu0
      %v684 = vpop.f32.mrb[0].mxu0
      %v685 = vadd.f32 0.0, %v684
      %v686 = vpop.f32.mrb[0].mxu0
      %687 = vmatprep.mubr.bf16.mxu0 0
      %688 = vmatmul.mubr.bf16.gmra.mrb[0].mxu0 %v543
      %v689 = vpop.f32.mrb[0].mxu0
      %v690 = vadd.f32 0.0, %v689
      %v691 = vpop.f32.mrb[0].mxu0
      %v692 = vpop.f32.mrb[0].mxu0
      %v693 = vadd.f32 0.0, %v692
      %v694 = vpop.f32.mrb[0].mxu0
      %695 = vmatprep.mubr.bf16.mxu0 0
      %696 = vmatmul.mubr.bf16.gmra.mrb[0].mxu0 %v546
      %v697 = vpop.f32.mrb[0].mxu0
      %v698 = vadd.f32 0.0, %v697
      %v699 = vpop.f32.mrb[0].mxu0
      %v700 = vpop.f32.mrb[0].mxu0
      %v701 = vadd.f32 0.0, %v700
      %v702 = vpop.f32.mrb[0].mxu0
      %703 = vmatprep.mubr.bf16.mxu0 0
      %704 = vmatmul.mubr.bf16.gmra.mrb[0].mxu0 %v549
      %v705 = vpop.f32.mrb[0].mxu0
      %v706 = vadd.f32 0.0, %v705
      %v707 = vpop.f32.mrb[0].mxu0
      %v708 = vpop.f32.mrb[0].mxu0
      %v709 = vadd.f32 0.0, %v708
      %v710 = vpop.f32.mrb[0].mxu0
      %711 = vmatprep.mubr.bf16.mxu0 0
      %712 = vmatmul.mubr.bf16.gmra.mrb[0].mxu0 %v552
      %v713 = vpop.f32.mrb[0].mxu0
      %v714 = vadd.f32 0.0, %v713
      %v715 = vpop.f32.mrb[0].mxu0
      %v716 = vpop.f32.mrb[0].mxu0
      %v717 = vadd.f32 0.0, %v716
      %v718 = vpop.f32.mrb[0].mxu0
      %719 = vmatprep.mubr.bf16.mxu0 0
      %720 = vmatmul.mubr.bf16.gmra.mrb[0].mxu0 %v555
      %v721 = vpop.f32.mrb[0].mxu0
      %v722 = vadd.f32 0.0, %v721
      %v723 = vpop.f32.mrb[0].mxu0
      %v724 = vpop.f32.mrb[0].mxu0
      %v725 = vadd.f32 0.0, %v724
      %v726 = vpop.f32.mrb[0].mxu0
      %727 = vmatprep.mubr.bf16.mxu0 0
      %728 = vmatmul.mubr.bf16.gmra.mrb[0].mxu0 %v558
      %v729 = vpop.f32.mrb[0].mxu0
      %v730 = vadd.f32 0.0, %v729
      %v731 = vpop.f32.mrb[0].mxu0
      %v732 = vpop.f32.mrb[0].mxu0
      %v733 = vadd.f32 0.0, %v732
      %v734 = vpop.f32.mrb[0].mxu0
      %735 = vmatprep.mubr.bf16.mxu0 0
      %736 = vmatmul.mubr.bf16.gmra.mrb[0].mxu0 %v561
      %v737 = vpop.f32.mrb[0].mxu0
      %v738 = vadd.f32 0.0, %v737
      %v739 = vpop.f32.mrb[0].mxu0
      %v740 = vpop.f32.mrb[0].mxu0
      %v741 = vadd.f32 0.0, %v740
      %v742 = vpop.f32.mrb[0].mxu0
      %743 = vdwg.mxu0
      %vm744 = vcmask 64512
      %745 = vst.msk [vmem:[%s235] sm:$0xff] %vm744, %v602
      %746 = vst.msk [vmem:[%s235 + $0x8] sm:$0xff] %vm744, %v605
      %747 = vst.msk [vmem:[%s235 + $0x10] sm:$0xff] %vm744, %v610
      %748 = vst.msk [vmem:[%s235 + $0x18] sm:$0xff] %vm744, %v613
      %749 = vst.msk [vmem:[%s235 + $0x20] sm:$0xff] %vm744, %v618
      %750 = vst.msk [vmem:[%s235 + $0x28] sm:$0xff] %vm744, %v621
      %751 = vst.msk [vmem:[%s235 + $0x30] sm:$0xff] %vm744, %v626
      %752 = vst.msk [vmem:[%s235 + $0x38] sm:$0xff] %vm744, %v629
      %753 = vst.msk [vmem:[%s235 + $0x40] sm:$0xff] %vm744, %v634
      %754 = vst.msk [vmem:[%s235 + $0x48] sm:$0xff] %vm744, %v637
      %755 = vst.msk [vmem:[%s235 + $0x50] sm:$0xff] %vm744, %v642
      %756 = vst.msk [vmem:[%s235 + $0x58] sm:$0xff] %vm744, %v645
      %757 = vst.msk [vmem:[%s235 + $0x60] sm:$0xff] %vm744, %v650
      %758 = vst.msk [vmem:[%s235 + $0x68] sm:$0xff] %vm744, %v653
      %759 = vst.msk [vmem:[%s235 + $0x70] sm:$0xff] %vm744, %v658
      %760 = vst.msk [vmem:[%s235 + $0x78] sm:$0xff] %vm744, %v661
      %761 = vst.msk [vmem:[%s235 + $0x80] sm:$0xff] %vm744, %v666
      %762 = vst.msk [vmem:[%s235 + $0x88] sm:$0xff] %vm744, %v669
      %763 = vst.msk [vmem:[%s235 + $0x90] sm:$0xff] %vm744, %v674
      %764 = vst.msk [vmem:[%s235 + $0x98] sm:$0xff] %vm744, %v677
      %765 = vst.msk [vmem:[%s235 + $0xa0] sm:$0xff] %vm744, %v682
      %766 = vst.msk [vmem:[%s235 + $0xa8] sm:$0xff] %vm744, %v685
      %767 = vst.msk [vmem:[%s235 + $0xb0] sm:$0xff] %vm744, %v690
      %768 = vst.msk [vmem:[%s235 + $0xb8] sm:$0xff] %vm744, %v693
      %769 = vst.msk [vmem:[%s235 + $0xc0] sm:$0xff] %vm744, %v698
      %770 = vst.msk [vmem:[%s235 + $0xc8] sm:$0xff] %vm744, %v701
      %771 = vst.msk [vmem:[%s235 + $0xd0] sm:$0xff] %vm744, %v706
      %772 = vst.msk [vmem:[%s235 + $0xd8] sm:$0xff] %vm744, %v709
      %773 = vst.msk [vmem:[%s235 + $0xe0] sm:$0xff] %vm744, %v714
      %774 = vst.msk [vmem:[%s235 + $0xe8] sm:$0xff] %vm744, %v717
      %775 = vst.msk [vmem:[%s235 + $0xf0] sm:$0xff] %vm744, %v722
      %776 = vst.msk [vmem:[%s235 + $0xf8] sm:$0xff] %vm744, %v725
      %777 = vst.msk [vmem:[%s235 + $0x100] sm:$0xff] %vm744, %v730
      %778 = vst.msk [vmem:[%s235 + $0x108] sm:$0xff] %vm744, %v733
      %779 = vst.msk [vmem:[%s235 + $0x110] sm:$0xff] %vm744, %v738
      %780 = vst.msk [vmem:[%s235 + $0x118] sm:$0xff] %vm744, %v741
      %v781 = vld [vmem:[%s2] sm:$0xff]
      %v782 = vld [vmem:[%s2 + $0x8] sm:$0xff]
      %v783 = vld [vmem:[%s2 + $0x10] sm:$0xff]
      %v784 = vld [vmem:[%s2 + $0x18] sm:$0xff]
      %v785 = vld [vmem:[%s2 + $0x20] sm:$0xff]
      %v786 = vld [vmem:[%s2 + $0x28] sm:$0xff]
      %v787 = vld [vmem:[%s2 + $0x30] sm:$0xff]
      %v788 = vld [vmem:[%s2 + $0x38] sm:$0xff]
      %v789 = vld [vmem:[%s2 + $0x40] sm:$0xff]
      %v790 = vld [vmem:[%s2 + $0x48] sm:$0xff]
      %v791 = vld [vmem:[%s2 + $0x50] sm:$0xff]
      %v792 = vld [vmem:[%s2 + $0x58] sm:$0xff]
      %v793 = vld [vmem:[%s2 + $0x60] sm:$0xff]
      %v794 = vld [vmem:[%s2 + $0x68] sm:$0xff]
      %v795 = vld [vmem:[%s2 + $0x70] sm:$0xff]
      %v796 = vld [vmem:[%s2 + $0x78] sm:$0xff]
      %v797 = vld [vmem:[%s2 + $0x80] sm:$0xff]
      %v798 = vld [vmem:[%s2 + $0x88] sm:$0xff]
      %v799 = vld [vmem:[%s2 + $0x90] sm:$0xff]
      %v800 = vld [vmem:[%s2 + $0x98] sm:$0xff]
      %v801 = vld [vmem:[%s2 + $0xa0] sm:$0xff]
      %v802 = vld [vmem:[%s2 + $0xa8] sm:$0xff]
      %v803 = vld [vmem:[%s2 + $0xb0] sm:$0xff]
      %v804 = vld [vmem:[%s2 + $0xb8] sm:$0xff]
      %v805 = vld [vmem:[%s2 + $0xc0] sm:$0xff]
      %v806 = vld [vmem:[%s2 + $0xc8] sm:$0xff]
      %v807 = vld [vmem:[%s2 + $0xd0] sm:$0xff]
      %v808 = vld [vmem:[%s2 + $0xd8] sm:$0xff]
      %v809 = vld [vmem:[%s2 + $0xe0] sm:$0xff]
      %v810 = vld [vmem:[%s2 + $0xe8] sm:$0xff]
      %v811 = vld [vmem:[%s2 + $0xf0] sm:$0xff]
      %v812 = vld [vmem:[%s2 + $0xf8] sm:$0xff]
      %v813 = vld [vmem:[%s2 + $0x100] sm:$0xff]
      %v814 = vld [vmem:[%s2 + $0x108] sm:$0xff]
      %v815 = vld [vmem:[%s2 + $0x110] sm:$0xff]
      %v816 = vld [vmem:[%s2 + $0x118] sm:$0xff]
      %818 = vset.pattern.permute.xlu0 0
      %819 = vperm.xlu0 %818, %v781
      %v820 = vpop.permute.xlu0 %819
      %823 = vset.pattern.permute.xlu0 0
      %824 = vperm.xlu0 %823, %v782
      %v825 = vpop.permute.xlu0 %824
      %828 = vset.pattern.permute.xlu0 0
      %829 = vperm.xlu0 %828, %v783
      %v830 = vpop.permute.xlu0 %829
      %833 = vset.pattern.permute.xlu0 0
      %834 = vperm.xlu0 %833, %v784
      %v835 = vpop.permute.xlu0 %834
      %838 = vset.pattern.permute.xlu0 0
      %839 = vperm.xlu0 %838, %v785
      %v840 = vpop.permute.xlu0 %839
      %843 = vset.pattern.permute.xlu0 0
      %844 = vperm.xlu0 %843, %v786
      %v845 = vpop.permute.xlu0 %844
      %848 = vset.pattern.permute.xlu0 0
      %849 = vperm.xlu0 %848, %v787
      %v850 = vpop.permute.xlu0 %849
      %853 = vset.pattern.permute.xlu0 0
      %854 = vperm.xlu0 %853, %v788
      %v855 = vpop.permute.xlu0 %854
      %858 = vset.pattern.permute.xlu0 0
      %859 = vperm.xlu0 %858, %v789
      %v860 = vpop.permute.xlu0 %859
      %863 = vset.pattern.permute.xlu0 0
      %864 = vperm.xlu0 %863, %v790
      %v865 = vpop.permute.xlu0 %864
      %868 = vset.pattern.permute.xlu0 0
      %869 = vperm.xlu0 %868, %v791
      %v870 = vpop.permute.xlu0 %869
      %873 = vset.pattern.permute.xlu0 0
      %874 = vperm.xlu0 %873, %v792
      %v875 = vpop.permute.xlu0 %874
      %878 = vset.pattern.permute.xlu0 0
      %879 = vperm.xlu0 %878, %v793
      %v880 = vpop.permute.xlu0 %879
      %883 = vset.pattern.permute.xlu0 0
      %884 = vperm.xlu0 %883, %v794
      %v885 = vpop.permute.xlu0 %884
      %888 = vset.pattern.permute.xlu0 0
      %889 = vperm.xlu0 %888, %v795
      %v890 = vpop.permute.xlu0 %889
      %893 = vset.pattern.permute.xlu0 0
      %894 = vperm.xlu0 %893, %v796
      %v895 = vpop.permute.xlu0 %894
      %898 = vset.pattern.permute.xlu0 0
      %899 = vperm.xlu0 %898, %v797
      %v900 = vpop.permute.xlu0 %899
      %903 = vset.pattern.permute.xlu0 0
      %904 = vperm.xlu0 %903, %v798
      %v905 = vpop.permute.xlu0 %904
      %908 = vset.pattern.permute.xlu0 0
      %909 = vperm.xlu0 %908, %v799
      %v910 = vpop.permute.xlu0 %909
      %913 = vset.pattern.permute.xlu0 0
      %914 = vperm.xlu0 %913, %v800
      %v915 = vpop.permute.xlu0 %914
      %918 = vset.pattern.permute.xlu0 0
      %919 = vperm.xlu0 %918, %v801
      %v920 = vpop.permute.xlu0 %919
      %923 = vset.pattern.permute.xlu0 0
      %924 = vperm.xlu0 %923, %v802
      %v925 = vpop.permute.xlu0 %924
      %928 = vset.pattern.permute.xlu0 0
      %929 = vperm.xlu0 %928, %v803
      %v930 = vpop.permute.xlu0 %929
      %933 = vset.pattern.permute.xlu0 0
      %934 = vperm.xlu0 %933, %v804
      %v935 = vpop.permute.xlu0 %934
      %938 = vset.pattern.permute.xlu0 0
      %939 = vperm.xlu0 %938, %v805
      %v940 = vpop.permute.xlu0 %939
      %943 = vset.pattern.permute.xlu0 0
      %944 = vperm.xlu0 %943, %v806
      %v945 = vpop.permute.xlu0 %944
      %948 = vset.pattern.permute.xlu0 0
      %949 = vperm.xlu0 %948, %v807
      %v950 = vpop.permute.xlu0 %949
      %953 = vset.pattern.permute.xlu0 0
      %954 = vperm.xlu0 %953, %v808
      %v955 = vpop.permute.xlu0 %954
      %958 = vset.pattern.permute.xlu0 0
      %959 = vperm.xlu0 %958, %v809
      %v960 = vpop.permute.xlu0 %959
      %963 = vset.pattern.permute.xlu0 0
      %964 = vperm.xlu0 %963, %v810
      %v965 = vpop.permute.xlu0 %964
      %968 = vset.pattern.permute.xlu0 0
      %969 = vperm.xlu0 %968, %v811
      %v970 = vpop.permute.xlu0 %969
      %973 = vset.pattern.permute.xlu0 0
      %974 = vperm.xlu0 %973, %v812
      %v975 = vpop.permute.xlu0 %974
      %978 = vset.pattern.permute.xlu0 0
      %979 = vperm.xlu0 %978, %v813
      %v980 = vpop.permute.xlu0 %979
      %983 = vset.pattern.permute.xlu0 0
      %984 = vperm.xlu0 %983, %v814
      %v985 = vpop.permute.xlu0 %984
      %988 = vset.pattern.permute.xlu0 0
      %989 = vperm.xlu0 %988, %v815
      %v990 = vpop.permute.xlu0 %989
      %993 = vset.pattern.permute.xlu0 0
      %994 = vperm.xlu0 %993, %v816
      %v995 = vpop.permute.xlu0 %994
      %v997 = vmul.f32 %v602, %v820
      %v998 = vmul.f32 %v605, %v825
      %v999 = vmul.f32 %v610, %v830
      %v1000 = vmul.f32 %v613, %v835
      %v1001 = vmul.f32 %v618, %v840
      %v1002 = vmul.f32 %v621, %v845
      %v1003 = vmul.f32 %v626, %v850
      %v1004 = vmul.f32 %v629, %v855
      %v1005 = vmul.f32 %v634, %v860
      %v1006 = vmul.f32 %v637, %v865
      %v1007 = vmul.f32 %v642, %v870
      %v1008 = vmul.f32 %v645, %v875
      %v1009 = vmul.f32 %v650, %v880
      %v1010 = vmul.f32 %v653, %v885
      %v1011 = vmul.f32 %v658, %v890
      %v1012 = vmul.f32 %v661, %v895
      %v1013 = vmul.f32 %v666, %v900
      %v1014 = vmul.f32 %v669, %v905
      %v1015 = vmul.f32 %v674, %v910
      %v1016 = vmul.f32 %v677, %v915
      %v1017 = vmul.f32 %v682, %v920
      %v1018 = vmul.f32 %v685, %v925
      %v1019 = vmul.f32 %v690, %v930
      %v1020 = vmul.f32 %v693, %v935
      %v1021 = vmul.f32 %v698, %v940
      %v1022 = vmul.f32 %v701, %v945
      %v1023 = vmul.f32 %v706, %v950
      %v1024 = vmul.f32 %v709, %v955
      %v1025 = vmul.f32 %v714, %v960
      %v1026 = vmul.f32 %v717, %v965
      %v1027 = vmul.f32 %v722, %v970
      %v1028 = vmul.f32 %v725, %v975
      %v1029 = vmul.f32 %v730, %v980
      %v1030 = vmul.f32 %v733, %v985
      %v1031 = vmul.f32 %v738, %v990
      %v1032 = vmul.f32 %v741, %v995
      %v1033 = vsel %vm744, %v997, 0.0
      %v1034 = vsel %vm744, %v998, 0.0
      %v1035 = vadd.f32 %v1033, %v1034
      %v1036 = vsel %vm744, %v999, 0.0
      %v1037 = vadd.f32 %v1035, %v1036
      %v1038 = vsel %vm744, %v1000, 0.0
      %v1039 = vadd.f32 %v1037, %v1038
      %v1040 = vsel %vm744, %v1001, 0.0
      %v1041 = vadd.f32 %v1039, %v1040
      %v1042 = vsel %vm744, %v1002, 0.0
      %v1043 = vadd.f32 %v1041, %v1042
      %v1044 = vsel %vm744, %v1003, 0.0
      %v1045 = vadd.f32 %v1043, %v1044
      %v1046 = vsel %vm744, %v1004, 0.0
      %v1047 = vadd.f32 %v1045, %v1046
      %v1048 = vsel %vm744, %v1005, 0.0
      %v1049 = vadd.f32 %v1047, %v1048
      %v1050 = vsel %vm744, %v1006, 0.0
      %v1051 = vadd.f32 %v1049, %v1050
      %v1052 = vsel %vm744, %v1007, 0.0
      %v1053 = vadd.f32 %v1051, %v1052
      %v1054 = vsel %vm744, %v1008, 0.0
      %v1055 = vadd.f32 %v1053, %v1054
      %v1056 = vsel %vm744, %v1009, 0.0
      %v1057 = vadd.f32 %v1055, %v1056
      %v1058 = vsel %vm744, %v1010, 0.0
      %v1059 = vadd.f32 %v1057, %v1058
      %v1060 = vsel %vm744, %v1011, 0.0
      %v1061 = vadd.f32 %v1059, %v1060
      %v1062 = vsel %vm744, %v1012, 0.0
      %v1063 = vadd.f32 %v1061, %v1062
      %v1064 = vsel %vm744, %v1013, 0.0
      %v1065 = vadd.f32 %v1063, %v1064
      %v1066 = vsel %vm744, %v1014, 0.0
      %v1067 = vadd.f32 %v1065, %v1066
      %v1068 = vsel %vm744, %v1015, 0.0
      %v1069 = vadd.f32 %v1067, %v1068
      %v1070 = vsel %vm744, %v1016, 0.0
      %v1071 = vadd.f32 %v1069, %v1070
      %v1072 = vsel %vm744, %v1017, 0.0
      %v1073 = vadd.f32 %v1071, %v1072
      %v1074 = vsel %vm744, %v1018, 0.0
      %v1075 = vadd.f32 %v1073, %v1074
      %v1076 = vsel %vm744, %v1019, 0.0
      %v1077 = vadd.f32 %v1075, %v1076
      %v1078 = vsel %vm744, %v1020, 0.0
      %v1079 = vadd.f32 %v1077, %v1078
      %v1080 = vsel %vm744, %v1021, 0.0
      %v1081 = vadd.f32 %v1079, %v1080
      %v1082 = vsel %vm744, %v1022, 0.0
      %v1083 = vadd.f32 %v1081, %v1082
      %v1084 = vsel %vm744, %v1023, 0.0
      %v1085 = vadd.f32 %v1083, %v1084
      %v1086 = vsel %vm744, %v1024, 0.0
      %v1087 = vadd.f32 %v1085, %v1086
      %v1088 = vsel %vm744, %v1025, 0.0
      %v1089 = vadd.f32 %v1087, %v1088
      %v1090 = vsel %vm744, %v1026, 0.0
      %v1091 = vadd.f32 %v1089, %v1090
      %v1092 = vsel %vm744, %v1027, 0.0
      %v1093 = vadd.f32 %v1091, %v1092
      %v1094 = vsel %vm744, %v1028, 0.0
      %v1095 = vadd.f32 %v1093, %v1094
      %v1096 = vsel %vm744, %v1029, 0.0
      %v1097 = vadd.f32 %v1095, %v1096
      %v1098 = vsel %vm744, %v1030, 0.0
      %v1099 = vadd.f32 %v1097, %v1098
      %v1100 = vsel %vm744, %v1031, 0.0
      %v1101 = vadd.f32 %v1099, %v1100
      %v1102 = vsel %vm744, %v1032, 0.0
      %v1103 = vadd.f32 %v1101, %v1102
      %v1104 = vrot.slane %v1103, 4
      %v1105 = vadd.f32 %v1103, %v1104
      %v1106 = vrot.slane %v1105, 2
      %v1107 = vadd.f32 %v1105, %v1106
      %v1108 = vrot.slane %v1107, 1
      %v1109 = vadd.f32 %v1107, %v1108
      %vm1110 = vcmask 57344
      %1111 = vst.msk [vmem:[%s238] sm:$0x1] %vm1110, %v1109
      %v1112 = vmul.f32 %v997, %v602
      %v1113 = vmul.f32 %v998, %v605
      %v1114 = vmul.f32 %v999, %v610
      %v1115 = vmul.f32 %v1000, %v613
      %v1116 = vmul.f32 %v1001, %v618
      %v1117 = vmul.f32 %v1002, %v621
      %v1118 = vmul.f32 %v1003, %v626
      %v1119 = vmul.f32 %v1004, %v629
      %v1120 = vmul.f32 %v1005, %v634
      %v1121 = vmul.f32 %v1006, %v637
      %v1122 = vmul.f32 %v1007, %v642
      %v1123 = vmul.f32 %v1008, %v645
      %v1124 = vmul.f32 %v1009, %v650
      %v1125 = vmul.f32 %v1010, %v653
      %v1126 = vmul.f32 %v1011, %v658
      %v1127 = vmul.f32 %v1012, %v661
      %v1128 = vmul.f32 %v1013, %v666
      %v1129 = vmul.f32 %v1014, %v669
      %v1130 = vmul.f32 %v1015, %v674
      %v1131 = vmul.f32 %v1016, %v677
      %v1132 = vmul.f32 %v1017, %v682
      %v1133 = vmul.f32 %v1018, %v685
      %v1134 = vmul.f32 %v1019, %v690
      %v1135 = vmul.f32 %v1020, %v693
      %v1136 = vmul.f32 %v1021, %v698
      %v1137 = vmul.f32 %v1022, %v701
      %v1138 = vmul.f32 %v1023, %v706
      %v1139 = vmul.f32 %v1024, %v709
      %v1140 = vmul.f32 %v1025, %v714
      %v1141 = vmul.f32 %v1026, %v717
      %v1142 = vmul.f32 %v1027, %v722
      %v1143 = vmul.f32 %v1028, %v725
      %v1144 = vmul.f32 %v1029, %v730
      %v1145 = vmul.f32 %v1030, %v733
      %v1146 = vmul.f32 %v1031, %v738
      %v1147 = vmul.f32 %v1032, %v741
      %v1148 = vsel %vm744, %v1112, 0.0
      %v1149 = vsel %vm744, %v1113, 0.0
      %v1150 = vadd.f32 %v1148, %v1149
      %v1151 = vsel %vm744, %v1114, 0.0
      %v1152 = vadd.f32 %v1150, %v1151
      %v1153 = vsel %vm744, %v1115, 0.0
      %v1154 = vadd.f32 %v1152, %v1153
      %v1155 = vsel %vm744, %v1116, 0.0
      %v1156 = vadd.f32 %v1154, %v1155
      %v1157 = vsel %vm744, %v1117, 0.0
      %v1158 = vadd.f32 %v1156, %v1157
      %v1159 = vsel %vm744, %v1118, 0.0
      %v1160 = vadd.f32 %v1158, %v1159
      %v1161 = vsel %vm744, %v1119, 0.0
      %v1162 = vadd.f32 %v1160, %v1161
      %v1163 = vsel %vm744, %v1120, 0.0
      %v1164 = vadd.f32 %v1162, %v1163
      %v1165 = vsel %vm744, %v1121, 0.0
      %v1166 = vadd.f32 %v1164, %v1165
      %v1167 = vsel %vm744, %v1122, 0.0
      %v1168 = vadd.f32 %v1166, %v1167
      %v1169 = vsel %vm744, %v1123, 0.0
      %v1170 = vadd.f32 %v1168, %v1169
      %v1171 = vsel %vm744, %v1124, 0.0
      %v1172 = vadd.f32 %v1170, %v1171
      %v1173 = vsel %vm744, %v1125, 0.0
      %v1174 = vadd.f32 %v1172, %v1173
      %v1175 = vsel %vm744, %v1126, 0.0
      %v1176 = vadd.f32 %v1174, %v1175
      %v1177 = vsel %vm744, %v1127, 0.0
      %v1178 = vadd.f32 %v1176, %v1177
      %v1179 = vsel %vm744, %v1128, 0.0
      %v1180 = vadd.f32 %v1178, %v1179
      %v1181 = vsel %vm744, %v1129, 0.0
      %v1182 = vadd.f32 %v1180, %v1181
      %v1183 = vsel %vm744, %v1130, 0.0
      %v1184 = vadd.f32 %v1182, %v1183
      %v1185 = vsel %vm744, %v1131, 0.0
      %v1186 = vadd.f32 %v1184, %v1185
      %v1187 = vsel %vm744, %v1132, 0.0
      %v1188 = vadd.f32 %v1186, %v1187
      %v1189 = vsel %vm744, %v1133, 0.0
      %v1190 = vadd.f32 %v1188, %v1189
      %v1191 = vsel %vm744, %v1134, 0.0
      %v1192 = vadd.f32 %v1190, %v1191
      %v1193 = vsel %vm744, %v1135, 0.0
      %v1194 = vadd.f32 %v1192, %v1193
      %v1195 = vsel %vm744, %v1136, 0.0
      %v1196 = vadd.f32 %v1194, %v1195
      %v1197 = vsel %vm744, %v1137, 0.0
      %v1198 = vadd.f32 %v1196, %v1197
      %v1199 = vsel %vm744, %v1138, 0.0
      %v1200 = vadd.f32 %v1198, %v1199
      %v1201 = vsel %vm744, %v1139, 0.0
      %v1202 = vadd.f32 %v1200, %v1201
      %v1203 = vsel %vm744, %v1140, 0.0
      %v1204 = vadd.f32 %v1202, %v1203
      %v1205 = vsel %vm744, %v1141, 0.0
      %v1206 = vadd.f32 %v1204, %v1205
      %v1207 = vsel %vm744, %v1142, 0.0
      %v1208 = vadd.f32 %v1206, %v1207
      %v1209 = vsel %vm744, %v1143, 0.0
      %v1210 = vadd.f32 %v1208, %v1209
      %v1211 = vsel %vm744, %v1144, 0.0
      %v1212 = vadd.f32 %v1210, %v1211
      %v1213 = vsel %vm744, %v1145, 0.0
      %v1214 = vadd.f32 %v1212, %v1213
      %v1215 = vsel %vm744, %v1146, 0.0
      %v1216 = vadd.f32 %v1214, %v1215
      %v1217 = vsel %vm744, %v1147, 0.0
      %v1218 = vadd.f32 %v1216, %v1217
      %v1219 = vrot.slane %v1218, 4
      %v1220 = vadd.f32 %v1218, %v1219
      %v1221 = vrot.slane %v1220, 2
      %v1222 = vadd.f32 %v1220, %v1221
      %v1223 = vrot.slane %v1222, 1
      %v1224 = vadd.f32 %v1222, %v1223
      %1225 = vst.msk [vmem:[%s241] sm:$0x1] %vm1110, %v1224
      %p1226 = scmp.lt.s32.totalorder %s17, 1
      %s1227 = scalar_select %p1226, %s17, 1
      %s1228 = smul.addr %s1227, 36
      %s1229 = smul.addr %s1228, 8
      %s1230 = scalar_lea.vmem %s3, %s1229
      %p1231 = scmp.lt.s32.totalorder %s17, 1
      %s1232 = scalar_select %p1231, %s17, 1
      %s1233 = scalar_lea.vmem %s4, %s1232
      %p1234 = scmp.lt.s32.totalorder %s17, 1
      %s1235 = scalar_select %p1234, %s17, 1
      %s1236 = scalar_lea.vmem %s5, %s1235
      // Predicated region
      $region33: #{basic_block_split_forward.8} parent=31 // pred_check
        %p1237 = pneg %p103
      $region34: #{basic_block_split_forward.8} parent=31 // pred_check_branch
        %1239 = sbr.rel (%p1237) target = $region36
      $region35: #{basic_block_split_forward.8} parent=31 // pred_region
        _
      $region36: #{basic_block_split_forward.8} parent=31 // pred_fallthru
        _
      // Predicated region
      $region37: #{basic_block_split_forward.8} parent=31 // pred_check
        %p1240 = pneg %p129
      $region38: #{basic_block_split_forward.8} parent=31 // pred_check_branch
        %1242 = sbr.rel (%p1240) target = $region40
      $region39: #{basic_block_split_forward.8} parent=31 // pred_region
        _
      $region40: #{basic_block_split_forward.8} parent=31 // pred_fallthru
        _
      // Predicated region
      $region41: #{basic_block_split_forward.8} parent=31 // pred_check
        %p1243 = pneg %p155
      $region42: #{basic_block_split_forward.8} parent=31 // pred_check_branch
        %1245 = sbr.rel (%p1243) target = $region44
      $region43: #{basic_block_split_forward.8} parent=31 // pred_region
        _
      $region44: #{basic_block_split_forward.8} parent=31 // pred_fallthru
        _
    $region32: #{basic_block_split_forward.8} parent=5 // pred_fallthru
      _
    %p1246 = scmp.le.s32.totalorder 2, %s12
    // Predicated region
    $region45: #{basic_block_split_forward.8} parent=5 // pred_check
      %p1247 = pneg %p1246
    $region46: #{basic_block_split_forward.8} parent=5 // pred_check_branch
      %1249 = sbr.rel (%p1247) target = $region48
    $region47: #{basic_block_split_forward.8} parent=5 // pred_region
      %s1250 = ssub.s32 %s12, 2
      // Predicated region
      $region49: #{basic_block_split_forward.8} parent=47 // pred_check
        %p1251 = pneg %p109
      $region50: #{basic_block_split_forward.8} parent=47 // pred_check_branch
        %1253 = sbr.rel (%p1251) target = $region52
      $region51: #{basic_block_split_forward.8} parent=47 // pred_region
        %p1254 = scmp.lt.s32.totalorder %s18, 1
        %s1255 = scalar_select %p1254, %s18, 1
        %s1256 = smul.addr %s1255, 36
        %s1257 = smul.addr %s1256, 8
        %s1258 = scalar_lea.vmem %s3, %s1257
      $region52: #{basic_block_split_forward.8} parent=47 // pred_fallthru
        _
      // Predicated region
      $region53: #{basic_block_split_forward.8} parent=47 // pred_check
        %p1259 = pneg %p135
      $region54: #{basic_block_split_forward.8} parent=47 // pred_check_branch
        %1261 = sbr.rel (%p1259) target = $region56
      $region55: #{basic_block_split_forward.8} parent=47 // pred_region
        %p1262 = scmp.lt.s32.totalorder %s18, 1
        %s1263 = scalar_select %p1262, %s18, 1
        %s1264 = scalar_lea.vmem %s4, %s1263
      $region56: #{basic_block_split_forward.8} parent=47 // pred_fallthru
        _
      // Predicated region
      $region57: #{basic_block_split_forward.8} parent=47 // pred_check
        %p1265 = pneg %p161
      $region58: #{basic_block_split_forward.8} parent=47 // pred_check_branch
        %1267 = sbr.rel (%p1265) target = $region60
      $region59: #{basic_block_split_forward.8} parent=47 // pred_region
        %p1268 = scmp.lt.s32.totalorder %s18, 1
        %s1269 = scalar_select %p1268, %s18, 1
        %s1270 = scalar_lea.vmem %s5, %s1269
      $region60: #{basic_block_split_forward.8} parent=47 // pred_fallthru
        _
    $region48: #{basic_block_split_forward.8} parent=5 // pred_fallthru
      _
  $region6: #{basic_block_split_forward.8} parent=0 // loop_footer
    %s16 = sadd.s32 1, %s12
  $region7: #{basic_block_split_forward.8} parent=0 // loop_footer_branch
    %11 = sbr.rel target = $region3
  $region8: #{basic_block_split_forward.8} parent=0 // loop_exit
    _

// kernel: basic_block_split_forward.7
$region0: #{basic_block_split_forward.7}
  #allocation0 [shape = 'u32[]', space=smem, size = 0x4, offset = 0x4, fixed_abs, tag = 'smem constant byte address 0x4 - core index']
  #allocation1 [shape = 'u32[144,128]{1,0:T(1,128)}', space=vmem, size = 0x12000, scoped, tag = 'internal scratch']
  %s0 = inlined_call_operand.vmem [shape: bf16[2,342,8], index: 0, kind: input, shape index: {}]
  %s1 = inlined_call_operand.vmem [shape: bf16[9,8,8], index: 1, kind: input, shape index: {}]
  %s2 = inlined_call_operand.vmem [shape: f32[1,288,1], index: 2, kind: input, shape index: {}]
  %s3 = inlined_call_operand.vmem [shape: f32[2,288,8], index: 3, kind: output, shape index: {0}]
  %s4 = inlined_call_operand.vmem [shape: f32[2,1,8], index: 4, kind: output, shape index: {1}]
  %s5 = inlined_call_operand.vmem [shape: f32[2,1,8], index: 5, kind: output, shape index: {2}]
  %6 = xla_tuple %s3, %s4, %s5
  %s7 = sld [smem:[#allocation0]]
  $region61: #{basic_block_split_forward.7} parent=0
    _
  %s9 = ssub.s32 1, %s7
  %s10 = scalar_select 0, %s9, %s7
  loop: start=0, step=1, limit=4
  $region2: #{basic_block_split_forward.7} parent=0 // loop_pre_header
    _
  $region3: #{basic_block_split_forward.7} parent=0 // loop_header
    %s12 = sphi 0, %s16
    %p13 = scmp.ge.s32.totalorder %s12, 4
    %s22 = sphi 0, %s24
    %s25 = sphi 0, %s22
    %s26 = sphi 0, %s25
    %s42 = sphi 0, %s26
    %s46 = sphi 0, %s46
    %s48 = sphi 0, %s46
    %s49 = sphi 0, %s48
    %s63 = sphi 0, %s49
    %s67 = sphi 0, %s67
    %s69 = sphi 0, %s67
    %s70 = sphi 0, %s69
    %s84 = sphi 0, %s70
    %s90 = sphi 0, %s92
    %s93 = sphi 0, %s90
    %s94 = sphi 0, %s93
    %s110 = sphi 0, %s94
    %s116 = sphi 0, %s118
    %s119 = sphi 0, %s116
    %s120 = sphi 0, %s119
    %s136 = sphi 0, %s120
    %s142 = sphi 0, %s144
    %s145 = sphi 0, %s142
    %s146 = sphi 0, %s145
    %s162 = sphi 0, %s146
  $region4: #{basic_block_split_forward.7} parent=0 // loop_header_branch
    %15 = sbr.rel (%p13) target = $region8
  $region5: #{basic_block_split_forward.7} parent=0 // loop_body
    %s17 = ssub.s32 %s12, 1
    %s18 = ssub.s32 %s12, 2
    %s19 = sadd.s32 %s12, 1
    %s20 = ssub.s32 %s12, %s19
    %p21 = scmp.eq.s32.totalorder %s20, 0
    %s23 = sadd.s32 %s22, 1
    %s24 = scalar_select %p21, %s22, %s23
    %p27 = pneg %p21
    %p28 = scmp.eq.s32.totalorder %s12, 1
    %p29 = por %p27, %p28
    %p30 = scmp.ne.s32.totalorder %s22, %s25
    %p31 = scmp.eq.s32.totalorder %s12, 0
    %p32 = por %p30, %p31
    %p33 = scmp.ne.s32.totalorder %s22, %s25
    %p34 = scmp.eq.s32.totalorder %s17, 1
    %p35 = por %p33, %p34
    %p36 = scmp.ne.s32.totalorder %s25, %s26
    %p37 = scmp.eq.s32.totalorder %s17, 0
    %p38 = por %p36, %p37
    %p39 = scmp.ne.s32.totalorder %s25, %s26
    %p40 = scmp.eq.s32.totalorder %s18, 1
    %p41 = por %p39, %p40
    %p43 = scmp.ne.s32.totalorder %s26, %s42
    %p44 = scmp.eq.s32.totalorder %s18, 0
    %p45 = por %p43, %p44
    %s47 = sadd.s32 %s46, 1
    %p50 = scmp.eq.s32.totalorder %s12, 1
    %p51 = scmp.ne.s32.totalorder %s46, %s48
    %p52 = scmp.eq.s32.totalorder %s12, 0
    %p53 = por %p51, %p52
    %p54 = scmp.ne.s32.totalorder %s46, %s48
    %p55 = scmp.eq.s32.totalorder %s17, 1
    %p56 = por %p54, %p55
    %p57 = scmp.ne.s32.totalorder %s48, %s49
    %p58 = scmp.eq.s32.totalorder %s17, 0
    %p59 = por %p57, %p58
    %p60 = scmp.ne.s32.totalorder %s48, %s49
    %p61 = scmp.eq.s32.totalorder %s18, 1
    %p62 = por %p60, %p61
    %p64 = scmp.ne.s32.totalorder %s49, %s63
    %p65 = scmp.eq.s32.totalorder %s18, 0
    %p66 = por %p64, %p65
    %s68 = sadd.s32 %s67, 1
    %p71 = scmp.eq.s32.totalorder %s12, 1
    %p72 = scmp.ne.s32.totalorder %s67, %s69
    %p73 = scmp.eq.s32.totalorder %s12, 0
    %p74 = por %p72, %p73
    %p75 = scmp.ne.s32.totalorder %s67, %s69
    %p76 = scmp.eq.s32.totalorder %s17, 1
    %p77 = por %p75, %p76
    %p78 = scmp.ne.s32.totalorder %s69, %s70
    %p79 = scmp.eq.s32.totalorder %s17, 0
    %p80 = por %p78, %p79
    %p81 = scmp.ne.s32.totalorder %s69, %s70
    %p82 = scmp.eq.s32.totalorder %s18, 1
    %p83 = por %p81, %p82
    %p85 = scmp.ne.s32.totalorder %s70, %s84
    %p86 = scmp.eq.s32.totalorder %s18, 0
    %p87 = por %p85, %p86
    %s88 = ssub.s32 %s12, %s19
    %p89 = scmp.eq.s32.totalorder %s88, 0
    %s91 = sadd.s32 %s90, 1
    %s92 = scalar_select %p89, %s90, %s91
    %p95 = pneg %p89
    %p96 = scmp.eq.s32.totalorder %s12, 1
    %p97 = por %p95, %p96
    %p98 = scmp.ne.s32.totalorder %s90, %s93
    %p99 = scmp.eq.s32.totalorder %s12, 0
    %p100 = por %p98, %p99
    %p101 = scmp.ne.s32.totalorder %s90, %s93
    %p102 = scmp.eq.s32.totalorder %s17, 1
    %p103 = por %p101, %p102
    %p104 = scmp.ne.s32.totalorder %s93, %s94
    %p105 = scmp.eq.s32.totalorder %s17, 0
    %p106 = por %p104, %p105
    %p107 = scmp.ne.s32.totalorder %s93, %s94
    %p108 = scmp.eq.s32.totalorder %s18, 1
    %p109 = por %p107, %p108
    %p111 = scmp.ne.s32.totalorder %s94, %s110
    %p112 = scmp.eq.s32.totalorder %s18, 0
    %p113 = por %p111, %p112
    %s114 = ssub.s32 %s12, %s19
    %p115 = scmp.eq.s32.totalorder %s114, 0
    %s117 = sadd.s32 %s116, 1
    %s118 = scalar_select %p115, %s116, %s117
    %p121 = pneg %p115
    %p122 = scmp.eq.s32.totalorder %s12, 1
    %p123 = por %p121, %p122
    %p124 = scmp.ne.s32.totalorder %s116, %s119
    %p125 = scmp.eq.s32.totalorder %s12, 0
    %p126 = por %p124, %p125
    %p127 = scmp.ne.s32.totalorder %s116, %s119
    %p128 = scmp.eq.s32.totalorder %s17, 1
    %p129 = por %p127, %p128
    %p130 = scmp.ne.s32.totalorder %s119, %s120
    %p131 = scmp.eq.s32.totalorder %s17, 0
    %p132 = por %p130, %p131
    %p133 = scmp.ne.s32.totalorder %s119, %s120
    %p134 = scmp.eq.s32.totalorder %s18, 1
    %p135 = por %p133, %p134
    %p137 = scmp.ne.s32.totalorder %s120, %s136
    %p138 = scmp.eq.s32.totalorder %s18, 0
    %p139 = por %p137, %p138
    %s140 = ssub.s32 %s12, %s19
    %p141 = scmp.eq.s32.totalorder %s140, 0
    %s143 = sadd.s32 %s142, 1
    %s144 = scalar_select %p141, %s142, %s143
    %p147 = pneg %p141
    %p148 = scmp.eq.s32.totalorder %s12, 1
    %p149 = por %p147, %p148
    %p150 = scmp.ne.s32.totalorder %s142, %s145
    %p151 = scmp.eq.s32.totalorder %s12, 0
    %p152 = por %p150, %p151
    %p153 = scmp.ne.s32.totalorder %s142, %s145
    %p154 = scmp.eq.s32.totalorder %s17, 1
    %p155 = por %p153, %p154
    %p156 = scmp.ne.s32.totalorder %s145, %s146
    %p157 = scmp.eq.s32.totalorder %s17, 0
    %p158 = por %p156, %p157
    %p159 = scmp.ne.s32.totalorder %s145, %s146
    %p160 = scmp.eq.s32.totalorder %s18, 1
    %p161 = por %p159, %p160
    %p163 = scmp.ne.s32.totalorder %s146, %s162
    %p164 = scmp.eq.s32.totalorder %s18, 0
    %p165 = por %p163, %p164
    %p166 = scmp.le.s32.totalorder 1, %s12
    %p167 = scmp.lt.s32.totalorder %s12, 3
    %p168 = pnand %p166, %p167
    %p169 = pneg %p168
    // Predicated region
    $region9: #{basic_block_split_forward.7} parent=5 // pred_check
      _
    $region10: #{basic_block_split_forward.7} parent=5 // pred_check_branch
      %171 = sbr.rel (%p168) target = $region12
    $region11: #{basic_block_split_forward.7} parent=5 // pred_region
      %s172 = ssub.s32 %s12, 1
      // Predicated region
      $region13: #{basic_block_split_forward.7} parent=11 // pred_check
        %p173 = pneg %p59
      $region14: #{basic_block_split_forward.7} parent=11 // pred_check_branch
        %175 = sbr.rel (%p173) target = $region16
      $region15: #{basic_block_split_forward.7} parent=11 // pred_region
        _
      $region16: #{basic_block_split_forward.7} parent=11 // pred_fallthru
        _
      // Predicated region
      $region17: #{basic_block_split_forward.7} parent=11 // pred_check
        %p176 = pneg %p80
      $region18: #{basic_block_split_forward.7} parent=11 // pred_check_branch
        %178 = sbr.rel (%p176) target = $region20
      $region19: #{basic_block_split_forward.7} parent=11 // pred_region
        _
      $region20: #{basic_block_split_forward.7} parent=11 // pred_fallthru
        _
    $region12: #{basic_block_split_forward.7} parent=5 // pred_fallthru
      _
    %p179 = scmp.lt.s32.totalorder %s12, 2
    // Predicated region
    $region21: #{basic_block_split_forward.7} parent=5 // pred_check
      %p180 = pneg %p179
    $region22: #{basic_block_split_forward.7} parent=5 // pred_check_branch
      %182 = sbr.rel (%p180) target = $region24
    $region23: #{basic_block_split_forward.7} parent=5 // pred_region
      // Predicated region
      $region25: #{basic_block_split_forward.7} parent=23 // pred_check
        %p183 = pneg %p32
      $region26: #{basic_block_split_forward.7} parent=23 // pred_check_branch
        %185 = sbr.rel (%p183) target = $region28
      $region27: #{basic_block_split_forward.7} parent=23 // pred_region
        %p186 = scmp.lt.s32.totalorder %s12, 1
        %s187 = scalar_select %p186, %s12, 1
        %s188 = smul.addr %s187, 43
        %s189 = smul.addr %s188, 4
        %s190 = scalar_lea.vmem %s0, %s189
      $region28: #{basic_block_split_forward.7} parent=23 // pred_fallthru
        _
    $region24: #{basic_block_split_forward.7} parent=5 // pred_fallthru
      _
    %p191 = scmp.le.s32.totalorder 1, %s12
    %p192 = scmp.lt.s32.totalorder %s12, 3
    %p193 = pnand %p191, %p192
    %p194 = pneg %p193
    // Predicated region
    $region29: #{basic_block_split_forward.7} parent=5 // pred_check
      _
    $region30: #{basic_block_split_forward.7} parent=5 // pred_check_branch
      %196 = sbr.rel (%p193) target = $region32
    $region31: #{basic_block_split_forward.7} parent=5 // pred_region
      %s197 = ssub.s32 %s12, 1
      %p198 = scmp.lt.s32.totalorder %s17, 1
      %s199 = scalar_select %p198, %s17, 1
      %s200 = smul.addr %s199, 43
      %s201 = smul.addr %s200, 4
      %s202 = scalar_lea.vmem %s0, %s201
      %p203 = pneg %p38
      %p204 = pneg %p35
      %p205 = pneg %p59
      %p206 = pneg %p56
      %p207 = pneg %p80
      %p208 = pneg %p77
      %p209 = pneg %p106
      %p210 = pneg %p103
      %p211 = scmp.lt.s32.totalorder %s17, 1
      %s212 = scalar_select %p211, %s17, 1
      %s213 = smul.addr %s212, 36
      %s214 = smul.addr %s213, 8
      %s215 = scalar_lea.vmem %s3, %s214
      %p216 = pneg %p132
      %p217 = pneg %p129
      %p218 = scmp.lt.s32.totalorder %s17, 1
      %s219 = scalar_select %p218, %s17, 1
      %s220 = scalar_lea.vmem %s4, %s219
      %p221 = pneg %p158
      %p222 = pneg %p155
      %p223 = scmp.lt.s32.totalorder %s17, 1
      %s224 = scalar_select %p223, %s17, 1
      %s225 = scalar_lea.vmem %s5, %s224
      %p226 = scmp.lt.s32.totalorder %s17, 1
      %s227 = scalar_select %p226, %s17, 1
      %s228 = smul.addr %s227, 43
      %s229 = smul.addr %s228, 4
      %s230 = scalar_lea.vmem %s0, %s229
      %p231 = scmp.lt.s32.totalorder %s17, 1
      %s232 = scalar_select %p231, %s17, 1
      %s233 = smul.addr %s232, 36
      %s234 = smul.addr %s233, 8
      %s235 = scalar_lea.vmem %s3, %s234
      %p236 = scmp.lt.s32.totalorder %s17, 1
      %s237 = scalar_select %p236, %s17, 1
      %s238 = scalar_lea.vmem %s4, %s237
      %p239 = scmp.lt.s32.totalorder %s17, 1
      %s240 = scalar_select %p239, %s17, 1
      %s241 = scalar_lea.vmem %s5, %s240
      %v243 = vld [vmem:[%s230] sm:$0xf]
      %v244 = vld [vmem:[%s230 + $0x4] sm:$0xf]
      %v245 = vld [vmem:[%s230 + $0x8] sm:$0xf]
      %v246 = vld [vmem:[%s230 + $0xc] sm:$0xf]
      %v247 = vld [vmem:[%s230 + $0x10] sm:$0xf]
      %v248 = vld [vmem:[%s230 + $0x14] sm:$0xf]
      %v249 = vld [vmem:[%s230 + $0x18] sm:$0xf]
      %v250 = vld [vmem:[%s230 + $0x1c] sm:$0xf]
      %v251 = vld [vmem:[%s230 + $0x20] sm:$0xf]
      %v252 = vld [vmem:[%s230 + $0x24] sm:$0xf]
      %v253 = vld [vmem:[%s230 + $0x28] sm:$0xf]
      %v254 = vld [vmem:[%s230 + $0x2c] sm:$0xf]
      %v255 = vld [vmem:[%s230 + $0x30] sm:$0xf]
      %v256 = vld [vmem:[%s230 + $0x34] sm:$0xf]
      %v257 = vld [vmem:[%s230 + $0x38] sm:$0xf]
      %v258 = vld [vmem:[%s230 + $0x3c] sm:$0xf]
      %v259 = vld [vmem:[%s230 + $0x40] sm:$0xf]
      %v260 = vld [vmem:[%s230 + $0x44] sm:$0xf]
      %v261 = vld [vmem:[%s230 + $0x48] sm:$0xf]
      %v262 = vld [vmem:[%s230 + $0x4c] sm:$0xf]
      %v263 = vld [vmem:[%s230 + $0x50] sm:$0xf]
      %v264 = vld [vmem:[%s230 + $0x54] sm:$0xf]
      %v265 = vld [vmem:[%s230 + $0x58] sm:$0xf]
      %v266 = vld [vmem:[%s230 + $0x5c] sm:$0xf]
      %v267 = vld [vmem:[%s230 + $0x60] sm:$0xf]
      %v268 = vld [vmem:[%s230 + $0x64] sm:$0xf]
      %v269 = vld [vmem:[%s230 + $0x68] sm:$0xf]
      %v270 = vld [vmem:[%s230 + $0x6c] sm:$0xf]
      %v271 = vld [vmem:[%s230 + $0x70] sm:$0xf]
      %v272 = vld [vmem:[%s230 + $0x74] sm:$0xf]
      %v273 = vld [vmem:[%s230 + $0x78] sm:$0xf]
      %v274 = vld [vmem:[%s230 + $0x7c] sm:$0xf]
      %v275 = vld [vmem:[%s230 + $0x80] sm:$0xf]
      %v276 = vld [vmem:[%s230 + $0x84] sm:$0xf]
      %v277 = vld [vmem:[%s230 + $0x88] sm:$0xf]
      %v278 = vld [vmem:[%s230 + $0x8c] sm:$0xf]
      %v279 = vld [vmem:[%s230 + $0x90] sm:$0xf]
      %v280 = vld [vmem:[%s230 + $0x94] sm:$0xf]
      %v281 = vld [vmem:[%s230 + $0x98] sm:$0xf]
      %v282 = vld [vmem:[%s230 + $0x9c] sm:$0xf]
      %v283 = vld [vmem:[%s230 + $0xa0] sm:$0xf]
      %v284 = vunpack.c.l.bf16 %v243
      %v285 = vunpack.c.l.bf16 %v244
      %v286 = vunpack.c.l.bf16 %v245
      %v287 = vunpack.c.l.bf16 %v246
      %v288 = vunpack.c.l.bf16 %v247
      %v289 = vunpack.c.l.bf16 %v248
      %v290 = vunpack.c.l.bf16 %v249
      %v291 = vunpack.c.l.bf16 %v250
      %v292 = vunpack.c.l.bf16 %v251
      %v293 = vunpack.c.l.bf16 %v252
      %v294 = vunpack.c.l.bf16 %v253
      %v295 = vunpack.c.l.bf16 %v254
      %v296 = vunpack.c.l.bf16 %v255
      %v297 = vunpack.c.l.bf16 %v256
      %v298 = vunpack.c.l.bf16 %v257
      %v299 = vunpack.c.l.bf16 %v258
      %v300 = vunpack.c.l.bf16 %v259
      %v301 = vunpack.c.l.bf16 %v260
      %v302 = vunpack.c.l.bf16 %v261
      %v303 = vunpack.c.l.bf16 %v262
      %v304 = vunpack.c.l.bf16 %v263
      %v305 = vunpack.c.l.bf16 %v264
      %v306 = vunpack.c.l.bf16 %v265
      %v307 = vunpack.c.l.bf16 %v266
      %v308 = vunpack.c.l.bf16 %v267
      %v309 = vunpack.c.l.bf16 %v268
      %v310 = vunpack.c.l.bf16 %v269
      %v311 = vunpack.c.l.bf16 %v270
      %v312 = vunpack.c.l.bf16 %v271
      %v313 = vunpack.c.l.bf16 %v272
      %v314 = vunpack.c.l.bf16 %v273
      %v315 = vunpack.c.l.bf16 %v274
      %v316 = vunpack.c.l.bf16 %v275
      %v317 = vunpack.c.l.bf16 %v276
      %v318 = vunpack.c.l.bf16 %v277
      %v319 = vunpack.c.l.bf16 %v278
      %v320 = vunpack.c.l.bf16 %v279
      %v321 = vunpack.c.l.bf16 %v280
      %v322 = vunpack.c.l.bf16 %v281
      %v323 = vunpack.c.l.bf16 %v282
      %v324 = vunpack.c.l.bf16 %v283
      %v325 = vpack.c.bf16 %v285, %v284
      %v326 = vpack.c.bf16 %v287, %v286
      %v327 = vpack.c.bf16 %v289, %v288
      %v328 = vpack.c.bf16 %v291, %v290
      %v329 = vpack.c.bf16 %v293, %v292
      %v330 = vpack.c.bf16 %v295, %v294
      %v331 = vpack.c.bf16 %v297, %v296
      %v332 = vpack.c.bf16 %v299, %v298
      %v333 = vpack.c.bf16 %v301, %v300
      %v334 = vpack.c.bf16 %v303, %v302
      %v335 = vpack.c.bf16 %v305, %v304
      %v336 = vpack.c.bf16 %v307, %v306
      %v337 = vpack.c.bf16 %v309, %v308
      %v338 = vpack.c.bf16 %v311, %v310
      %v339 = vpack.c.bf16 %v313, %v312
      %v340 = vpack.c.bf16 %v315, %v314
      %v341 = vpack.c.bf16 %v317, %v316
      %v342 = vpack.c.bf16 %v319, %v318
      %v343 = vld [vmem:[%s1] sm:$0xf]
      %v344 = vpack.c.bf16 %v320, %v320
      %s345 = scalar_lea.vmem %s1, 4
      %v346 = vld [vmem:[%s345] sm:$0xf]
      %vm347 = vsmask.f32 7424
      %v349 = vshrl.u32 %v325, 16
      %v351 = vshll.u32 %v325, 16
      %v353 = vrot.slane %v351, 1
      %v354 = vor.u32 %v349, %v353
      %v356 = vshll.u32 %v326, 16
      %v358 = vrot.slane %v356, 1
      %v359 = vsel %vm347, %v354, %v358
      %v360 = vshrl.u32 %v326, 16
      %v362 = vor.u32 %v360, %v358
      %v364 = vshll.u32 %v327, 16
      %v366 = vrot.slane %v364, 1
      %v367 = vsel %vm347, %v362, %v366
      %v368 = vshrl.u32 %v327, 16
      %v370 = vor.u32 %v368, %v366
      %v372 = vshll.u32 %v328, 16
      %v374 = vrot.slane %v372, 1
      %v375 = vsel %vm347, %v370, %v374
      %v376 = vshrl.u32 %v328, 16
      %v378 = vor.u32 %v376, %v374
      %v380 = vshll.u32 %v329, 16
      %v382 = vrot.slane %v380, 1
      %v383 = vsel %vm347, %v378, %v382
      %v384 = vshrl.u32 %v329, 16
      %v386 = vor.u32 %v384, %v382
      %v388 = vshll.u32 %v330, 16
      %v390 = vrot.slane %v388, 1
      %v391 = vsel %vm347, %v386, %v390
      %v392 = vshrl.u32 %v330, 16
      %v394 = vor.u32 %v392, %v390
      %v396 = vshll.u32 %v331, 16
      %v398 = vrot.slane %v396, 1
      %v399 = vsel %vm347, %v394, %v398
      %v400 = vshrl.u32 %v331, 16
      %v402 = vor.u32 %v400, %v398
      %v404 = vshll.u32 %v332, 16
      %v406 = vrot.slane %v404, 1
      %v407 = vsel %vm347, %v402, %v406
      %v408 = vshrl.u32 %v332, 16
      %v410 = vor.u32 %v408, %v406
      %v412 = vshll.u32 %v333, 16
      %v414 = vrot.slane %v412, 1
      %v415 = vsel %vm347, %v410, %v414
      %v416 = vshrl.u32 %v333, 16
      %v418 = vor.u32 %v416, %v414
      %v420 = vshll.u32 %v334, 16
      %v422 = vrot.slane %v420, 1
      %v423 = vsel %vm347, %v418, %v422
      %v424 = vshrl.u32 %v334, 16
      %v426 = vor.u32 %v424, %v422
      %v428 = vshll.u32 %v335, 16
      %v430 = vrot.slane %v428, 1
      %v431 = vsel %vm347, %v426, %v430
      %v432 = vshrl.u32 %v335, 16
      %v434 = vor.u32 %v432, %v430
      %v436 = vshll.u32 %v336, 16
      %v438 = vrot.slane %v436, 1
      %v439 = vsel %vm347, %v434, %v438
      %v440 = vshrl.u32 %v336, 16
      %v442 = vor.u32 %v440, %v438
      %v444 = vshll.u32 %v337, 16
      %v446 = vrot.slane %v444, 1
      %v447 = vsel %vm347, %v442, %v446
      %v448 = vshrl.u32 %v337, 16
      %v450 = vor.u32 %v448, %v446
      %v452 = vshll.u32 %v338, 16
      %v454 = vrot.slane %v452, 1
      %v455 = vsel %vm347, %v450, %v454
      %v456 = vshrl.u32 %v338, 16
      %v458 = vor.u32 %v456, %v454
      %v460 = vshll.u32 %v339, 16
      %v462 = vrot.slane %v460, 1
      %v463 = vsel %vm347, %v458, %v462
      %v464 = vshrl.u32 %v339, 16
      %v466 = vor.u32 %v464, %v462
      %v468 = vshll.u32 %v340, 16
      %v470 = vrot.slane %v468, 1
      %v471 = vsel %vm347, %v466, %v470
      %v472 = vshrl.u32 %v340, 16
      %v474 = vor.u32 %v472, %v470
      %v476 = vshll.u32 %v341, 16
      %v478 = vrot.slane %v476, 1
      %v479 = vsel %vm347, %v474, %v478
      %v480 = vshrl.u32 %v341, 16
      %v482 = vor.u32 %v480, %v478
      %v484 = vshll.u32 %v342, 16
      %v486 = vrot.slane %v484, 1
      %v487 = vsel %vm347, %v482, %v486
      %v488 = vshrl.u32 %v342, 16
      %v490 = vor.u32 %v488, %v486
      %v492 = vshll.u32 %v344, 16
      %v494 = vrot.slane %v492, 1
      %v495 = vsel %vm347, %v490, %v494
      %vm496 = vcmask 64512
      %v498 = vsel %vm496, %v359, 0
      %v501 = vsel %vm496, %v367, 0
      %v504 = vsel %vm496, %v375, 0
      %v507 = vsel %vm496, %v383, 0
      %v510 = vsel %vm496, %v391, 0
      %v513 = vsel %vm496, %v399, 0
      %v516 = vsel %vm496, %v407, 0
      %v519 = vsel %vm496, %v415, 0
      %v522 = vsel %vm496, %v423, 0
      %v525 = vsel %vm496, %v431, 0
      %v528 = vsel %vm496, %v439, 0
      %v531 = vsel %vm496, %v447, 0
      %v534 = vsel %vm496, %v455, 0
      %v537 = vsel %vm496, %v463, 0
      %v540 = vsel %vm496, %v471, 0
      %v543 = vsel %vm496, %v479, 0
      %v546 = vsel %vm496, %v487, 0
      %v549 = vsel %vm496, %v495, 0
      %vm551 = vcmask 1043456
      %v553 = vsel %vm551, %v346, 0
      %555 = vmatprep.subr.bf16.mxu0 0
      %556 = vmatpush1.bf16.msra.mxu0 %v553
      %557 = vmatprep.subr.bf16.mxu0 0
      %558 = vmatpush1.bf16.msra.mxu0 0
      %559 = vmatprep.subr.bf16.mxu0 0
      %560 = vmatpush1.bf16.msra.mxu0 0
      %561 = vmatprep.subr.bf16.mxu0 0
      %562 = vmatpush1.bf16.msra.mxu0 0
      %563 = vmatprep.subr.bf16.mxu0 0
      %564 = vmatpush1.bf16.msra.mxu0 0
      %565 = vmatprep.subr.bf16.mxu0 0
      %566 = vmatpush1.bf16.msra.mxu0 0
      %567 = vmatprep.subr.bf16.mxu0 0
      %568 = vmatpush1.bf16.msra.mxu0 0
      %569 = vmatprep.subr.bf16.mxu0 0
      %570 = vmatpush1.bf16.msra.mxu0 0
      %571 = vmatprep.subr.bf16.mxu0 0
      %572 = vmatpush1.bf16.msra.mxu0 0
      %573 = vmatprep.subr.bf16.mxu0 0
      %574 = vmatpush1.bf16.msra.mxu0 0
      %575 = vmatprep.subr.bf16.mxu0 0
      %576 = vmatpush1.bf16.msra.mxu0 0
      %577 = vmatprep.subr.bf16.mxu0 0
      %578 = vmatpush1.bf16.msra.mxu0 0
      %579 = vmatprep.subr.bf16.mxu0 0
      %580 = vmatpush1.bf16.msra.mxu0 0
      %581 = vmatprep.subr.bf16.mxu0 0
      %582 = vmatpush1.bf16.msra.mxu0 0
      %583 = vmatprep.subr.bf16.mxu0 0
      %584 = vmatpush1.bf16.msra.mxu0 0
      %585 = vmatprep.subr.bf16.mxu0 0
      %586 = vmatpush1.bf16.msra.mxu0 0
      %587 = vmatprep.mubr.bf16.mxu0 0
      %588 = vmatmul.mubr.bf16.gmra.mrb[0].mxu0 %v498
      %v589 = vpop.f32.mrb[0].mxu0
      %v590 = vadd.f32 0.0, %v589
      %v591 = vpop.f32.mrb[0].mxu0
      %v592 = vpop.f32.mrb[0].mxu0
      %v593 = vadd.f32 0.0, %v592
      %v594 = vpop.f32.mrb[0].mxu0
      %595 = vmatprep.mubr.bf16.mxu0 0
      %596 = vmatmul.mubr.bf16.gmra.mrb[0].mxu0 %v501
      %v597 = vpop.f32.mrb[0].mxu0
      %v598 = vadd.f32 0.0, %v597
      %v599 = vpop.f32.mrb[0].mxu0
      %v600 = vpop.f32.mrb[0].mxu0
      %v601 = vadd.f32 0.0, %v600
      %v602 = vpop.f32.mrb[0].mxu0
      %603 = vmatprep.mubr.bf16.mxu0 0
      %604 = vmatmul.mubr.bf16.gmra.mrb[0].mxu0 %v504
      %v605 = vpop.f32.mrb[0].mxu0
      %v606 = vadd.f32 0.0, %v605
      %v607 = vpop.f32.mrb[0].mxu0
      %v608 = vpop.f32.mrb[0].mxu0
      %v609 = vadd.f32 0.0, %v608
      %v610 = vpop.f32.mrb[0].mxu0
      %611 = vmatprep.mubr.bf16.mxu0 0
      %612 = vmatmul.mubr.bf16.gmra.mrb[0].mxu0 %v507
      %v613 = vpop.f32.mrb[0].mxu0
      %v614 = vadd.f32 0.0, %v613
      %v615 = vpop.f32.mrb[0].mxu0
      %v616 = vpop.f32.mrb[0].mxu0
      %v617 = vadd.f32 0.0, %v616
      %v618 = vpop.f32.mrb[0].mxu0
      %619 = vmatprep.mubr.bf16.mxu0 0
      %620 = vmatmul.mubr.bf16.gmra.mrb[0].mxu0 %v510
      %v621 = vpop.f32.mrb[0].mxu0
      %v622 = vadd.f32 0.0, %v621
      %v623 = vpop.f32.mrb[0].mxu0
      %v624 = vpop.f32.mrb[0].mxu0
      %v625 = vadd.f32 0.0, %v624
      %v626 = vpop.f32.mrb[0].mxu0
      %627 = vmatprep.mubr.bf16.mxu0 0
      %628 = vmatmul.mubr.bf16.gmra.mrb[0].mxu0 %v513
      %v629 = vpop.f32.mrb[0].mxu0
      %v630 = vadd.f32 0.0, %v629
      %v631 = vpop.f32.mrb[0].mxu0
      %v632 = vpop.f32.mrb[0].mxu0
      %v633 = vadd.f32 0.0, %v632
      %v634 = vpop.f32.mrb[0].mxu0
      %635 = vmatprep.mubr.bf16.mxu0 0
      %636 = vmatmul.mubr.bf16.gmra.mrb[0].mxu0 %v516
      %v637 = vpop.f32.mrb[0].mxu0
      %v638 = vadd.f32 0.0, %v637
      %v639 = vpop.f32.mrb[0].mxu0
      %v640 = vpop.f32.mrb[0].mxu0
      %v641 = vadd.f32 0.0, %v640
      %v642 = vpop.f32.mrb[0].mxu0
      %643 = vmatprep.mubr.bf16.mxu0 0
      %644 = vmatmul.mubr.bf16.gmra.mrb[0].mxu0 %v519
      %v645 = vpop.f32.mrb[0].mxu0
      %v646 = vadd.f32 0.0, %v645
      %v647 = vpop.f32.mrb[0].mxu0
      %v648 = vpop.f32.mrb[0].mxu0
      %v649 = vadd.f32 0.0, %v648
      %v650 = vpop.f32.mrb[0].mxu0
      %651 = vmatprep.mubr.bf16.mxu0 0
      %652 = vmatmul.mubr.bf16.gmra.mrb[0].mxu0 %v522
      %v653 = vpop.f32.mrb[0].mxu0
      %v654 = vadd.f32 0.0, %v653
      %v655 = vpop.f32.mrb[0].mxu0
      %v656 = vpop.f32.mrb[0].mxu0
      %v657 = vadd.f32 0.0, %v656
      %v658 = vpop.f32.mrb[0].mxu0
      %659 = vmatprep.mubr.bf16.mxu0 0
      %660 = vmatmul.mubr.bf16.gmra.mrb[0].mxu0 %v525
      %v661 = vpop.f32.mrb[0].mxu0
      %v662 = vadd.f32 0.0, %v661
      %v663 = vpop.f32.mrb[0].mxu0
      %v664 = vpop.f32.mrb[0].mxu0
      %v665 = vadd.f32 0.0, %v664
      %v666 = vpop.f32.mrb[0].mxu0
      %667 = vmatprep.mubr.bf16.mxu0 0
      %668 = vmatmul.mubr.bf16.gmra.mrb[0].mxu0 %v528
      %v669 = vpop.f32.mrb[0].mxu0
      %v670 = vadd.f32 0.0, %v669
      %v671 = vpop.f32.mrb[0].mxu0
      %v672 = vpop.f32.mrb[0].mxu0
      %v673 = vadd.f32 0.0, %v672
      %v674 = vpop.f32.mrb[0].mxu0
      %675 = vmatprep.mubr.bf16.mxu0 0
      %676 = vmatmul.mubr.bf16.gmra.mrb[0].mxu0 %v531
      %v677 = vpop.f32.mrb[0].mxu0
      %v678 = vadd.f32 0.0, %v677
      %v679 = vpop.f32.mrb[0].mxu0
      %v680 = vpop.f32.mrb[0].mxu0
      %v681 = vadd.f32 0.0, %v680
      %v682 = vpop.f32.mrb[0].mxu0
      %683 = vmatprep.mubr.bf16.mxu0 0
      %684 = vmatmul.mubr.bf16.gmra.mrb[0].mxu0 %v534
      %v685 = vpop.f32.mrb[0].mxu0
      %v686 = vadd.f32 0.0, %v685
      %v687 = vpop.f32.mrb[0].mxu0
      %v688 = vpop.f32.mrb[0].mxu0
      %v689 = vadd.f32 0.0, %v688
      %v690 = vpop.f32.mrb[0].mxu0
      %691 = vmatprep.mubr.bf16.mxu0 0
      %692 = vmatmul.mubr.bf16.gmra.mrb[0].mxu0 %v537
      %v693 = vpop.f32.mrb[0].mxu0
      %v694 = vadd.f32 0.0, %v693
      %v695 = vpop.f32.mrb[0].mxu0
      %v696 = vpop.f32.mrb[0].mxu0
      %v697 = vadd.f32 0.0, %v696
      %v698 = vpop.f32.mrb[0].mxu0
      %699 = vmatprep.mubr.bf16.mxu0 0
      %700 = vmatmul.mubr.bf16.gmra.mrb[0].mxu0 %v540
      %v701 = vpop.f32.mrb[0].mxu0
      %v702 = vadd.f32 0.0, %v701
      %v703 = vpop.f32.mrb[0].mxu0
      %v704 = vpop.f32.mrb[0].mxu0
      %v705 = vadd.f32 0.0, %v704
      %v706 = vpop.f32.mrb[0].mxu0
      %707 = vmatprep.mubr.bf16.mxu0 0
      %708 = vmatmul.mubr.bf16.gmra.mrb[0].mxu0 %v543
      %v709 = vpop.f32.mrb[0].mxu0
      %v710 = vadd.f32 0.0, %v709
      %v711 = vpop.f32.mrb[0].mxu0
      %v712 = vpop.f32.mrb[0].mxu0
      %v713 = vadd.f32 0.0, %v712
      %v714 = vpop.f32.mrb[0].mxu0
      %715 = vmatprep.mubr.bf16.mxu0 0
      %716 = vmatmul.mubr.bf16.gmra.mrb[0].mxu0 %v546
      %v717 = vpop.f32.mrb[0].mxu0
      %v718 = vadd.f32 0.0, %v717
      %v719 = vpop.f32.mrb[0].mxu0
      %v720 = vpop.f32.mrb[0].mxu0
      %v721 = vadd.f32 0.0, %v720
      %v722 = vpop.f32.mrb[0].mxu0
      %723 = vmatprep.mubr.bf16.mxu0 0
      %724 = vmatmul.mubr.bf16.gmra.mrb[0].mxu0 %v549
      %v725 = vpop.f32.mrb[0].mxu0
      %v726 = vadd.f32 0.0, %v725
      %v727 = vpop.f32.mrb[0].mxu0
      %v728 = vpop.f32.mrb[0].mxu0
      %v729 = vadd.f32 0.0, %v728
      %v730 = vpop.f32.mrb[0].mxu0
      %731 = vdwg.mxu0
      %v732 = vsel %vm496, %v325, 0
      %v734 = vsel %vm496, %v326, 0
      %v736 = vsel %vm496, %v327, 0
      %v738 = vsel %vm496, %v328, 0
      %v740 = vsel %vm496, %v329, 0
      %v742 = vsel %vm496, %v330, 0
      %v744 = vsel %vm496, %v331, 0
      %v746 = vsel %vm496, %v332, 0
      %v748 = vsel %vm496, %v333, 0
      %v750 = vsel %vm496, %v334, 0
      %v752 = vsel %vm496, %v335, 0
      %v754 = vsel %vm496, %v336, 0
      %v756 = vsel %vm496, %v337, 0
      %v758 = vsel %vm496, %v338, 0
      %v760 = vsel %vm496, %v339, 0
      %v762 = vsel %vm496, %v340, 0
      %v764 = vsel %vm496, %v341, 0
      %v766 = vsel %vm496, %v342, 0
      %v769 = vsel %vm551, %v343, 0
      %771 = vmatprep.subr.bf16.mxu0 0
      %772 = vmatpush1.bf16.msra.mxu0 %v769
      %773 = vmatprep.subr.bf16.mxu0 0
      %774 = vmatpush1.bf16.msra.mxu0 0
      %775 = vmatprep.subr.bf16.mxu0 0
      %776 = vmatpush1.bf16.msra.mxu0 0
      %777 = vmatprep.subr.bf16.mxu0 0
      %778 = vmatpush1.bf16.msra.mxu0 0
      %779 = vmatprep.subr.bf16.mxu0 0
      %780 = vmatpush1.bf16.msra.mxu0 0
      %781 = vmatprep.subr.bf16.mxu0 0
      %782 = vmatpush1.bf16.msra.mxu0 0
      %783 = vmatprep.subr.bf16.mxu0 0
      %784 = vmatpush1.bf16.msra.mxu0 0
      %785 = vmatprep.subr.bf16.mxu0 0
      %786 = vmatpush1.bf16.msra.mxu0 0
      %787 = vmatprep.subr.bf16.mxu0 0
      %788 = vmatpush1.bf16.msra.mxu0 0
      %789 = vmatprep.subr.bf16.mxu0 0
      %790 = vmatpush1.bf16.msra.mxu0 0
      %791 = vmatprep.subr.bf16.mxu0 0
      %792 = vmatpush1.bf16.msra.mxu0 0
      %793 = vmatprep.subr.bf16.mxu0 0
      %794 = vmatpush1.bf16.msra.mxu0 0
      %795 = vmatprep.subr.bf16.mxu0 0
      %796 = vmatpush1.bf16.msra.mxu0 0
      %797 = vmatprep.subr.bf16.mxu0 0
      %798 = vmatpush1.bf16.msra.mxu0 0
      %799 = vmatprep.subr.bf16.mxu0 0
      %800 = vmatpush1.bf16.msra.mxu0 0
      %801 = vmatprep.subr.bf16.mxu0 0
      %802 = vmatpush1.bf16.msra.mxu0 0
      %803 = vmatprep.mubr.bf16.mxu0 0
      %804 = vmatmul.mubr.bf16.gmra.mrb[0].mxu0 %v732
      %v805 = vpop.f32.mrb[0].mxu0
      %v806 = vadd.f32 %v590, %v805
      %v807 = vpop.f32.mrb[0].mxu0
      %v808 = vpop.f32.mrb[0].mxu0
      %v809 = vadd.f32 %v593, %v808
      %v810 = vpop.f32.mrb[0].mxu0
      %811 = vmatprep.mubr.bf16.mxu0 0
      %812 = vmatmul.mubr.bf16.gmra.mrb[0].mxu0 %v734
      %v813 = vpop.f32.mrb[0].mxu0
      %v814 = vadd.f32 %v598, %v813
      %v815 = vpop.f32.mrb[0].mxu0
      %v816 = vpop.f32.mrb[0].mxu0
      %v817 = vadd.f32 %v601, %v816
      %v818 = vpop.f32.mrb[0].mxu0
      %819 = vmatprep.mubr.bf16.mxu0 0
      %820 = vmatmul.mubr.bf16.gmra.mrb[0].mxu0 %v736
      %v821 = vpop.f32.mrb[0].mxu0
      %v822 = vadd.f32 %v606, %v821
      %v823 = vpop.f32.mrb[0].mxu0
      %v824 = vpop.f32.mrb[0].mxu0
      %v825 = vadd.f32 %v609, %v824
      %v826 = vpop.f32.mrb[0].mxu0
      %827 = vmatprep.mubr.bf16.mxu0 0
      %828 = vmatmul.mubr.bf16.gmra.mrb[0].mxu0 %v738
      %v829 = vpop.f32.mrb[0].mxu0
      %v830 = vadd.f32 %v614, %v829
      %v831 = vpop.f32.mrb[0].mxu0
      %v832 = vpop.f32.mrb[0].mxu0
      %v833 = vadd.f32 %v617, %v832
      %v834 = vpop.f32.mrb[0].mxu0
      %835 = vmatprep.mubr.bf16.mxu0 0
      %836 = vmatmul.mubr.bf16.gmra.mrb[0].mxu0 %v740
      %v837 = vpop.f32.mrb[0].mxu0
      %v838 = vadd.f32 %v622, %v837
      %v839 = vpop.f32.mrb[0].mxu0
      %v840 = vpop.f32.mrb[0].mxu0
      %v841 = vadd.f32 %v625, %v840
      %v842 = vpop.f32.mrb[0].mxu0
      %843 = vmatprep.mubr.bf16.mxu0 0
      %844 = vmatmul.mubr.bf16.gmra.mrb[0].mxu0 %v742
      %v845 = vpop.f32.mrb[0].mxu0
      %v846 = vadd.f32 %v630, %v845
      %v847 = vpop.f32.mrb[0].mxu0
      %v848 = vpop.f32.mrb[0].mxu0
      %v849 = vadd.f32 %v633, %v848
      %v850 = vpop.f32.mrb[0].mxu0
      %851 = vmatprep.mubr.bf16.mxu0 0
      %852 = vmatmul.mubr.bf16.gmra.mrb[0].mxu0 %v744
      %v853 = vpop.f32.mrb[0].mxu0
      %v854 = vadd.f32 %v638, %v853
      %v855 = vpop.f32.mrb[0].mxu0
      %v856 = vpop.f32.mrb[0].mxu0
      %v857 = vadd.f32 %v641, %v856
      %v858 = vpop.f32.mrb[0].mxu0
      %859 = vmatprep.mubr.bf16.mxu0 0
      %860 = vmatmul.mubr.bf16.gmra.mrb[0].mxu0 %v746
      %v861 = vpop.f32.mrb[0].mxu0
      %v862 = vadd.f32 %v646, %v861
      %v863 = vpop.f32.mrb[0].mxu0
      %v864 = vpop.f32.mrb[0].mxu0
      %v865 = vadd.f32 %v649, %v864
      %v866 = vpop.f32.mrb[0].mxu0
      %867 = vmatprep.mubr.bf16.mxu0 0
      %868 = vmatmul.mubr.bf16.gmra.mrb[0].mxu0 %v748
      %v869 = vpop.f32.mrb[0].mxu0
      %v870 = vadd.f32 %v654, %v869
      %v871 = vpop.f32.mrb[0].mxu0
      %v872 = vpop.f32.mrb[0].mxu0
      %v873 = vadd.f32 %v657, %v872
      %v874 = vpop.f32.mrb[0].mxu0
      %875 = vmatprep.mubr.bf16.mxu0 0
      %876 = vmatmul.mubr.bf16.gmra.mrb[0].mxu0 %v750
      %v877 = vpop.f32.mrb[0].mxu0
      %v878 = vadd.f32 %v662, %v877
      %v879 = vpop.f32.mrb[0].mxu0
      %v880 = vpop.f32.mrb[0].mxu0
      %v881 = vadd.f32 %v665, %v880
      %v882 = vpop.f32.mrb[0].mxu0
      %883 = vmatprep.mubr.bf16.mxu0 0
      %884 = vmatmul.mubr.bf16.gmra.mrb[0].mxu0 %v752
      %v885 = vpop.f32.mrb[0].mxu0
      %v886 = vadd.f32 %v670, %v885
      %v887 = vpop.f32.mrb[0].mxu0
      %v888 = vpop.f32.mrb[0].mxu0
      %v889 = vadd.f32 %v673, %v888
      %v890 = vpop.f32.mrb[0].mxu0
      %891 = vmatprep.mubr.bf16.mxu0 0
      %892 = vmatmul.mubr.bf16.gmra.mrb[0].mxu0 %v754
      %v893 = vpop.f32.mrb[0].mxu0
      %v894 = vadd.f32 %v678, %v893
      %v895 = vpop.f32.mrb[0].mxu0
      %v896 = vpop.f32.mrb[0].mxu0
      %v897 = vadd.f32 %v681, %v896
      %v898 = vpop.f32.mrb[0].mxu0
      %899 = vmatprep.mubr.bf16.mxu0 0
      %900 = vmatmul.mubr.bf16.gmra.mrb[0].mxu0 %v756
      %v901 = vpop.f32.mrb[0].mxu0
      %v902 = vadd.f32 %v686, %v901
      %v903 = vpop.f32.mrb[0].mxu0
      %v904 = vpop.f32.mrb[0].mxu0
      %v905 = vadd.f32 %v689, %v904
      %v906 = vpop.f32.mrb[0].mxu0
      %907 = vmatprep.mubr.bf16.mxu0 0
      %908 = vmatmul.mubr.bf16.gmra.mrb[0].mxu0 %v758
      %v909 = vpop.f32.mrb[0].mxu0
      %v910 = vadd.f32 %v694, %v909
      %v911 = vpop.f32.mrb[0].mxu0
      %v912 = vpop.f32.mrb[0].mxu0
      %v913 = vadd.f32 %v697, %v912
      %v914 = vpop.f32.mrb[0].mxu0
      %915 = vmatprep.mubr.bf16.mxu0 0
      %916 = vmatmul.mubr.bf16.gmra.mrb[0].mxu0 %v760
      %v917 = vpop.f32.mrb[0].mxu0
      %v918 = vadd.f32 %v702, %v917
      %v919 = vpop.f32.mrb[0].mxu0
      %v920 = vpop.f32.mrb[0].mxu0
      %v921 = vadd.f32 %v705, %v920
      %v922 = vpop.f32.mrb[0].mxu0
      %923 = vmatprep.mubr.bf16.mxu0 0
      %924 = vmatmul.mubr.bf16.gmra.mrb[0].mxu0 %v762
      %v925 = vpop.f32.mrb[0].mxu0
      %v926 = vadd.f32 %v710, %v925
      %v927 = vpop.f32.mrb[0].mxu0
      %v928 = vpop.f32.mrb[0].mxu0
      %v929 = vadd.f32 %v713, %v928
      %v930 = vpop.f32.mrb[0].mxu0
      %931 = vmatprep.mubr.bf16.mxu0 0
      %932 = vmatmul.mubr.bf16.gmra.mrb[0].mxu0 %v764
      %v933 = vpop.f32.mrb[0].mxu0
      %v934 = vadd.f32 %v718, %v933
      %v935 = vpop.f32.mrb[0].mxu0
      %v936 = vpop.f32.mrb[0].mxu0
      %v937 = vadd.f32 %v721, %v936
      %v938 = vpop.f32.mrb[0].mxu0
      %939 = vmatprep.mubr.bf16.mxu0 0
      %940 = vmatmul.mubr.bf16.gmra.mrb[0].mxu0 %v766
      %v941 = vpop.f32.mrb[0].mxu0
      %v942 = vadd.f32 %v726, %v941
      %v943 = vpop.f32.mrb[0].mxu0
      %v944 = vpop.f32.mrb[0].mxu0
      %v945 = vadd.f32 %v729, %v944
      %v946 = vpop.f32.mrb[0].mxu0
      %947 = vdwg.mxu0
      %s948 = scalar_lea.vmem %s1, 8
      %v949 = vld [vmem:[%s948] sm:$0xf]
      %vm969 = vcmask 1046528
      %v970 = vrot.slane %v325, 1
      %v971 = vrot.slane %v326, 1
      %v972 = vsel %vm969, %v970, %v971
      %v973 = vrot.slane %v327, 1
      %v974 = vsel %vm969, %v971, %v973
      %v975 = vrot.slane %v328, 1
      %v976 = vsel %vm969, %v973, %v975
      %v977 = vrot.slane %v329, 1
      %v978 = vsel %vm969, %v975, %v977
      %v979 = vrot.slane %v330, 1
      %v980 = vsel %vm969, %v977, %v979
      %v981 = vrot.slane %v331, 1
      %v982 = vsel %vm969, %v979, %v981
      %v983 = vrot.slane %v332, 1
      %v984 = vsel %vm969, %v981, %v983
      %v985 = vrot.slane %v333, 1
      %v986 = vsel %vm969, %v983, %v985
      %v987 = vrot.slane %v334, 1
      %v988 = vsel %vm969, %v985, %v987
      %v989 = vrot.slane %v335, 1
      %v990 = vsel %vm969, %v987, %v989
      %v991 = vrot.slane %v336, 1
      %v992 = vsel %vm969, %v989, %v991
      %v993 = vrot.slane %v337, 1
      %v994 = vsel %vm969, %v991, %v993
      %v995 = vrot.slane %v338, 1
      %v996 = vsel %vm969, %v993, %v995
      %v997 = vrot.slane %v339, 1
      %v998 = vsel %vm969, %v995, %v997
      %v999 = vrot.slane %v340, 1
      %v1000 = vsel %vm969, %v997, %v999
      %v1001 = vrot.slane %v341, 1
      %v1002 = vsel %vm969, %v999, %v1001
      %v1003 = vrot.slane %v342, 1
      %v1004 = vsel %vm969, %v1001, %v1003
      %v1005 = vrot.slane %v344, 1
      %v1006 = vsel %vm969, %v1003, %v1005
      %v1008 = vsel %vm496, %v972, 0
      %v1011 = vsel %vm496, %v974, 0
      %v1014 = vsel %vm496, %v976, 0
      %v1017 = vsel %vm496, %v978, 0
      %v1020 = vsel %vm496, %v980, 0
      %v1023 = vsel %vm496, %v982, 0
      %v1026 = vsel %vm496, %v984, 0
      %v1029 = vsel %vm496, %v986, 0
      %v1032 = vsel %vm496, %v988, 0
      %v1035 = vsel %vm496, %v990, 0
      %v1038 = vsel %vm496, %v992, 0
      %v1041 = vsel %vm496, %v994, 0
      %v1044 = vsel %vm496, %v996, 0
      %v1047 = vsel %vm496, %v998, 0
      %v1050 = vsel %vm496, %v1000, 0
      %v1053 = vsel %vm496, %v1002, 0
      %v1056 = vsel %vm496, %v1004, 0
      %v1059 = vsel %vm496, %v1006, 0
      %v1062 = vsel %vm551, %v949, 0
      %1064 = vmatprep.subr.bf16.mxu0 0
      %1065 = vmatpush1.bf16.msra.mxu0 %v1062
      %1066 = vmatprep.subr.bf16.mxu0 0
      %1067 = vmatpush1.bf16.msra.mxu0 0
      %1068 = vmatprep.subr.bf16.mxu0 0
      %1069 = vmatpush1.bf16.msra.mxu0 0
      %1070 = vmatprep.subr.bf16.mxu0 0
      %1071 = vmatpush1.bf16.msra.mxu0 0
      %1072 = vmatprep.subr.bf16.mxu0 0
      %1073 = vmatpush1.bf16.msra.mxu0 0
      %1074 = vmatprep.subr.bf16.mxu0 0
      %1075 = vmatpush1.bf16.msra.mxu0 0
      %1076 = vmatprep.subr.bf16.mxu0 0
      %1077 = vmatpush1.bf16.msra.mxu0 0
      %1078 = vmatprep.subr.bf16.mxu0 0
      %1079 = vmatpush1.bf16.msra.mxu0 0
      %1080 = vmatprep.subr.bf16.mxu0 0
      %1081 = vmatpush1.bf16.msra.mxu0 0
      %1082 = vmatprep.subr.bf16.mxu0 0
      %1083 = vmatpush1.bf16.msra.mxu0 0
      %1084 = vmatprep.subr.bf16.mxu0 0
      %1085 = vmatpush1.bf16.msra.mxu0 0
      %1086 = vmatprep.subr.bf16.mxu0 0
      %1087 = vmatpush1.bf16.msra.mxu0 0
      %1088 = vmatprep.subr.bf16.mxu0 0
      %1089 = vmatpush1.bf16.msra.mxu0 0
      %1090 = vmatprep.subr.bf16.mxu0 0
      %1091 = vmatpush1.bf16.msra.mxu0 0
      %1092 = vmatprep.subr.bf16.mxu0 0
      %1093 = vmatpush1.bf16.msra.mxu0 0
      %1094 = vmatprep.subr.bf16.mxu0 0
      %1095 = vmatpush1.bf16.msra.mxu0 0
      %1096 = vmatprep.mubr.bf16.mxu0 0
      %1097 = vmatmul.mubr.bf16.gmra.mrb[0].mxu0 %v1008
      %v1098 = vpop.f32.mrb[0].mxu0
      %v1099 = vadd.f32 0.0, %v1098
      %v1100 = vpop.f32.mrb[0].mxu0
      %v1101 = vpop.f32.mrb[0].mxu0
      %v1102 = vadd.f32 0.0, %v1101
      %v1103 = vpop.f32.mrb[0].mxu0
      %1104 = vmatprep.mubr.bf16.mxu0 0
      %1105 = vmatmul.mubr.bf16.gmra.mrb[0].mxu0 %v1011
      %v1106 = vpop.f32.mrb[0].mxu0
      %v1107 = vadd.f32 0.0, %v1106
      %v1108 = vpop.f32.mrb[0].mxu0
      %v1109 = vpop.f32.mrb[0].mxu0
      %v1110 = vadd.f32 0.0, %v1109
      %v1111 = vpop.f32.mrb[0].mxu0
      %1112 = vmatprep.mubr.bf16.mxu0 0
      %1113 = vmatmul.mubr.bf16.gmra.mrb[0].mxu0 %v1014
      %v1114 = vpop.f32.mrb[0].mxu0
      %v1115 = vadd.f32 0.0, %v1114
      %v1116 = vpop.f32.mrb[0].mxu0
      %v1117 = vpop.f32.mrb[0].mxu0
      %v1118 = vadd.f32 0.0, %v1117
      %v1119 = vpop.f32.mrb[0].mxu0
      %1120 = vmatprep.mubr.bf16.mxu0 0
      %1121 = vmatmul.mubr.bf16.gmra.mrb[0].mxu0 %v1017
      %v1122 = vpop.f32.mrb[0].mxu0
      %v1123 = vadd.f32 0.0, %v1122
      %v1124 = vpop.f32.mrb[0].mxu0
      %v1125 = vpop.f32.mrb[0].mxu0
      %v1126 = vadd.f32 0.0, %v1125
      %v1127 = vpop.f32.mrb[0].mxu0
      %1128 = vmatprep.mubr.bf16.mxu0 0
      %1129 = vmatmul.mubr.bf16.gmra.mrb[0].mxu0 %v1020
      %v1130 = vpop.f32.mrb[0].mxu0
      %v1131 = vadd.f32 0.0, %v1130
      %v1132 = vpop.f32.mrb[0].mxu0
      %v1133 = vpop.f32.mrb[0].mxu0
      %v1134 = vadd.f32 0.0, %v1133
      %v1135 = vpop.f32.mrb[0].mxu0
      %1136 = vmatprep.mubr.bf16.mxu0 0
      %1137 = vmatmul.mubr.bf16.gmra.mrb[0].mxu0 %v1023
      %v1138 = vpop.f32.mrb[0].mxu0
      %v1139 = vadd.f32 0.0, %v1138
      %v1140 = vpop.f32.mrb[0].mxu0
      %v1141 = vpop.f32.mrb[0].mxu0
      %v1142 = vadd.f32 0.0, %v1141
      %v1143 = vpop.f32.mrb[0].mxu0
      %1144 = vmatprep.mubr.bf16.mxu0 0
      %1145 = vmatmul.mubr.bf16.gmra.mrb[0].mxu0 %v1026
      %v1146 = vpop.f32.mrb[0].mxu0
      %v1147 = vadd.f32 0.0, %v1146
      %v1148 = vpop.f32.mrb[0].mxu0
      %v1149 = vpop.f32.mrb[0].mxu0
      %v1150 = vadd.f32 0.0, %v1149
      %v1151 = vpop.f32.mrb[0].mxu0
      %1152 = vmatprep.mubr.bf16.mxu0 0
      %1153 = vmatmul.mubr.bf16.gmra.mrb[0].mxu0 %v1029
      %v1154 = vpop.f32.mrb[0].mxu0
      %v1155 = vadd.f32 0.0, %v1154
      %v1156 = vpop.f32.mrb[0].mxu0
      %v1157 = vpop.f32.mrb[0].mxu0
      %v1158 = vadd.f32 0.0, %v1157
      %v1159 = vpop.f32.mrb[0].mxu0
      %1160 = vmatprep.mubr.bf16.mxu0 0
      %1161 = vmatmul.mubr.bf16.gmra.mrb[0].mxu0 %v1032
      %v1162 = vpop.f32.mrb[0].mxu0
      %v1163 = vadd.f32 0.0, %v1162
      %v1164 = vpop.f32.mrb[0].mxu0
      %v1165 = vpop.f32.mrb[0].mxu0
      %v1166 = vadd.f32 0.0, %v1165
      %v1167 = vpop.f32.mrb[0].mxu0
      %1168 = vmatprep.mubr.bf16.mxu0 0
      %1169 = vmatmul.mubr.bf16.gmra.mrb[0].mxu0 %v1035
      %v1170 = vpop.f32.mrb[0].mxu0
      %v1171 = vadd.f32 0.0, %v1170
      %v1172 = vpop.f32.mrb[0].mxu0
      %v1173 = vpop.f32.mrb[0].mxu0
      %v1174 = vadd.f32 0.0, %v1173
      %v1175 = vpop.f32.mrb[0].mxu0
      %1176 = vmatprep.mubr.bf16.mxu0 0
      %1177 = vmatmul.mubr.bf16.gmra.mrb[0].mxu0 %v1038
      %v1178 = vpop.f32.mrb[0].mxu0
      %v1179 = vadd.f32 0.0, %v1178
      %v1180 = vpop.f32.mrb[0].mxu0
      %v1181 = vpop.f32.mrb[0].mxu0
      %v1182 = vadd.f32 0.0, %v1181
      %v1183 = vpop.f32.mrb[0].mxu0
      %1184 = vmatprep.mubr.bf16.mxu0 0
      %1185 = vmatmul.mubr.bf16.gmra.mrb[0].mxu0 %v1041
      %v1186 = vpop.f32.mrb[0].mxu0
      %v1187 = vadd.f32 0.0, %v1186
      %v1188 = vpop.f32.mrb[0].mxu0
      %v1189 = vpop.f32.mrb[0].mxu0
      %v1190 = vadd.f32 0.0, %v1189
      %v1191 = vpop.f32.mrb[0].mxu0
      %1192 = vmatprep.mubr.bf16.mxu0 0
      %1193 = vmatmul.mubr.bf16.gmra.mrb[0].mxu0 %v1044
      %v1194 = vpop.f32.mrb[0].mxu0
      %v1195 = vadd.f32 0.0, %v1194
      %v1196 = vpop.f32.mrb[0].mxu0
      %v1197 = vpop.f32.mrb[0].mxu0
      %v1198 = vadd.f32 0.0, %v1197
      %v1199 = vpop.f32.mrb[0].mxu0
      %1200 = vmatprep.mubr.bf16.mxu0 0
      %1201 = vmatmul.mubr.bf16.gmra.mrb[0].mxu0 %v1047
      %v1202 = vpop.f32.mrb[0].mxu0
      %v1203 = vadd.f32 0.0, %v1202
      %v1204 = vpop.f32.mrb[0].mxu0
      %v1205 = vpop.f32.mrb[0].mxu0
      %v1206 = vadd.f32 0.0, %v1205
      %v1207 = vpop.f32.mrb[0].mxu0
      %1208 = vmatprep.mubr.bf16.mxu0 0
      %1209 = vmatmul.mubr.bf16.gmra.mrb[0].mxu0 %v1050
      %v1210 = vpop.f32.mrb[0].mxu0
      %v1211 = vadd.f32 0.0, %v1210
      %v1212 = vpop.f32.mrb[0].mxu0
      %v1213 = vpop.f32.mrb[0].mxu0
      %v1214 = vadd.f32 0.0, %v1213
      %v1215 = vpop.f32.mrb[0].mxu0
      %1216 = vmatprep.mubr.bf16.mxu0 0
      %1217 = vmatmul.mubr.bf16.gmra.mrb[0].mxu0 %v1053
      %v1218 = vpop.f32.mrb[0].mxu0
      %v1219 = vadd.f32 0.0, %v1218
      %v1220 = vpop.f32.mrb[0].mxu0
      %v1221 = vpop.f32.mrb[0].mxu0
      %v1222 = vadd.f32 0.0, %v1221
      %v1223 = vpop.f32.mrb[0].mxu0
      %1224 = vmatprep.mubr.bf16.mxu0 0
      %1225 = vmatmul.mubr.bf16.gmra.mrb[0].mxu0 %v1056
      %v1226 = vpop.f32.mrb[0].mxu0
      %v1227 = vadd.f32 0.0, %v1226
      %v1228 = vpop.f32.mrb[0].mxu0
      %v1229 = vpop.f32.mrb[0].mxu0
      %v1230 = vadd.f32 0.0, %v1229
      %v1231 = vpop.f32.mrb[0].mxu0
      %1232 = vmatprep.mubr.bf16.mxu0 0
      %1233 = vmatmul.mubr.bf16.gmra.mrb[0].mxu0 %v1059
      %v1234 = vpop.f32.mrb[0].mxu0
      %v1235 = vadd.f32 0.0, %v1234
      %v1236 = vpop.f32.mrb[0].mxu0
      %v1237 = vpop.f32.mrb[0].mxu0
      %v1238 = vadd.f32 0.0, %v1237
      %v1239 = vpop.f32.mrb[0].mxu0
      %1240 = vdwg.mxu0
      %v1241 = vadd.f32 %v806, %v1099
      %v1242 = vadd.f32 %v809, %v1102
      %v1243 = vadd.f32 %v814, %v1107
      %v1244 = vadd.f32 %v817, %v1110
      %v1245 = vadd.f32 %v822, %v1115
      %v1246 = vadd.f32 %v825, %v1118
      %v1247 = vadd.f32 %v830, %v1123
      %v1248 = vadd.f32 %v833, %v1126
      %v1249 = vadd.f32 %v838, %v1131
      %v1250 = vadd.f32 %v841, %v1134
      %v1251 = vadd.f32 %v846, %v1139
      %v1252 = vadd.f32 %v849, %v1142
      %v1253 = vadd.f32 %v854, %v1147
      %v1254 = vadd.f32 %v857, %v1150
      %v1255 = vadd.f32 %v862, %v1155
      %v1256 = vadd.f32 %v865, %v1158
      %v1257 = vadd.f32 %v870, %v1163
      %v1258 = vadd.f32 %v873, %v1166
      %v1259 = vadd.f32 %v878, %v1171
      %v1260 = vadd.f32 %v881, %v1174
      %v1261 = vadd.f32 %v886, %v1179
      %v1262 = vadd.f32 %v889, %v1182
      %v1263 = vadd.f32 %v894, %v1187
      %v1264 = vadd.f32 %v897, %v1190
      %v1265 = vadd.f32 %v902, %v1195
      %v1266 = vadd.f32 %v905, %v1198
      %v1267 = vadd.f32 %v910, %v1203
      %v1268 = vadd.f32 %v913, %v1206
      %v1269 = vadd.f32 %v918, %v1211
      %v1270 = vadd.f32 %v921, %v1214
      %v1271 = vadd.f32 %v926, %v1219
      %v1272 = vadd.f32 %v929, %v1222
      %v1273 = vadd.f32 %v934, %v1227
      %v1274 = vadd.f32 %v937, %v1230
      %v1275 = vadd.f32 %v942, %v1235
      %v1276 = vadd.f32 %v945, %v1238
      %v1277 = vpack.c.bf16 %v321, %v320
      %v1278 = vpack.c.bf16 %v322, %v322
      %s1279 = scalar_lea.vmem %s1, 12
      %v1280 = vld [vmem:[%s1279] sm:$0xf]
      %v1283 = vrot.slane %v1277, 1
      %v1284 = vsel %vm969, %v1003, %v1283
      %v1285 = vrot.slane %v1278, 1
      %v1286 = vsel %vm969, %v1283, %v1285
      %v1288 = vsel %vm496, %v1284, 0
      %v1291 = vsel %vm496, %v1286, 0
      %v1294 = vsel %vm551, %v1280, 0
      %1296 = vmatprep.subr.bf16.mxu0 0
      %1297 = vmatpush1.bf16.msra.mxu0 %v1294
      %1298 = vmatprep.subr.bf16.mxu0 0
      %1299 = vmatpush1.bf16.msra.mxu0 0
      %1300 = vmatprep.subr.bf16.mxu0 0
      %1301 = vmatpush1.bf16.msra.mxu0 0
      %1302 = vmatprep.subr.bf16.mxu0 0
      %1303 = vmatpush1.bf16.msra.mxu0 0
      %1304 = vmatprep.subr.bf16.mxu0 0
      %1305 = vmatpush1.bf16.msra.mxu0 0
      %1306 = vmatprep.subr.bf16.mxu0 0
      %1307 = vmatpush1.bf16.msra.mxu0 0
      %1308 = vmatprep.subr.bf16.mxu0 0
      %1309 = vmatpush1.bf16.msra.mxu0 0
      %1310 = vmatprep.subr.bf16.mxu0 0
      %1311 = vmatpush1.bf16.msra.mxu0 0
      %1312 = vmatprep.subr.bf16.mxu0 0
      %1313 = vmatpush1.bf16.msra.mxu0 0
      %1314 = vmatprep.subr.bf16.mxu0 0
      %1315 = vmatpush1.bf16.msra.mxu0 0
      %1316 = vmatprep.subr.bf16.mxu0 0
      %1317 = vmatpush1.bf16.msra.mxu0 0
      %1318 = vmatprep.subr.bf16.mxu0 0
      %1319 = vmatpush1.bf16.msra.mxu0 0
      %1320 = vmatprep.subr.bf16.mxu0 0
      %1321 = vmatpush1.bf16.msra.mxu0 0
      %1322 = vmatprep.subr.bf16.mxu0 0
      %1323 = vmatpush1.bf16.msra.mxu0 0
      %1324 = vmatprep.subr.bf16.mxu0 0
      %1325 = vmatpush1.bf16.msra.mxu0 0
      %1326 = vmatprep.subr.bf16.mxu0 0
      %1327 = vmatpush1.bf16.msra.mxu0 0
      %1328 = vmatprep.mubr.bf16.mxu0 0
      %1329 = vmatmul.mubr.bf16.gmra.mrb[0].mxu0 %v1011
      %v1330 = vpop.f32.mrb[0].mxu0
      %v1331 = vadd.f32 0.0, %v1330
      %v1332 = vpop.f32.mrb[0].mxu0
      %v1333 = vpop.f32.mrb[0].mxu0
      %v1334 = vadd.f32 0.0, %v1333
      %v1335 = vpop.f32.mrb[0].mxu0
      %1336 = vmatprep.mubr.bf16.mxu0 0
      %1337 = vmatmul.mubr.bf16.gmra.mrb[0].mxu0 %v1014
      %v1338 = vpop.f32.mrb[0].mxu0
      %v1339 = vadd.f32 0.0, %v1338
      %v1340 = vpop.f32.mrb[0].mxu0
      %v1341 = vpop.f32.mrb[0].mxu0
      %v1342 = vadd.f32 0.0, %v1341
      %v1343 = vpop.f32.mrb[0].mxu0
      %1344 = vmatprep.mubr.bf16.mxu0 0
      %1345 = vmatmul.mubr.bf16.gmra.mrb[0].mxu0 %v1017
      %v1346 = vpop.f32.mrb[0].mxu0
      %v1347 = vadd.f32 0.0, %v1346
      %v1348 = vpop.f32.mrb[0].mxu0
      %v1349 = vpop.f32.mrb[0].mxu0
      %v1350 = vadd.f32 0.0, %v1349
      %v1351 = vpop.f32.mrb[0].mxu0
      %1352 = vmatprep.mubr.bf16.mxu0 0
      %1353 = vmatmul.mubr.bf16.gmra.mrb[0].mxu0 %v1020
      %v1354 = vpop.f32.mrb[0].mxu0
      %v1355 = vadd.f32 0.0, %v1354
      %v1356 = vpop.f32.mrb[0].mxu0
      %v1357 = vpop.f32.mrb[0].mxu0
      %v1358 = vadd.f32 0.0, %v1357
      %v1359 = vpop.f32.mrb[0].mxu0
      %1360 = vmatprep.mubr.bf16.mxu0 0
      %1361 = vmatmul.mubr.bf16.gmra.mrb[0].mxu0 %v1023
      %v1362 = vpop.f32.mrb[0].mxu0
      %v1363 = vadd.f32 0.0, %v1362
      %v1364 = vpop.f32.mrb[0].mxu0
      %v1365 = vpop.f32.mrb[0].mxu0
      %v1366 = vadd.f32 0.0, %v1365
      %v1367 = vpop.f32.mrb[0].mxu0
      %1368 = vmatprep.mubr.bf16.mxu0 0
      %1369 = vmatmul.mubr.bf16.gmra.mrb[0].mxu0 %v1026
      %v1370 = vpop.f32.mrb[0].mxu0
      %v1371 = vadd.f32 0.0, %v1370
      %v1372 = vpop.f32.mrb[0].mxu0
      %v1373 = vpop.f32.mrb[0].mxu0
      %v1374 = vadd.f32 0.0, %v1373
      %v1375 = vpop.f32.mrb[0].mxu0
      %1376 = vmatprep.mubr.bf16.mxu0 0
      %1377 = vmatmul.mubr.bf16.gmra.mrb[0].mxu0 %v1029
      %v1378 = vpop.f32.mrb[0].mxu0
      %v1379 = vadd.f32 0.0, %v1378
      %v1380 = vpop.f32.mrb[0].mxu0
      %v1381 = vpop.f32.mrb[0].mxu0
      %v1382 = vadd.f32 0.0, %v1381
      %v1383 = vpop.f32.mrb[0].mxu0
      %1384 = vmatprep.mubr.bf16.mxu0 0
      %1385 = vmatmul.mubr.bf16.gmra.mrb[0].mxu0 %v1032
      %v1386 = vpop.f32.mrb[0].mxu0
      %v1387 = vadd.f32 0.0, %v1386
      %v1388 = vpop.f32.mrb[0].mxu0
      %v1389 = vpop.f32.mrb[0].mxu0
      %v1390 = vadd.f32 0.0, %v1389
      %v1391 = vpop.f32.mrb[0].mxu0
      %1392 = vmatprep.mubr.bf16.mxu0 0
      %1393 = vmatmul.mubr.bf16.gmra.mrb[0].mxu0 %v1035
      %v1394 = vpop.f32.mrb[0].mxu0
      %v1395 = vadd.f32 0.0, %v1394
      %v1396 = vpop.f32.mrb[0].mxu0
      %v1397 = vpop.f32.mrb[0].mxu0
      %v1398 = vadd.f32 0.0, %v1397
      %v1399 = vpop.f32.mrb[0].mxu0
      %1400 = vmatprep.mubr.bf16.mxu0 0
      %1401 = vmatmul.mubr.bf16.gmra.mrb[0].mxu0 %v1038
      %v1402 = vpop.f32.mrb[0].mxu0
      %v1403 = vadd.f32 0.0, %v1402
      %v1404 = vpop.f32.mrb[0].mxu0
      %v1405 = vpop.f32.mrb[0].mxu0
      %v1406 = vadd.f32 0.0, %v1405
      %v1407 = vpop.f32.mrb[0].mxu0
      %1408 = vmatprep.mubr.bf16.mxu0 0
      %1409 = vmatmul.mubr.bf16.gmra.mrb[0].mxu0 %v1041
      %v1410 = vpop.f32.mrb[0].mxu0
      %v1411 = vadd.f32 0.0, %v1410
      %v1412 = vpop.f32.mrb[0].mxu0
      %v1413 = vpop.f32.mrb[0].mxu0
      %v1414 = vadd.f32 0.0, %v1413
      %v1415 = vpop.f32.mrb[0].mxu0
      %1416 = vmatprep.mubr.bf16.mxu0 0
      %1417 = vmatmul.mubr.bf16.gmra.mrb[0].mxu0 %v1044
      %v1418 = vpop.f32.mrb[0].mxu0
      %v1419 = vadd.f32 0.0, %v1418
      %v1420 = vpop.f32.mrb[0].mxu0
      %v1421 = vpop.f32.mrb[0].mxu0
      %v1422 = vadd.f32 0.0, %v1421
      %v1423 = vpop.f32.mrb[0].mxu0
      %1424 = vmatprep.mubr.bf16.mxu0 0
      %1425 = vmatmul.mubr.bf16.gmra.mrb[0].mxu0 %v1047
      %v1426 = vpop.f32.mrb[0].mxu0
      %v1427 = vadd.f32 0.0, %v1426
      %v1428 = vpop.f32.mrb[0].mxu0
      %v1429 = vpop.f32.mrb[0].mxu0
      %v1430 = vadd.f32 0.0, %v1429
      %v1431 = vpop.f32.mrb[0].mxu0
      %1432 = vmatprep.mubr.bf16.mxu0 0
      %1433 = vmatmul.mubr.bf16.gmra.mrb[0].mxu0 %v1050
      %v1434 = vpop.f32.mrb[0].mxu0
      %v1435 = vadd.f32 0.0, %v1434
      %v1436 = vpop.f32.mrb[0].mxu0
      %v1437 = vpop.f32.mrb[0].mxu0
      %v1438 = vadd.f32 0.0, %v1437
      %v1439 = vpop.f32.mrb[0].mxu0
      %1440 = vmatprep.mubr.bf16.mxu0 0
      %1441 = vmatmul.mubr.bf16.gmra.mrb[0].mxu0 %v1053
      %v1442 = vpop.f32.mrb[0].mxu0
      %v1443 = vadd.f32 0.0, %v1442
      %v1444 = vpop.f32.mrb[0].mxu0
      %v1445 = vpop.f32.mrb[0].mxu0
      %v1446 = vadd.f32 0.0, %v1445
      %v1447 = vpop.f32.mrb[0].mxu0
      %1448 = vmatprep.mubr.bf16.mxu0 0
      %1449 = vmatmul.mubr.bf16.gmra.mrb[0].mxu0 %v1056
      %v1450 = vpop.f32.mrb[0].mxu0
      %v1451 = vadd.f32 0.0, %v1450
      %v1452 = vpop.f32.mrb[0].mxu0
      %v1453 = vpop.f32.mrb[0].mxu0
      %v1454 = vadd.f32 0.0, %v1453
      %v1455 = vpop.f32.mrb[0].mxu0
      %1456 = vmatprep.mubr.bf16.mxu0 0
      %1457 = vmatmul.mubr.bf16.gmra.mrb[0].mxu0 %v1288
      %v1458 = vpop.f32.mrb[0].mxu0
      %v1459 = vadd.f32 0.0, %v1458
      %v1460 = vpop.f32.mrb[0].mxu0
      %v1461 = vpop.f32.mrb[0].mxu0
      %v1462 = vadd.f32 0.0, %v1461
      %v1463 = vpop.f32.mrb[0].mxu0
      %1464 = vmatprep.mubr.bf16.mxu0 0
      %1465 = vmatmul.mubr.bf16.gmra.mrb[0].mxu0 %v1291
      %v1466 = vpop.f32.mrb[0].mxu0
      %v1467 = vadd.f32 0.0, %v1466
      %v1468 = vpop.f32.mrb[0].mxu0
      %v1469 = vpop.f32.mrb[0].mxu0
      %v1470 = vadd.f32 0.0, %v1469
      %v1471 = vpop.f32.mrb[0].mxu0
      %1472 = vdwg.mxu0
      %v1473 = vadd.f32 %v1241, %v1331
      %v1474 = vadd.f32 %v1242, %v1334
      %v1475 = vadd.f32 %v1243, %v1339
      %v1476 = vadd.f32 %v1244, %v1342
      %v1477 = vadd.f32 %v1245, %v1347
      %v1478 = vadd.f32 %v1246, %v1350
      %v1479 = vadd.f32 %v1247, %v1355
      %v1480 = vadd.f32 %v1248, %v1358
      %v1481 = vadd.f32 %v1249, %v1363
      %v1482 = vadd.f32 %v1250, %v1366
      %v1483 = vadd.f32 %v1251, %v1371
      %v1484 = vadd.f32 %v1252, %v1374
      %v1485 = vadd.f32 %v1253, %v1379
      %v1486 = vadd.f32 %v1254, %v1382
      %v1487 = vadd.f32 %v1255, %v1387
      %v1488 = vadd.f32 %v1256, %v1390
      %v1489 = vadd.f32 %v1257, %v1395
      %v1490 = vadd.f32 %v1258, %v1398
      %v1491 = vadd.f32 %v1259, %v1403
      %v1492 = vadd.f32 %v1260, %v1406
      %v1493 = vadd.f32 %v1261, %v1411
      %v1494 = vadd.f32 %v1262, %v1414
      %v1495 = vadd.f32 %v1263, %v1419
      %v1496 = vadd.f32 %v1264, %v1422
      %v1497 = vadd.f32 %v1265, %v1427
      %v1498 = vadd.f32 %v1266, %v1430
      %v1499 = vadd.f32 %v1267, %v1435
      %v1500 = vadd.f32 %v1268, %v1438
      %v1501 = vadd.f32 %v1269, %v1443
      %v1502 = vadd.f32 %v1270, %v1446
      %v1503 = vadd.f32 %v1271, %v1451
      %v1504 = vadd.f32 %v1272, %v1454
      %v1505 = vadd.f32 %v1273, %v1459
      %v1506 = vadd.f32 %v1274, %v1462
      %v1507 = vadd.f32 %v1275, %v1467
      %v1508 = vadd.f32 %v1276, %v1470
      %s1509 = scalar_lea.vmem %s1, 16
      %v1510 = vld [vmem:[%s1509] sm:$0xf]
      %vm1511 = vsmask.f32 6400
      %v1512 = vrot.slane %v360, 1
      %v1513 = vrot.slane %v356, 2
      %v1514 = vor.u32 %v1512, %v1513
      %v1515 = vrot.slane %v368, 1
      %v1516 = vrot.slane %v364, 2
      %v1517 = vor.u32 %v1515, %v1516
      %v1518 = vsel %vm1511, %v1514, %v1517
      %v1519 = vrot.slane %v376, 1
      %v1520 = vrot.slane %v372, 2
      %v1521 = vor.u32 %v1519, %v1520
      %v1522 = vsel %vm1511, %v1517, %v1521
      %v1523 = vrot.slane %v384, 1
      %v1524 = vrot.slane %v380, 2
      %v1525 = vor.u32 %v1523, %v1524
      %v1526 = vsel %vm1511, %v1521, %v1525
      %v1527 = vrot.slane %v392, 1
      %v1528 = vrot.slane %v388, 2
      %v1529 = vor.u32 %v1527, %v1528
      %v1530 = vsel %vm1511, %v1525, %v1529
      %v1531 = vrot.slane %v400, 1
      %v1532 = vrot.slane %v396, 2
      %v1533 = vor.u32 %v1531, %v1532
      %v1534 = vsel %vm1511, %v1529, %v1533
      %v1535 = vrot.slane %v408, 1
      %v1536 = vrot.slane %v404, 2
      %v1537 = vor.u32 %v1535, %v1536
      %v1538 = vsel %vm1511, %v1533, %v1537
      %v1539 = vrot.slane %v416, 1
      %v1540 = vrot.slane %v412, 2
      %v1541 = vor.u32 %v1539, %v1540
      %v1542 = vsel %vm1511, %v1537, %v1541
      %v1543 = vrot.slane %v424, 1
      %v1544 = vrot.slane %v420, 2
      %v1545 = vor.u32 %v1543, %v1544
      %v1546 = vsel %vm1511, %v1541, %v1545
      %v1547 = vrot.slane %v432, 1
      %v1548 = vrot.slane %v428, 2
      %v1549 = vor.u32 %v1547, %v1548
      %v1550 = vsel %vm1511, %v1545, %v1549
      %v1551 = vrot.slane %v440, 1
      %v1552 = vrot.slane %v436, 2
      %v1553 = vor.u32 %v1551, %v1552
      %v1554 = vsel %vm1511, %v1549, %v1553
      %v1555 = vrot.slane %v448, 1
      %v1556 = vrot.slane %v444, 2
      %v1557 = vor.u32 %v1555, %v1556
      %v1558 = vsel %vm1511, %v1553, %v1557
      %v1559 = vrot.slane %v456, 1
      %v1560 = vrot.slane %v452, 2
      %v1561 = vor.u32 %v1559, %v1560
      %v1562 = vsel %vm1511, %v1557, %v1561
      %v1563 = vrot.slane %v464, 1
      %v1564 = vrot.slane %v460, 2
      %v1565 = vor.u32 %v1563, %v1564
      %v1566 = vsel %vm1511, %v1561, %v1565
      %v1567 = vrot.slane %v472, 1
      %v1568 = vrot.slane %v468, 2
      %v1569 = vor.u32 %v1567, %v1568
      %v1570 = vsel %vm1511, %v1565, %v1569
      %v1571 = vrot.slane %v480, 1
      %v1572 = vrot.slane %v476, 2
      %v1573 = vor.u32 %v1571, %v1572
      %v1574 = vsel %vm1511, %v1569, %v1573
      %v1575 = vrot.slane %v488, 1
      %v1576 = vrot.slane %v484, 2
      %v1577 = vor.u32 %v1575, %v1576
      %v1578 = vsel %vm1511, %v1573, %v1577
      %v1580 = vshrl.u32 %v1277, 16
      %v1582 = vrot.slane %v1580, 1
      %v1583 = vshll.u32 %v1277, 16
      %v1585 = vrot.slane %v1583, 2
      %v1586 = vor.u32 %v1582, %v1585
      %v1587 = vsel %vm1511, %v1577, %v1586
      %v1589 = vshrl.u32 %v1278, 16
      %v1591 = vrot.slane %v1589, 1
      %v1592 = vshll.u32 %v1278, 16
      %v1594 = vrot.slane %v1592, 2
      %v1595 = vor.u32 %v1591, %v1594
      %v1596 = vsel %vm1511, %v1586, %v1595
      %v1598 = vsel %vm496, %v1518, 0
      %v1601 = vsel %vm496, %v1522, 0
      %v1604 = vsel %vm496, %v1526, 0
      %v1607 = vsel %vm496, %v1530, 0
      %v1610 = vsel %vm496, %v1534, 0
      %v1613 = vsel %vm496, %v1538, 0
      %v1616 = vsel %vm496, %v1542, 0
      %v1619 = vsel %vm496, %v1546, 0
      %v1622 = vsel %vm496, %v1550, 0
      %v1625 = vsel %vm496, %v1554, 0
      %v1628 = vsel %vm496, %v1558, 0
      %v1631 = vsel %vm496, %v1562, 0
      %v1634 = vsel %vm496, %v1566, 0
      %v1637 = vsel %vm496, %v1570, 0
      %v1640 = vsel %vm496, %v1574, 0
      %v1643 = vsel %vm496, %v1578, 0
      %v1646 = vsel %vm496, %v1587, 0
      %v1649 = vsel %vm496, %v1596, 0
      %v1652 = vsel %vm551, %v1510, 0
      %1654 = vmatprep.subr.bf16.mxu0 0
      %1655 = vmatpush1.bf16.msra.mxu0 %v1652
      %1656 = vmatprep.subr.bf16.mxu0 0
      %1657 = vmatpush1.bf16.msra.mxu0 0
      %1658 = vmatprep.subr.bf16.mxu0 0
      %1659 = vmatpush1.bf16.msra.mxu0 0
      %1660 = vmatprep.subr.bf16.mxu0 0
      %1661 = vmatpush1.bf16.msra.mxu0 0
      %1662 = vmatprep.subr.bf16.mxu0 0
      %1663 = vmatpush1.bf16.msra.mxu0 0
      %1664 = vmatprep.subr.bf16.mxu0 0
      %1665 = vmatpush1.bf16.msra.mxu0 0
      %1666 = vmatprep.subr.bf16.mxu0 0
      %1667 = vmatpush1.bf16.msra.mxu0 0
      %1668 = vmatprep.subr.bf16.mxu0 0
      %1669 = vmatpush1.bf16.msra.mxu0 0
      %1670 = vmatprep.subr.bf16.mxu0 0
      %1671 = vmatpush1.bf16.msra.mxu0 0
      %1672 = vmatprep.subr.bf16.mxu0 0
      %1673 = vmatpush1.bf16.msra.mxu0 0
      %1674 = vmatprep.subr.bf16.mxu0 0
      %1675 = vmatpush1.bf16.msra.mxu0 0
      %1676 = vmatprep.subr.bf16.mxu0 0
      %1677 = vmatpush1.bf16.msra.mxu0 0
      %1678 = vmatprep.subr.bf16.mxu0 0
      %1679 = vmatpush1.bf16.msra.mxu0 0
      %1680 = vmatprep.subr.bf16.mxu0 0
      %1681 = vmatpush1.bf16.msra.mxu0 0
      %1682 = vmatprep.subr.bf16.mxu0 0
      %1683 = vmatpush1.bf16.msra.mxu0 0
      %1684 = vmatprep.subr.bf16.mxu0 0
      %1685 = vmatpush1.bf16.msra.mxu0 0
      %1686 = vmatprep.mubr.bf16.mxu0 0
      %1687 = vmatmul.mubr.bf16.gmra.mrb[0].mxu0 %v1598
      %v1688 = vpop.f32.mrb[0].mxu0
      %v1689 = vadd.f32 0.0, %v1688
      %v1690 = vpop.f32.mrb[0].mxu0
      %v1691 = vpop.f32.mrb[0].mxu0
      %v1692 = vadd.f32 0.0, %v1691
      %v1693 = vpop.f32.mrb[0].mxu0
      %1694 = vmatprep.mubr.bf16.mxu0 0
      %1695 = vmatmul.mubr.bf16.gmra.mrb[0].mxu0 %v1601
      %v1696 = vpop.f32.mrb[0].mxu0
      %v1697 = vadd.f32 0.0, %v1696
      %v1698 = vpop.f32.mrb[0].mxu0
      %v1699 = vpop.f32.mrb[0].mxu0
      %v1700 = vadd.f32 0.0, %v1699
      %v1701 = vpop.f32.mrb[0].mxu0
      %1702 = vmatprep.mubr.bf16.mxu0 0
      %1703 = vmatmul.mubr.bf16.gmra.mrb[0].mxu0 %v1604
      %v1704 = vpop.f32.mrb[0].mxu0
      %v1705 = vadd.f32 0.0, %v1704
      %v1706 = vpop.f32.mrb[0].mxu0
      %v1707 = vpop.f32.mrb[0].mxu0
      %v1708 = vadd.f32 0.0, %v1707
      %v1709 = vpop.f32.mrb[0].mxu0
      %1710 = vmatprep.mubr.bf16.mxu0 0
      %1711 = vmatmul.mubr.bf16.gmra.mrb[0].mxu0 %v1607
      %v1712 = vpop.f32.mrb[0].mxu0
      %v1713 = vadd.f32 0.0, %v1712
      %v1714 = vpop.f32.mrb[0].mxu0
      %v1715 = vpop.f32.mrb[0].mxu0
      %v1716 = vadd.f32 0.0, %v1715
      %v1717 = vpop.f32.mrb[0].mxu0
      %1718 = vmatprep.mubr.bf16.mxu0 0
      %1719 = vmatmul.mubr.bf16.gmra.mrb[0].mxu0 %v1610
      %v1720 = vpop.f32.mrb[0].mxu0
      %v1721 = vadd.f32 0.0, %v1720
      %v1722 = vpop.f32.mrb[0].mxu0
      %v1723 = vpop.f32.mrb[0].mxu0
      %v1724 = vadd.f32 0.0, %v1723
      %v1725 = vpop.f32.mrb[0].mxu0
      %1726 = vmatprep.mubr.bf16.mxu0 0
      %1727 = vmatmul.mubr.bf16.gmra.mrb[0].mxu0 %v1613
      %v1728 = vpop.f32.mrb[0].mxu0
      %v1729 = vadd.f32 0.0, %v1728
      %v1730 = vpop.f32.mrb[0].mxu0
      %v1731 = vpop.f32.mrb[0].mxu0
      %v1732 = vadd.f32 0.0, %v1731
      %v1733 = vpop.f32.mrb[0].mxu0
      %1734 = vmatprep.mubr.bf16.mxu0 0
      %1735 = vmatmul.mubr.bf16.gmra.mrb[0].mxu0 %v1616
      %v1736 = vpop.f32.mrb[0].mxu0
      %v1737 = vadd.f32 0.0, %v1736
      %v1738 = vpop.f32.mrb[0].mxu0
      %v1739 = vpop.f32.mrb[0].mxu0
      %v1740 = vadd.f32 0.0, %v1739
      %v1741 = vpop.f32.mrb[0].mxu0
      %1742 = vmatprep.mubr.bf16.mxu0 0
      %1743 = vmatmul.mubr.bf16.gmra.mrb[0].mxu0 %v1619
      %v1744 = vpop.f32.mrb[0].mxu0
      %v1745 = vadd.f32 0.0, %v1744
      %v1746 = vpop.f32.mrb[0].mxu0
      %v1747 = vpop.f32.mrb[0].mxu0
      %v1748 = vadd.f32 0.0, %v1747
      %v1749 = vpop.f32.mrb[0].mxu0
      %1750 = vmatprep.mubr.bf16.mxu0 0
      %1751 = vmatmul.mubr.bf16.gmra.mrb[0].mxu0 %v1622
      %v1752 = vpop.f32.mrb[0].mxu0
      %v1753 = vadd.f32 0.0, %v1752
      %v1754 = vpop.f32.mrb[0].mxu0
      %v1755 = vpop.f32.mrb[0].mxu0
      %v1756 = vadd.f32 0.0, %v1755
      %v1757 = vpop.f32.mrb[0].mxu0
      %1758 = vmatprep.mubr.bf16.mxu0 0
      %1759 = vmatmul.mubr.bf16.gmra.mrb[0].mxu0 %v1625
      %v1760 = vpop.f32.mrb[0].mxu0
      %v1761 = vadd.f32 0.0, %v1760
      %v1762 = vpop.f32.mrb[0].mxu0
      %v1763 = vpop.f32.mrb[0].mxu0
      %v1764 = vadd.f32 0.0, %v1763
      %v1765 = vpop.f32.mrb[0].mxu0
      %1766 = vmatprep.mubr.bf16.mxu0 0
      %1767 = vmatmul.mubr.bf16.gmra.mrb[0].mxu0 %v1628
      %v1768 = vpop.f32.mrb[0].mxu0
      %v1769 = vadd.f32 0.0, %v1768
      %v1770 = vpop.f32.mrb[0].mxu0
      %v1771 = vpop.f32.mrb[0].mxu0
      %v1772 = vadd.f32 0.0, %v1771
      %v1773 = vpop.f32.mrb[0].mxu0
      %1774 = vmatprep.mubr.bf16.mxu0 0
      %1775 = vmatmul.mubr.bf16.gmra.mrb[0].mxu0 %v1631
      %v1776 = vpop.f32.mrb[0].mxu0
      %v1777 = vadd.f32 0.0, %v1776
      %v1778 = vpop.f32.mrb[0].mxu0
      %v1779 = vpop.f32.mrb[0].mxu0
      %v1780 = vadd.f32 0.0, %v1779
      %v1781 = vpop.f32.mrb[0].mxu0
      %1782 = vmatprep.mubr.bf16.mxu0 0
      %1783 = vmatmul.mubr.bf16.gmra.mrb[0].mxu0 %v1634
      %v1784 = vpop.f32.mrb[0].mxu0
      %v1785 = vadd.f32 0.0, %v1784
      %v1786 = vpop.f32.mrb[0].mxu0
      %v1787 = vpop.f32.mrb[0].mxu0
      %v1788 = vadd.f32 0.0, %v1787
      %v1789 = vpop.f32.mrb[0].mxu0
      %1790 = vmatprep.mubr.bf16.mxu0 0
      %1791 = vmatmul.mubr.bf16.gmra.mrb[0].mxu0 %v1637
      %v1792 = vpop.f32.mrb[0].mxu0
      %v1793 = vadd.f32 0.0, %v1792
      %v1794 = vpop.f32.mrb[0].mxu0
      %v1795 = vpop.f32.mrb[0].mxu0
      %v1796 = vadd.f32 0.0, %v1795
      %v1797 = vpop.f32.mrb[0].mxu0
      %1798 = vmatprep.mubr.bf16.mxu0 0
      %1799 = vmatmul.mubr.bf16.gmra.mrb[0].mxu0 %v1640
      %v1800 = vpop.f32.mrb[0].mxu0
      %v1801 = vadd.f32 0.0, %v1800
      %v1802 = vpop.f32.mrb[0].mxu0
      %v1803 = vpop.f32.mrb[0].mxu0
      %v1804 = vadd.f32 0.0, %v1803
      %v1805 = vpop.f32.mrb[0].mxu0
      %1806 = vmatprep.mubr.bf16.mxu0 0
      %1807 = vmatmul.mubr.bf16.gmra.mrb[0].mxu0 %v1643
      %v1808 = vpop.f32.mrb[0].mxu0
      %v1809 = vadd.f32 0.0, %v1808
      %v1810 = vpop.f32.mrb[0].mxu0
      %v1811 = vpop.f32.mrb[0].mxu0
      %v1812 = vadd.f32 0.0, %v1811
      %v1813 = vpop.f32.mrb[0].mxu0
      %1814 = vmatprep.mubr.bf16.mxu0 0
      %1815 = vmatmul.mubr.bf16.gmra.mrb[0].mxu0 %v1646
      %v1816 = vpop.f32.mrb[0].mxu0
      %v1817 = vadd.f32 0.0, %v1816
      %v1818 = vpop.f32.mrb[0].mxu0
      %v1819 = vpop.f32.mrb[0].mxu0
      %v1820 = vadd.f32 0.0, %v1819
      %v1821 = vpop.f32.mrb[0].mxu0
      %1822 = vmatprep.mubr.bf16.mxu0 0
      %1823 = vmatmul.mubr.bf16.gmra.mrb[0].mxu0 %v1649
      %v1824 = vpop.f32.mrb[0].mxu0
      %v1825 = vadd.f32 0.0, %v1824
      %v1826 = vpop.f32.mrb[0].mxu0
      %v1827 = vpop.f32.mrb[0].mxu0
      %v1828 = vadd.f32 0.0, %v1827
      %v1829 = vpop.f32.mrb[0].mxu0
      %1830 = vdwg.mxu0
      %v1831 = vadd.f32 %v1473, %v1689
      %v1832 = vadd.f32 %v1474, %v1692
      %v1833 = vadd.f32 %v1475, %v1697
      %v1834 = vadd.f32 %v1476, %v1700
      %v1835 = vadd.f32 %v1477, %v1705
      %v1836 = vadd.f32 %v1478, %v1708
      %v1837 = vadd.f32 %v1479, %v1713
      %v1838 = vadd.f32 %v1480, %v1716
      %v1839 = vadd.f32 %v1481, %v1721
      %v1840 = vadd.f32 %v1482, %v1724
      %v1841 = vadd.f32 %v1483, %v1729
      %v1842 = vadd.f32 %v1484, %v1732
      %v1843 = vadd.f32 %v1485, %v1737
      %v1844 = vadd.f32 %v1486, %v1740
      %v1845 = vadd.f32 %v1487, %v1745
      %v1846 = vadd.f32 %v1488, %v1748
      %v1847 = vadd.f32 %v1489, %v1753
      %v1848 = vadd.f32 %v1490, %v1756
      %v1849 = vadd.f32 %v1491, %v1761
      %v1850 = vadd.f32 %v1492, %v1764
      %v1851 = vadd.f32 %v1493, %v1769
      %v1852 = vadd.f32 %v1494, %v1772
      %v1853 = vadd.f32 %v1495, %v1777
      %v1854 = vadd.f32 %v1496, %v1780
      %v1855 = vadd.f32 %v1497, %v1785
      %v1856 = vadd.f32 %v1498, %v1788
      %v1857 = vadd.f32 %v1499, %v1793
      %v1858 = vadd.f32 %v1500, %v1796
      %v1859 = vadd.f32 %v1501, %v1801
      %v1860 = vadd.f32 %v1502, %v1804
      %v1861 = vadd.f32 %v1503, %v1809
      %v1862 = vadd.f32 %v1504, %v1812
      %v1863 = vadd.f32 %v1505, %v1817
      %v1864 = vadd.f32 %v1506, %v1820
      %v1865 = vadd.f32 %v1507, %v1825
      %v1866 = vadd.f32 %v1508, %v1828
      %s1867 = scalar_lea.vmem %s1, 20
      %v1868 = vld [vmem:[%s1867] sm:$0xf]
      %vm1869 = vcmask 1045504
      %v1870 = vrot.slane %v326, 2
      %v1871 = vrot.slane %v327, 2
      %v1872 = vsel %vm1869, %v1870, %v1871
      %v1873 = vrot.slane %v328, 2
      %v1874 = vsel %vm1869, %v1871, %v1873
      %v1875 = vrot.slane %v329, 2
      %v1876 = vsel %vm1869, %v1873, %v1875
      %v1877 = vrot.slane %v330, 2
      %v1878 = vsel %vm1869, %v1875, %v1877
      %v1879 = vrot.slane %v331, 2
      %v1880 = vsel %vm1869, %v1877, %v1879
      %v1881 = vrot.slane %v332, 2
      %v1882 = vsel %vm1869, %v1879, %v1881
      %v1883 = vrot.slane %v333, 2
      %v1884 = vsel %vm1869, %v1881, %v1883
      %v1885 = vrot.slane %v334, 2
      %v1886 = vsel %vm1869, %v1883, %v1885
      %v1887 = vrot.slane %v335, 2
      %v1888 = vsel %vm1869, %v1885, %v1887
      %v1889 = vrot.slane %v336, 2
      %v1890 = vsel %vm1869, %v1887, %v1889
      %v1891 = vrot.slane %v337, 2
      %v1892 = vsel %vm1869, %v1889, %v1891
      %v1893 = vrot.slane %v338, 2
      %v1894 = vsel %vm1869, %v1891, %v1893
      %v1895 = vrot.slane %v339, 2
      %v1896 = vsel %vm1869, %v1893, %v1895
      %v1897 = vrot.slane %v340, 2
      %v1898 = vsel %vm1869, %v1895, %v1897
      %v1899 = vrot.slane %v341, 2
      %v1900 = vsel %vm1869, %v1897, %v1899
      %v1901 = vrot.slane %v342, 2
      %v1902 = vsel %vm1869, %v1899, %v1901
      %v1903 = vrot.slane %v1277, 2
      %v1904 = vsel %vm1869, %v1901, %v1903
      %v1905 = vrot.slane %v1278, 2
      %v1906 = vsel %vm1869, %v1903, %v1905
      %v1908 = vsel %vm496, %v1872, 0
      %v1911 = vsel %vm496, %v1874, 0
      %v1914 = vsel %vm496, %v1876, 0
      %v1917 = vsel %vm496, %v1878, 0
      %v1920 = vsel %vm496, %v1880, 0
      %v1923 = vsel %vm496, %v1882, 0
      %v1926 = vsel %vm496, %v1884, 0
      %v1929 = vsel %vm496, %v1886, 0
      %v1932 = vsel %vm496, %v1888, 0
      %v1935 = vsel %vm496, %v1890, 0
      %v1938 = vsel %vm496, %v1892, 0
      %v1941 = vsel %vm496, %v1894, 0
      %v1944 = vsel %vm496, %v1896, 0
      %v1947 = vsel %vm496, %v1898, 0
      %v1950 = vsel %vm496, %v1900, 0
      %v1953 = vsel %vm496, %v1902, 0
      %v1956 = vsel %vm496, %v1904, 0
      %v1959 = vsel %vm496, %v1906, 0
      %v1962 = vsel %vm551, %v1868, 0
      %1964 = vmatprep.subr.bf16.mxu0 0
      %1965 = vmatpush1.bf16.msra.mxu0 %v1962
      %1966 = vmatprep.subr.bf16.mxu0 0
      %1967 = vmatpush1.bf16.msra.mxu0 0
      %1968 = vmatprep.subr.bf16.mxu0 0
      %1969 = vmatpush1.bf16.msra.mxu0 0
      %1970 = vmatprep.subr.bf16.mxu0 0
      %1971 = vmatpush1.bf16.msra.mxu0 0
      %1972 = vmatprep.subr.bf16.mxu0 0
      %1973 = vmatpush1.bf16.msra.mxu0 0
      %1974 = vmatprep.subr.bf16.mxu0 0
      %1975 = vmatpush1.bf16.msra.mxu0 0
      %1976 = vmatprep.subr.bf16.mxu0 0
      %1977 = vmatpush1.bf16.msra.mxu0 0
      %1978 = vmatprep.subr.bf16.mxu0 0
      %1979 = vmatpush1.bf16.msra.mxu0 0
      %1980 = vmatprep.subr.bf16.mxu0 0
      %1981 = vmatpush1.bf16.msra.mxu0 0
      %1982 = vmatprep.subr.bf16.mxu0 0
      %1983 = vmatpush1.bf16.msra.mxu0 0
      %1984 = vmatprep.subr.bf16.mxu0 0
      %1985 = vmatpush1.bf16.msra.mxu0 0
      %1986 = vmatprep.subr.bf16.mxu0 0
      %1987 = vmatpush1.bf16.msra.mxu0 0
      %1988 = vmatprep.subr.bf16.mxu0 0
      %1989 = vmatpush1.bf16.msra.mxu0 0
      %1990 = vmatprep.subr.bf16.mxu0 0
      %1991 = vmatpush1.bf16.msra.mxu0 0
      %1992 = vmatprep.subr.bf16.mxu0 0
      %1993 = vmatpush1.bf16.msra.mxu0 0
      %1994 = vmatprep.subr.bf16.mxu0 0
      %1995 = vmatpush1.bf16.msra.mxu0 0
      %1996 = vmatprep.mubr.bf16.mxu0 0
      %1997 = vmatmul.mubr.bf16.gmra.mrb[0].mxu0 %v1908
      %v1998 = vpop.f32.mrb[0].mxu0
      %v1999 = vadd.f32 0.0, %v1998
      %v2000 = vpop.f32.mrb[0].mxu0
      %v2001 = vpop.f32.mrb[0].mxu0
      %v2002 = vadd.f32 0.0, %v2001
      %v2003 = vpop.f32.mrb[0].mxu0
      %2004 = vmatprep.mubr.bf16.mxu0 0
      %2005 = vmatmul.mubr.bf16.gmra.mrb[0].mxu0 %v1911
      %v2006 = vpop.f32.mrb[0].mxu0
      %v2007 = vadd.f32 0.0, %v2006
      %v2008 = vpop.f32.mrb[0].mxu0
      %v2009 = vpop.f32.mrb[0].mxu0
      %v2010 = vadd.f32 0.0, %v2009
      %v2011 = vpop.f32.mrb[0].mxu0
      %2012 = vmatprep.mubr.bf16.mxu0 0
      %2013 = vmatmul.mubr.bf16.gmra.mrb[0].mxu0 %v1914
      %v2014 = vpop.f32.mrb[0].mxu0
      %v2015 = vadd.f32 0.0, %v2014
      %v2016 = vpop.f32.mrb[0].mxu0
      %v2017 = vpop.f32.mrb[0].mxu0
      %v2018 = vadd.f32 0.0, %v2017
      %v2019 = vpop.f32.mrb[0].mxu0
      %2020 = vmatprep.mubr.bf16.mxu0 0
      %2021 = vmatmul.mubr.bf16.gmra.mrb[0].mxu0 %v1917
      %v2022 = vpop.f32.mrb[0].mxu0
      %v2023 = vadd.f32 0.0, %v2022
      %v2024 = vpop.f32.mrb[0].mxu0
      %v2025 = vpop.f32.mrb[0].mxu0
      %v2026 = vadd.f32 0.0, %v2025
      %v2027 = vpop.f32.mrb[0].mxu0
      %2028 = vmatprep.mubr.bf16.mxu0 0
      %2029 = vmatmul.mubr.bf16.gmra.mrb[0].mxu0 %v1920
      %v2030 = vpop.f32.mrb[0].mxu0
      %v2031 = vadd.f32 0.0, %v2030
      %v2032 = vpop.f32.mrb[0].mxu0
      %v2033 = vpop.f32.mrb[0].mxu0
      %v2034 = vadd.f32 0.0, %v2033
      %v2035 = vpop.f32.mrb[0].mxu0
      %2036 = vmatprep.mubr.bf16.mxu0 0
      %2037 = vmatmul.mubr.bf16.gmra.mrb[0].mxu0 %v1923
      %v2038 = vpop.f32.mrb[0].mxu0
      %v2039 = vadd.f32 0.0, %v2038
      %v2040 = vpop.f32.mrb[0].mxu0
      %v2041 = vpop.f32.mrb[0].mxu0
      %v2042 = vadd.f32 0.0, %v2041
      %v2043 = vpop.f32.mrb[0].mxu0
      %2044 = vmatprep.mubr.bf16.mxu0 0
      %2045 = vmatmul.mubr.bf16.gmra.mrb[0].mxu0 %v1926
      %v2046 = vpop.f32.mrb[0].mxu0
      %v2047 = vadd.f32 0.0, %v2046
      %v2048 = vpop.f32.mrb[0].mxu0
      %v2049 = vpop.f32.mrb[0].mxu0
      %v2050 = vadd.f32 0.0, %v2049
      %v2051 = vpop.f32.mrb[0].mxu0
      %2052 = vmatprep.mubr.bf16.mxu0 0
      %2053 = vmatmul.mubr.bf16.gmra.mrb[0].mxu0 %v1929
      %v2054 = vpop.f32.mrb[0].mxu0
      %v2055 = vadd.f32 0.0, %v2054
      %v2056 = vpop.f32.mrb[0].mxu0
      %v2057 = vpop.f32.mrb[0].mxu0
      %v2058 = vadd.f32 0.0, %v2057
      %v2059 = vpop.f32.mrb[0].mxu0
      %2060 = vmatprep.mubr.bf16.mxu0 0
      %2061 = vmatmul.mubr.bf16.gmra.mrb[0].mxu0 %v1932
      %v2062 = vpop.f32.mrb[0].mxu0
      %v2063 = vadd.f32 0.0, %v2062
      %v2064 = vpop.f32.mrb[0].mxu0
      %v2065 = vpop.f32.mrb[0].mxu0
      %v2066 = vadd.f32 0.0, %v2065
      %v2067 = vpop.f32.mrb[0].mxu0
      %2068 = vmatprep.mubr.bf16.mxu0 0
      %2069 = vmatmul.mubr.bf16.gmra.mrb[0].mxu0 %v1935
      %v2070 = vpop.f32.mrb[0].mxu0
      %v2071 = vadd.f32 0.0, %v2070
      %v2072 = vpop.f32.mrb[0].mxu0
      %v2073 = vpop.f32.mrb[0].mxu0
      %v2074 = vadd.f32 0.0, %v2073
      %v2075 = vpop.f32.mrb[0].mxu0
      %2076 = vmatprep.mubr.bf16.mxu0 0
      %2077 = vmatmul.mubr.bf16.gmra.mrb[0].mxu0 %v1938
      %v2078 = vpop.f32.mrb[0].mxu0
      %v2079 = vadd.f32 0.0, %v2078
      %v2080 = vpop.f32.mrb[0].mxu0
      %v2081 = vpop.f32.mrb[0].mxu0
      %v2082 = vadd.f32 0.0, %v2081
      %v2083 = vpop.f32.mrb[0].mxu0
      %2084 = vmatprep.mubr.bf16.mxu0 0
      %2085 = vmatmul.mubr.bf16.gmra.mrb[0].mxu0 %v1941
      %v2086 = vpop.f32.mrb[0].mxu0
      %v2087 = vadd.f32 0.0, %v2086
      %v2088 = vpop.f32.mrb[0].mxu0
      %v2089 = vpop.f32.mrb[0].mxu0
      %v2090 = vadd.f32 0.0, %v2089
      %v2091 = vpop.f32.mrb[0].mxu0
      %2092 = vmatprep.mubr.bf16.mxu0 0
      %2093 = vmatmul.mubr.bf16.gmra.mrb[0].mxu0 %v1944
      %v2094 = vpop.f32.mrb[0].mxu0
      %v2095 = vadd.f32 0.0, %v2094
      %v2096 = vpop.f32.mrb[0].mxu0
      %v2097 = vpop.f32.mrb[0].mxu0
      %v2098 = vadd.f32 0.0, %v2097
      %v2099 = vpop.f32.mrb[0].mxu0
      %2100 = vmatprep.mubr.bf16.mxu0 0
      %2101 = vmatmul.mubr.bf16.gmra.mrb[0].mxu0 %v1947
      %v2102 = vpop.f32.mrb[0].mxu0
      %v2103 = vadd.f32 0.0, %v2102
      %v2104 = vpop.f32.mrb[0].mxu0
      %v2105 = vpop.f32.mrb[0].mxu0
      %v2106 = vadd.f32 0.0, %v2105
      %v2107 = vpop.f32.mrb[0].mxu0
      %2108 = vmatprep.mubr.bf16.mxu0 0
      %2109 = vmatmul.mubr.bf16.gmra.mrb[0].mxu0 %v1950
      %v2110 = vpop.f32.mrb[0].mxu0
      %v2111 = vadd.f32 0.0, %v2110
      %v2112 = vpop.f32.mrb[0].mxu0
      %v2113 = vpop.f32.mrb[0].mxu0
      %v2114 = vadd.f32 0.0, %v2113
      %v2115 = vpop.f32.mrb[0].mxu0
      %2116 = vmatprep.mubr.bf16.mxu0 0
      %2117 = vmatmul.mubr.bf16.gmra.mrb[0].mxu0 %v1953
      %v2118 = vpop.f32.mrb[0].mxu0
      %v2119 = vadd.f32 0.0, %v2118
      %v2120 = vpop.f32.mrb[0].mxu0
      %v2121 = vpop.f32.mrb[0].mxu0
      %v2122 = vadd.f32 0.0, %v2121
      %v2123 = vpop.f32.mrb[0].mxu0
      %2124 = vmatprep.mubr.bf16.mxu0 0
      %2125 = vmatmul.mubr.bf16.gmra.mrb[0].mxu0 %v1956
      %v2126 = vpop.f32.mrb[0].mxu0
      %v2127 = vadd.f32 0.0, %v2126
      %v2128 = vpop.f32.mrb[0].mxu0
      %v2129 = vpop.f32.mrb[0].mxu0
      %v2130 = vadd.f32 0.0, %v2129
      %v2131 = vpop.f32.mrb[0].mxu0
      %2132 = vmatprep.mubr.bf16.mxu0 0
      %2133 = vmatmul.mubr.bf16.gmra.mrb[0].mxu0 %v1959
      %v2134 = vpop.f32.mrb[0].mxu0
      %v2135 = vadd.f32 0.0, %v2134
      %v2136 = vpop.f32.mrb[0].mxu0
      %v2137 = vpop.f32.mrb[0].mxu0
      %v2138 = vadd.f32 0.0, %v2137
      %v2139 = vpop.f32.mrb[0].mxu0
      %2140 = vdwg.mxu0
      %v2141 = vadd.f32 %v1831, %v1999
      %v2142 = vadd.f32 %v1832, %v2002
      %v2143 = vadd.f32 %v1833, %v2007
      %v2144 = vadd.f32 %v1834, %v2010
      %v2145 = vadd.f32 %v1835, %v2015
      %v2146 = vadd.f32 %v1836, %v2018
      %v2147 = vadd.f32 %v1837, %v2023
      %v2148 = vadd.f32 %v1838, %v2026
      %v2149 = vadd.f32 %v1839, %v2031
      %v2150 = vadd.f32 %v1840, %v2034
      %v2151 = vadd.f32 %v1841, %v2039
      %v2152 = vadd.f32 %v1842, %v2042
      %v2153 = vadd.f32 %v1843, %v2047
      %v2154 = vadd.f32 %v1844, %v2050
      %v2155 = vadd.f32 %v1845, %v2055
      %v2156 = vadd.f32 %v1846, %v2058
      %v2157 = vadd.f32 %v1847, %v2063
      %v2158 = vadd.f32 %v1848, %v2066
      %v2159 = vadd.f32 %v1849, %v2071
      %v2160 = vadd.f32 %v1850, %v2074
      %v2161 = vadd.f32 %v1851, %v2079
      %v2162 = vadd.f32 %v1852, %v2082
      %v2163 = vadd.f32 %v1853, %v2087
      %v2164 = vadd.f32 %v1854, %v2090
      %v2165 = vadd.f32 %v1855, %v2095
      %v2166 = vadd.f32 %v1856, %v2098
      %v2167 = vadd.f32 %v1857, %v2103
      %v2168 = vadd.f32 %v1858, %v2106
      %v2169 = vadd.f32 %v1859, %v2111
      %v2170 = vadd.f32 %v1860, %v2114
      %v2171 = vadd.f32 %v1861, %v2119
      %v2172 = vadd.f32 %v1862, %v2122
      %v2173 = vadd.f32 %v1863, %v2127
      %v2174 = vadd.f32 %v1864, %v2130
      %v2175 = vadd.f32 %v1865, %v2135
      %v2176 = vadd.f32 %v1866, %v2138
      %v2177 = vpack.c.bf16 %v323, %v322
      %v2178 = vpack.c.bf16 %v324, %v324
      %s2179 = scalar_lea.vmem %s1, 24
      %v2180 = vld [vmem:[%s2179] sm:$0xf]
      %v2183 = vrot.slane %v2177, 2
      %v2184 = vsel %vm1869, %v1903, %v2183
      %v2185 = vrot.slane %v2178, 2
      %v2186 = vsel %vm1869, %v2183, %v2185
      %v2188 = vsel %vm496, %v2184, 0
      %v2191 = vsel %vm496, %v2186, 0
      %v2194 = vsel %vm551, %v2180, 0
      %2196 = vmatprep.subr.bf16.mxu0 0
      %2197 = vmatpush1.bf16.msra.mxu0 %v2194
      %2198 = vmatprep.subr.bf16.mxu0 0
      %2199 = vmatpush1.bf16.msra.mxu0 0
      %2200 = vmatprep.subr.bf16.mxu0 0
      %2201 = vmatpush1.bf16.msra.mxu0 0
      %2202 = vmatprep.subr.bf16.mxu0 0
      %2203 = vmatpush1.bf16.msra.mxu0 0
      %2204 = vmatprep.subr.bf16.mxu0 0
      %2205 = vmatpush1.bf16.msra.mxu0 0
      %2206 = vmatprep.subr.bf16.mxu0 0
      %2207 = vmatpush1.bf16.msra.mxu0 0
      %2208 = vmatprep.subr.bf16.mxu0 0
      %2209 = vmatpush1.bf16.msra.mxu0 0
      %2210 = vmatprep.subr.bf16.mxu0 0
      %2211 = vmatpush1.bf16.msra.mxu0 0
      %2212 = vmatprep.subr.bf16.mxu0 0
      %2213 = vmatpush1.bf16.msra.mxu0 0
      %2214 = vmatprep.subr.bf16.mxu0 0
      %2215 = vmatpush1.bf16.msra.mxu0 0
      %2216 = vmatprep.subr.bf16.mxu0 0
      %2217 = vmatpush1.bf16.msra.mxu0 0
      %2218 = vmatprep.subr.bf16.mxu0 0
      %2219 = vmatpush1.bf16.msra.mxu0 0
      %2220 = vmatprep.subr.bf16.mxu0 0
      %2221 = vmatpush1.bf16.msra.mxu0 0
      %2222 = vmatprep.subr.bf16.mxu0 0
      %2223 = vmatpush1.bf16.msra.mxu0 0
      %2224 = vmatprep.subr.bf16.mxu0 0
      %2225 = vmatpush1.bf16.msra.mxu0 0
      %2226 = vmatprep.subr.bf16.mxu0 0
      %2227 = vmatpush1.bf16.msra.mxu0 0
      %2228 = vmatprep.mubr.bf16.mxu0 0
      %2229 = vmatmul.mubr.bf16.gmra.mrb[0].mxu0 %v1911
      %v2230 = vpop.f32.mrb[0].mxu0
      %v2231 = vadd.f32 0.0, %v2230
      %v2232 = vpop.f32.mrb[0].mxu0
      %v2233 = vpop.f32.mrb[0].mxu0
      %v2234 = vadd.f32 0.0, %v2233
      %v2235 = vpop.f32.mrb[0].mxu0
      %2236 = vmatprep.mubr.bf16.mxu0 0
      %2237 = vmatmul.mubr.bf16.gmra.mrb[0].mxu0 %v1914
      %v2238 = vpop.f32.mrb[0].mxu0
      %v2239 = vadd.f32 0.0, %v2238
      %v2240 = vpop.f32.mrb[0].mxu0
      %v2241 = vpop.f32.mrb[0].mxu0
      %v2242 = vadd.f32 0.0, %v2241
      %v2243 = vpop.f32.mrb[0].mxu0
      %2244 = vmatprep.mubr.bf16.mxu0 0
      %2245 = vmatmul.mubr.bf16.gmra.mrb[0].mxu0 %v1917
      %v2246 = vpop.f32.mrb[0].mxu0
      %v2247 = vadd.f32 0.0, %v2246
      %v2248 = vpop.f32.mrb[0].mxu0
      %v2249 = vpop.f32.mrb[0].mxu0
      %v2250 = vadd.f32 0.0, %v2249
      %v2251 = vpop.f32.mrb[0].mxu0
      %2252 = vmatprep.mubr.bf16.mxu0 0
      %2253 = vmatmul.mubr.bf16.gmra.mrb[0].mxu0 %v1920
      %v2254 = vpop.f32.mrb[0].mxu0
      %v2255 = vadd.f32 0.0, %v2254
      %v2256 = vpop.f32.mrb[0].mxu0
      %v2257 = vpop.f32.mrb[0].mxu0
      %v2258 = vadd.f32 0.0, %v2257
      %v2259 = vpop.f32.mrb[0].mxu0
      %2260 = vmatprep.mubr.bf16.mxu0 0
      %2261 = vmatmul.mubr.bf16.gmra.mrb[0].mxu0 %v1923
      %v2262 = vpop.f32.mrb[0].mxu0
      %v2263 = vadd.f32 0.0, %v2262
      %v2264 = vpop.f32.mrb[0].mxu0
      %v2265 = vpop.f32.mrb[0].mxu0
      %v2266 = vadd.f32 0.0, %v2265
      %v2267 = vpop.f32.mrb[0].mxu0
      %2268 = vmatprep.mubr.bf16.mxu0 0
      %2269 = vmatmul.mubr.bf16.gmra.mrb[0].mxu0 %v1926
      %v2270 = vpop.f32.mrb[0].mxu0
      %v2271 = vadd.f32 0.0, %v2270
      %v2272 = vpop.f32.mrb[0].mxu0
      %v2273 = vpop.f32.mrb[0].mxu0
      %v2274 = vadd.f32 0.0, %v2273
      %v2275 = vpop.f32.mrb[0].mxu0
      %2276 = vmatprep.mubr.bf16.mxu0 0
      %2277 = vmatmul.mubr.bf16.gmra.mrb[0].mxu0 %v1929
      %v2278 = vpop.f32.mrb[0].mxu0
      %v2279 = vadd.f32 0.0, %v2278
      %v2280 = vpop.f32.mrb[0].mxu0
      %v2281 = vpop.f32.mrb[0].mxu0
      %v2282 = vadd.f32 0.0, %v2281
      %v2283 = vpop.f32.mrb[0].mxu0
      %2284 = vmatprep.mubr.bf16.mxu0 0
      %2285 = vmatmul.mubr.bf16.gmra.mrb[0].mxu0 %v1932
      %v2286 = vpop.f32.mrb[0].mxu0
      %v2287 = vadd.f32 0.0, %v2286
      %v2288 = vpop.f32.mrb[0].mxu0
      %v2289 = vpop.f32.mrb[0].mxu0
      %v2290 = vadd.f32 0.0, %v2289
      %v2291 = vpop.f32.mrb[0].mxu0
      %2292 = vmatprep.mubr.bf16.mxu0 0
      %2293 = vmatmul.mubr.bf16.gmra.mrb[0].mxu0 %v1935
      %v2294 = vpop.f32.mrb[0].mxu0
      %v2295 = vadd.f32 0.0, %v2294
      %v2296 = vpop.f32.mrb[0].mxu0
      %v2297 = vpop.f32.mrb[0].mxu0
      %v2298 = vadd.f32 0.0, %v2297
      %v2299 = vpop.f32.mrb[0].mxu0
      %2300 = vmatprep.mubr.bf16.mxu0 0
      %2301 = vmatmul.mubr.bf16.gmra.mrb[0].mxu0 %v1938
      %v2302 = vpop.f32.mrb[0].mxu0
      %v2303 = vadd.f32 0.0, %v2302
      %v2304 = vpop.f32.mrb[0].mxu0
      %v2305 = vpop.f32.mrb[0].mxu0
      %v2306 = vadd.f32 0.0, %v2305
      %v2307 = vpop.f32.mrb[0].mxu0
      %2308 = vmatprep.mubr.bf16.mxu0 0
      %2309 = vmatmul.mubr.bf16.gmra.mrb[0].mxu0 %v1941
      %v2310 = vpop.f32.mrb[0].mxu0
      %v2311 = vadd.f32 0.0, %v2310
      %v2312 = vpop.f32.mrb[0].mxu0
      %v2313 = vpop.f32.mrb[0].mxu0
      %v2314 = vadd.f32 0.0, %v2313
      %v2315 = vpop.f32.mrb[0].mxu0
      %2316 = vmatprep.mubr.bf16.mxu0 0
      %2317 = vmatmul.mubr.bf16.gmra.mrb[0].mxu0 %v1944
      %v2318 = vpop.f32.mrb[0].mxu0
      %v2319 = vadd.f32 0.0, %v2318
      %v2320 = vpop.f32.mrb[0].mxu0
      %v2321 = vpop.f32.mrb[0].mxu0
      %v2322 = vadd.f32 0.0, %v2321
      %v2323 = vpop.f32.mrb[0].mxu0
      %2324 = vmatprep.mubr.bf16.mxu0 0
      %2325 = vmatmul.mubr.bf16.gmra.mrb[0].mxu0 %v1947
      %v2326 = vpop.f32.mrb[0].mxu0
      %v2327 = vadd.f32 0.0, %v2326
      %v2328 = vpop.f32.mrb[0].mxu0
      %v2329 = vpop.f32.mrb[0].mxu0
      %v2330 = vadd.f32 0.0, %v2329
      %v2331 = vpop.f32.mrb[0].mxu0
      %2332 = vmatprep.mubr.bf16.mxu0 0
      %2333 = vmatmul.mubr.bf16.gmra.mrb[0].mxu0 %v1950
      %v2334 = vpop.f32.mrb[0].mxu0
      %v2335 = vadd.f32 0.0, %v2334
      %v2336 = vpop.f32.mrb[0].mxu0
      %v2337 = vpop.f32.mrb[0].mxu0
      %v2338 = vadd.f32 0.0, %v2337
      %v2339 = vpop.f32.mrb[0].mxu0
      %2340 = vmatprep.mubr.bf16.mxu0 0
      %2341 = vmatmul.mubr.bf16.gmra.mrb[0].mxu0 %v1953
      %v2342 = vpop.f32.mrb[0].mxu0
      %v2343 = vadd.f32 0.0, %v2342
      %v2344 = vpop.f32.mrb[0].mxu0
      %v2345 = vpop.f32.mrb[0].mxu0
      %v2346 = vadd.f32 0.0, %v2345
      %v2347 = vpop.f32.mrb[0].mxu0
      %2348 = vmatprep.mubr.bf16.mxu0 0
      %2349 = vmatmul.mubr.bf16.gmra.mrb[0].mxu0 %v1956
      %v2350 = vpop.f32.mrb[0].mxu0
      %v2351 = vadd.f32 0.0, %v2350
      %v2352 = vpop.f32.mrb[0].mxu0
      %v2353 = vpop.f32.mrb[0].mxu0
      %v2354 = vadd.f32 0.0, %v2353
      %v2355 = vpop.f32.mrb[0].mxu0
      %2356 = vmatprep.mubr.bf16.mxu0 0
      %2357 = vmatmul.mubr.bf16.gmra.mrb[0].mxu0 %v2188
      %v2358 = vpop.f32.mrb[0].mxu0
      %v2359 = vadd.f32 0.0, %v2358
      %v2360 = vpop.f32.mrb[0].mxu0
      %v2361 = vpop.f32.mrb[0].mxu0
      %v2362 = vadd.f32 0.0, %v2361
      %v2363 = vpop.f32.mrb[0].mxu0
      %2364 = vmatprep.mubr.bf16.mxu0 0
      %2365 = vmatmul.mubr.bf16.gmra.mrb[0].mxu0 %v2191
      %v2366 = vpop.f32.mrb[0].mxu0
      %v2367 = vadd.f32 0.0, %v2366
      %v2368 = vpop.f32.mrb[0].mxu0
      %v2369 = vpop.f32.mrb[0].mxu0
      %v2370 = vadd.f32 0.0, %v2369
      %v2371 = vpop.f32.mrb[0].mxu0
      %2372 = vdwg.mxu0
      %v2373 = vadd.f32 %v2141, %v2231
      %v2374 = vadd.f32 %v2142, %v2234
      %v2375 = vadd.f32 %v2143, %v2239
      %v2376 = vadd.f32 %v2144, %v2242
      %v2377 = vadd.f32 %v2145, %v2247
      %v2378 = vadd.f32 %v2146, %v2250
      %v2379 = vadd.f32 %v2147, %v2255
      %v2380 = vadd.f32 %v2148, %v2258
      %v2381 = vadd.f32 %v2149, %v2263
      %v2382 = vadd.f32 %v2150, %v2266
      %v2383 = vadd.f32 %v2151, %v2271
      %v2384 = vadd.f32 %v2152, %v2274
      %v2385 = vadd.f32 %v2153, %v2279
      %v2386 = vadd.f32 %v2154, %v2282
      %v2387 = vadd.f32 %v2155, %v2287
      %v2388 = vadd.f32 %v2156, %v2290
      %v2389 = vadd.f32 %v2157, %v2295
      %v2390 = vadd.f32 %v2158, %v2298
      %v2391 = vadd.f32 %v2159, %v2303
      %v2392 = vadd.f32 %v2160, %v2306
      %v2393 = vadd.f32 %v2161, %v2311
      %v2394 = vadd.f32 %v2162, %v2314
      %v2395 = vadd.f32 %v2163, %v2319
      %v2396 = vadd.f32 %v2164, %v2322
      %v2397 = vadd.f32 %v2165, %v2327
      %v2398 = vadd.f32 %v2166, %v2330
      %v2399 = vadd.f32 %v2167, %v2335
      %v2400 = vadd.f32 %v2168, %v2338
      %v2401 = vadd.f32 %v2169, %v2343
      %v2402 = vadd.f32 %v2170, %v2346
      %v2403 = vadd.f32 %v2171, %v2351
      %v2404 = vadd.f32 %v2172, %v2354
      %v2405 = vadd.f32 %v2173, %v2359
      %v2406 = vadd.f32 %v2174, %v2362
      %v2407 = vadd.f32 %v2175, %v2367
      %v2408 = vadd.f32 %v2176, %v2370
      %s2409 = scalar_lea.vmem %s1, 28
      %v2410 = vld [vmem:[%s2409] sm:$0xf]
      %vm2411 = vsmask.f32 5376
      %v2412 = vrot.slane %v368, 2
      %v2413 = vrot.slane %v364, 3
      %v2414 = vor.u32 %v2412, %v2413
      %v2415 = vrot.slane %v376, 2
      %v2416 = vrot.slane %v372, 3
      %v2417 = vor.u32 %v2415, %v2416
      %v2418 = vsel %vm2411, %v2414, %v2417
      %v2419 = vrot.slane %v384, 2
      %v2420 = vrot.slane %v380, 3
      %v2421 = vor.u32 %v2419, %v2420
      %v2422 = vsel %vm2411, %v2417, %v2421
      %v2423 = vrot.slane %v392, 2
      %v2424 = vrot.slane %v388, 3
      %v2425 = vor.u32 %v2423, %v2424
      %v2426 = vsel %vm2411, %v2421, %v2425
      %v2427 = vrot.slane %v400, 2
      %v2428 = vrot.slane %v396, 3
      %v2429 = vor.u32 %v2427, %v2428
      %v2430 = vsel %vm2411, %v2425, %v2429
      %v2431 = vrot.slane %v408, 2
      %v2432 = vrot.slane %v404, 3
      %v2433 = vor.u32 %v2431, %v2432
      %v2434 = vsel %vm2411, %v2429, %v2433
      %v2435 = vrot.slane %v416, 2
      %v2436 = vrot.slane %v412, 3
      %v2437 = vor.u32 %v2435, %v2436
      %v2438 = vsel %vm2411, %v2433, %v2437
      %v2439 = vrot.slane %v424, 2
      %v2440 = vrot.slane %v420, 3
      %v2441 = vor.u32 %v2439, %v2440
      %v2442 = vsel %vm2411, %v2437, %v2441
      %v2443 = vrot.slane %v432, 2
      %v2444 = vrot.slane %v428, 3
      %v2445 = vor.u32 %v2443, %v2444
      %v2446 = vsel %vm2411, %v2441, %v2445
      %v2447 = vrot.slane %v440, 2
      %v2448 = vrot.slane %v436, 3
      %v2449 = vor.u32 %v2447, %v2448
      %v2450 = vsel %vm2411, %v2445, %v2449
      %v2451 = vrot.slane %v448, 2
      %v2452 = vrot.slane %v444, 3
      %v2453 = vor.u32 %v2451, %v2452
      %v2454 = vsel %vm2411, %v2449, %v2453
      %v2455 = vrot.slane %v456, 2
      %v2456 = vrot.slane %v452, 3
      %v2457 = vor.u32 %v2455, %v2456
      %v2458 = vsel %vm2411, %v2453, %v2457
      %v2459 = vrot.slane %v464, 2
      %v2460 = vrot.slane %v460, 3
      %v2461 = vor.u32 %v2459, %v2460
      %v2462 = vsel %vm2411, %v2457, %v2461
      %v2463 = vrot.slane %v472, 2
      %v2464 = vrot.slane %v468, 3
      %v2465 = vor.u32 %v2463, %v2464
      %v2466 = vsel %vm2411, %v2461, %v2465
      %v2467 = vrot.slane %v480, 2
      %v2468 = vrot.slane %v476, 3
      %v2469 = vor.u32 %v2467, %v2468
      %v2470 = vsel %vm2411, %v2465, %v2469
      %v2471 = vrot.slane %v488, 2
      %v2472 = vrot.slane %v484, 3
      %v2473 = vor.u32 %v2471, %v2472
      %v2474 = vsel %vm2411, %v2469, %v2473
      %v2475 = vrot.slane %v1580, 2
      %v2476 = vrot.slane %v1583, 3
      %v2477 = vor.u32 %v2475, %v2476
      %v2478 = vsel %vm2411, %v2473, %v2477
      %v2480 = vshrl.u32 %v2177, 16
      %v2482 = vrot.slane %v2480, 2
      %v2483 = vshll.u32 %v2177, 16
      %v2485 = vrot.slane %v2483, 3
      %v2486 = vor.u32 %v2482, %v2485
      %v2487 = vsel %vm2411, %v2477, %v2486
      %v2489 = vshrl.u32 %v2178, 16
      %v2491 = vrot.slane %v2489, 2
      %v2492 = vshll.u32 %v2178, 16
      %v2494 = vrot.slane %v2492, 3
      %v2495 = vor.u32 %v2491, %v2494
      %v2496 = vsel %vm2411, %v2486, %v2495
      %v2498 = vsel %vm496, %v2418, 0
      %v2501 = vsel %vm496, %v2422, 0
      %v2504 = vsel %vm496, %v2426, 0
      %v2507 = vsel %vm496, %v2430, 0
      %v2510 = vsel %vm496, %v2434, 0
      %v2513 = vsel %vm496, %v2438, 0
      %v2516 = vsel %vm496, %v2442, 0
      %v2519 = vsel %vm496, %v2446, 0
      %v2522 = vsel %vm496, %v2450, 0
      %v2525 = vsel %vm496, %v2454, 0
      %v2528 = vsel %vm496, %v2458, 0
      %v2531 = vsel %vm496, %v2462, 0
      %v2534 = vsel %vm496, %v2466, 0
      %v2537 = vsel %vm496, %v2470, 0
      %v2540 = vsel %vm496, %v2474, 0
      %v2543 = vsel %vm496, %v2478, 0
      %v2546 = vsel %vm496, %v2487, 0
      %v2549 = vsel %vm496, %v2496, 0
      %v2552 = vsel %vm551, %v2410, 0
      %2554 = vmatprep.subr.bf16.mxu0 0
      %2555 = vmatpush1.bf16.msra.mxu0 %v2552
      %2556 = vmatprep.subr.bf16.mxu0 0
      %2557 = vmatpush1.bf16.msra.mxu0 0
      %2558 = vmatprep.subr.bf16.mxu0 0
      %2559 = vmatpush1.bf16.msra.mxu0 0
      %2560 = vmatprep.subr.bf16.mxu0 0
      %2561 = vmatpush1.bf16.msra.mxu0 0
      %2562 = vmatprep.subr.bf16.mxu0 0
      %2563 = vmatpush1.bf16.msra.mxu0 0
      %2564 = vmatprep.subr.bf16.mxu0 0
      %2565 = vmatpush1.bf16.msra.mxu0 0
      %2566 = vmatprep.subr.bf16.mxu0 0
      %2567 = vmatpush1.bf16.msra.mxu0 0
      %2568 = vmatprep.subr.bf16.mxu0 0
      %2569 = vmatpush1.bf16.msra.mxu0 0
      %2570 = vmatprep.subr.bf16.mxu0 0
      %2571 = vmatpush1.bf16.msra.mxu0 0
      %2572 = vmatprep.subr.bf16.mxu0 0
      %2573 = vmatpush1.bf16.msra.mxu0 0
      %2574 = vmatprep.subr.bf16.mxu0 0
      %2575 = vmatpush1.bf16.msra.mxu0 0
      %2576 = vmatprep.subr.bf16.mxu0 0
      %2577 = vmatpush1.bf16.msra.mxu0 0
      %2578 = vmatprep.subr.bf16.mxu0 0
      %2579 = vmatpush1.bf16.msra.mxu0 0
      %2580 = vmatprep.subr.bf16.mxu0 0
      %2581 = vmatpush1.bf16.msra.mxu0 0
      %2582 = vmatprep.subr.bf16.mxu0 0
      %2583 = vmatpush1.bf16.msra.mxu0 0
      %2584 = vmatprep.subr.bf16.mxu0 0
      %2585 = vmatpush1.bf16.msra.mxu0 0
      %2586 = vmatprep.mubr.bf16.mxu0 0
      %2587 = vmatmul.mubr.bf16.gmra.mrb[0].mxu0 %v2498
      %v2588 = vpop.f32.mrb[0].mxu0
      %v2589 = vadd.f32 0.0, %v2588
      %v2590 = vpop.f32.mrb[0].mxu0
      %v2591 = vpop.f32.mrb[0].mxu0
      %v2592 = vadd.f32 0.0, %v2591
      %v2593 = vpop.f32.mrb[0].mxu0
      %2594 = vmatprep.mubr.bf16.mxu0 0
      %2595 = vmatmul.mubr.bf16.gmra.mrb[0].mxu0 %v2501
      %v2596 = vpop.f32.mrb[0].mxu0
      %v2597 = vadd.f32 0.0, %v2596
      %v2598 = vpop.f32.mrb[0].mxu0
      %v2599 = vpop.f32.mrb[0].mxu0
      %v2600 = vadd.f32 0.0, %v2599
      %v2601 = vpop.f32.mrb[0].mxu0
      %2602 = vmatprep.mubr.bf16.mxu0 0
      %2603 = vmatmul.mubr.bf16.gmra.mrb[0].mxu0 %v2504
      %v2604 = vpop.f32.mrb[0].mxu0
      %v2605 = vadd.f32 0.0, %v2604
      %v2606 = vpop.f32.mrb[0].mxu0
      %v2607 = vpop.f32.mrb[0].mxu0
      %v2608 = vadd.f32 0.0, %v2607
      %v2609 = vpop.f32.mrb[0].mxu0
      %2610 = vmatprep.mubr.bf16.mxu0 0
      %2611 = vmatmul.mubr.bf16.gmra.mrb[0].mxu0 %v2507
      %v2612 = vpop.f32.mrb[0].mxu0
      %v2613 = vadd.f32 0.0, %v2612
      %v2614 = vpop.f32.mrb[0].mxu0
      %v2615 = vpop.f32.mrb[0].mxu0
      %v2616 = vadd.f32 0.0, %v2615
      %v2617 = vpop.f32.mrb[0].mxu0
      %2618 = vmatprep.mubr.bf16.mxu0 0
      %2619 = vmatmul.mubr.bf16.gmra.mrb[0].mxu0 %v2510
      %v2620 = vpop.f32.mrb[0].mxu0
      %v2621 = vadd.f32 0.0, %v2620
      %v2622 = vpop.f32.mrb[0].mxu0
      %v2623 = vpop.f32.mrb[0].mxu0
      %v2624 = vadd.f32 0.0, %v2623
      %v2625 = vpop.f32.mrb[0].mxu0
      %2626 = vmatprep.mubr.bf16.mxu0 0
      %2627 = vmatmul.mubr.bf16.gmra.mrb[0].mxu0 %v2513
      %v2628 = vpop.f32.mrb[0].mxu0
      %v2629 = vadd.f32 0.0, %v2628
      %v2630 = vpop.f32.mrb[0].mxu0
      %v2631 = vpop.f32.mrb[0].mxu0
      %v2632 = vadd.f32 0.0, %v2631
      %v2633 = vpop.f32.mrb[0].mxu0
      %2634 = vmatprep.mubr.bf16.mxu0 0
      %2635 = vmatmul.mubr.bf16.gmra.mrb[0].mxu0 %v2516
      %v2636 = vpop.f32.mrb[0].mxu0
      %v2637 = vadd.f32 0.0, %v2636
      %v2638 = vpop.f32.mrb[0].mxu0
      %v2639 = vpop.f32.mrb[0].mxu0
      %v2640 = vadd.f32 0.0, %v2639
      %v2641 = vpop.f32.mrb[0].mxu0
      %2642 = vmatprep.mubr.bf16.mxu0 0
      %2643 = vmatmul.mubr.bf16.gmra.mrb[0].mxu0 %v2519
      %v2644 = vpop.f32.mrb[0].mxu0
      %v2645 = vadd.f32 0.0, %v2644
      %v2646 = vpop.f32.mrb[0].mxu0
      %v2647 = vpop.f32.mrb[0].mxu0
      %v2648 = vadd.f32 0.0, %v2647
      %v2649 = vpop.f32.mrb[0].mxu0
      %2650 = vmatprep.mubr.bf16.mxu0 0
      %2651 = vmatmul.mubr.bf16.gmra.mrb[0].mxu0 %v2522
      %v2652 = vpop.f32.mrb[0].mxu0
      %v2653 = vadd.f32 0.0, %v2652
      %v2654 = vpop.f32.mrb[0].mxu0
      %v2655 = vpop.f32.mrb[0].mxu0
      %v2656 = vadd.f32 0.0, %v2655
      %v2657 = vpop.f32.mrb[0].mxu0
      %2658 = vmatprep.mubr.bf16.mxu0 0
      %2659 = vmatmul.mubr.bf16.gmra.mrb[0].mxu0 %v2525
      %v2660 = vpop.f32.mrb[0].mxu0
      %v2661 = vadd.f32 0.0, %v2660
      %v2662 = vpop.f32.mrb[0].mxu0
      %v2663 = vpop.f32.mrb[0].mxu0
      %v2664 = vadd.f32 0.0, %v2663
      %v2665 = vpop.f32.mrb[0].mxu0
      %2666 = vmatprep.mubr.bf16.mxu0 0
      %2667 = vmatmul.mubr.bf16.gmra.mrb[0].mxu0 %v2528
      %v2668 = vpop.f32.mrb[0].mxu0
      %v2669 = vadd.f32 0.0, %v2668
      %v2670 = vpop.f32.mrb[0].mxu0
      %v2671 = vpop.f32.mrb[0].mxu0
      %v2672 = vadd.f32 0.0, %v2671
      %v2673 = vpop.f32.mrb[0].mxu0
      %2674 = vmatprep.mubr.bf16.mxu0 0
      %2675 = vmatmul.mubr.bf16.gmra.mrb[0].mxu0 %v2531
      %v2676 = vpop.f32.mrb[0].mxu0
      %v2677 = vadd.f32 0.0, %v2676
      %v2678 = vpop.f32.mrb[0].mxu0
      %v2679 = vpop.f32.mrb[0].mxu0
      %v2680 = vadd.f32 0.0, %v2679
      %v2681 = vpop.f32.mrb[0].mxu0
      %2682 = vmatprep.mubr.bf16.mxu0 0
      %2683 = vmatmul.mubr.bf16.gmra.mrb[0].mxu0 %v2534
      %v2684 = vpop.f32.mrb[0].mxu0
      %v2685 = vadd.f32 0.0, %v2684
      %v2686 = vpop.f32.mrb[0].mxu0
      %v2687 = vpop.f32.mrb[0].mxu0
      %v2688 = vadd.f32 0.0, %v2687
      %v2689 = vpop.f32.mrb[0].mxu0
      %2690 = vmatprep.mubr.bf16.mxu0 0
      %2691 = vmatmul.mubr.bf16.gmra.mrb[0].mxu0 %v2537
      %v2692 = vpop.f32.mrb[0].mxu0
      %v2693 = vadd.f32 0.0, %v2692
      %v2694 = vpop.f32.mrb[0].mxu0
      %v2695 = vpop.f32.mrb[0].mxu0
      %v2696 = vadd.f32 0.0, %v2695
      %v2697 = vpop.f32.mrb[0].mxu0
      %2698 = vmatprep.mubr.bf16.mxu0 0
      %2699 = vmatmul.mubr.bf16.gmra.mrb[0].mxu0 %v2540
      %v2700 = vpop.f32.mrb[0].mxu0
      %v2701 = vadd.f32 0.0, %v2700
      %v2702 = vpop.f32.mrb[0].mxu0
      %v2703 = vpop.f32.mrb[0].mxu0
      %v2704 = vadd.f32 0.0, %v2703
      %v2705 = vpop.f32.mrb[0].mxu0
      %2706 = vmatprep.mubr.bf16.mxu0 0
      %2707 = vmatmul.mubr.bf16.gmra.mrb[0].mxu0 %v2543
      %v2708 = vpop.f32.mrb[0].mxu0
      %v2709 = vadd.f32 0.0, %v2708
      %v2710 = vpop.f32.mrb[0].mxu0
      %v2711 = vpop.f32.mrb[0].mxu0
      %v2712 = vadd.f32 0.0, %v2711
      %v2713 = vpop.f32.mrb[0].mxu0
      %2714 = vmatprep.mubr.bf16.mxu0 0
      %2715 = vmatmul.mubr.bf16.gmra.mrb[0].mxu0 %v2546
      %v2716 = vpop.f32.mrb[0].mxu0
      %v2717 = vadd.f32 0.0, %v2716
      %v2718 = vpop.f32.mrb[0].mxu0
      %v2719 = vpop.f32.mrb[0].mxu0
      %v2720 = vadd.f32 0.0, %v2719
      %v2721 = vpop.f32.mrb[0].mxu0
      %2722 = vmatprep.mubr.bf16.mxu0 0
      %2723 = vmatmul.mubr.bf16.gmra.mrb[0].mxu0 %v2549
      %v2724 = vpop.f32.mrb[0].mxu0
      %v2725 = vadd.f32 0.0, %v2724
      %v2726 = vpop.f32.mrb[0].mxu0
      %v2727 = vpop.f32.mrb[0].mxu0
      %v2728 = vadd.f32 0.0, %v2727
      %v2729 = vpop.f32.mrb[0].mxu0
      %2730 = vdwg.mxu0
      %v2731 = vadd.f32 %v2373, %v2589
      %v2732 = vadd.f32 %v2374, %v2592
      %v2733 = vadd.f32 %v2375, %v2597
      %v2734 = vadd.f32 %v2376, %v2600
      %v2735 = vadd.f32 %v2377, %v2605
      %v2736 = vadd.f32 %v2378, %v2608
      %v2737 = vadd.f32 %v2379, %v2613
      %v2738 = vadd.f32 %v2380, %v2616
      %v2739 = vadd.f32 %v2381, %v2621
      %v2740 = vadd.f32 %v2382, %v2624
      %v2741 = vadd.f32 %v2383, %v2629
      %v2742 = vadd.f32 %v2384, %v2632
      %v2743 = vadd.f32 %v2385, %v2637
      %v2744 = vadd.f32 %v2386, %v2640
      %v2745 = vadd.f32 %v2387, %v2645
      %v2746 = vadd.f32 %v2388, %v2648
      %v2747 = vadd.f32 %v2389, %v2653
      %v2748 = vadd.f32 %v2390, %v2656
      %v2749 = vadd.f32 %v2391, %v2661
      %v2750 = vadd.f32 %v2392, %v2664
      %v2751 = vadd.f32 %v2393, %v2669
      %v2752 = vadd.f32 %v2394, %v2672
      %v2753 = vadd.f32 %v2395, %v2677
      %v2754 = vadd.f32 %v2396, %v2680
      %v2755 = vadd.f32 %v2397, %v2685
      %v2756 = vadd.f32 %v2398, %v2688
      %v2757 = vadd.f32 %v2399, %v2693
      %v2758 = vadd.f32 %v2400, %v2696
      %v2759 = vadd.f32 %v2401, %v2701
      %v2760 = vadd.f32 %v2402, %v2704
      %v2761 = vadd.f32 %v2403, %v2709
      %v2762 = vadd.f32 %v2404, %v2712
      %v2763 = vadd.f32 %v2405, %v2717
      %v2764 = vadd.f32 %v2406, %v2720
      %v2765 = vadd.f32 %v2407, %v2725
      %v2766 = vadd.f32 %v2408, %v2728
      %s2767 = scalar_lea.vmem %s1, 32
      %v2768 = vld [vmem:[%s2767] sm:$0xf]
      %vm2769 = vcmask 1044480
      %v2770 = vrot.slane %v327, 3
      %v2771 = vrot.slane %v328, 3
      %v2772 = vsel %vm2769, %v2770, %v2771
      %v2773 = vrot.slane %v329, 3
      %v2774 = vsel %vm2769, %v2771, %v2773
      %v2775 = vrot.slane %v330, 3
      %v2776 = vsel %vm2769, %v2773, %v2775
      %v2777 = vrot.slane %v331, 3
      %v2778 = vsel %vm2769, %v2775, %v2777
      %v2779 = vrot.slane %v332, 3
      %v2780 = vsel %vm2769, %v2777, %v2779
      %v2781 = vrot.slane %v333, 3
      %v2782 = vsel %vm2769, %v2779, %v2781
      %v2783 = vrot.slane %v334, 3
      %v2784 = vsel %vm2769, %v2781, %v2783
      %v2785 = vrot.slane %v335, 3
      %v2786 = vsel %vm2769, %v2783, %v2785
      %v2787 = vrot.slane %v336, 3
      %v2788 = vsel %vm2769, %v2785, %v2787
      %v2789 = vrot.slane %v337, 3
      %v2790 = vsel %vm2769, %v2787, %v2789
      %v2791 = vrot.slane %v338, 3
      %v2792 = vsel %vm2769, %v2789, %v2791
      %v2793 = vrot.slane %v339, 3
      %v2794 = vsel %vm2769, %v2791, %v2793
      %v2795 = vrot.slane %v340, 3
      %v2796 = vsel %vm2769, %v2793, %v2795
      %v2797 = vrot.slane %v341, 3
      %v2798 = vsel %vm2769, %v2795, %v2797
      %v2799 = vrot.slane %v342, 3
      %v2800 = vsel %vm2769, %v2797, %v2799
      %v2801 = vrot.slane %v1277, 3
      %v2802 = vsel %vm2769, %v2799, %v2801
      %v2803 = vrot.slane %v2177, 3
      %v2804 = vsel %vm2769, %v2801, %v2803
      %v2805 = vrot.slane %v2178, 3
      %v2806 = vsel %vm2769, %v2803, %v2805
      %v2808 = vsel %vm496, %v2772, 0
      %v2811 = vsel %vm496, %v2774, 0
      %v2814 = vsel %vm496, %v2776, 0
      %v2817 = vsel %vm496, %v2778, 0
      %v2820 = vsel %vm496, %v2780, 0
      %v2823 = vsel %vm496, %v2782, 0
      %v2826 = vsel %vm496, %v2784, 0
      %v2829 = vsel %vm496, %v2786, 0
      %v2832 = vsel %vm496, %v2788, 0
      %v2835 = vsel %vm496, %v2790, 0
      %v2838 = vsel %vm496, %v2792, 0
      %v2841 = vsel %vm496, %v2794, 0
      %v2844 = vsel %vm496, %v2796, 0
      %v2847 = vsel %vm496, %v2798, 0
      %v2850 = vsel %vm496, %v2800, 0
      %v2853 = vsel %vm496, %v2802, 0
      %v2856 = vsel %vm496, %v2804, 0
      %v2859 = vsel %vm496, %v2806, 0
      %v2862 = vsel %vm551, %v2768, 0
      %2864 = vmatprep.subr.bf16.mxu0 0
      %2865 = vmatpush1.bf16.msra.mxu0 %v2862
      %2866 = vmatprep.subr.bf16.mxu0 0
      %2867 = vmatpush1.bf16.msra.mxu0 0
      %2868 = vmatprep.subr.bf16.mxu0 0
      %2869 = vmatpush1.bf16.msra.mxu0 0
      %2870 = vmatprep.subr.bf16.mxu0 0
      %2871 = vmatpush1.bf16.msra.mxu0 0
      %2872 = vmatprep.subr.bf16.mxu0 0
      %2873 = vmatpush1.bf16.msra.mxu0 0
      %2874 = vmatprep.subr.bf16.mxu0 0
      %2875 = vmatpush1.bf16.msra.mxu0 0
      %2876 = vmatprep.subr.bf16.mxu0 0
      %2877 = vmatpush1.bf16.msra.mxu0 0
      %2878 = vmatprep.subr.bf16.mxu0 0
      %2879 = vmatpush1.bf16.msra.mxu0 0
      %2880 = vmatprep.subr.bf16.mxu0 0
      %2881 = vmatpush1.bf16.msra.mxu0 0
      %2882 = vmatprep.subr.bf16.mxu0 0
      %2883 = vmatpush1.bf16.msra.mxu0 0
      %2884 = vmatprep.subr.bf16.mxu0 0
      %2885 = vmatpush1.bf16.msra.mxu0 0
      %2886 = vmatprep.subr.bf16.mxu0 0
      %2887 = vmatpush1.bf16.msra.mxu0 0
      %2888 = vmatprep.subr.bf16.mxu0 0
      %2889 = vmatpush1.bf16.msra.mxu0 0
      %2890 = vmatprep.subr.bf16.mxu0 0
      %2891 = vmatpush1.bf16.msra.mxu0 0
      %2892 = vmatprep.subr.bf16.mxu0 0
      %2893 = vmatpush1.bf16.msra.mxu0 0
      %2894 = vmatprep.subr.bf16.mxu0 0
      %2895 = vmatpush1.bf16.msra.mxu0 0
      %2896 = vmatprep.mubr.bf16.mxu0 0
      %2897 = vmatmul.mubr.bf16.gmra.mrb[0].mxu0 %v2808
      %v2898 = vpop.f32.mrb[0].mxu0
      %v2899 = vadd.f32 0.0, %v2898
      %v2900 = vpop.f32.mrb[0].mxu0
      %v2901 = vpop.f32.mrb[0].mxu0
      %v2902 = vadd.f32 0.0, %v2901
      %v2903 = vpop.f32.mrb[0].mxu0
      %2904 = vmatprep.mubr.bf16.mxu0 0
      %2905 = vmatmul.mubr.bf16.gmra.mrb[0].mxu0 %v2811
      %v2906 = vpop.f32.mrb[0].mxu0
      %v2907 = vadd.f32 0.0, %v2906
      %v2908 = vpop.f32.mrb[0].mxu0
      %v2909 = vpop.f32.mrb[0].mxu0
      %v2910 = vadd.f32 0.0, %v2909
      %v2911 = vpop.f32.mrb[0].mxu0
      %2912 = vmatprep.mubr.bf16.mxu0 0
      %2913 = vmatmul.mubr.bf16.gmra.mrb[0].mxu0 %v2814
      %v2914 = vpop.f32.mrb[0].mxu0
      %v2915 = vadd.f32 0.0, %v2914
      %v2916 = vpop.f32.mrb[0].mxu0
      %v2917 = vpop.f32.mrb[0].mxu0
      %v2918 = vadd.f32 0.0, %v2917
      %v2919 = vpop.f32.mrb[0].mxu0
      %2920 = vmatprep.mubr.bf16.mxu0 0
      %2921 = vmatmul.mubr.bf16.gmra.mrb[0].mxu0 %v2817
      %v2922 = vpop.f32.mrb[0].mxu0
      %v2923 = vadd.f32 0.0, %v2922
      %v2924 = vpop.f32.mrb[0].mxu0
      %v2925 = vpop.f32.mrb[0].mxu0
      %v2926 = vadd.f32 0.0, %v2925
      %v2927 = vpop.f32.mrb[0].mxu0
      %2928 = vmatprep.mubr.bf16.mxu0 0
      %2929 = vmatmul.mubr.bf16.gmra.mrb[0].mxu0 %v2820
      %v2930 = vpop.f32.mrb[0].mxu0
      %v2931 = vadd.f32 0.0, %v2930
      %v2932 = vpop.f32.mrb[0].mxu0
      %v2933 = vpop.f32.mrb[0].mxu0
      %v2934 = vadd.f32 0.0, %v2933
      %v2935 = vpop.f32.mrb[0].mxu0
      %2936 = vmatprep.mubr.bf16.mxu0 0
      %2937 = vmatmul.mubr.bf16.gmra.mrb[0].mxu0 %v2823
      %v2938 = vpop.f32.mrb[0].mxu0
      %v2939 = vadd.f32 0.0, %v2938
      %v2940 = vpop.f32.mrb[0].mxu0
      %v2941 = vpop.f32.mrb[0].mxu0
      %v2942 = vadd.f32 0.0, %v2941
      %v2943 = vpop.f32.mrb[0].mxu0
      %2944 = vmatprep.mubr.bf16.mxu0 0
      %2945 = vmatmul.mubr.bf16.gmra.mrb[0].mxu0 %v2826
      %v2946 = vpop.f32.mrb[0].mxu0
      %v2947 = vadd.f32 0.0, %v2946
      %v2948 = vpop.f32.mrb[0].mxu0
      %v2949 = vpop.f32.mrb[0].mxu0
      %v2950 = vadd.f32 0.0, %v2949
      %v2951 = vpop.f32.mrb[0].mxu0
      %2952 = vmatprep.mubr.bf16.mxu0 0
      %2953 = vmatmul.mubr.bf16.gmra.mrb[0].mxu0 %v2829
      %v2954 = vpop.f32.mrb[0].mxu0
      %v2955 = vadd.f32 0.0, %v2954
      %v2956 = vpop.f32.mrb[0].mxu0
      %v2957 = vpop.f32.mrb[0].mxu0
      %v2958 = vadd.f32 0.0, %v2957
      %v2959 = vpop.f32.mrb[0].mxu0
      %2960 = vmatprep.mubr.bf16.mxu0 0
      %2961 = vmatmul.mubr.bf16.gmra.mrb[0].mxu0 %v2832
      %v2962 = vpop.f32.mrb[0].mxu0
      %v2963 = vadd.f32 0.0, %v2962
      %v2964 = vpop.f32.mrb[0].mxu0
      %v2965 = vpop.f32.mrb[0].mxu0
      %v2966 = vadd.f32 0.0, %v2965
      %v2967 = vpop.f32.mrb[0].mxu0
      %2968 = vmatprep.mubr.bf16.mxu0 0
      %2969 = vmatmul.mubr.bf16.gmra.mrb[0].mxu0 %v2835
      %v2970 = vpop.f32.mrb[0].mxu0
      %v2971 = vadd.f32 0.0, %v2970
      %v2972 = vpop.f32.mrb[0].mxu0
      %v2973 = vpop.f32.mrb[0].mxu0
      %v2974 = vadd.f32 0.0, %v2973
      %v2975 = vpop.f32.mrb[0].mxu0
      %2976 = vmatprep.mubr.bf16.mxu0 0
      %2977 = vmatmul.mubr.bf16.gmra.mrb[0].mxu0 %v2838
      %v2978 = vpop.f32.mrb[0].mxu0
      %v2979 = vadd.f32 0.0, %v2978
      %v2980 = vpop.f32.mrb[0].mxu0
      %v2981 = vpop.f32.mrb[0].mxu0
      %v2982 = vadd.f32 0.0, %v2981
      %v2983 = vpop.f32.mrb[0].mxu0
      %2984 = vmatprep.mubr.bf16.mxu0 0
      %2985 = vmatmul.mubr.bf16.gmra.mrb[0].mxu0 %v2841
      %v2986 = vpop.f32.mrb[0].mxu0
      %v2987 = vadd.f32 0.0, %v2986
      %v2988 = vpop.f32.mrb[0].mxu0
      %v2989 = vpop.f32.mrb[0].mxu0
      %v2990 = vadd.f32 0.0, %v2989
      %v2991 = vpop.f32.mrb[0].mxu0
      %2992 = vmatprep.mubr.bf16.mxu0 0
      %2993 = vmatmul.mubr.bf16.gmra.mrb[0].mxu0 %v2844
      %v2994 = vpop.f32.mrb[0].mxu0
      %v2995 = vadd.f32 0.0, %v2994
      %v2996 = vpop.f32.mrb[0].mxu0
      %v2997 = vpop.f32.mrb[0].mxu0
      %v2998 = vadd.f32 0.0, %v2997
      %v2999 = vpop.f32.mrb[0].mxu0
      %3000 = vmatprep.mubr.bf16.mxu0 0
      %3001 = vmatmul.mubr.bf16.gmra.mrb[0].mxu0 %v2847
      %v3002 = vpop.f32.mrb[0].mxu0
      %v3003 = vadd.f32 0.0, %v3002
      %v3004 = vpop.f32.mrb[0].mxu0
      %v3005 = vpop.f32.mrb[0].mxu0
      %v3006 = vadd.f32 0.0, %v3005
      %v3007 = vpop.f32.mrb[0].mxu0
      %3008 = vmatprep.mubr.bf16.mxu0 0
      %3009 = vmatmul.mubr.bf16.gmra.mrb[0].mxu0 %v2850
      %v3010 = vpop.f32.mrb[0].mxu0
      %v3011 = vadd.f32 0.0, %v3010
      %v3012 = vpop.f32.mrb[0].mxu0
      %v3013 = vpop.f32.mrb[0].mxu0
      %v3014 = vadd.f32 0.0, %v3013
      %v3015 = vpop.f32.mrb[0].mxu0
      %3016 = vmatprep.mubr.bf16.mxu0 0
      %3017 = vmatmul.mubr.bf16.gmra.mrb[0].mxu0 %v2853
      %v3018 = vpop.f32.mrb[0].mxu0
      %v3019 = vadd.f32 0.0, %v3018
      %v3020 = vpop.f32.mrb[0].mxu0
      %v3021 = vpop.f32.mrb[0].mxu0
      %v3022 = vadd.f32 0.0, %v3021
      %v3023 = vpop.f32.mrb[0].mxu0
      %3024 = vmatprep.mubr.bf16.mxu0 0
      %3025 = vmatmul.mubr.bf16.gmra.mrb[0].mxu0 %v2856
      %v3026 = vpop.f32.mrb[0].mxu0
      %v3027 = vadd.f32 0.0, %v3026
      %v3028 = vpop.f32.mrb[0].mxu0
      %v3029 = vpop.f32.mrb[0].mxu0
      %v3030 = vadd.f32 0.0, %v3029
      %v3031 = vpop.f32.mrb[0].mxu0
      %3032 = vmatprep.mubr.bf16.mxu0 0
      %3033 = vmatmul.mubr.bf16.gmra.mrb[0].mxu0 %v2859
      %v3034 = vpop.f32.mrb[0].mxu0
      %v3035 = vadd.f32 0.0, %v3034
      %v3036 = vpop.f32.mrb[0].mxu0
      %v3037 = vpop.f32.mrb[0].mxu0
      %v3038 = vadd.f32 0.0, %v3037
      %v3039 = vpop.f32.mrb[0].mxu0
      %3040 = vdwg.mxu0
      %v3041 = vadd.f32 %v2731, %v2899
      %v3042 = vadd.f32 %v2732, %v2902
      %v3043 = vadd.f32 %v2733, %v2907
      %v3044 = vadd.f32 %v2734, %v2910
      %v3045 = vadd.f32 %v2735, %v2915
      %v3046 = vadd.f32 %v2736, %v2918
      %v3047 = vadd.f32 %v2737, %v2923
      %v3048 = vadd.f32 %v2738, %v2926
      %v3049 = vadd.f32 %v2739, %v2931
      %v3050 = vadd.f32 %v2740, %v2934
      %v3051 = vadd.f32 %v2741, %v2939
      %v3052 = vadd.f32 %v2742, %v2942
      %v3053 = vadd.f32 %v2743, %v2947
      %v3054 = vadd.f32 %v2744, %v2950
      %v3055 = vadd.f32 %v2745, %v2955
      %v3056 = vadd.f32 %v2746, %v2958
      %v3057 = vadd.f32 %v2747, %v2963
      %v3058 = vadd.f32 %v2748, %v2966
      %v3059 = vadd.f32 %v2749, %v2971
      %v3060 = vadd.f32 %v2750, %v2974
      %v3061 = vadd.f32 %v2751, %v2979
      %v3062 = vadd.f32 %v2752, %v2982
      %v3063 = vadd.f32 %v2753, %v2987
      %v3064 = vadd.f32 %v2754, %v2990
      %v3065 = vadd.f32 %v2755, %v2995
      %v3066 = vadd.f32 %v2756, %v2998
      %v3067 = vadd.f32 %v2757, %v3003
      %v3068 = vadd.f32 %v2758, %v3006
      %v3069 = vadd.f32 %v2759, %v3011
      %v3070 = vadd.f32 %v2760, %v3014
      %v3071 = vadd.f32 %v2761, %v3019
      %v3072 = vadd.f32 %v2762, %v3022
      %v3073 = vadd.f32 %v2763, %v3027
      %v3074 = vadd.f32 %v2764, %v3030
      %v3075 = vadd.f32 %v2765, %v3035
      %v3076 = vadd.f32 %v2766, %v3038
      %3077 = vst.msk [vmem:[%s235] sm:$0xff] %vm496, %v3041
      %3078 = vst.msk [vmem:[%s235 + $0x8] sm:$0xff] %vm496, %v3042
      %3079 = vst.msk [vmem:[%s235 + $0x10] sm:$0xff] %vm496, %v3043
      %3080 = vst.msk [vmem:[%s235 + $0x18] sm:$0xff] %vm496, %v3044
      %3081 = vst.msk [vmem:[%s235 + $0x20] sm:$0xff] %vm496, %v3045
      %3082 = vst.msk [vmem:[%s235 + $0x28] sm:$0xff] %vm496, %v3046
      %3083 = vst.msk [vmem:[%s235 + $0x30] sm:$0xff] %vm496, %v3047
      %3084 = vst.msk [vmem:[%s235 + $0x38] sm:$0xff] %vm496, %v3048
      %3085 = vst.msk [vmem:[%s235 + $0x40] sm:$0xff] %vm496, %v3049
      %3086 = vst.msk [vmem:[%s235 + $0x48] sm:$0xff] %vm496, %v3050
      %3087 = vst.msk [vmem:[%s235 + $0x50] sm:$0xff] %vm496, %v3051
      %3088 = vst.msk [vmem:[%s235 + $0x58] sm:$0xff] %vm496, %v3052
      %3089 = vst.msk [vmem:[%s235 + $0x60] sm:$0xff] %vm496, %v3053
      %3090 = vst.msk [vmem:[%s235 + $0x68] sm:$0xff] %vm496, %v3054
      %3091 = vst.msk [vmem:[%s235 + $0x70] sm:$0xff] %vm496, %v3055
      %3092 = vst.msk [vmem:[%s235 + $0x78] sm:$0xff] %vm496, %v3056
      %3093 = vst.msk [vmem:[%s235 + $0x80] sm:$0xff] %vm496, %v3057
      %3094 = vst.msk [vmem:[%s235 + $0x88] sm:$0xff] %vm496, %v3058
      %3095 = vst.msk [vmem:[%s235 + $0x90] sm:$0xff] %vm496, %v3059
      %3096 = vst.msk [vmem:[%s235 + $0x98] sm:$0xff] %vm496, %v3060
      %3097 = vst.msk [vmem:[%s235 + $0xa0] sm:$0xff] %vm496, %v3061
      %3098 = vst.msk [vmem:[%s235 + $0xa8] sm:$0xff] %vm496, %v3062
      %3099 = vst.msk [vmem:[%s235 + $0xb0] sm:$0xff] %vm496, %v3063
      %3100 = vst.msk [vmem:[%s235 + $0xb8] sm:$0xff] %vm496, %v3064
      %3101 = vst.msk [vmem:[%s235 + $0xc0] sm:$0xff] %vm496, %v3065
      %3102 = vst.msk [vmem:[%s235 + $0xc8] sm:$0xff] %vm496, %v3066
      %3103 = vst.msk [vmem:[%s235 + $0xd0] sm:$0xff] %vm496, %v3067
      %3104 = vst.msk [vmem:[%s235 + $0xd8] sm:$0xff] %vm496, %v3068
      %3105 = vst.msk [vmem:[%s235 + $0xe0] sm:$0xff] %vm496, %v3069
      %3106 = vst.msk [vmem:[%s235 + $0xe8] sm:$0xff] %vm496, %v3070
      %3107 = vst.msk [vmem:[%s235 + $0xf0] sm:$0xff] %vm496, %v3071
      %3108 = vst.msk [vmem:[%s235 + $0xf8] sm:$0xff] %vm496, %v3072
      %3109 = vst.msk [vmem:[%s235 + $0x100] sm:$0xff] %vm496, %v3073
      %3110 = vst.msk [vmem:[%s235 + $0x108] sm:$0xff] %vm496, %v3074
      %3111 = vst.msk [vmem:[%s235 + $0x110] sm:$0xff] %vm496, %v3075
      %3112 = vst.msk [vmem:[%s235 + $0x118] sm:$0xff] %vm496, %v3076
      %v3113 = vld [vmem:[%s2] sm:$0xff]
      %v3114 = vld [vmem:[%s2 + $0x8] sm:$0xff]
      %v3115 = vld [vmem:[%s2 + $0x10] sm:$0xff]
      %v3116 = vld [vmem:[%s2 + $0x18] sm:$0xff]
      %v3117 = vld [vmem:[%s2 + $0x20] sm:$0xff]
      %v3118 = vld [vmem:[%s2 + $0x28] sm:$0xff]
      %v3119 = vld [vmem:[%s2 + $0x30] sm:$0xff]
      %v3120 = vld [vmem:[%s2 + $0x38] sm:$0xff]
      %v3121 = vld [vmem:[%s2 + $0x40] sm:$0xff]
      %v3122 = vld [vmem:[%s2 + $0x48] sm:$0xff]
      %v3123 = vld [vmem:[%s2 + $0x50] sm:$0xff]
      %v3124 = vld [vmem:[%s2 + $0x58] sm:$0xff]
      %v3125 = vld [vmem:[%s2 + $0x60] sm:$0xff]
      %v3126 = vld [vmem:[%s2 + $0x68] sm:$0xff]
      %v3127 = vld [vmem:[%s2 + $0x70] sm:$0xff]
      %v3128 = vld [vmem:[%s2 + $0x78] sm:$0xff]
      %v3129 = vld [vmem:[%s2 + $0x80] sm:$0xff]
      %v3130 = vld [vmem:[%s2 + $0x88] sm:$0xff]
      %v3131 = vld [vmem:[%s2 + $0x90] sm:$0xff]
      %v3132 = vld [vmem:[%s2 + $0x98] sm:$0xff]
      %v3133 = vld [vmem:[%s2 + $0xa0] sm:$0xff]
      %v3134 = vld [vmem:[%s2 + $0xa8] sm:$0xff]
      %v3135 = vld [vmem:[%s2 + $0xb0] sm:$0xff]
      %v3136 = vld [vmem:[%s2 + $0xb8] sm:$0xff]
      %v3137 = vld [vmem:[%s2 + $0xc0] sm:$0xff]
      %v3138 = vld [vmem:[%s2 + $0xc8] sm:$0xff]
      %v3139 = vld [vmem:[%s2 + $0xd0] sm:$0xff]
      %v3140 = vld [vmem:[%s2 + $0xd8] sm:$0xff]
      %v3141 = vld [vmem:[%s2 + $0xe0] sm:$0xff]
      %v3142 = vld [vmem:[%s2 + $0xe8] sm:$0xff]
      %v3143 = vld [vmem:[%s2 + $0xf0] sm:$0xff]
      %v3144 = vld [vmem:[%s2 + $0xf8] sm:$0xff]
      %v3145 = vld [vmem:[%s2 + $0x100] sm:$0xff]
      %v3146 = vld [vmem:[%s2 + $0x108] sm:$0xff]
      %v3147 = vld [vmem:[%s2 + $0x110] sm:$0xff]
      %v3148 = vld [vmem:[%s2 + $0x118] sm:$0xff]
      %3150 = vset.pattern.permute.xlu0 0
      %3151 = vperm.xlu0 %3150, %v3113
      %v3152 = vpop.permute.xlu0 %3151
      %3155 = vset.pattern.permute.xlu0 0
      %3156 = vperm.xlu0 %3155, %v3114
      %v3157 = vpop.permute.xlu0 %3156
      %3160 = vset.pattern.permute.xlu0 0
      %3161 = vperm.xlu0 %3160, %v3115
      %v3162 = vpop.permute.xlu0 %3161
      %3165 = vset.pattern.permute.xlu0 0
      %3166 = vperm.xlu0 %3165, %v3116
      %v3167 = vpop.permute.xlu0 %3166
      %3170 = vset.pattern.permute.xlu0 0
      %3171 = vperm.xlu0 %3170, %v3117
      %v3172 = vpop.permute.xlu0 %3171
      %3175 = vset.pattern.permute.xlu0 0
      %3176 = vperm.xlu0 %3175, %v3118
      %v3177 = vpop.permute.xlu0 %3176
      %3180 = vset.pattern.permute.xlu0 0
      %3181 = vperm.xlu0 %3180, %v3119
      %v3182 = vpop.permute.xlu0 %3181
      %3185 = vset.pattern.permute.xlu0 0
      %3186 = vperm.xlu0 %3185, %v3120
      %v3187 = vpop.permute.xlu0 %3186
      %3190 = vset.pattern.permute.xlu0 0
      %3191 = vperm.xlu0 %3190, %v3121
      %v3192 = vpop.permute.xlu0 %3191
      %3195 = vset.pattern.permute.xlu0 0
      %3196 = vperm.xlu0 %3195, %v3122
      %v3197 = vpop.permute.xlu0 %3196
      %3200 = vset.pattern.permute.xlu0 0
      %3201 = vperm.xlu0 %3200, %v3123
      %v3202 = vpop.permute.xlu0 %3201
      %3205 = vset.pattern.permute.xlu0 0
      %3206 = vperm.xlu0 %3205, %v3124
      %v3207 = vpop.permute.xlu0 %3206
      %3210 = vset.pattern.permute.xlu0 0
      %3211 = vperm.xlu0 %3210, %v3125
      %v3212 = vpop.permute.xlu0 %3211
      %3215 = vset.pattern.permute.xlu0 0
      %3216 = vperm.xlu0 %3215, %v3126
      %v3217 = vpop.permute.xlu0 %3216
      %3220 = vset.pattern.permute.xlu0 0
      %3221 = vperm.xlu0 %3220, %v3127
      %v3222 = vpop.permute.xlu0 %3221
      %3225 = vset.pattern.permute.xlu0 0
      %3226 = vperm.xlu0 %3225, %v3128
      %v3227 = vpop.permute.xlu0 %3226
      %3230 = vset.pattern.permute.xlu0 0
      %3231 = vperm.xlu0 %3230, %v3129
      %v3232 = vpop.permute.xlu0 %3231
      %3235 = vset.pattern.permute.xlu0 0
      %3236 = vperm.xlu0 %3235, %v3130
      %v3237 = vpop.permute.xlu0 %3236
      %3240 = vset.pattern.permute.xlu0 0
      %3241 = vperm.xlu0 %3240, %v3131
      %v3242 = vpop.permute.xlu0 %3241
      %3245 = vset.pattern.permute.xlu0 0
      %3246 = vperm.xlu0 %3245, %v3132
      %v3247 = vpop.permute.xlu0 %3246
      %3250 = vset.pattern.permute.xlu0 0
      %3251 = vperm.xlu0 %3250, %v3133
      %v3252 = vpop.permute.xlu0 %3251
      %3255 = vset.pattern.permute.xlu0 0
      %3256 = vperm.xlu0 %3255, %v3134
      %v3257 = vpop.permute.xlu0 %3256
      %3260 = vset.pattern.permute.xlu0 0
      %3261 = vperm.xlu0 %3260, %v3135
      %v3262 = vpop.permute.xlu0 %3261
      %3265 = vset.pattern.permute.xlu0 0
      %3266 = vperm.xlu0 %3265, %v3136
      %v3267 = vpop.permute.xlu0 %3266
      %3270 = vset.pattern.permute.xlu0 0
      %3271 = vperm.xlu0 %3270, %v3137
      %v3272 = vpop.permute.xlu0 %3271
      %3275 = vset.pattern.permute.xlu0 0
      %3276 = vperm.xlu0 %3275, %v3138
      %v3277 = vpop.permute.xlu0 %3276
      %3280 = vset.pattern.permute.xlu0 0
      %3281 = vperm.xlu0 %3280, %v3139
      %v3282 = vpop.permute.xlu0 %3281
      %3285 = vset.pattern.permute.xlu0 0
      %3286 = vperm.xlu0 %3285, %v3140
      %v3287 = vpop.permute.xlu0 %3286
      %3290 = vset.pattern.permute.xlu0 0
      %3291 = vperm.xlu0 %3290, %v3141
      %v3292 = vpop.permute.xlu0 %3291
      %3295 = vset.pattern.permute.xlu0 0
      %3296 = vperm.xlu0 %3295, %v3142
      %v3297 = vpop.permute.xlu0 %3296
      %3300 = vset.pattern.permute.xlu0 0
      %3301 = vperm.xlu0 %3300, %v3143
      %v3302 = vpop.permute.xlu0 %3301
      %3305 = vset.pattern.permute.xlu0 0
      %3306 = vperm.xlu0 %3305, %v3144
      %v3307 = vpop.permute.xlu0 %3306
      %3310 = vset.pattern.permute.xlu0 0
      %3311 = vperm.xlu0 %3310, %v3145
      %v3312 = vpop.permute.xlu0 %3311
      %3315 = vset.pattern.permute.xlu0 0
      %3316 = vperm.xlu0 %3315, %v3146
      %v3317 = vpop.permute.xlu0 %3316
      %3320 = vset.pattern.permute.xlu0 0
      %3321 = vperm.xlu0 %3320, %v3147
      %v3322 = vpop.permute.xlu0 %3321
      %3325 = vset.pattern.permute.xlu0 0
      %3326 = vperm.xlu0 %3325, %v3148
      %v3327 = vpop.permute.xlu0 %3326
      %v3329 = vmul.f32 %v3041, %v3152
      %v3330 = vmul.f32 %v3042, %v3157
      %v3331 = vmul.f32 %v3043, %v3162
      %v3332 = vmul.f32 %v3044, %v3167
      %v3333 = vmul.f32 %v3045, %v3172
      %v3334 = vmul.f32 %v3046, %v3177
      %v3335 = vmul.f32 %v3047, %v3182
      %v3336 = vmul.f32 %v3048, %v3187
      %v3337 = vmul.f32 %v3049, %v3192
      %v3338 = vmul.f32 %v3050, %v3197
      %v3339 = vmul.f32 %v3051, %v3202
      %v3340 = vmul.f32 %v3052, %v3207
      %v3341 = vmul.f32 %v3053, %v3212
      %v3342 = vmul.f32 %v3054, %v3217
      %v3343 = vmul.f32 %v3055, %v3222
      %v3344 = vmul.f32 %v3056, %v3227
      %v3345 = vmul.f32 %v3057, %v3232
      %v3346 = vmul.f32 %v3058, %v3237
      %v3347 = vmul.f32 %v3059, %v3242
      %v3348 = vmul.f32 %v3060, %v3247
      %v3349 = vmul.f32 %v3061, %v3252
      %v3350 = vmul.f32 %v3062, %v3257
      %v3351 = vmul.f32 %v3063, %v3262
      %v3352 = vmul.f32 %v3064, %v3267
      %v3353 = vmul.f32 %v3065, %v3272
      %v3354 = vmul.f32 %v3066, %v3277
      %v3355 = vmul.f32 %v3067, %v3282
      %v3356 = vmul.f32 %v3068, %v3287
      %v3357 = vmul.f32 %v3069, %v3292
      %v3358 = vmul.f32 %v3070, %v3297
      %v3359 = vmul.f32 %v3071, %v3302
      %v3360 = vmul.f32 %v3072, %v3307
      %v3361 = vmul.f32 %v3073, %v3312
      %v3362 = vmul.f32 %v3074, %v3317
      %v3363 = vmul.f32 %v3075, %v3322
      %v3364 = vmul.f32 %v3076, %v3327
      %v3365 = vsel %vm496, %v3329, 0.0
      %v3366 = vsel %vm496, %v3330, 0.0
      %v3367 = vadd.f32 %v3365, %v3366
      %v3368 = vsel %vm496, %v3331, 0.0
      %v3369 = vadd.f32 %v3367, %v3368
      %v3370 = vsel %vm496, %v3332, 0.0
      %v3371 = vadd.f32 %v3369, %v3370
      %v3372 = vsel %vm496, %v3333, 0.0
      %v3373 = vadd.f32 %v3371, %v3372
      %v3374 = vsel %vm496, %v3334, 0.0
      %v3375 = vadd.f32 %v3373, %v3374
      %v3376 = vsel %vm496, %v3335, 0.0
      %v3377 = vadd.f32 %v3375, %v3376
      %v3378 = vsel %vm496, %v3336, 0.0
      %v3379 = vadd.f32 %v3377, %v3378
      %v3380 = vsel %vm496, %v3337, 0.0
      %v3381 = vadd.f32 %v3379, %v3380
      %v3382 = vsel %vm496, %v3338, 0.0
      %v3383 = vadd.f32 %v3381, %v3382
      %v3384 = vsel %vm496, %v3339, 0.0
      %v3385 = vadd.f32 %v3383, %v3384
      %v3386 = vsel %vm496, %v3340, 0.0
      %v3387 = vadd.f32 %v3385, %v3386
      %v3388 = vsel %vm496, %v3341, 0.0
      %v3389 = vadd.f32 %v3387, %v3388
      %v3390 = vsel %vm496, %v3342, 0.0
      %v3391 = vadd.f32 %v3389, %v3390
      %v3392 = vsel %vm496, %v3343, 0.0
      %v3393 = vadd.f32 %v3391, %v3392
      %v3394 = vsel %vm496, %v3344, 0.0
      %v3395 = vadd.f32 %v3393, %v3394
      %v3396 = vsel %vm496, %v3345, 0.0
      %v3397 = vadd.f32 %v3395, %v3396
      %v3398 = vsel %vm496, %v3346, 0.0
      %v3399 = vadd.f32 %v3397, %v3398
      %v3400 = vsel %vm496, %v3347, 0.0
      %v3401 = vadd.f32 %v3399, %v3400
      %v3402 = vsel %vm496, %v3348, 0.0
      %v3403 = vadd.f32 %v3401, %v3402
      %v3404 = vsel %vm496, %v3349, 0.0
      %v3405 = vadd.f32 %v3403, %v3404
      %v3406 = vsel %vm496, %v3350, 0.0
      %v3407 = vadd.f32 %v3405, %v3406
      %v3408 = vsel %vm496, %v3351, 0.0
      %v3409 = vadd.f32 %v3407, %v3408
      %v3410 = vsel %vm496, %v3352, 0.0
      %v3411 = vadd.f32 %v3409, %v3410
      %v3412 = vsel %vm496, %v3353, 0.0
      %v3413 = vadd.f32 %v3411, %v3412
      %v3414 = vsel %vm496, %v3354, 0.0
      %v3415 = vadd.f32 %v3413, %v3414
      %v3416 = vsel %vm496, %v3355, 0.0
      %v3417 = vadd.f32 %v3415, %v3416
      %v3418 = vsel %vm496, %v3356, 0.0
      %v3419 = vadd.f32 %v3417, %v3418
      %v3420 = vsel %vm496, %v3357, 0.0
      %v3421 = vadd.f32 %v3419, %v3420
      %v3422 = vsel %vm496, %v3358, 0.0
      %v3423 = vadd.f32 %v3421, %v3422
      %v3424 = vsel %vm496, %v3359, 0.0
      %v3425 = vadd.f32 %v3423, %v3424
      %v3426 = vsel %vm496, %v3360, 0.0
      %v3427 = vadd.f32 %v3425, %v3426
      %v3428 = vsel %vm496, %v3361, 0.0
      %v3429 = vadd.f32 %v3427, %v3428
      %v3430 = vsel %vm496, %v3362, 0.0
      %v3431 = vadd.f32 %v3429, %v3430
      %v3432 = vsel %vm496, %v3363, 0.0
      %v3433 = vadd.f32 %v3431, %v3432
      %v3434 = vsel %vm496, %v3364, 0.0
      %v3435 = vadd.f32 %v3433, %v3434
      %v3436 = vrot.slane %v3435, 4
      %v3437 = vadd.f32 %v3435, %v3436
      %v3438 = vrot.slane %v3437, 2
      %v3439 = vadd.f32 %v3437, %v3438
      %v3440 = vrot.slane %v3439, 1
      %v3441 = vadd.f32 %v3439, %v3440
      %vm3442 = vcmask 57344
      %3443 = vst.msk [vmem:[%s238] sm:$0x1] %vm3442, %v3441
      %v3444 = vmul.f32 %v3329, %v3041
      %v3445 = vmul.f32 %v3330, %v3042
      %v3446 = vmul.f32 %v3331, %v3043
      %v3447 = vmul.f32 %v3332, %v3044
      %v3448 = vmul.f32 %v3333, %v3045
      %v3449 = vmul.f32 %v3334, %v3046
      %v3450 = vmul.f32 %v3335, %v3047
      %v3451 = vmul.f32 %v3336, %v3048
      %v3452 = vmul.f32 %v3337, %v3049
      %v3453 = vmul.f32 %v3338, %v3050
      %v3454 = vmul.f32 %v3339, %v3051
      %v3455 = vmul.f32 %v3340, %v3052
      %v3456 = vmul.f32 %v3341, %v3053
      %v3457 = vmul.f32 %v3342, %v3054
      %v3458 = vmul.f32 %v3343, %v3055
      %v3459 = vmul.f32 %v3344, %v3056
      %v3460 = vmul.f32 %v3345, %v3057
      %v3461 = vmul.f32 %v3346, %v3058
      %v3462 = vmul.f32 %v3347, %v3059
      %v3463 = vmul.f32 %v3348, %v3060
      %v3464 = vmul.f32 %v3349, %v3061
      %v3465 = vmul.f32 %v3350, %v3062
      %v3466 = vmul.f32 %v3351, %v3063
      %v3467 = vmul.f32 %v3352, %v3064
      %v3468 = vmul.f32 %v3353, %v3065
      %v3469 = vmul.f32 %v3354, %v3066
      %v3470 = vmul.f32 %v3355, %v3067
      %v3471 = vmul.f32 %v3356, %v3068
      %v3472 = vmul.f32 %v3357, %v3069
      %v3473 = vmul.f32 %v3358, %v3070
      %v3474 = vmul.f32 %v3359, %v3071
      %v3475 = vmul.f32 %v3360, %v3072
      %v3476 = vmul.f32 %v3361, %v3073
      %v3477 = vmul.f32 %v3362, %v3074
      %v3478 = vmul.f32 %v3363, %v3075
      %v3479 = vmul.f32 %v3364, %v3076
      %v3480 = vsel %vm496, %v3444, 0.0
      %v3481 = vsel %vm496, %v3445, 0.0
      %v3482 = vadd.f32 %v3480, %v3481
      %v3483 = vsel %vm496, %v3446, 0.0
      %v3484 = vadd.f32 %v3482, %v3483
      %v3485 = vsel %vm496, %v3447, 0.0
      %v3486 = vadd.f32 %v3484, %v3485
      %v3487 = vsel %vm496, %v3448, 0.0
      %v3488 = vadd.f32 %v3486, %v3487
      %v3489 = vsel %vm496, %v3449, 0.0
      %v3490 = vadd.f32 %v3488, %v3489
      %v3491 = vsel %vm496, %v3450, 0.0
      %v3492 = vadd.f32 %v3490, %v3491
      %v3493 = vsel %vm496, %v3451, 0.0
      %v3494 = vadd.f32 %v3492, %v3493
      %v3495 = vsel %vm496, %v3452, 0.0
      %v3496 = vadd.f32 %v3494, %v3495
      %v3497 = vsel %vm496, %v3453, 0.0
      %v3498 = vadd.f32 %v3496, %v3497
      %v3499 = vsel %vm496, %v3454, 0.0
      %v3500 = vadd.f32 %v3498, %v3499
      %v3501 = vsel %vm496, %v3455, 0.0
      %v3502 = vadd.f32 %v3500, %v3501
      %v3503 = vsel %vm496, %v3456, 0.0
      %v3504 = vadd.f32 %v3502, %v3503
      %v3505 = vsel %vm496, %v3457, 0.0
      %v3506 = vadd.f32 %v3504, %v3505
      %v3507 = vsel %vm496, %v3458, 0.0
      %v3508 = vadd.f32 %v3506, %v3507
      %v3509 = vsel %vm496, %v3459, 0.0
      %v3510 = vadd.f32 %v3508, %v3509
      %v3511 = vsel %vm496, %v3460, 0.0
      %v3512 = vadd.f32 %v3510, %v3511
      %v3513 = vsel %vm496, %v3461, 0.0
      %v3514 = vadd.f32 %v3512, %v3513
      %v3515 = vsel %vm496, %v3462, 0.0
      %v3516 = vadd.f32 %v3514, %v3515
      %v3517 = vsel %vm496, %v3463, 0.0
      %v3518 = vadd.f32 %v3516, %v3517
      %v3519 = vsel %vm496, %v3464, 0.0
      %v3520 = vadd.f32 %v3518, %v3519
      %v3521 = vsel %vm496, %v3465, 0.0
      %v3522 = vadd.f32 %v3520, %v3521
      %v3523 = vsel %vm496, %v3466, 0.0
      %v3524 = vadd.f32 %v3522, %v3523
      %v3525 = vsel %vm496, %v3467, 0.0
      %v3526 = vadd.f32 %v3524, %v3525
      %v3527 = vsel %vm496, %v3468, 0.0
      %v3528 = vadd.f32 %v3526, %v3527
      %v3529 = vsel %vm496, %v3469, 0.0
      %v3530 = vadd.f32 %v3528, %v3529
      %v3531 = vsel %vm496, %v3470, 0.0
      %v3532 = vadd.f32 %v3530, %v3531
      %v3533 = vsel %vm496, %v3471, 0.0
      %v3534 = vadd.f32 %v3532, %v3533
      %v3535 = vsel %vm496, %v3472, 0.0
      %v3536 = vadd.f32 %v3534, %v3535
      %v3537 = vsel %vm496, %v3473, 0.0
      %v3538 = vadd.f32 %v3536, %v3537
      %v3539 = vsel %vm496, %v3474, 0.0
      %v3540 = vadd.f32 %v3538, %v3539
      %v3541 = vsel %vm496, %v3475, 0.0
      %v3542 = vadd.f32 %v3540, %v3541
      %v3543 = vsel %vm496, %v3476, 0.0
      %v3544 = vadd.f32 %v3542, %v3543
      %v3545 = vsel %vm496, %v3477, 0.0
      %v3546 = vadd.f32 %v3544, %v3545
      %v3547 = vsel %vm496, %v3478, 0.0
      %v3548 = vadd.f32 %v3546, %v3547
      %v3549 = vsel %vm496, %v3479, 0.0
      %v3550 = vadd.f32 %v3548, %v3549
      %v3551 = vrot.slane %v3550, 4
      %v3552 = vadd.f32 %v3550, %v3551
      %v3553 = vrot.slane %v3552, 2
      %v3554 = vadd.f32 %v3552, %v3553
      %v3555 = vrot.slane %v3554, 1
      %v3556 = vadd.f32 %v3554, %v3555
      %3557 = vst.msk [vmem:[%s241] sm:$0x1] %vm3442, %v3556
      %p3558 = scmp.lt.s32.totalorder %s17, 1
      %s3559 = scalar_select %p3558, %s17, 1
      %s3560 = smul.addr %s3559, 36
      %s3561 = smul.addr %s3560, 8
      %s3562 = scalar_lea.vmem %s3, %s3561
      %p3563 = scmp.lt.s32.totalorder %s17, 1
      %s3564 = scalar_select %p3563, %s17, 1
      %s3565 = scalar_lea.vmem %s4, %s3564
      %p3566 = scmp.lt.s32.totalorder %s17, 1
      %s3567 = scalar_select %p3566, %s17, 1
      %s3568 = scalar_lea.vmem %s5, %s3567
      // Predicated region
      $region33: #{basic_block_split_forward.7} parent=31 // pred_check
        %p3569 = pneg %p103
      $region34: #{basic_block_split_forward.7} parent=31 // pred_check_branch
        %3571 = sbr.rel (%p3569) target = $region36
      $region35: #{basic_block_split_forward.7} parent=31 // pred_region
        _
      $region36: #{basic_block_split_forward.7} parent=31 // pred_fallthru
        _
      // Predicated region
      $region37: #{basic_block_split_forward.7} parent=31 // pred_check
        %p3572 = pneg %p129
      $region38: #{basic_block_split_forward.7} parent=31 // pred_check_branch
        %3574 = sbr.rel (%p3572) target = $region40
      $region39: #{basic_block_split_forward.7} parent=31 // pred_region
        _
      $region40: #{basic_block_split_forward.7} parent=31 // pred_fallthru
        _
      // Predicated region
      $region41: #{basic_block_split_forward.7} parent=31 // pred_check
        %p3575 = pneg %p155
      $region42: #{basic_block_split_forward.7} parent=31 // pred_check_branch
        %3577 = sbr.rel (%p3575) target = $region44
      $region43: #{basic_block_split_forward.7} parent=31 // pred_region
        _
      $region44: #{basic_block_split_forward.7} parent=31 // pred_fallthru
        _
    $region32: #{basic_block_split_forward.7} parent=5 // pred_fallthru
      _
    %p3578 = scmp.le.s32.totalorder 2, %s12
    // Predicated region
    $region45: #{basic_block_split_forward.7} parent=5 // pred_check
      %p3579 = pneg %p3578
    $region46: #{basic_block_split_forward.7} parent=5 // pred_check_branch
      %3581 = sbr.rel (%p3579) target = $region48
    $region47: #{basic_block_split_forward.7} parent=5 // pred_region
      %s3582 = ssub.s32 %s12, 2
      // Predicated region
      $region49: #{basic_block_split_forward.7} parent=47 // pred_check
        %p3583 = pneg %p109
      $region50: #{basic_block_split_forward.7} parent=47 // pred_check_branch
        %3585 = sbr.rel (%p3583) target = $region52
      $region51: #{basic_block_split_forward.7} parent=47 // pred_region
        %p3586 = scmp.lt.s32.totalorder %s18, 1
        %s3587 = scalar_select %p3586, %s18, 1
        %s3588 = smul.addr %s3587, 36
        %s3589 = smul.addr %s3588, 8
        %s3590 = scalar_lea.vmem %s3, %s3589
      $region52: #{basic_block_split_forward.7} parent=47 // pred_fallthru
        _
      // Predicated region
      $region53: #{basic_block_split_forward.7} parent=47 // pred_check
        %p3591 = pneg %p135
      $region54: #{basic_block_split_forward.7} parent=47 // pred_check_branch
        %3593 = sbr.rel (%p3591) target = $region56
      $region55: #{basic_block_split_forward.7} parent=47 // pred_region
        %p3594 = scmp.lt.s32.totalorder %s18, 1
        %s3595 = scalar_select %p3594, %s18, 1
        %s3596 = scalar_lea.vmem %s4, %s3595
      $region56: #{basic_block_split_forward.7} parent=47 // pred_fallthru
        _
      // Predicated region
      $region57: #{basic_block_split_forward.7} parent=47 // pred_check
        %p3597 = pneg %p161
      $region58: #{basic_block_split_forward.7} parent=47 // pred_check_branch
        %3599 = sbr.rel (%p3597) target = $region60
      $region59: #{basic_block_split_forward.7} parent=47 // pred_region
        %p3600 = scmp.lt.s32.totalorder %s18, 1
        %s3601 = scalar_select %p3600, %s18, 1
        %s3602 = scalar_lea.vmem %s5, %s3601
      $region60: #{basic_block_split_forward.7} parent=47 // pred_fallthru
        _
    $region48: #{basic_block_split_forward.7} parent=5 // pred_fallthru
      _
  $region6: #{basic_block_split_forward.7} parent=0 // loop_footer
    %s16 = sadd.s32 1, %s12
  $region7: #{basic_block_split_forward.7} parent=0 // loop_footer_branch
    %11 = sbr.rel target = $region3
  $region8: #{basic_block_split_forward.7} parent=0 // loop_exit
    _

</llo_original>
